<compile_context>
chip_gen: v5e
topology: v5e:2x2
jax: 0.10.0
libtpu: 0.0.40
codegen_flags: <defaults>
</compile_context>

<pallas_src>
import functools

import jax
import jax.numpy as jnp
from jax.experimental import pallas as pl
from jax.experimental.pallas import tpu as pltpu


# ---------------------------------------------------------------------------
# Fused conv1(3->128, 3x3, valid) + bias + ReLU + MaxPool2d(2,2).
#
# The wrapper builds 4 im2col "tap" arrays (one per position in each 2x2 pool
# window), each (N, 31*31, 32) bf16, patch features in (kh, kw, in_c) order,
# zero-padded 27 -> 32.  The kernel does 4 small matmuls with a running max
# (bias/ReLU commute with the max), producing the pooled activation directly
# in (h, w, c) layout -- optionally quantized per-image to int8 for the i8xi8
# fc1 path (scale written as a (1,1) side output).
# ---------------------------------------------------------------------------
def _conv_relu_pool_kernel(a_ref, b_ref, c_ref, d_ref, w_ref, bias_ref,
                           *out_refs, quantize):
    w = w_ref[...]                                   # (32, 128) bf16
    y = jnp.dot(a_ref[0], w, preferred_element_type=jnp.float32)
    y = jnp.maximum(y, jnp.dot(b_ref[0], w, preferred_element_type=jnp.float32))
    y = jnp.maximum(y, jnp.dot(c_ref[0], w, preferred_element_type=jnp.float32))
    y = jnp.maximum(y, jnp.dot(d_ref[0], w, preferred_element_type=jnp.float32))
    y = jnp.maximum(y + bias_ref[...], 0.0)          # (961, 128) f32, >= 0
    if quantize:
        o_ref, scale_ref = out_refs
        amax = jnp.maximum(jnp.max(y, axis=(0, 1), keepdims=True), 1e-6)  # (1,1)
        scale_ref[...] = amax * (1.0 / 127.0)
        o_ref[0] = jnp.round(y * (127.0 / amax)).astype(jnp.int8)
    else:
        (o_ref,) = out_refs
        o_ref[0] = y.astype(o_ref.dtype)


def im2col_pool_taps(x_nhwc):
    """4 bf16 patch arrays (N, 961, 32); tap (dp,dq) holds the 3x3 patches for
    conv output positions (2*ho+dp, 2*wo+dq)."""
    N = x_nhwc.shape[0]
    taps = []
    for dp in range(2):
        for dq in range(2):
            cols = []
            for kh in range(3):
                for kw in range(3):
                    cols.append(
                        x_nhwc[:, dp + kh:dp + kh + 62:2, dq + kw:dq + kw + 62:2, :])
            t = jnp.concatenate(cols, axis=-1)                     # (N,31,31,27)
            t = jnp.pad(t, ((0, 0), (0, 0), (0, 0), (0, 5)))       # K 27 -> 32
            taps.append(t.reshape(N, 31 * 31, 32).astype(jnp.bfloat16))
    return taps


def conv_relu_pool_pallas(taps, w32, bias, *, quantize):
    N = taps[0].shape[0]
    P = 31 * 31
    tap_spec = pl.BlockSpec((1, P, 32), lambda n: (n, 0, 0))
    if quantize:
        out_shape = (jax.ShapeDtypeStruct((N, P, 128), jnp.int8),
                     jax.ShapeDtypeStruct((N, 1), jnp.float32))
        out_specs = (pl.BlockSpec((1, P, 128), lambda n: (n, 0, 0)),
                     pl.BlockSpec((1, 1), lambda n: (n, 0)))
    else:
        out_shape = jax.ShapeDtypeStruct((N, P, 128), jnp.bfloat16)
        out_specs = pl.BlockSpec((1, P, 128), lambda n: (n, 0, 0))
    return pl.pallas_call(
        functools.partial(_conv_relu_pool_kernel, quantize=quantize),
        out_shape=out_shape,
        grid=(N,),
        in_specs=[tap_spec, tap_spec, tap_spec, tap_spec,
                  pl.BlockSpec((32, 128), lambda n: (0, 0)),
                  pl.BlockSpec((1, 128), lambda n: (0, 0))],
        out_specs=out_specs,
        compiler_params=pltpu.CompilerParams(
            dimension_semantics=("parallel",)),
    )(taps[0], taps[1], taps[2], taps[3], w32, bias.reshape(1, 128))


# ---------------------------------------------------------------------------
# Linear kernels.  grid = (N_blocks, K_blocks); N "parallel", K reduction.
# ---------------------------------------------------------------------------
def _weight_block_spec(tk, tn, buffers):
    index_map = lambda nb, k: (k, nb)
    if buffers is not None and buffers != 2:
        try:
            return pl.BlockSpec((tk, tn), index_map,
                                pipeline_mode=pl.Buffered(buffers))
        except TypeError:          # older BlockSpec without pipeline_mode
            pass
    return pl.BlockSpec((tk, tn), index_map)


def _linear_f_kernel(x_ref, w_ref, b_ref, o_ref, acc_ref, *, relu):
    k = pl.program_id(1)

    @pl.when(k == 0)
    def _():
        acc_ref[...] = jnp.zeros_like(acc_ref)

    acc_ref[...] += jnp.dot(x_ref[...], w_ref[...],
                            preferred_element_type=jnp.float32)

    @pl.when(k == pl.num_programs(1) - 1)
    def _():
        y = acc_ref[...] + b_ref[...]
        if relu:
            y = jnp.maximum(y, 0.0)
        o_ref[...] = y.astype(o_ref.dtype)


def _linear_q8_kernel(x_ref, w_ref, rs_ref, cs_ref, b_ref, o_ref, acc_ref, *, relu):
    k = pl.program_id(1)

    @pl.when(k == 0)
    def _():
        acc_ref[...] = jnp.zeros_like(acc_ref)

    acc_ref[...] += jnp.dot(x_ref[...], w_ref[...],
                            preferred_element_type=jnp.int32)

    @pl.when(k == pl.num_programs(1) - 1)
    def _():
        y = acc_ref[...].astype(jnp.float32) * (rs_ref[...] * cs_ref[...]) + b_ref[...]
        if relu:
            y = jnp.maximum(y, 0.0)
        o_ref[...] = y.astype(o_ref.dtype)


def linear_pallas(x, w, b, *, relu, tn=None, tk=None, weight_buffers=None,
                  vmem_limit=None):
    """x: (M, K), w: (K, N) [same dtype as x], b: (N,) f32 -> (M, N) f32."""
    M, K = x.shape
    K2, Nout = w.shape
    assert K == K2
    tn = Nout if tn is None else tn
    tk = K if tk is None else tk
    assert Nout % tn == 0 and K % tk == 0, (Nout, tn, K, tk)
    assert tk == K or tk % 128 == 0
    return pl.pallas_call(
        functools.partial(_linear_f_kernel, relu=relu),
        out_shape=jax.ShapeDtypeStruct((M, Nout), jnp.float32),
        grid=(Nout // tn, K // tk),
        in_specs=[
            pl.BlockSpec((M, tk), lambda nb, k: (0, k)),
            _weight_block_spec(tk, tn, weight_buffers),
            pl.BlockSpec((1, tn), lambda nb, k: (0, nb)),
        ],
        out_specs=pl.BlockSpec((M, tn), lambda nb, k: (0, nb)),
        scratch_shapes=[pltpu.VMEM((M, tn), jnp.float32)],
        compiler_params=pltpu.CompilerParams(
            dimension_semantics=("parallel", "arbitrary"),
            vmem_limit_bytes=vmem_limit),
    )(x, w, b.reshape(1, Nout))


def linear_q8_pallas(x, w, row_scale, col_scale, b, *, relu, tn, tk,
                     weight_buffers=None, vmem_limit=None):
    """x: (M, K) int8, w: (K, N) int8, scales f32, b: (N,) f32 -> (M, N) f32."""
    M, K = x.shape
    K2, Nout = w.shape
    assert K == K2 and Nout % tn == 0 and K % tk == 0
    assert tk % 128 == 0
    return pl.pallas_call(
        functools.partial(_linear_q8_kernel, relu=relu),
        out_shape=jax.ShapeDtypeStruct((M, Nout), jnp.float32),
        grid=(Nout // tn, K // tk),
        in_specs=[
            pl.BlockSpec((M, tk), lambda nb, k: (0, k)),
            _weight_block_spec(tk, tn, weight_buffers),
            pl.BlockSpec((M, 1), lambda nb, k: (0, 0)),
            pl.BlockSpec((1, tn), lambda nb, k: (0, nb)),
            pl.BlockSpec((1, tn), lambda nb, k: (0, nb)),
        ],
        out_specs=pl.BlockSpec((M, tn), lambda nb, k: (0, nb)),
        scratch_shapes=[pltpu.VMEM((M, tn), jnp.int32)],
        compiler_params=pltpu.CompilerParams(
            dimension_semantics=("parallel", "arbitrary"),
            vmem_limit_bytes=vmem_limit),
    )(x, w, row_scale.reshape(M, 1), col_scale.reshape(1, Nout), b.reshape(1, Nout))


# ---------------------------------------------------------------------------
# Parameters (PyTorch-style uniform(-1/sqrt(fan_in), .)) + one-time layout prep.
# ---------------------------------------------------------------------------
def init_params(key):
    ks = jax.random.split(key, 6)

    def u(k, shape, fan_in):
        bnd = 1.0 / float(fan_in) ** 0.5
        return jax.random.uniform(k, shape, jnp.float32, -bnd, bnd)

    K1 = 128 * 31 * 31
    return {
        "conv_w": u(ks[0], (128, 3, 3, 3), 27),      # (out_c, in_c, kh, kw)
        "conv_b": u(ks[1], (128,), 27),
        "fc1_wT": u(ks[2], (K1, 1000), K1),          # rows in PyTorch (c,h,w) order
        "fc1_b": u(ks[3], (1000,), K1),
        "fc2_wT": u(ks[4], (1000, 10), 1000),
        "fc2_b": u(ks[5], (10,), 1000),
    }


def prepare_params(params, *, mode):
    """One-time layout transforms (offline, outside the forward pass)."""
    C, H, W, F1, F1P = 128, 31, 31, 1000, 1024
    # conv weight: (out,in,kh,kw) -> (kh,kw,in,out) -> (27,128), pad K 27->32, bf16.
    w_conv = jnp.transpose(params["conv_w"], (2, 3, 1, 0)).reshape(27, 128)
    w_conv = jnp.pad(w_conv, ((0, 5), (0, 0))).astype(jnp.bfloat16)
    # fc1: rows permuted from PyTorch (c,h,w) flatten order to pooled (h,w,c) layout,
    # out-dim padded 1000 -> 1024 with zero columns.
    w1 = params["fc1_wT"].reshape(C, H, W, F1).transpose(1, 2, 0, 3)
    w1 = w1.reshape(C * H * W, F1)
    w1 = jnp.pad(w1, ((0, 0), (0, F1P - F1)))
    b1 = jnp.pad(params["fc1_b"], (0, F1P - F1))
    # fc2: pad in-dim 1000 -> 1024 (zero rows) and out-dim 10 -> 128 (zero cols + bias).
    w2 = jnp.pad(params["fc2_wT"], ((0, F1P - F1), (0, 128 - 10)))
    b2 = jnp.pad(params["fc2_b"], (0, 128 - 10))
    out = {"conv_w": w_conv, "conv_b": params["conv_b"],
           "fc1_b": b1, "fc2_w": w2, "fc2_b": b2}
    if mode == "int8":
        amax = jnp.maximum(jnp.max(jnp.abs(w1), axis=0, keepdims=True), 1e-30)
        cs = amax / 127.0                                          # (1, 1024)
        out["fc1_w"] = jnp.clip(jnp.round(w1 / cs), -127, 127).astype(jnp.int8)
        out["fc1_col_scale"] = cs
    else:
        # TODO(synk): fp8(e4m3) fc1 weights with per-column scale on v7x MXU.
        out["fc1_w"] = w1.astype(jnp.bfloat16)
    return out


# ---------------------------------------------------------------------------
# Forward pass (Pallas) and a pure-JAX reference in PyTorch semantics.
# ---------------------------------------------------------------------------
def net1_forward(prepped, x_nchw, *, mode, tn, weight_buffers):
    N = x_nchw.shape[0]
    x_nhwc = jnp.transpose(x_nchw, (0, 2, 3, 1))           # NCHW -> NHWC (tiny glue)
    taps = im2col_pool_taps(x_nhwc)
    if mode == "int8":
        pooled, row_scale = conv_relu_pool_pallas(
            taps, prepped["conv_w"], prepped["conv_b"], quantize=True)
        flat = pooled.reshape(N, 31 * 31 * 128)             # (h,w,c) order, int8
        h = linear_q8_pallas(flat, prepped["fc1_w"], row_scale,
                             prepped["fc1_col_scale"], prepped["fc1_b"],
                             relu=True, tn=tn, tk=3968,      # 123008 = 31 * 3968
                             weight_buffers=weight_buffers, vmem_limit=48 << 20)
    else:
        pooled = conv_relu_pool_pallas(
            taps, prepped["conv_w"], prepped["conv_b"], quantize=False)
        flat = pooled.reshape(N, 31 * 31 * 128)              # bf16
        h = linear_pallas(flat, prepped["fc1_w"], prepped["fc1_b"],
                          relu=True, tn=tn, tk=3968,
                          weight_buffers=weight_buffers, vmem_limit=48 << 20)
    out = linear_pallas(h, prepped["fc2_w"], prepped["fc2_b"], relu=False)
    return out[:, :10]                                        # drop lane padding


def net1_reference(params, x_nchw):
    hp = jax.lax.Precision.HIGHEST
    N = x_nchw.shape[0]
    x_nhwc = jnp.transpose(x_nchw, (0, 2, 3, 1))
    cols = []
    for kh in range(3):
        for kw in range(3):
            cols.append(x_nhwc[:, kh:kh + 62, kw:kw + 62, :])
    patches = jnp.concatenate(cols, axis=-1).reshape(N * 62 * 62, 27)
    w_conv = jnp.transpose(params["conv_w"], (2, 3, 1, 0)).reshape(27, 128)
    conv = jnp.maximum(jnp.dot(patches, w_conv, precision=hp)
                       + params["conv_b"], 0.0).reshape(N, 62, 62, 128)
    pooled = conv.reshape(N, 31, 2, 31, 2, 128).max(axis=(2, 4))
    flat = jnp.transpose(pooled, (0, 3, 1, 2)).reshape(N, 128 * 31 * 31)  # NCHW flatten
    h = jnp.maximum(jnp.dot(flat, params["fc1_wT"], precision=hp)
                    + params["fc1_b"], 0.0)
    return jnp.dot(h, params["fc2_wT"], precision=hp) + params["fc2_b"]


if __name__ == "__main__":
    key = jax.random.PRNGKey(0)
    kp, kx = jax.random.split(key)
    params = init_params(kp)
    # Input must be 64x64 so that fc1's 128*31*31 flatten matches the module.
    x = jax.random.normal(kx, (2, 3, 64, 64), jnp.float32)

    kind = jax.devices()[0].device_kind.lower()
    is_v7 = "v7" in kind
    if is_v7:
        preferred = dict(mode="bf16", tn=512, weight_buffers=3)   # dual-TC shard on nb
    else:
        preferred = dict(mode="int8", tn=1024, weight_buffers=3)  # i8xi8 MXU path
    configs = [preferred, dict(mode="bf16", tn=512, weight_buffers=2)]  # safe fallback

    out, last_err = None, None
    for cfg in configs:
        try:
            prepped = prepare_params(params, mode=cfg["mode"])
            fwd = jax.jit(functools.partial(net1_forward, **cfg))
            out = jax.block_until_ready(fwd(prepped, x))
            break
        except Exception as e:   # fall back to the conservative config
            last_err = e
            out = None
    if out is None:
        raise last_err

    assert out.shape == (2, 10)
    ref = net1_reference(params, x)
    assert bool(jnp.all(jnp.isfinite(out)))
    assert bool(jnp.allclose(out, ref, rtol=2e-2, atol=2e-2)), (
        float(jnp.max(jnp.abs(out - ref))))
    print("KERNEL_OK")
</pallas_src>

<mosaic_0001>
module attributes {stable_mosaic.version = 11 : i64} {
  func.func @_conv_relu_pool_kernel(%arg0: i32, %arg1: memref<1x961x32xbf16, #tpu.memory_space<vmem>>, %arg2: memref<1x961x32xbf16, #tpu.memory_space<vmem>>, %arg3: memref<1x961x32xbf16, #tpu.memory_space<vmem>>, %arg4: memref<1x961x32xbf16, #tpu.memory_space<vmem>>, %arg5: memref<32x128xbf16, #tpu.memory_space<vmem>>, %arg6: memref<1x128xf32, #tpu.memory_space<vmem>>, %arg7: memref<1x961x128xbf16, #tpu.memory_space<vmem>>) attributes {dimension_semantics = [#tpu.dimension_semantics<parallel>], iteration_bounds = array<i64: 2>, scalar_prefetch = 0 : i64, scratch_operands = 0 : i64, tpu.core_type = #tpu.core_type<tc>, window_params = [{transform_indices = @transform_0, window_bounds = array<i64: 1, 961, 32>}, {transform_indices = @transform_1, window_bounds = array<i64: 1, 961, 32>}, {transform_indices = @transform_2, window_bounds = array<i64: 1, 961, 32>}, {transform_indices = @transform_3, window_bounds = array<i64: 1, 961, 32>}, {pipeline_mode = #tpu.pipeline_mode<synchronous>, transform_indices = @transform_4, window_bounds = array<i64: 32, 128>}, {pipeline_mode = #tpu.pipeline_mode<synchronous>, transform_indices = @transform_5, window_bounds = array<i64: 1, 128>}, {transform_indices = @transform_6, window_bounds = array<i64: 1, 961, 128>}]} {
    %c0 = arith.constant 0 : index
    %c0_0 = arith.constant 0 : index
    %0 = vector.load %arg5[%c0, %c0_0] : memref<32x128xbf16, #tpu.memory_space<vmem>>, vector<32x128xbf16>
    %c0_1 = arith.constant 0 : index
    %c0_2 = arith.constant 0 : index
    %c0_3 = arith.constant 0 : index
    %1 = vector.load %arg1[%c0_1, %c0_2, %c0_3] : memref<1x961x32xbf16, #tpu.memory_space<vmem>>, vector<1x961x32xbf16>
    %2 = vector.shape_cast %1 : vector<1x961x32xbf16> to vector<961x32xbf16>
    %cst = arith.constant dense<0.000000e+00> : vector<961x128xf32>
    %3 = tpu.matmul %2, %0, %cst {dimension_numbers = #tpu.dot_dimension_numbers<[1], [0], [0], [1], [0, 0, 1, 1], [], []>} : vector<961x32xbf16>, vector<32x128xbf16>, vector<961x128xf32> -> vector<961x128xf32>
    %c0_4 = arith.constant 0 : index
    %c0_5 = arith.constant 0 : index
    %c0_6 = arith.constant 0 : index
    %4 = vector.load %arg2[%c0_4, %c0_5, %c0_6] : memref<1x961x32xbf16, #tpu.memory_space<vmem>>, vector<1x961x32xbf16>
    %5 = vector.shape_cast %4 : vector<1x961x32xbf16> to vector<961x32xbf16>
    %cst_7 = arith.constant dense<0.000000e+00> : vector<961x128xf32>
    %6 = tpu.matmul %5, %0, %cst_7 {dimension_numbers = #tpu.dot_dimension_numbers<[1], [0], [0], [1], [0, 0, 1, 1], [], []>} : vector<961x32xbf16>, vector<32x128xbf16>, vector<961x128xf32> -> vector<961x128xf32>
    %7 = arith.maximumf %3, %6 : vector<961x128xf32>
    %c0_8 = arith.constant 0 : index
    %c0_9 = arith.constant 0 : index
    %c0_10 = arith.constant 0 : index
    %8 = vector.load %arg3[%c0_8, %c0_9, %c0_10] : memref<1x961x32xbf16, #tpu.memory_space<vmem>>, vector<1x961x32xbf16>
    %9 = vector.shape_cast %8 : vector<1x961x32xbf16> to vector<961x32xbf16>
    %cst_11 = arith.constant dense<0.000000e+00> : vector<961x128xf32>
    %10 = tpu.matmul %9, %0, %cst_11 {dimension_numbers = #tpu.dot_dimension_numbers<[1], [0], [0], [1], [0, 0, 1, 1], [], []>} : vector<961x32xbf16>, vector<32x128xbf16>, vector<961x128xf32> -> vector<961x128xf32>
    %11 = arith.maximumf %7, %10 : vector<961x128xf32>
    %c0_12 = arith.constant 0 : index
    %c0_13 = arith.constant 0 : index
    %c0_14 = arith.constant 0 : index
    %12 = vector.load %arg4[%c0_12, %c0_13, %c0_14] : memref<1x961x32xbf16, #tpu.memory_space<vmem>>, vector<1x961x32xbf16>
    %13 = vector.shape_cast %12 : vector<1x961x32xbf16> to vector<961x32xbf16>
    %cst_15 = arith.constant dense<0.000000e+00> : vector<961x128xf32>
    %14 = tpu.matmul %13, %0, %cst_15 {dimension_numbers = #tpu.dot_dimension_numbers<[1], [0], [0], [1], [0, 0, 1, 1], [], []>} : vector<961x32xbf16>, vector<32x128xbf16>, vector<961x128xf32> -> vector<961x128xf32>
    %15 = arith.maximumf %11, %14 : vector<961x128xf32>
    %c0_16 = arith.constant 0 : index
    %c0_17 = arith.constant 0 : index
    %16 = vector.load %arg6[%c0_16, %c0_17] : memref<1x128xf32, #tpu.memory_space<vmem>>, vector<1x128xf32>
    %17 = vector.broadcast %16 : vector<1x128xf32> to vector<961x128xf32>
    %18 = arith.addf %15, %17 : vector<961x128xf32>
    %cst_18 = arith.constant 0.000000e+00 : f32
    %19 = vector.broadcast %cst_18 : f32 to vector<961x128xf32>
    %20 = arith.maximumf %18, %19 : vector<961x128xf32>
    %21 = arith.truncf %20 : vector<961x128xf32> to vector<961x128xbf16>
    %c0_19 = arith.constant 0 : index
    %c0_20 = arith.constant 0 : index
    %c0_21 = arith.constant 0 : index
    %22 = vector.load %arg7[%c0_19, %c0_20, %c0_21] : memref<1x961x128xbf16, #tpu.memory_space<vmem>>, vector<1x961x128xbf16>
    %23 = vector.shape_cast %22 : vector<1x961x128xbf16> to vector<961x128xbf16>
    %24 = vector.shape_cast %21 : vector<961x128xbf16> to vector<1x961x128xbf16>
    tpu.vector_store %arg7[%c0_19, %c0_20, %c0_21], %24 {strides = array<i32>} : memref<1x961x128xbf16, #tpu.memory_space<vmem>>, vector<1x961x128xbf16>,
    return
  }
  func.func @transform_0(%arg0: i32) -> (i32, i32, i32) {
    %c0_i32 = arith.constant 0 : i32
    %c0_i32_0 = arith.constant 0 : i32
    %c0_i32_1 = arith.constant 0 : i32
    return %arg0, %c0_i32, %c0_i32_0 : i32, i32, i32
  }
  func.func @transform_1(%arg0: i32) -> (i32, i32, i32) {
    %c0_i32 = arith.constant 0 : i32
    %c0_i32_0 = arith.constant 0 : i32
    %c0_i32_1 = arith.constant 0 : i32
    return %arg0, %c0_i32, %c0_i32_0 : i32, i32, i32
  }
  func.func @transform_2(%arg0: i32) -> (i32, i32, i32) {
    %c0_i32 = arith.constant 0 : i32
    %c0_i32_0 = arith.constant 0 : i32
    %c0_i32_1 = arith.constant 0 : i32
    return %arg0, %c0_i32, %c0_i32_0 : i32, i32, i32
  }
  func.func @transform_3(%arg0: i32) -> (i32, i32, i32) {
    %c0_i32 = arith.constant 0 : i32
    %c0_i32_0 = arith.constant 0 : i32
    %c0_i32_1 = arith.constant 0 : i32
    return %arg0, %c0_i32, %c0_i32_0 : i32, i32, i32
  }
  func.func @transform_4(%arg0: i32) -> (i32, i32) {
    %c0_i32 = arith.constant 0 : i32
    %c0_i32_0 = arith.constant 0 : i32
    %c0_i32_1 = arith.constant 0 : i32
    return %c0_i32, %c0_i32_0 : i32, i32
  }
  func.func @transform_5(%arg0: i32) -> (i32, i32) {
    %c0_i32 = arith.constant 0 : i32
    %c0_i32_0 = arith.constant 0 : i32
    %c0_i32_1 = arith.constant 0 : i32
    return %c0_i32, %c0_i32_0 : i32, i32
  }
  func.func @transform_6(%arg0: i32) -> (i32, i32, i32) {
    %c0_i32 = arith.constant 0 : i32
    %c0_i32_0 = arith.constant 0 : i32
    %c0_i32_1 = arith.constant 0 : i32
    return %arg0, %c0_i32, %c0_i32_0 : i32, i32, i32
  }
}

module attributes {stable_mosaic.version = 11 : i64} {
  func.func @_linear_f_kernel(%arg0: i32, %arg1: i32, %arg2: memref<2x3968xbf16, #tpu.memory_space<vmem>>, %arg3: memref<3968x512xbf16, #tpu.memory_space<vmem>>, %arg4: memref<1x512xf32, #tpu.memory_space<vmem>>, %arg5: memref<2x512xf32, #tpu.memory_space<vmem>>, %arg6: memref<2x512xf32, #tpu.memory_space<vmem>>) attributes {dimension_semantics = [#tpu.dimension_semantics<parallel>, #tpu.dimension_semantics<arbitrary>], iteration_bounds = array<i64: 2, 31>, scalar_prefetch = 0 : i64, scratch_operands = 1 : i64, tpu.core_type = #tpu.core_type<tc>, window_params = [{transform_indices = @transform_0, window_bounds = array<i64: 2, 3968>}, {transform_indices = @transform_1, window_bounds = array<i64: 3968, 512>}, {transform_indices = @transform_2, window_bounds = array<i64: 1, 512>}, {transform_indices = @transform_3, window_bounds = array<i64: 2, 512>}]} {
    %c0_i32 = arith.constant 0 : i32
    %0 = arith.cmpi eq, %arg1, %c0_i32 : i32
    %1 = arith.extui %0 : i1 to i32
    %c0_i32_0 = arith.constant 0 : i32
    %2 = arith.cmpi ne, %1, %c0_i32_0 : i32
    scf.if %2 {
      %cst_9 = arith.constant 0.000000e+00 : f32
      %12 = vector.broadcast %cst_9 : f32 to vector<2x512xf32>
      %c0_10 = arith.constant 0 : index
      %c0_11 = arith.constant 0 : index
      %13 = vector.load %arg6[%c0_10, %c0_11] : memref<2x512xf32, #tpu.memory_space<vmem>>, vector<2x512xf32>
      tpu.vector_store %arg6[%c0_10, %c0_11], %12 {strides = array<i32>} : memref<2x512xf32, #tpu.memory_space<vmem>>, vector<2x512xf32>,
    } else {
    }
    %c0 = arith.constant 0 : index
    %c0_1 = arith.constant 0 : index
    %3 = vector.load %arg6[%c0, %c0_1] : memref<2x512xf32, #tpu.memory_space<vmem>>, vector<2x512xf32>
    %c0_2 = arith.constant 0 : index
    %c0_3 = arith.constant 0 : index
    %4 = vector.load %arg2[%c0_2, %c0_3] : memref<2x3968xbf16, #tpu.memory_space<vmem>>, vector<2x3968xbf16>
    %c0_4 = arith.constant 0 : index
    %c0_5 = arith.constant 0 : index
    %5 = vector.load %arg3[%c0_4, %c0_5] : memref<3968x512xbf16, #tpu.memory_space<vmem>>, vector<3968x512xbf16>
    %cst = arith.constant dense<0.000000e+00> : vector<2x512xf32>
    %6 = tpu.matmul %4, %5, %cst {dimension_numbers = #tpu.dot_dimension_numbers<[1], [0], [0], [1], [0, 0, 1, 1], [], []>} : vector<2x3968xbf16>, vector<3968x512xbf16>, vector<2x512xf32> -> vector<2x512xf32>
    %7 = arith.addf %3, %6 : vector<2x512xf32>
    %c0_6 = arith.constant 0 : index
    %c0_7 = arith.constant 0 : index
    %8 = vector.load %arg6[%c0_6, %c0_7] : memref<2x512xf32, #tpu.memory_space<vmem>>, vector<2x512xf32>
    tpu.vector_store %arg6[%c0_6, %c0_7], %7 {strides = array<i32>} : memref<2x512xf32, #tpu.memory_space<vmem>>, vector<2x512xf32>,
    %c30_i32 = arith.constant 30 : i32
    %9 = arith.cmpi eq, %arg1, %c30_i32 : i32
    %10 = arith.extui %9 : i1 to i32
    %c0_i32_8 = arith.constant 0 : i32
    %11 = arith.cmpi ne, %10, %c0_i32_8 : i32
    scf.if %11 {
      %c0_9 = arith.constant 0 : index
      %c0_10 = arith.constant 0 : index
      %12 = vector.load %arg6[%c0_9, %c0_10] : memref<2x512xf32, #tpu.memory_space<vmem>>, vector<2x512xf32>
      %c0_11 = arith.constant 0 : index
      %c0_12 = arith.constant 0 : index
      %13 = vector.load %arg4[%c0_11, %c0_12] : memref<1x512xf32, #tpu.memory_space<vmem>>, vector<1x512xf32>
      %14 = vector.broadcast %13 : vector<1x512xf32> to vector<2x512xf32>
      %15 = arith.addf %12, %14 : vector<2x512xf32>
      %cst_13 = arith.constant 0.000000e+00 : f32
      %16 = vector.broadcast %cst_13 : f32 to vector<2x512xf32>
      %17 = arith.maximumf %15, %16 : vector<2x512xf32>
      %c0_14 = arith.constant 0 : index
      %c0_15 = arith.constant 0 : index
      %18 = vector.load %arg5[%c0_14, %c0_15] : memref<2x512xf32, #tpu.memory_space<vmem>>, vector<2x512xf32>
      tpu.vector_store %arg5[%c0_14, %c0_15], %17 {strides = array<i32>} : memref<2x512xf32, #tpu.memory_space<vmem>>, vector<2x512xf32>,
    } else {
    }
    return
  }
  func.func @transform_0(%arg0: i32, %arg1: i32) -> (i32, i32) {
    %c0_i32 = arith.constant 0 : i32
    %c0_i32_0 = arith.constant 0 : i32
    return %c0_i32, %arg1 : i32, i32
  }
  func.func @transform_1(%arg0: i32, %arg1: i32) -> (i32, i32) {
    %c0_i32 = arith.constant 0 : i32
    return %arg1, %arg0 : i32, i32
  }
  func.func @transform_2(%arg0: i32, %arg1: i32) -> (i32, i32) {
    %c0_i32 = arith.constant 0 : i32
    %c0_i32_0 = arith.constant 0 : i32
    return %c0_i32, %arg0 : i32, i32
  }
  func.func @transform_3(%arg0: i32, %arg1: i32) -> (i32, i32) {
    %c0_i32 = arith.constant 0 : i32
    %c0_i32_0 = arith.constant 0 : i32
    return %c0_i32, %arg0 : i32, i32
  }
}

module attributes {stable_mosaic.version = 11 : i64} {
  func.func @_linear_f_kernel(%arg0: i32, %arg1: i32, %arg2: memref<2x1024xf32, #tpu.memory_space<vmem>>, %arg3: memref<1024x128xf32, #tpu.memory_space<vmem>>, %arg4: memref<1x128xf32, #tpu.memory_space<vmem>>, %arg5: memref<2x128xf32, #tpu.memory_space<vmem>>, %arg6: memref<2x128xf32, #tpu.memory_space<vmem>>) attributes {dimension_semantics = [#tpu.dimension_semantics<parallel>, #tpu.dimension_semantics<arbitrary>], iteration_bounds = array<i64: 1, 1>, scalar_prefetch = 0 : i64, scratch_operands = 1 : i64, tpu.core_type = #tpu.core_type<tc>, window_params = [{transform_indices = @transform_0, window_bounds = array<i64: 2, 1024>}, {transform_indices = @transform_1, window_bounds = array<i64: 1024, 128>}, {transform_indices = @transform_2, window_bounds = array<i64: 1, 128>}, {transform_indices = @transform_3, window_bounds = array<i64: 2, 128>}]} {
    %c0_i32 = arith.constant 0 : i32
    %0 = arith.cmpi eq, %arg1, %c0_i32 : i32
    %1 = arith.extui %0 : i1 to i32
    %c0_i32_0 = arith.constant 0 : i32
    %2 = arith.cmpi ne, %1, %c0_i32_0 : i32
    scf.if %2 {
      %cst_10 = arith.constant 0.000000e+00 : f32
      %12 = vector.broadcast %cst_10 : f32 to vector<2x128xf32>
      %c0_11 = arith.constant 0 : index
      %c0_12 = arith.constant 0 : index
      %13 = vector.load %arg6[%c0_11, %c0_12] : memref<2x128xf32, #tpu.memory_space<vmem>>, vector<2x128xf32>
      tpu.vector_store %arg6[%c0_11, %c0_12], %12 {strides = array<i32>} : memref<2x128xf32, #tpu.memory_space<vmem>>, vector<2x128xf32>,
    } else {
    }
    %c0 = arith.constant 0 : index
    %c0_1 = arith.constant 0 : index
    %3 = vector.load %arg6[%c0, %c0_1] : memref<2x128xf32, #tpu.memory_space<vmem>>, vector<2x128xf32>
    %c0_2 = arith.constant 0 : index
    %c0_3 = arith.constant 0 : index
    %4 = vector.load %arg2[%c0_2, %c0_3] : memref<2x1024xf32, #tpu.memory_space<vmem>>, vector<2x1024xf32>
    %c0_4 = arith.constant 0 : index
    %c0_5 = arith.constant 0 : index
    %5 = vector.load %arg3[%c0_4, %c0_5] : memref<1024x128xf32, #tpu.memory_space<vmem>>, vector<1024x128xf32>
    %cst = arith.constant dense<0.000000e+00> : vector<2x128xf32>
    %6 = tpu.matmul %4, %5, %cst {dimension_numbers = #tpu.dot_dimension_numbers<[1], [0], [0], [1], [0, 0, 1, 1], [], []>} : vector<2x1024xf32>, vector<1024x128xf32>, vector<2x128xf32> -> vector<2x128xf32>
    %7 = arith.addf %3, %6 : vector<2x128xf32>
    %c0_6 = arith.constant 0 : index
    %c0_7 = arith.constant 0 : index
    %8 = vector.load %arg6[%c0_6, %c0_7] : memref<2x128xf32, #tpu.memory_space<vmem>>, vector<2x128xf32>
    tpu.vector_store %arg6[%c0_6, %c0_7], %7 {strides = array<i32>} : memref<2x128xf32, #tpu.memory_space<vmem>>, vector<2x128xf32>,
    %c0_i32_8 = arith.constant 0 : i32
    %9 = arith.cmpi eq, %arg1, %c0_i32_8 : i32
    %10 = arith.extui %9 : i1 to i32
    %c0_i32_9 = arith.constant 0 : i32
    %11 = arith.cmpi ne, %10, %c0_i32_9 : i32
    scf.if %11 {
      %c0_10 = arith.constant 0 : index
      %c0_11 = arith.constant 0 : index
      %12 = vector.load %arg6[%c0_10, %c0_11] : memref<2x128xf32, #tpu.memory_space<vmem>>, vector<2x128xf32>
      %c0_12 = arith.constant 0 : index
      %c0_13 = arith.constant 0 : index
      %13 = vector.load %arg4[%c0_12, %c0_13] : memref<1x128xf32, #tpu.memory_space<vmem>>, vector<1x128xf32>
      %14 = vector.broadcast %13 : vector<1x128xf32> to vector<2x128xf32>
      %15 = arith.addf %12, %14 : vector<2x128xf32>
      %c0_14 = arith.constant 0 : index
      %c0_15 = arith.constant 0 : index
      %16 = vector.load %arg5[%c0_14, %c0_15] : memref<2x128xf32, #tpu.memory_space<vmem>>, vector<2x128xf32>
      tpu.vector_store %arg5[%c0_14, %c0_15], %15 {strides = array<i32>} : memref<2x128xf32, #tpu.memory_space<vmem>>, vector<2x128xf32>,
    } else {
    }
    return
  }
  func.func @transform_0(%arg0: i32, %arg1: i32) -> (i32, i32) {
    %c0_i32 = arith.constant 0 : i32
    %c0_i32_0 = arith.constant 0 : i32
    return %c0_i32, %arg1 : i32, i32
  }
  func.func @transform_1(%arg0: i32, %arg1: i32) -> (i32, i32) {
    %c0_i32 = arith.constant 0 : i32
    return %arg1, %arg0 : i32, i32
  }
  func.func @transform_2(%arg0: i32, %arg1: i32) -> (i32, i32) {
    %c0_i32 = arith.constant 0 : i32
    %c0_i32_0 = arith.constant 0 : i32
    return %c0_i32, %arg0 : i32, i32
  }
  func.func @transform_3(%arg0: i32, %arg1: i32) -> (i32, i32) {
    %c0_i32 = arith.constant 0 : i32
    %c0_i32_0 = arith.constant 0 : i32
    return %c0_i32, %arg0 : i32, i32
  }
}

</mosaic_0001>

<llo_original>
// kernel: net1_forward.5
$region0: #{net1_forward.5}
  #allocation0 [shape = 'u32[]', space=smem, size = 0x4, offset = 0x4, fixed_abs, tag = 'smem constant byte address 0x4 - core index']
  #allocation1 [shape = 'u32[72,128]{1,0:T(1,128)}', space=vmem, size = 0x9000, scoped, tag = 'internal scratch']
  #allocation2 [shape = 'f32[2,128]{1,0:T(2,128)}', space=vmem, size = 0x400, scoped, tag = 'scratch operand']
  %s0 = inlined_call_operand.vmem [shape: f32[2,1024], index: 0, kind: input, shape index: {}]
  %s1 = inlined_call_operand.hbm [shape: f32[1024,128], index: 1, kind: input, shape index: {}]
  %s2 = inlined_call_operand.hbm [shape: f32[1,128], index: 2, kind: input, shape index: {}]
  %s3 = inlined_call_operand.hbm [shape: f32[2,128], index: 3, kind: output, shape index: {}]
  %s4 = sld [smem:[#allocation0]]
  $region38: #{net1_forward.5} parent=0
    _
  %s6 = ssub.s32 1, %s4
  %s7 = scalar_select 0, %s6, %s4
  $region1: #{net1_forward.5} parent=0
    #allocation3 [shape = 'u8[524288]{0}', space=vmem, size = 0x80000, scoped, tag = 'input window, operand 1, single buffered']
    #allocation4 [shape = 's32[1]{0}', space=sflag, size = 0x4, scoped, tag = 'scoped memory for net1_forward.5']
    #allocation5 [shape = 's32[1]{0}', space=sflag, size = 0x4, scoped, tag = 'scoped memory for net1_forward.5']
    #allocation6 [shape = 'u8[512]{0}', space=vmem, size = 0x400, scoped, tag = 'input window, operand 2, single buffered']
    #allocation7 [shape = 's32[1]{0}', space=sflag, size = 0x4, scoped, tag = 'scoped memory for net1_forward.5']
    #allocation8 [shape = 'u8[1024]{0}', space=vmem, size = 0x400, scoped, tag = 'output window, operand 0, single buffered']
    %8 = vsyncpa [#allocation4], 0
    %9 = vsyncpa [#allocation7], 0
    %10 = vsyncpa [#allocation5], 0
    // Predicated region
    $region2: #{net1_forward.5} parent=1 // pred_check
      _
    $region3: #{net1_forward.5} parent=1 // pred_check_branch
      %12 = sbr.rel (0) target = $region5
    $region4: #{net1_forward.5} parent=1 // pred_region
      _
    $region5: #{net1_forward.5} parent=1 // pred_fallthru
      _
    // Predicated region
    $region6: #{net1_forward.5} parent=1 // pred_check
      _
    $region7: #{net1_forward.5} parent=1 // pred_check_branch
      %14 = sbr.rel (0) target = $region9
    $region8: #{net1_forward.5} parent=1 // pred_region
      %16 = vsyncadd [#allocation4], 0
      %s17 = sshll.u32 %s1, 4
      %s18 = int_to_ptr.hbm [resolvable:$true] %s17
      %s19 = sshll.u32 [#allocation3], 4
      %s20 = int_to_ptr.vmem [resolvable:$true] %s19
      %25 = dma.hbm_to_vmem [thread:$0]  %s18, 16384, %s20, [#allocation4], 128, 128, 8
    $region9: #{net1_forward.5} parent=1 // pred_fallthru
      _
    // Predicated region
    $region10: #{net1_forward.5} parent=1 // pred_check
      _
    $region11: #{net1_forward.5} parent=1 // pred_check_branch
      %27 = sbr.rel (0) target = $region13
    $region12: #{net1_forward.5} parent=1 // pred_region
      %29 = vsyncadd [#allocation7], 0
      %s31 = sshll.u32 %s2, 4
      %s32 = int_to_ptr.hbm [resolvable:$true] %s31
      %s33 = sshll.u32 [#allocation6], 4
      %s34 = int_to_ptr.vmem [resolvable:$true] %s33
      %36 = dma.hbm_to_vmem [thread:$0]  %s32, 16, %s34, [#allocation7]
    $region13: #{net1_forward.5} parent=1 // pred_fallthru
      _
    // Predicated region
    $region14: #{net1_forward.5} parent=1 // pred_check
      _
    $region15: #{net1_forward.5} parent=1 // pred_check_branch
      %38 = sbr.rel (0) target = $region17
    $region16: #{net1_forward.5} parent=1 // pred_region
      %40 = dma.done [#allocation4], 16384
    $region17: #{net1_forward.5} parent=1 // pred_fallthru
      _
    // Predicated region
    $region18: #{net1_forward.5} parent=1 // pred_check
      _
    $region19: #{net1_forward.5} parent=1 // pred_check_branch
      %42 = sbr.rel (0) target = $region21
    $region20: #{net1_forward.5} parent=1 // pred_region
      %44 = dma.done [#allocation7], 16
    $region21: #{net1_forward.5} parent=1 // pred_fallthru
      _
    %p45 = scmp.eq.s32.totalorder 0, 0
    // Predicated region
    $region22: #{net1_forward.5} parent=1 // pred_check
      %p46 = pneg %p45
    $region23: #{net1_forward.5} parent=1 // pred_check_branch
      %48 = sbr.rel (%p46) target = $region25
    $region24: #{net1_forward.5} parent=1 // pred_region
      %49 = vst [vmem:[#allocation2] sm:$0x3] 0.0
    $region25: #{net1_forward.5} parent=1 // pred_fallthru
      _
    %v50 = vld [vmem:[#allocation2] sm:$0x3]
    %v51 = vld [vmem:[%s0] sm:$0xff]
    %v52 = vld [vmem:[%s0 + $0x8] sm:$0xff]
    %v53 = vld [vmem:[#allocation3] sm:$0xff]
    %v54 = vld [vmem:[#allocation3 + $0x8] sm:$0xff]
    %v55 = vld [vmem:[#allocation3 + $0x10] sm:$0xff]
    %v56 = vld [vmem:[#allocation3 + $0x18] sm:$0xff]
    %v57 = vld [vmem:[#allocation3 + $0x20] sm:$0xff]
    %v58 = vld [vmem:[#allocation3 + $0x28] sm:$0xff]
    %v59 = vld [vmem:[#allocation3 + $0x30] sm:$0xff]
    %v60 = vld [vmem:[#allocation3 + $0x38] sm:$0xff]
    %v61 = vld [vmem:[#allocation3 + $0x40] sm:$0xff]
    %v62 = vld [vmem:[#allocation3 + $0x48] sm:$0xff]
    %v63 = vld [vmem:[#allocation3 + $0x50] sm:$0xff]
    %v64 = vld [vmem:[#allocation3 + $0x58] sm:$0xff]
    %v65 = vld [vmem:[#allocation3 + $0x60] sm:$0xff]
    %v66 = vld [vmem:[#allocation3 + $0x68] sm:$0xff]
    %v67 = vld [vmem:[#allocation3 + $0x70] sm:$0xff]
    %v68 = vld [vmem:[#allocation3 + $0x78] sm:$0xff]
    %v69 = vld [vmem:[#allocation3 + $0x80] sm:$0xff]
    %v70 = vld [vmem:[#allocation3 + $0x88] sm:$0xff]
    %v71 = vld [vmem:[#allocation3 + $0x90] sm:$0xff]
    %v72 = vld [vmem:[#allocation3 + $0x98] sm:$0xff]
    %v73 = vld [vmem:[#allocation3 + $0xa0] sm:$0xff]
    %v74 = vld [vmem:[#allocation3 + $0xa8] sm:$0xff]
    %v75 = vld [vmem:[#allocation3 + $0xb0] sm:$0xff]
    %v76 = vld [vmem:[#allocation3 + $0xb8] sm:$0xff]
    %v77 = vld [vmem:[#allocation3 + $0xc0] sm:$0xff]
    %v78 = vld [vmem:[#allocation3 + $0xc8] sm:$0xff]
    %v79 = vld [vmem:[#allocation3 + $0xd0] sm:$0xff]
    %v80 = vld [vmem:[#allocation3 + $0xd8] sm:$0xff]
    %v81 = vld [vmem:[#allocation3 + $0xe0] sm:$0xff]
    %v82 = vld [vmem:[#allocation3 + $0xe8] sm:$0xff]
    %v83 = vld [vmem:[#allocation3 + $0xf0] sm:$0xff]
    %v84 = vld [vmem:[#allocation3 + $0xf8] sm:$0xff]
    %v85 = vld [vmem:[#allocation3 + $0x100] sm:$0xff]
    %v86 = vld [vmem:[#allocation3 + $0x108] sm:$0xff]
    %v87 = vld [vmem:[#allocation3 + $0x110] sm:$0xff]
    %v88 = vld [vmem:[#allocation3 + $0x118] sm:$0xff]
    %v89 = vld [vmem:[#allocation3 + $0x120] sm:$0xff]
    %v90 = vld [vmem:[#allocation3 + $0x128] sm:$0xff]
    %v91 = vld [vmem:[#allocation3 + $0x130] sm:$0xff]
    %v92 = vld [vmem:[#allocation3 + $0x138] sm:$0xff]
    %v93 = vld [vmem:[#allocation3 + $0x140] sm:$0xff]
    %v94 = vld [vmem:[#allocation3 + $0x148] sm:$0xff]
    %v95 = vld [vmem:[#allocation3 + $0x150] sm:$0xff]
    %v96 = vld [vmem:[#allocation3 + $0x158] sm:$0xff]
    %v97 = vld [vmem:[#allocation3 + $0x160] sm:$0xff]
    %v98 = vld [vmem:[#allocation3 + $0x168] sm:$0xff]
    %v99 = vld [vmem:[#allocation3 + $0x170] sm:$0xff]
    %v100 = vld [vmem:[#allocation3 + $0x178] sm:$0xff]
    %v101 = vld [vmem:[#allocation3 + $0x180] sm:$0xff]
    %v102 = vld [vmem:[#allocation3 + $0x188] sm:$0xff]
    %v103 = vld [vmem:[#allocation3 + $0x190] sm:$0xff]
    %v104 = vld [vmem:[#allocation3 + $0x198] sm:$0xff]
    %v105 = vld [vmem:[#allocation3 + $0x1a0] sm:$0xff]
    %v106 = vld [vmem:[#allocation3 + $0x1a8] sm:$0xff]
    %v107 = vld [vmem:[#allocation3 + $0x1b0] sm:$0xff]
    %v108 = vld [vmem:[#allocation3 + $0x1b8] sm:$0xff]
    %v109 = vld [vmem:[#allocation3 + $0x1c0] sm:$0xff]
    %v110 = vld [vmem:[#allocation3 + $0x1c8] sm:$0xff]
    %v111 = vld [vmem:[#allocation3 + $0x1d0] sm:$0xff]
    %v112 = vld [vmem:[#allocation3 + $0x1d8] sm:$0xff]
    %v113 = vld [vmem:[#allocation3 + $0x1e0] sm:$0xff]
    %v114 = vld [vmem:[#allocation3 + $0x1e8] sm:$0xff]
    %v115 = vld [vmem:[#allocation3 + $0x1f0] sm:$0xff]
    %v116 = vld [vmem:[#allocation3 + $0x1f8] sm:$0xff]
    %v117 = vld [vmem:[#allocation3 + $0x200] sm:$0xff]
    %v118 = vld [vmem:[#allocation3 + $0x208] sm:$0xff]
    %v119 = vld [vmem:[#allocation3 + $0x210] sm:$0xff]
    %v120 = vld [vmem:[#allocation3 + $0x218] sm:$0xff]
    %v121 = vld [vmem:[#allocation3 + $0x220] sm:$0xff]
    %v122 = vld [vmem:[#allocation3 + $0x228] sm:$0xff]
    %v123 = vld [vmem:[#allocation3 + $0x230] sm:$0xff]
    %v124 = vld [vmem:[#allocation3 + $0x238] sm:$0xff]
    %v125 = vld [vmem:[#allocation3 + $0x240] sm:$0xff]
    %v126 = vld [vmem:[#allocation3 + $0x248] sm:$0xff]
    %v127 = vld [vmem:[#allocation3 + $0x250] sm:$0xff]
    %v128 = vld [vmem:[#allocation3 + $0x258] sm:$0xff]
    %v129 = vld [vmem:[#allocation3 + $0x260] sm:$0xff]
    %v130 = vld [vmem:[#allocation3 + $0x268] sm:$0xff]
    %v131 = vld [vmem:[#allocation3 + $0x270] sm:$0xff]
    %v132 = vld [vmem:[#allocation3 + $0x278] sm:$0xff]
    %v133 = vld [vmem:[#allocation3 + $0x280] sm:$0xff]
    %v134 = vld [vmem:[#allocation3 + $0x288] sm:$0xff]
    %v135 = vld [vmem:[#allocation3 + $0x290] sm:$0xff]
    %v136 = vld [vmem:[#allocation3 + $0x298] sm:$0xff]
    %v137 = vld [vmem:[#allocation3 + $0x2a0] sm:$0xff]
    %v138 = vld [vmem:[#allocation3 + $0x2a8] sm:$0xff]
    %v139 = vld [vmem:[#allocation3 + $0x2b0] sm:$0xff]
    %v140 = vld [vmem:[#allocation3 + $0x2b8] sm:$0xff]
    %v141 = vld [vmem:[#allocation3 + $0x2c0] sm:$0xff]
    %v142 = vld [vmem:[#allocation3 + $0x2c8] sm:$0xff]
    %v143 = vld [vmem:[#allocation3 + $0x2d0] sm:$0xff]
    %v144 = vld [vmem:[#allocation3 + $0x2d8] sm:$0xff]
    %v145 = vld [vmem:[#allocation3 + $0x2e0] sm:$0xff]
    %v146 = vld [vmem:[#allocation3 + $0x2e8] sm:$0xff]
    %v147 = vld [vmem:[#allocation3 + $0x2f0] sm:$0xff]
    %v148 = vld [vmem:[#allocation3 + $0x2f8] sm:$0xff]
    %v149 = vld [vmem:[#allocation3 + $0x300] sm:$0xff]
    %v150 = vld [vmem:[#allocation3 + $0x308] sm:$0xff]
    %v151 = vld [vmem:[#allocation3 + $0x310] sm:$0xff]
    %v152 = vld [vmem:[#allocation3 + $0x318] sm:$0xff]
    %v153 = vld [vmem:[#allocation3 + $0x320] sm:$0xff]
    %v154 = vld [vmem:[#allocation3 + $0x328] sm:$0xff]
    %v155 = vld [vmem:[#allocation3 + $0x330] sm:$0xff]
    %v156 = vld [vmem:[#allocation3 + $0x338] sm:$0xff]
    %v157 = vld [vmem:[#allocation3 + $0x340] sm:$0xff]
    %v158 = vld [vmem:[#allocation3 + $0x348] sm:$0xff]
    %v159 = vld [vmem:[#allocation3 + $0x350] sm:$0xff]
    %v160 = vld [vmem:[#allocation3 + $0x358] sm:$0xff]
    %v161 = vld [vmem:[#allocation3 + $0x360] sm:$0xff]
    %v162 = vld [vmem:[#allocation3 + $0x368] sm:$0xff]
    %v163 = vld [vmem:[#allocation3 + $0x370] sm:$0xff]
    %v164 = vld [vmem:[#allocation3 + $0x378] sm:$0xff]
    %v165 = vld [vmem:[#allocation3 + $0x380] sm:$0xff]
    %v166 = vld [vmem:[#allocation3 + $0x388] sm:$0xff]
    %v167 = vld [vmem:[#allocation3 + $0x390] sm:$0xff]
    %v168 = vld [vmem:[#allocation3 + $0x398] sm:$0xff]
    %v169 = vld [vmem:[#allocation3 + $0x3a0] sm:$0xff]
    %v170 = vld [vmem:[#allocation3 + $0x3a8] sm:$0xff]
    %v171 = vld [vmem:[#allocation3 + $0x3b0] sm:$0xff]
    %v172 = vld [vmem:[#allocation3 + $0x3b8] sm:$0xff]
    %v173 = vld [vmem:[#allocation3 + $0x3c0] sm:$0xff]
    %v174 = vld [vmem:[#allocation3 + $0x3c8] sm:$0xff]
    %v175 = vld [vmem:[#allocation3 + $0x3d0] sm:$0xff]
    %v176 = vld [vmem:[#allocation3 + $0x3d8] sm:$0xff]
    %v177 = vld [vmem:[#allocation3 + $0x3e0] sm:$0xff]
    %v178 = vld [vmem:[#allocation3 + $0x3e8] sm:$0xff]
    %v179 = vld [vmem:[#allocation3 + $0x3f0] sm:$0xff]
    %v180 = vld [vmem:[#allocation3 + $0x3f8] sm:$0xff]
    %183 = vst [vmem:[#allocation1] ss:$4 sm:$0xff] %v51
    %s184 = scalar_lea.vmem [#allocation1], 32
    %185 = vst [vmem:[%s184] ss:$4 sm:$0xff] %v52
    %v186 = vld.sshfl [vmem:[#allocation1] sm:$0xff pattern:$0x73625140]
    %v187 = vld.sshfl [vmem:[#allocation1 + $0x8] sm:$0xff pattern:$0x73625140]
    %v188 = vld.sshfl [vmem:[#allocation1 + $0x10] sm:$0xff pattern:$0x73625140]
    %v189 = vld.sshfl [vmem:[#allocation1 + $0x18] sm:$0xff pattern:$0x73625140]
    %v190 = vld.sshfl [vmem:[#allocation1 + $0x20] sm:$0xff pattern:$0x73625140]
    %v191 = vld.sshfl [vmem:[#allocation1 + $0x28] sm:$0xff pattern:$0x73625140]
    %v192 = vld.sshfl [vmem:[#allocation1 + $0x30] sm:$0xff pattern:$0x73625140]
    %v193 = vld.sshfl [vmem:[#allocation1 + $0x38] sm:$0xff pattern:$0x73625140]
    %202 = vmatpush.msra.mxu0 %v68
    %203 = vmatpush.msra.mxu0 %v67
    %204 = vmatpush.msra.mxu0 %v66
    %205 = vmatpush.msra.mxu0 %v65
    %206 = vmatpush.msra.mxu0 %v64
    %207 = vmatpush.msra.mxu0 %v63
    %208 = vmatpush.msra.mxu0 %v62
    %209 = vmatpush.msra.mxu0 %v61
    %210 = vmatpush.msra.mxu0 %v60
    %211 = vmatpush.msra.mxu0 %v59
    %212 = vmatpush.msra.mxu0 %v58
    %213 = vmatpush.msra.mxu0 %v57
    %214 = vmatpush.msra.mxu0 %v56
    %215 = vmatpush.msra.mxu0 %v55
    %216 = vmatpush.msra.mxu0 %v54
    %217 = vmatpush.msra.mxu0 %v53
    %218 = vmatmul.f32.gmra.mxu0 %v186
    %v219 = vpop.f32.mrf.mxu0
    %v220 = vadd.f32 0.0, %v219
    %221 = vdwg.mxu0
    %222 = vmatpush.msra.mxu0 %v84
    %223 = vmatpush.msra.mxu0 %v83
    %224 = vmatpush.msra.mxu0 %v82
    %225 = vmatpush.msra.mxu0 %v81
    %226 = vmatpush.msra.mxu0 %v80
    %227 = vmatpush.msra.mxu0 %v79
    %228 = vmatpush.msra.mxu0 %v78
    %229 = vmatpush.msra.mxu0 %v77
    %230 = vmatpush.msra.mxu0 %v76
    %231 = vmatpush.msra.mxu0 %v75
    %232 = vmatpush.msra.mxu0 %v74
    %233 = vmatpush.msra.mxu0 %v73
    %234 = vmatpush.msra.mxu0 %v72
    %235 = vmatpush.msra.mxu0 %v71
    %236 = vmatpush.msra.mxu0 %v70
    %237 = vmatpush.msra.mxu0 %v69
    %238 = vmatmul.f32.gmra.mxu0 %v187
    %v239 = vpop.f32.mrf.mxu0
    %v240 = vadd.f32 %v220, %v239
    %241 = vdwg.mxu0
    %242 = vmatpush.msra.mxu0 %v100
    %243 = vmatpush.msra.mxu0 %v99
    %244 = vmatpush.msra.mxu0 %v98
    %245 = vmatpush.msra.mxu0 %v97
    %246 = vmatpush.msra.mxu0 %v96
    %247 = vmatpush.msra.mxu0 %v95
    %248 = vmatpush.msra.mxu0 %v94
    %249 = vmatpush.msra.mxu0 %v93
    %250 = vmatpush.msra.mxu0 %v92
    %251 = vmatpush.msra.mxu0 %v91
    %252 = vmatpush.msra.mxu0 %v90
    %253 = vmatpush.msra.mxu0 %v89
    %254 = vmatpush.msra.mxu0 %v88
    %255 = vmatpush.msra.mxu0 %v87
    %256 = vmatpush.msra.mxu0 %v86
    %257 = vmatpush.msra.mxu0 %v85
    %258 = vmatmul.f32.gmra.mxu0 %v188
    %v259 = vpop.f32.mrf.mxu0
    %v260 = vadd.f32 %v240, %v259
    %261 = vdwg.mxu0
    %262 = vmatpush.msra.mxu0 %v116
    %263 = vmatpush.msra.mxu0 %v115
    %264 = vmatpush.msra.mxu0 %v114
    %265 = vmatpush.msra.mxu0 %v113
    %266 = vmatpush.msra.mxu0 %v112
    %267 = vmatpush.msra.mxu0 %v111
    %268 = vmatpush.msra.mxu0 %v110
    %269 = vmatpush.msra.mxu0 %v109
    %270 = vmatpush.msra.mxu0 %v108
    %271 = vmatpush.msra.mxu0 %v107
    %272 = vmatpush.msra.mxu0 %v106
    %273 = vmatpush.msra.mxu0 %v105
    %274 = vmatpush.msra.mxu0 %v104
    %275 = vmatpush.msra.mxu0 %v103
    %276 = vmatpush.msra.mxu0 %v102
    %277 = vmatpush.msra.mxu0 %v101
    %278 = vmatmul.f32.gmra.mxu0 %v189
    %v279 = vpop.f32.mrf.mxu0
    %v280 = vadd.f32 %v260, %v279
    %281 = vdwg.mxu0
    %282 = vmatpush.msra.mxu0 %v132
    %283 = vmatpush.msra.mxu0 %v131
    %284 = vmatpush.msra.mxu0 %v130
    %285 = vmatpush.msra.mxu0 %v129
    %286 = vmatpush.msra.mxu0 %v128
    %287 = vmatpush.msra.mxu0 %v127
    %288 = vmatpush.msra.mxu0 %v126
    %289 = vmatpush.msra.mxu0 %v125
    %290 = vmatpush.msra.mxu0 %v124
    %291 = vmatpush.msra.mxu0 %v123
    %292 = vmatpush.msra.mxu0 %v122
    %293 = vmatpush.msra.mxu0 %v121
    %294 = vmatpush.msra.mxu0 %v120
    %295 = vmatpush.msra.mxu0 %v119
    %296 = vmatpush.msra.mxu0 %v118
    %297 = vmatpush.msra.mxu0 %v117
    %298 = vmatmul.f32.gmra.mxu0 %v190
    %v299 = vpop.f32.mrf.mxu0
    %v300 = vadd.f32 %v280, %v299
    %301 = vdwg.mxu0
    %302 = vmatpush.msra.mxu0 %v148
    %303 = vmatpush.msra.mxu0 %v147
    %304 = vmatpush.msra.mxu0 %v146
    %305 = vmatpush.msra.mxu0 %v145
    %306 = vmatpush.msra.mxu0 %v144
    %307 = vmatpush.msra.mxu0 %v143
    %308 = vmatpush.msra.mxu0 %v142
    %309 = vmatpush.msra.mxu0 %v141
    %310 = vmatpush.msra.mxu0 %v140
    %311 = vmatpush.msra.mxu0 %v139
    %312 = vmatpush.msra.mxu0 %v138
    %313 = vmatpush.msra.mxu0 %v137
    %314 = vmatpush.msra.mxu0 %v136
    %315 = vmatpush.msra.mxu0 %v135
    %316 = vmatpush.msra.mxu0 %v134
    %317 = vmatpush.msra.mxu0 %v133
    %318 = vmatmul.f32.gmra.mxu0 %v191
    %v319 = vpop.f32.mrf.mxu0
    %v320 = vadd.f32 %v300, %v319
    %321 = vdwg.mxu0
    %322 = vmatpush.msra.mxu0 %v164
    %323 = vmatpush.msra.mxu0 %v163
    %324 = vmatpush.msra.mxu0 %v162
    %325 = vmatpush.msra.mxu0 %v161
    %326 = vmatpush.msra.mxu0 %v160
    %327 = vmatpush.msra.mxu0 %v159
    %328 = vmatpush.msra.mxu0 %v158
    %329 = vmatpush.msra.mxu0 %v157
    %330 = vmatpush.msra.mxu0 %v156
    %331 = vmatpush.msra.mxu0 %v155
    %332 = vmatpush.msra.mxu0 %v154
    %333 = vmatpush.msra.mxu0 %v153
    %334 = vmatpush.msra.mxu0 %v152
    %335 = vmatpush.msra.mxu0 %v151
    %336 = vmatpush.msra.mxu0 %v150
    %337 = vmatpush.msra.mxu0 %v149
    %338 = vmatmul.f32.gmra.mxu0 %v192
    %v339 = vpop.f32.mrf.mxu0
    %v340 = vadd.f32 %v320, %v339
    %341 = vdwg.mxu0
    %342 = vmatpush.msra.mxu0 %v180
    %343 = vmatpush.msra.mxu0 %v179
    %344 = vmatpush.msra.mxu0 %v178
    %345 = vmatpush.msra.mxu0 %v177
    %346 = vmatpush.msra.mxu0 %v176
    %347 = vmatpush.msra.mxu0 %v175
    %348 = vmatpush.msra.mxu0 %v174
    %349 = vmatpush.msra.mxu0 %v173
    %350 = vmatpush.msra.mxu0 %v172
    %351 = vmatpush.msra.mxu0 %v171
    %352 = vmatpush.msra.mxu0 %v170
    %353 = vmatpush.msra.mxu0 %v169
    %354 = vmatpush.msra.mxu0 %v168
    %355 = vmatpush.msra.mxu0 %v167
    %356 = vmatpush.msra.mxu0 %v166
    %357 = vmatpush.msra.mxu0 %v165
    %358 = vmatmul.f32.gmra.mxu0 %v193
    %v359 = vpop.f32.mrf.mxu0
    %v360 = vadd.f32 %v340, %v359
    %361 = vdwg.mxu0
    %v362 = vadd.f32 %v50, %v360
    %363 = vst [vmem:[#allocation2] sm:$0x3] %v362
    // Predicated region
    $region26: #{net1_forward.5} parent=1 // pred_check
      %p364 = pneg %p45
    $region27: #{net1_forward.5} parent=1 // pred_check_branch
      %366 = sbr.rel (%p364) target = $region29
    $region28: #{net1_forward.5} parent=1 // pred_region
      %v367 = vld [vmem:[#allocation2] sm:$0x3]
      %v368 = vld [vmem:[#allocation6] sm:$0x1]
      %v370 = vperm.slane %v368, 0
      %v372 = vadd.f32 %v367, %v370
      %373 = vst [vmem:[#allocation8] sm:$0x3] %v372
    $region29: #{net1_forward.5} parent=1 // pred_fallthru
      _
    // Predicated region
    $region30: #{net1_forward.5} parent=1 // pred_check
      _
    $region31: #{net1_forward.5} parent=1 // pred_check_branch
      %375 = sbr.rel (0) target = $region33
    $region32: #{net1_forward.5} parent=1 // pred_region
      %377 = vsyncadd [#allocation5], 0
      %s379 = sshll.u32 [#allocation8], 4
      %s380 = int_to_ptr.vmem [resolvable:$true] %s379
      %s381 = sshll.u32 %s3, 4
      %s382 = int_to_ptr.hbm [resolvable:$true] %s381
      %384 = dma.vmem_to_hbm [thread:$0]  %s380, 32, %s382, [#allocation5]
    $region33: #{net1_forward.5} parent=1 // pred_fallthru
      _
    // Predicated region
    $region34: #{net1_forward.5} parent=1 // pred_check
      _
    $region35: #{net1_forward.5} parent=1 // pred_check_branch
      %386 = sbr.rel (0) target = $region37
    $region36: #{net1_forward.5} parent=1 // pred_region
      %388 = dma.done [#allocation5], 32
    $region37: #{net1_forward.5} parent=1 // pred_fallthru
      _
    %389 = vsyncpa [#allocation4], 1
    %390 = vsyncpa [#allocation7], 1
    %391 = vsyncpa [#allocation5], 1

// kernel: net1_forward.3
$region0: #{net1_forward.3}
  #allocation0 [shape = 'u32[]', space=smem, size = 0x4, offset = 0x4, fixed_abs, tag = 'smem constant byte address 0x4 - core index']
  #allocation1 [shape = 'u32[72,128]{1,0:T(1,128)}', space=vmem, size = 0x9000, scoped, tag = 'internal scratch']
  %s0 = inlined_call_operand.vmem [shape: bf16[2,961,32], index: 0, kind: input, shape index: {}]
  %s1 = inlined_call_operand.vmem [shape: bf16[2,961,32], index: 1, kind: input, shape index: {}]
  %s2 = inlined_call_operand.vmem [shape: bf16[2,961,32], index: 2, kind: input, shape index: {}]
  %s3 = inlined_call_operand.vmem [shape: bf16[2,961,32], index: 3, kind: input, shape index: {}]
  %s4 = inlined_call_operand.hbm [shape: bf16[32,128], index: 4, kind: input, shape index: {}]
  %s5 = inlined_call_operand.hbm [shape: f32[1,128], index: 5, kind: input, shape index: {}]
  %s6 = inlined_call_operand.vmem [shape: bf16[2,961,128], index: 6, kind: output, shape index: {}]
  %s7 = sld [smem:[#allocation0]]
  $region65: #{net1_forward.3} parent=0
    _
  %s9 = ssub.s32 1, %s7
  %s10 = scalar_select 0, %s9, %s7
  $region1: #{net1_forward.3} parent=0
    #allocation2 [shape = 'u8[8192]{0}', space=vmem, size = 0x2000, scoped, tag = 'input window, operand 4, single buffered']
    #allocation3 [shape = 's32[2]{0}', space=sflag, size = 0x8, scoped, tag = 'scoped memory for net1_forward.3']
    #allocation4 [shape = 'u8[512]{0}', space=vmem, size = 0x400, scoped, tag = 'input window, operand 5, single buffered']
    #allocation5 [shape = 's32[1]{0}', space=sflag, size = 0x4, scoped, tag = 'scoped memory for net1_forward.3']
    %11 = vsyncpa [#allocation3], 0
    %12 = vsyncpa [#allocation5], 0
    loop: start=0, step=1, limit=4
    $region2: #{net1_forward.3} parent=1 // loop_pre_header
      _
    $region3: #{net1_forward.3} parent=1 // loop_header
      %s14 = sphi 0, %s18
      %p15 = scmp.ge.s32.totalorder %s14, 4
      %s24 = sphi 0, %s26
      %s27 = sphi 0, %s24
      %s28 = sphi 0, %s27
      %s44 = sphi 0, %s28
      %s50 = sphi 0, %s52
      %s53 = sphi 0, %s50
      %s54 = sphi 0, %s53
      %s70 = sphi 0, %s54
      %s76 = sphi 0, %s78
      %s79 = sphi 0, %s76
      %s80 = sphi 0, %s79
      %s96 = sphi 0, %s80
      %s102 = sphi 0, %s104
      %s105 = sphi 0, %s102
      %s106 = sphi 0, %s105
      %s122 = sphi 0, %s106
      %s126 = sphi 0, %s126
      %s128 = sphi 0, %s126
      %s129 = sphi 0, %s128
      %s143 = sphi 0, %s129
      %s147 = sphi 0, %s147
      %s149 = sphi 0, %s147
      %s150 = sphi 0, %s149
      %s164 = sphi 0, %s150
      %s170 = sphi 0, %s172
      %s173 = sphi 0, %s170
      %s174 = sphi 0, %s173
      %s190 = sphi 0, %s174
    $region4: #{net1_forward.3} parent=1 // loop_header_branch
      %17 = sbr.rel (%p15) target = $region8
    $region5: #{net1_forward.3} parent=1 // loop_body
      %s19 = ssub.s32 %s14, 1
      %s20 = ssub.s32 %s14, 2
      %s21 = sadd.s32 %s14, 1
      %s22 = ssub.s32 %s14, %s21
      %p23 = scmp.eq.s32.totalorder %s22, 0
      %s25 = sadd.s32 %s24, 1
      %s26 = scalar_select %p23, %s24, %s25
      %p29 = pneg %p23
      %p30 = scmp.eq.s32.totalorder %s14, 1
      %p31 = por %p29, %p30
      %p32 = scmp.ne.s32.totalorder %s24, %s27
      %p33 = scmp.eq.s32.totalorder %s14, 0
      %p34 = por %p32, %p33
      %p35 = scmp.ne.s32.totalorder %s24, %s27
      %p36 = scmp.eq.s32.totalorder %s19, 1
      %p37 = por %p35, %p36
      %p38 = scmp.ne.s32.totalorder %s27, %s28
      %p39 = scmp.eq.s32.totalorder %s19, 0
      %p40 = por %p38, %p39
      %p41 = scmp.ne.s32.totalorder %s27, %s28
      %p42 = scmp.eq.s32.totalorder %s20, 1
      %p43 = por %p41, %p42
      %p45 = scmp.ne.s32.totalorder %s28, %s44
      %p46 = scmp.eq.s32.totalorder %s20, 0
      %p47 = por %p45, %p46
      %s48 = ssub.s32 %s14, %s21
      %p49 = scmp.eq.s32.totalorder %s48, 0
      %s51 = sadd.s32 %s50, 1
      %s52 = scalar_select %p49, %s50, %s51
      %p55 = pneg %p49
      %p56 = scmp.eq.s32.totalorder %s14, 1
      %p57 = por %p55, %p56
      %p58 = scmp.ne.s32.totalorder %s50, %s53
      %p59 = scmp.eq.s32.totalorder %s14, 0
      %p60 = por %p58, %p59
      %p61 = scmp.ne.s32.totalorder %s50, %s53
      %p62 = scmp.eq.s32.totalorder %s19, 1
      %p63 = por %p61, %p62
      %p64 = scmp.ne.s32.totalorder %s53, %s54
      %p65 = scmp.eq.s32.totalorder %s19, 0
      %p66 = por %p64, %p65
      %p67 = scmp.ne.s32.totalorder %s53, %s54
      %p68 = scmp.eq.s32.totalorder %s20, 1
      %p69 = por %p67, %p68
      %p71 = scmp.ne.s32.totalorder %s54, %s70
      %p72 = scmp.eq.s32.totalorder %s20, 0
      %p73 = por %p71, %p72
      %s74 = ssub.s32 %s14, %s21
      %p75 = scmp.eq.s32.totalorder %s74, 0
      %s77 = sadd.s32 %s76, 1
      %s78 = scalar_select %p75, %s76, %s77
      %p81 = pneg %p75
      %p82 = scmp.eq.s32.totalorder %s14, 1
      %p83 = por %p81, %p82
      %p84 = scmp.ne.s32.totalorder %s76, %s79
      %p85 = scmp.eq.s32.totalorder %s14, 0
      %p86 = por %p84, %p85
      %p87 = scmp.ne.s32.totalorder %s76, %s79
      %p88 = scmp.eq.s32.totalorder %s19, 1
      %p89 = por %p87, %p88
      %p90 = scmp.ne.s32.totalorder %s79, %s80
      %p91 = scmp.eq.s32.totalorder %s19, 0
      %p92 = por %p90, %p91
      %p93 = scmp.ne.s32.totalorder %s79, %s80
      %p94 = scmp.eq.s32.totalorder %s20, 1
      %p95 = por %p93, %p94
      %p97 = scmp.ne.s32.totalorder %s80, %s96
      %p98 = scmp.eq.s32.totalorder %s20, 0
      %p99 = por %p97, %p98
      %s100 = ssub.s32 %s14, %s21
      %p101 = scmp.eq.s32.totalorder %s100, 0
      %s103 = sadd.s32 %s102, 1
      %s104 = scalar_select %p101, %s102, %s103
      %p107 = pneg %p101
      %p108 = scmp.eq.s32.totalorder %s14, 1
      %p109 = por %p107, %p108
      %p110 = scmp.ne.s32.totalorder %s102, %s105
      %p111 = scmp.eq.s32.totalorder %s14, 0
      %p112 = por %p110, %p111
      %p113 = scmp.ne.s32.totalorder %s102, %s105
      %p114 = scmp.eq.s32.totalorder %s19, 1
      %p115 = por %p113, %p114
      %p116 = scmp.ne.s32.totalorder %s105, %s106
      %p117 = scmp.eq.s32.totalorder %s19, 0
      %p118 = por %p116, %p117
      %p119 = scmp.ne.s32.totalorder %s105, %s106
      %p120 = scmp.eq.s32.totalorder %s20, 1
      %p121 = por %p119, %p120
      %p123 = scmp.ne.s32.totalorder %s106, %s122
      %p124 = scmp.eq.s32.totalorder %s20, 0
      %p125 = por %p123, %p124
      %s127 = sadd.s32 %s126, 1
      %p130 = scmp.eq.s32.totalorder %s14, 1
      %p131 = scmp.ne.s32.totalorder %s126, %s128
      %p132 = scmp.eq.s32.totalorder %s14, 0
      %p133 = por %p131, %p132
      %p134 = scmp.ne.s32.totalorder %s126, %s128
      %p135 = scmp.eq.s32.totalorder %s19, 1
      %p136 = por %p134, %p135
      %p137 = scmp.ne.s32.totalorder %s128, %s129
      %p138 = scmp.eq.s32.totalorder %s19, 0
      %p139 = por %p137, %p138
      %p140 = scmp.ne.s32.totalorder %s128, %s129
      %p141 = scmp.eq.s32.totalorder %s20, 1
      %p142 = por %p140, %p141
      %p144 = scmp.ne.s32.totalorder %s129, %s143
      %p145 = scmp.eq.s32.totalorder %s20, 0
      %p146 = por %p144, %p145
      %s148 = sadd.s32 %s147, 1
      %p151 = scmp.eq.s32.totalorder %s14, 1
      %p152 = scmp.ne.s32.totalorder %s147, %s149
      %p153 = scmp.eq.s32.totalorder %s14, 0
      %p154 = por %p152, %p153
      %p155 = scmp.ne.s32.totalorder %s147, %s149
      %p156 = scmp.eq.s32.totalorder %s19, 1
      %p157 = por %p155, %p156
      %p158 = scmp.ne.s32.totalorder %s149, %s150
      %p159 = scmp.eq.s32.totalorder %s19, 0
      %p160 = por %p158, %p159
      %p161 = scmp.ne.s32.totalorder %s149, %s150
      %p162 = scmp.eq.s32.totalorder %s20, 1
      %p163 = por %p161, %p162
      %p165 = scmp.ne.s32.totalorder %s150, %s164
      %p166 = scmp.eq.s32.totalorder %s20, 0
      %p167 = por %p165, %p166
      %s168 = ssub.s32 %s14, %s21
      %p169 = scmp.eq.s32.totalorder %s168, 0
      %s171 = sadd.s32 %s170, 1
      %s172 = scalar_select %p169, %s170, %s171
      %p175 = pneg %p169
      %p176 = scmp.eq.s32.totalorder %s14, 1
      %p177 = por %p175, %p176
      %p178 = scmp.ne.s32.totalorder %s170, %s173
      %p179 = scmp.eq.s32.totalorder %s14, 0
      %p180 = por %p178, %p179
      %p181 = scmp.ne.s32.totalorder %s170, %s173
      %p182 = scmp.eq.s32.totalorder %s19, 1
      %p183 = por %p181, %p182
      %p184 = scmp.ne.s32.totalorder %s173, %s174
      %p185 = scmp.eq.s32.totalorder %s19, 0
      %p186 = por %p184, %p185
      %p187 = scmp.ne.s32.totalorder %s173, %s174
      %p188 = scmp.eq.s32.totalorder %s20, 1
      %p189 = por %p187, %p188
      %p191 = scmp.ne.s32.totalorder %s174, %s190
      %p192 = scmp.eq.s32.totalorder %s20, 0
      %p193 = por %p191, %p192
      %p194 = scmp.le.s32.totalorder 1, %s14
      %p195 = scmp.lt.s32.totalorder %s14, 3
      %p196 = pnand %p194, %p195
      %p197 = pneg %p196
      // Predicated region
      $region9: #{net1_forward.3} parent=5 // pred_check
        _
      $region10: #{net1_forward.3} parent=5 // pred_check_branch
        %199 = sbr.rel (%p196) target = $region12
      $region11: #{net1_forward.3} parent=5 // pred_region
        %s200 = ssub.s32 %s14, 1
        // Predicated region
        $region13: #{net1_forward.3} parent=11 // pred_check
          %p201 = pneg %p139
        $region14: #{net1_forward.3} parent=11 // pred_check_branch
          %203 = sbr.rel (%p201) target = $region16
        $region15: #{net1_forward.3} parent=11 // pred_region
          %205 = vsyncadd [#allocation3], 0
          %s206 = sshll.u32 %s4, 4
          %s207 = int_to_ptr.hbm [resolvable:$true] %s206
          %s208 = sshll.u32 [#allocation2], 4
          %s209 = int_to_ptr.vmem [resolvable:$true] %s208
          %214 = dma.hbm_to_vmem [thread:$0]  %s207, 256, %s209, [#allocation3], 64, 64, 4
        $region16: #{net1_forward.3} parent=11 // pred_fallthru
          _
        // Predicated region
        $region17: #{net1_forward.3} parent=11 // pred_check
          %p215 = pneg %p160
        $region18: #{net1_forward.3} parent=11 // pred_check_branch
          %217 = sbr.rel (%p215) target = $region20
        $region19: #{net1_forward.3} parent=11 // pred_region
          %219 = vsyncadd [#allocation5], 0
          %s221 = sshll.u32 %s5, 4
          %s222 = int_to_ptr.hbm [resolvable:$true] %s221
          %s223 = sshll.u32 [#allocation4], 4
          %s224 = int_to_ptr.vmem [resolvable:$true] %s223
          %226 = dma.hbm_to_vmem [thread:$0]  %s222, 16, %s224, [#allocation5]
        $region20: #{net1_forward.3} parent=11 // pred_fallthru
          _
      $region12: #{net1_forward.3} parent=5 // pred_fallthru
        _
      %p227 = scmp.lt.s32.totalorder %s14, 2
      // Predicated region
      $region21: #{net1_forward.3} parent=5 // pred_check
        %p228 = pneg %p227
      $region22: #{net1_forward.3} parent=5 // pred_check_branch
        %230 = sbr.rel (%p228) target = $region24
      $region23: #{net1_forward.3} parent=5 // pred_region
        // Predicated region
        $region25: #{net1_forward.3} parent=23 // pred_check
          %p231 = pneg %p34
        $region26: #{net1_forward.3} parent=23 // pred_check_branch
          %233 = sbr.rel (%p231) target = $region28
        $region27: #{net1_forward.3} parent=23 // pred_region
          %p234 = scmp.lt.s32.totalorder %s14, 1
          %s235 = scalar_select %p234, %s14, 1
          %s236 = smul.addr %s235, 121
          %s237 = smul.addr %s236, 4
          %s238 = scalar_lea.vmem %s0, %s237
        $region28: #{net1_forward.3} parent=23 // pred_fallthru
          _
        // Predicated region
        $region29: #{net1_forward.3} parent=23 // pred_check
          %p239 = pneg %p60
        $region30: #{net1_forward.3} parent=23 // pred_check_branch
          %241 = sbr.rel (%p239) target = $region32
        $region31: #{net1_forward.3} parent=23 // pred_region
          %p242 = scmp.lt.s32.totalorder %s14, 1
          %s243 = scalar_select %p242, %s14, 1
          %s244 = smul.addr %s243, 121
          %s245 = smul.addr %s244, 4
          %s246 = scalar_lea.vmem %s1, %s245
        $region32: #{net1_forward.3} parent=23 // pred_fallthru
          _
        // Predicated region
        $region33: #{net1_forward.3} parent=23 // pred_check
          %p247 = pneg %p86
        $region34: #{net1_forward.3} parent=23 // pred_check_branch
          %249 = sbr.rel (%p247) target = $region36
        $region35: #{net1_forward.3} parent=23 // pred_region
          %p250 = scmp.lt.s32.totalorder %s14, 1
          %s251 = scalar_select %p250, %s14, 1
          %s252 = smul.addr %s251, 121
          %s253 = smul.addr %s252, 4
          %s254 = scalar_lea.vmem %s2, %s253
        $region36: #{net1_forward.3} parent=23 // pred_fallthru
          _
        // Predicated region
        $region37: #{net1_forward.3} parent=23 // pred_check
          %p255 = pneg %p112
        $region38: #{net1_forward.3} parent=23 // pred_check_branch
          %257 = sbr.rel (%p255) target = $region40
        $region39: #{net1_forward.3} parent=23 // pred_region
          %p258 = scmp.lt.s32.totalorder %s14, 1
          %s259 = scalar_select %p258, %s14, 1
          %s260 = smul.addr %s259, 121
          %s261 = smul.addr %s260, 4
          %s262 = scalar_lea.vmem %s3, %s261
        $region40: #{net1_forward.3} parent=23 // pred_fallthru
          _
      $region24: #{net1_forward.3} parent=5 // pred_fallthru
        _
      %p263 = scmp.le.s32.totalorder 1, %s14
      %p264 = scmp.lt.s32.totalorder %s14, 3
      %p265 = pnand %p263, %p264
      %p266 = pneg %p265
      // Predicated region
      $region41: #{net1_forward.3} parent=5 // pred_check
        _
      $region42: #{net1_forward.3} parent=5 // pred_check_branch
        %268 = sbr.rel (%p265) target = $region44
      $region43: #{net1_forward.3} parent=5 // pred_region
        %s269 = ssub.s32 %s14, 1
        // Predicated region
        $region45: #{net1_forward.3} parent=43 // pred_check
          %p270 = pneg %p139
        $region46: #{net1_forward.3} parent=43 // pred_check_branch
          %272 = sbr.rel (%p270) target = $region48
        $region47: #{net1_forward.3} parent=43 // pred_region
          %274 = dma.done [#allocation3], 256
        $region48: #{net1_forward.3} parent=43 // pred_fallthru
          _
        // Predicated region
        $region49: #{net1_forward.3} parent=43 // pred_check
          %p275 = pneg %p160
        $region50: #{net1_forward.3} parent=43 // pred_check_branch
          %277 = sbr.rel (%p275) target = $region52
        $region51: #{net1_forward.3} parent=43 // pred_region
          %279 = dma.done [#allocation5], 16
        $region52: #{net1_forward.3} parent=43 // pred_fallthru
          _
        %p280 = scmp.lt.s32.totalorder %s19, 1
        %s281 = scalar_select %p280, %s19, 1
        %s282 = smul.addr %s281, 121
        %s283 = smul.addr %s282, 4
        %s284 = scalar_lea.vmem %s0, %s283
        %p285 = pneg %p40
        %p286 = pneg %p37
        %p287 = scmp.lt.s32.totalorder %s19, 1
        %s288 = scalar_select %p287, %s19, 1
        %s289 = smul.addr %s288, 121
        %s290 = smul.addr %s289, 4
        %s291 = scalar_lea.vmem %s1, %s290
        %p292 = pneg %p66
        %p293 = pneg %p63
        %p294 = scmp.lt.s32.totalorder %s19, 1
        %s295 = scalar_select %p294, %s19, 1
        %s296 = smul.addr %s295, 121
        %s297 = smul.addr %s296, 4
        %s298 = scalar_lea.vmem %s2, %s297
        %p299 = pneg %p92
        %p300 = pneg %p89
        %p301 = scmp.lt.s32.totalorder %s19, 1
        %s302 = scalar_select %p301, %s19, 1
        %s303 = smul.addr %s302, 121
        %s304 = smul.addr %s303, 4
        %s305 = scalar_lea.vmem %s3, %s304
        %p306 = pneg %p118
        %p307 = pneg %p115
        %p308 = pneg %p139
        %p309 = pneg %p136
        %p310 = pneg %p160
        %p311 = pneg %p157
        %p312 = pneg %p186
        %p313 = pneg %p183
        %p314 = scmp.lt.s32.totalorder %s19, 1
        %s315 = scalar_select %p314, %s19, 1
        %s316 = smul.addr %s315, 121
        %s317 = smul.addr %s316, 4
        %s318 = scalar_lea.vmem %s6, %s317
        %p319 = scmp.lt.s32.totalorder %s19, 1
        %s320 = scalar_select %p319, %s19, 1
        %s321 = smul.addr %s320, 121
        %s322 = smul.addr %s321, 4
        %s323 = scalar_lea.vmem %s0, %s322
        %p324 = scmp.lt.s32.totalorder %s19, 1
        %s325 = scalar_select %p324, %s19, 1
        %s326 = smul.addr %s325, 121
        %s327 = smul.addr %s326, 4
        %s328 = scalar_lea.vmem %s1, %s327
        %p329 = scmp.lt.s32.totalorder %s19, 1
        %s330 = scalar_select %p329, %s19, 1
        %s331 = smul.addr %s330, 121
        %s332 = smul.addr %s331, 4
        %s333 = scalar_lea.vmem %s2, %s332
        %p334 = scmp.lt.s32.totalorder %s19, 1
        %s335 = scalar_select %p334, %s19, 1
        %s336 = smul.addr %s335, 121
        %s337 = smul.addr %s336, 4
        %s338 = scalar_lea.vmem %s3, %s337
        %p339 = scmp.lt.s32.totalorder %s19, 1
        %s340 = scalar_select %p339, %s19, 1
        %s341 = smul.addr %s340, 121
        %s342 = smul.addr %s341, 4
        %s343 = scalar_lea.vmem %s6, %s342
        %v345 = vld [vmem:[#allocation2] sm:$0xf]
        %v346 = vld [vmem:[#allocation2 + $0x4] sm:$0xf]
        %v347 = vld [vmem:[#allocation2 + $0x8] sm:$0xf]
        %v348 = vld [vmem:[#allocation2 + $0xc] sm:$0xf]
        %v349 = vld [vmem:[%s323] sm:$0xf]
        %v350 = vld [vmem:[%s323 + $0x4] sm:$0xf]
        %v351 = vld [vmem:[%s323 + $0x8] sm:$0xf]
        %v352 = vld [vmem:[%s323 + $0xc] sm:$0xf]
        %v353 = vld [vmem:[%s323 + $0x10] sm:$0xf]
        %v354 = vld [vmem:[%s323 + $0x14] sm:$0xf]
        %v355 = vld [vmem:[%s323 + $0x18] sm:$0xf]
        %v356 = vld [vmem:[%s323 + $0x1c] sm:$0xf]
        %v357 = vld [vmem:[%s323 + $0x20] sm:$0xf]
        %v358 = vld [vmem:[%s323 + $0x24] sm:$0xf]
        %v359 = vld [vmem:[%s323 + $0x28] sm:$0xf]
        %v360 = vld [vmem:[%s323 + $0x2c] sm:$0xf]
        %v361 = vld [vmem:[%s323 + $0x30] sm:$0xf]
        %v362 = vld [vmem:[%s323 + $0x34] sm:$0xf]
        %v363 = vld [vmem:[%s323 + $0x38] sm:$0xf]
        %v364 = vld [vmem:[%s323 + $0x3c] sm:$0xf]
        %v365 = vld [vmem:[%s323 + $0x40] sm:$0xf]
        %v366 = vld [vmem:[%s323 + $0x44] sm:$0xf]
        %v367 = vld [vmem:[%s323 + $0x48] sm:$0xf]
        %v368 = vld [vmem:[%s323 + $0x4c] sm:$0xf]
        %v369 = vld [vmem:[%s323 + $0x50] sm:$0xf]
        %v370 = vld [vmem:[%s323 + $0x54] sm:$0xf]
        %v371 = vld [vmem:[%s323 + $0x58] sm:$0xf]
        %v372 = vld [vmem:[%s323 + $0x5c] sm:$0xf]
        %v373 = vld [vmem:[%s323 + $0x60] sm:$0xf]
        %v374 = vld [vmem:[%s323 + $0x64] sm:$0xf]
        %v375 = vld [vmem:[%s323 + $0x68] sm:$0xf]
        %v376 = vld [vmem:[%s323 + $0x6c] sm:$0xf]
        %v377 = vld [vmem:[%s323 + $0x70] sm:$0xf]
        %v378 = vld [vmem:[%s323 + $0x74] sm:$0xf]
        %v379 = vld [vmem:[%s323 + $0x78] sm:$0xf]
        %v380 = vld [vmem:[%s323 + $0x7c] sm:$0xf]
        %v381 = vld [vmem:[%s323 + $0x80] sm:$0xf]
        %v382 = vld [vmem:[%s323 + $0x84] sm:$0xf]
        %v383 = vld [vmem:[%s323 + $0x88] sm:$0xf]
        %v384 = vld [vmem:[%s323 + $0x8c] sm:$0xf]
        %v385 = vld [vmem:[%s323 + $0x90] sm:$0xf]
        %v386 = vld [vmem:[%s323 + $0x94] sm:$0xf]
        %v387 = vld [vmem:[%s323 + $0x98] sm:$0xf]
        %v388 = vld [vmem:[%s323 + $0x9c] sm:$0xf]
        %v389 = vld [vmem:[%s323 + $0xa0] sm:$0xf]
        %v390 = vld [vmem:[%s323 + $0xa4] sm:$0xf]
        %v391 = vld [vmem:[%s323 + $0xa8] sm:$0xf]
        %v392 = vld [vmem:[%s323 + $0xac] sm:$0xf]
        %v393 = vld [vmem:[%s323 + $0xb0] sm:$0xf]
        %v394 = vld [vmem:[%s323 + $0xb4] sm:$0xf]
        %v395 = vld [vmem:[%s323 + $0xb8] sm:$0xf]
        %v396 = vld [vmem:[%s323 + $0xbc] sm:$0xf]
        %v397 = vld [vmem:[%s323 + $0xc0] sm:$0xf]
        %v398 = vld [vmem:[%s323 + $0xc4] sm:$0xf]
        %v399 = vld [vmem:[%s323 + $0xc8] sm:$0xf]
        %v400 = vld [vmem:[%s323 + $0xcc] sm:$0xf]
        %v401 = vld [vmem:[%s323 + $0xd0] sm:$0xf]
        %v402 = vld [vmem:[%s323 + $0xd4] sm:$0xf]
        %v403 = vld [vmem:[%s323 + $0xd8] sm:$0xf]
        %v404 = vld [vmem:[%s323 + $0xdc] sm:$0xf]
        %v405 = vld [vmem:[%s323 + $0xe0] sm:$0xf]
        %v406 = vld [vmem:[%s323 + $0xe4] sm:$0xf]
        %v407 = vld [vmem:[%s323 + $0xe8] sm:$0xf]
        %v408 = vld [vmem:[%s323 + $0xec] sm:$0xf]
        %v409 = vld [vmem:[%s323 + $0xf0] sm:$0xf]
        %v410 = vld [vmem:[%s323 + $0xf4] sm:$0xf]
        %v411 = vld [vmem:[%s323 + $0xf8] sm:$0xf]
        %v412 = vld [vmem:[%s323 + $0xfc] sm:$0xf]
        %v413 = vld [vmem:[%s323 + $0x100] sm:$0xf]
        %v414 = vld [vmem:[%s323 + $0x104] sm:$0xf]
        %v415 = vld [vmem:[%s323 + $0x108] sm:$0xf]
        %v416 = vld [vmem:[%s323 + $0x10c] sm:$0xf]
        %v417 = vld [vmem:[%s323 + $0x110] sm:$0xf]
        %v418 = vld [vmem:[%s323 + $0x114] sm:$0xf]
        %v419 = vld [vmem:[%s323 + $0x118] sm:$0xf]
        %v420 = vld [vmem:[%s323 + $0x11c] sm:$0xf]
        %v421 = vld [vmem:[%s323 + $0x120] sm:$0xf]
        %v422 = vld [vmem:[%s323 + $0x124] sm:$0xf]
        %v423 = vld [vmem:[%s323 + $0x128] sm:$0xf]
        %v424 = vld [vmem:[%s323 + $0x12c] sm:$0xf]
        %v425 = vld [vmem:[%s323 + $0x130] sm:$0xf]
        %v426 = vld [vmem:[%s323 + $0x134] sm:$0xf]
        %v427 = vld [vmem:[%s323 + $0x138] sm:$0xf]
        %v428 = vld [vmem:[%s323 + $0x13c] sm:$0xf]
        %v429 = vld [vmem:[%s323 + $0x140] sm:$0xf]
        %v430 = vld [vmem:[%s323 + $0x144] sm:$0xf]
        %v431 = vld [vmem:[%s323 + $0x148] sm:$0xf]
        %v432 = vld [vmem:[%s323 + $0x14c] sm:$0xf]
        %v433 = vld [vmem:[%s323 + $0x150] sm:$0xf]
        %v434 = vld [vmem:[%s323 + $0x154] sm:$0xf]
        %v435 = vld [vmem:[%s323 + $0x158] sm:$0xf]
        %v436 = vld [vmem:[%s323 + $0x15c] sm:$0xf]
        %v437 = vld [vmem:[%s323 + $0x160] sm:$0xf]
        %v438 = vld [vmem:[%s323 + $0x164] sm:$0xf]
        %v439 = vld [vmem:[%s323 + $0x168] sm:$0xf]
        %v440 = vld [vmem:[%s323 + $0x16c] sm:$0xf]
        %v441 = vld [vmem:[%s323 + $0x170] sm:$0xf]
        %v442 = vld [vmem:[%s323 + $0x174] sm:$0xf]
        %v443 = vld [vmem:[%s323 + $0x178] sm:$0xf]
        %v444 = vld [vmem:[%s323 + $0x17c] sm:$0xf]
        %v445 = vld [vmem:[%s323 + $0x180] sm:$0xf]
        %v446 = vld [vmem:[%s323 + $0x184] sm:$0xf]
        %v447 = vld [vmem:[%s323 + $0x188] sm:$0xf]
        %v448 = vld [vmem:[%s323 + $0x18c] sm:$0xf]
        %v449 = vld [vmem:[%s323 + $0x190] sm:$0xf]
        %v450 = vld [vmem:[%s323 + $0x194] sm:$0xf]
        %v451 = vld [vmem:[%s323 + $0x198] sm:$0xf]
        %v452 = vld [vmem:[%s323 + $0x19c] sm:$0xf]
        %v453 = vld [vmem:[%s323 + $0x1a0] sm:$0xf]
        %v454 = vld [vmem:[%s323 + $0x1a4] sm:$0xf]
        %v455 = vld [vmem:[%s323 + $0x1a8] sm:$0xf]
        %v456 = vld [vmem:[%s323 + $0x1ac] sm:$0xf]
        %v457 = vld [vmem:[%s323 + $0x1b0] sm:$0xf]
        %v458 = vld [vmem:[%s323 + $0x1b4] sm:$0xf]
        %v459 = vld [vmem:[%s323 + $0x1b8] sm:$0xf]
        %v460 = vld [vmem:[%s323 + $0x1bc] sm:$0xf]
        %v461 = vld [vmem:[%s323 + $0x1c0] sm:$0xf]
        %v462 = vld [vmem:[%s323 + $0x1c4] sm:$0xf]
        %v463 = vld [vmem:[%s323 + $0x1c8] sm:$0xf]
        %v464 = vld [vmem:[%s323 + $0x1cc] sm:$0xf]
        %v465 = vld [vmem:[%s323 + $0x1d0] sm:$0xf]
        %v466 = vld [vmem:[%s323 + $0x1d4] sm:$0xf]
        %v467 = vld [vmem:[%s323 + $0x1d8] sm:$0xf]
        %v468 = vld [vmem:[%s323 + $0x1dc] sm:$0xf]
        %v469 = vld [vmem:[%s323 + $0x1e0] sm:$0x1]
        %v591 = vunpack.c.l.b16 %v349
        %v592 = vunpack.c.l.b16 %v350
        %v593 = vunpack.c.l.b16 %v351
        %v594 = vunpack.c.l.b16 %v352
        %v595 = vunpack.c.l.b16 %v353
        %v596 = vunpack.c.l.b16 %v354
        %v597 = vunpack.c.l.b16 %v355
        %v598 = vunpack.c.l.b16 %v356
        %v599 = vunpack.c.l.b16 %v357
        %v600 = vunpack.c.l.b16 %v358
        %v601 = vunpack.c.l.b16 %v359
        %v602 = vunpack.c.l.b16 %v360
        %v603 = vunpack.c.l.b16 %v361
        %v604 = vunpack.c.l.b16 %v362
        %v605 = vunpack.c.l.b16 %v363
        %v606 = vunpack.c.l.b16 %v364
        %v607 = vunpack.c.l.b16 %v365
        %v608 = vunpack.c.l.b16 %v366
        %v609 = vunpack.c.l.b16 %v367
        %v610 = vunpack.c.l.b16 %v368
        %v611 = vunpack.c.l.b16 %v369
        %v612 = vunpack.c.l.b16 %v370
        %v613 = vunpack.c.l.b16 %v371
        %v614 = vunpack.c.l.b16 %v372
        %v615 = vunpack.c.l.b16 %v373
        %v616 = vunpack.c.l.b16 %v374
        %v617 = vunpack.c.l.b16 %v375
        %v618 = vunpack.c.l.b16 %v376
        %v619 = vunpack.c.l.b16 %v377
        %v620 = vunpack.c.l.b16 %v378
        %v621 = vunpack.c.l.b16 %v379
        %v622 = vunpack.c.l.b16 %v380
        %v623 = vunpack.c.l.b16 %v381
        %v624 = vunpack.c.l.b16 %v382
        %v625 = vunpack.c.l.b16 %v383
        %v626 = vunpack.c.l.b16 %v384
        %v627 = vunpack.c.l.b16 %v385
        %v628 = vunpack.c.l.b16 %v386
        %v629 = vunpack.c.l.b16 %v387
        %v630 = vunpack.c.l.b16 %v388
        %v631 = vunpack.c.l.b16 %v389
        %v632 = vunpack.c.l.b16 %v390
        %v633 = vunpack.c.l.b16 %v391
        %v634 = vunpack.c.l.b16 %v392
        %v635 = vunpack.c.l.b16 %v393
        %v636 = vunpack.c.l.b16 %v394
        %v637 = vunpack.c.l.b16 %v395
        %v638 = vunpack.c.l.b16 %v396
        %v639 = vunpack.c.l.b16 %v397
        %v640 = vunpack.c.l.b16 %v398
        %v641 = vunpack.c.l.b16 %v399
        %v642 = vunpack.c.l.b16 %v400
        %v643 = vunpack.c.l.b16 %v401
        %v644 = vunpack.c.l.b16 %v402
        %v645 = vunpack.c.l.b16 %v403
        %v646 = vunpack.c.l.b16 %v404
        %v647 = vunpack.c.l.b16 %v405
        %v648 = vunpack.c.l.b16 %v406
        %v649 = vunpack.c.l.b16 %v407
        %v650 = vunpack.c.l.b16 %v408
        %v651 = vunpack.c.l.b16 %v409
        %v652 = vunpack.c.l.b16 %v410
        %v653 = vunpack.c.l.b16 %v411
        %v654 = vunpack.c.l.b16 %v412
        %v655 = vunpack.c.l.b16 %v413
        %v656 = vunpack.c.l.b16 %v414
        %v657 = vunpack.c.l.b16 %v415
        %v658 = vunpack.c.l.b16 %v416
        %v659 = vunpack.c.l.b16 %v417
        %v660 = vunpack.c.l.b16 %v418
        %v661 = vunpack.c.l.b16 %v419
        %v662 = vunpack.c.l.b16 %v420
        %v663 = vunpack.c.l.b16 %v421
        %v664 = vunpack.c.l.b16 %v422
        %v665 = vunpack.c.l.b16 %v423
        %v666 = vunpack.c.l.b16 %v424
        %v667 = vunpack.c.l.b16 %v425
        %v668 = vunpack.c.l.b16 %v426
        %v669 = vunpack.c.l.b16 %v427
        %v670 = vunpack.c.l.b16 %v428
        %v671 = vunpack.c.l.b16 %v429
        %v672 = vunpack.c.l.b16 %v430
        %v673 = vunpack.c.l.b16 %v431
        %v674 = vunpack.c.l.b16 %v432
        %v675 = vunpack.c.l.b16 %v433
        %v676 = vunpack.c.l.b16 %v434
        %v677 = vunpack.c.l.b16 %v435
        %v678 = vunpack.c.l.b16 %v436
        %v679 = vunpack.c.l.b16 %v437
        %v680 = vunpack.c.l.b16 %v438
        %v681 = vunpack.c.l.b16 %v439
        %v682 = vunpack.c.l.b16 %v440
        %v683 = vunpack.c.l.b16 %v441
        %v684 = vunpack.c.l.b16 %v442
        %v685 = vunpack.c.l.b16 %v443
        %v686 = vunpack.c.l.b16 %v444
        %v687 = vunpack.c.l.b16 %v445
        %v688 = vunpack.c.l.b16 %v446
        %v689 = vunpack.c.l.b16 %v447
        %v690 = vunpack.c.l.b16 %v448
        %v691 = vunpack.c.l.b16 %v449
        %v692 = vunpack.c.l.b16 %v450
        %v693 = vunpack.c.l.b16 %v451
        %v694 = vunpack.c.l.b16 %v452
        %v695 = vunpack.c.l.b16 %v453
        %v696 = vunpack.c.l.b16 %v454
        %v697 = vunpack.c.l.b16 %v455
        %v698 = vunpack.c.l.b16 %v456
        %v699 = vunpack.c.l.b16 %v457
        %v700 = vunpack.c.l.b16 %v458
        %v701 = vunpack.c.l.b16 %v459
        %v702 = vunpack.c.l.b16 %v460
        %v703 = vunpack.c.l.b16 %v461
        %v704 = vunpack.c.l.b16 %v462
        %v705 = vunpack.c.l.b16 %v463
        %v706 = vunpack.c.l.b16 %v464
        %v707 = vunpack.c.l.b16 %v465
        %v708 = vunpack.c.l.b16 %v466
        %v709 = vunpack.c.l.b16 %v467
        %v710 = vunpack.c.l.b16 %v468
        %v711 = vunpack.c.l.b16 %v469
        %v712 = vpack.c.b16 %v592, %v591
        %v713 = vpack.c.b16 %v594, %v593
        %v714 = vpack.c.b16 %v596, %v595
        %v715 = vpack.c.b16 %v598, %v597
        %v716 = vpack.c.b16 %v600, %v599
        %v717 = vpack.c.b16 %v602, %v601
        %v718 = vpack.c.b16 %v604, %v603
        %v719 = vpack.c.b16 %v606, %v605
        %v720 = vpack.c.b16 %v608, %v607
        %v721 = vpack.c.b16 %v610, %v609
        %v722 = vpack.c.b16 %v612, %v611
        %v723 = vpack.c.b16 %v614, %v613
        %v724 = vpack.c.b16 %v616, %v615
        %v725 = vpack.c.b16 %v618, %v617
        %v726 = vpack.c.b16 %v620, %v619
        %v727 = vpack.c.b16 %v622, %v621
        %v728 = vpack.c.b16 %v624, %v623
        %v729 = vpack.c.b16 %v626, %v625
        %v730 = vpack.c.b16 %v628, %v627
        %v731 = vpack.c.b16 %v630, %v629
        %v732 = vpack.c.b16 %v632, %v631
        %v733 = vpack.c.b16 %v634, %v633
        %v734 = vpack.c.b16 %v636, %v635
        %v735 = vpack.c.b16 %v638, %v637
        %v736 = vpack.c.b16 %v640, %v639
        %v737 = vpack.c.b16 %v642, %v641
        %v738 = vpack.c.b16 %v644, %v643
        %v739 = vpack.c.b16 %v646, %v645
        %v740 = vpack.c.b16 %v648, %v647
        %v741 = vpack.c.b16 %v650, %v649
        %v742 = vpack.c.b16 %v652, %v651
        %v743 = vpack.c.b16 %v654, %v653
        %v744 = vpack.c.b16 %v656, %v655
        %v745 = vpack.c.b16 %v658, %v657
        %v746 = vpack.c.b16 %v660, %v659
        %v747 = vpack.c.b16 %v662, %v661
        %v748 = vpack.c.b16 %v664, %v663
        %v749 = vpack.c.b16 %v666, %v665
        %v750 = vpack.c.b16 %v668, %v667
        %v751 = vpack.c.b16 %v670, %v669
        %v752 = vpack.c.b16 %v672, %v671
        %v753 = vpack.c.b16 %v674, %v673
        %v754 = vpack.c.b16 %v676, %v675
        %v755 = vpack.c.b16 %v678, %v677
        %v756 = vpack.c.b16 %v680, %v679
        %v757 = vpack.c.b16 %v682, %v681
        %v758 = vpack.c.b16 %v684, %v683
        %v759 = vpack.c.b16 %v686, %v685
        %v760 = vpack.c.b16 %v688, %v687
        %v761 = vpack.c.b16 %v690, %v689
        %v762 = vpack.c.b16 %v692, %v691
        %v763 = vpack.c.b16 %v694, %v693
        %v764 = vpack.c.b16 %v696, %v695
        %v765 = vpack.c.b16 %v698, %v697
        %v766 = vpack.c.b16 %v700, %v699
        %v767 = vpack.c.b16 %v702, %v701
        %v768 = vpack.c.b16 %v704, %v703
        %v769 = vpack.c.b16 %v706, %v705
        %v770 = vpack.c.b16 %v708, %v707
        %v771 = vpack.c.b16 %v710, %v709
        %v772 = vpack.c.b16 %v711, %v711
        %v777 = vunpack.c.l.b16 %v345
        %v778 = vunpack.c.l.b16 %v346
        %v779 = vunpack.c.l.b16 %v347
        %v780 = vunpack.c.l.b16 %v348
        %v781 = vpack.c.b16 %v778, %v777
        %v782 = vpack.c.b16 %v780, %v779
        %vm785 = vcmask 261120
        %v787 = vsel %vm785, %v712, 0
        %v790 = vsel %vm785, %v713, 0
        %v793 = vsel %vm785, %v714, 0
        %v796 = vsel %vm785, %v715, 0
        %v799 = vsel %vm785, %v716, 0
        %v802 = vsel %vm785, %v717, 0
        %v805 = vsel %vm785, %v718, 0
        %v808 = vsel %vm785, %v719, 0
        %v811 = vsel %vm785, %v720, 0
        %v814 = vsel %vm785, %v721, 0
        %v817 = vsel %vm785, %v722, 0
        %v820 = vsel %vm785, %v723, 0
        %v823 = vsel %vm785, %v724, 0
        %v826 = vsel %vm785, %v725, 0
        %v829 = vsel %vm785, %v726, 0
        %v832 = vsel %vm785, %v727, 0
        %v835 = vsel %vm785, %v728, 0
        %v838 = vsel %vm785, %v729, 0
        %v841 = vsel %vm785, %v730, 0
        %v844 = vsel %vm785, %v731, 0
        %v847 = vsel %vm785, %v732, 0
        %v850 = vsel %vm785, %v733, 0
        %v853 = vsel %vm785, %v734, 0
        %v856 = vsel %vm785, %v735, 0
        %v859 = vsel %vm785, %v736, 0
        %v862 = vsel %vm785, %v737, 0
        %v865 = vsel %vm785, %v738, 0
        %v868 = vsel %vm785, %v739, 0
        %v871 = vsel %vm785, %v740, 0
        %v874 = vsel %vm785, %v741, 0
        %v877 = vsel %vm785, %v742, 0
        %v880 = vsel %vm785, %v743, 0
        %v883 = vsel %vm785, %v744, 0
        %v886 = vsel %vm785, %v745, 0
        %v889 = vsel %vm785, %v746, 0
        %v892 = vsel %vm785, %v747, 0
        %v895 = vsel %vm785, %v748, 0
        %v898 = vsel %vm785, %v749, 0
        %v901 = vsel %vm785, %v750, 0
        %v904 = vsel %vm785, %v751, 0
        %v907 = vsel %vm785, %v752, 0
        %v910 = vsel %vm785, %v753, 0
        %v913 = vsel %vm785, %v754, 0
        %v916 = vsel %vm785, %v755, 0
        %v919 = vsel %vm785, %v756, 0
        %v922 = vsel %vm785, %v757, 0
        %v925 = vsel %vm785, %v758, 0
        %v928 = vsel %vm785, %v759, 0
        %v931 = vsel %vm785, %v760, 0
        %v934 = vsel %vm785, %v761, 0
        %v937 = vsel %vm785, %v762, 0
        %v940 = vsel %vm785, %v763, 0
        %v943 = vsel %vm785, %v764, 0
        %v946 = vsel %vm785, %v765, 0
        %v949 = vsel %vm785, %v766, 0
        %v952 = vsel %vm785, %v767, 0
        %v955 = vsel %vm785, %v768, 0
        %v958 = vsel %vm785, %v769, 0
        %v961 = vsel %vm785, %v770, 0
        %v964 = vsel %vm785, %v771, 0
        %v967 = vsel %vm785, %v772, 0
        %969 = vmatpush.bf16.msra.mxu0 0
        %970 = vmatpush.bf16.msra.mxu0 0
        %971 = vmatpush.bf16.msra.mxu0 0
        %972 = vmatpush.bf16.msra.mxu0 0
        %973 = vmatpush.bf16.msra.mxu0 0
        %974 = vmatpush.bf16.msra.mxu0 0
        %975 = vmatpush.bf16.msra.mxu0 %v782
        %976 = vmatpush.bf16.msra.mxu0 %v781
        %977 = vmatmul.bf16.gmra.mxu0 %v787
        %v978 = vpop.f32.mrf.mxu0
        %v979 = vadd.f32 0.0, %v978
        %v980 = vpop.f32.mrf.mxu0
        %v981 = vadd.f32 0.0, %v980
        %982 = vmatmul.bf16.gmra.mxu0 %v790
        %v983 = vpop.f32.mrf.mxu0
        %v984 = vadd.f32 0.0, %v983
        %v985 = vpop.f32.mrf.mxu0
        %v986 = vadd.f32 0.0, %v985
        %987 = vmatmul.bf16.gmra.mxu0 %v793
        %v988 = vpop.f32.mrf.mxu0
        %v989 = vadd.f32 0.0, %v988
        %v990 = vpop.f32.mrf.mxu0
        %v991 = vadd.f32 0.0, %v990
        %992 = vmatmul.bf16.gmra.mxu0 %v796
        %v993 = vpop.f32.mrf.mxu0
        %v994 = vadd.f32 0.0, %v993
        %v995 = vpop.f32.mrf.mxu0
        %v996 = vadd.f32 0.0, %v995
        %997 = vmatmul.bf16.gmra.mxu0 %v799
        %v998 = vpop.f32.mrf.mxu0
        %v999 = vadd.f32 0.0, %v998
        %v1000 = vpop.f32.mrf.mxu0
        %v1001 = vadd.f32 0.0, %v1000
        %1002 = vmatmul.bf16.gmra.mxu0 %v802
        %v1003 = vpop.f32.mrf.mxu0
        %v1004 = vadd.f32 0.0, %v1003
        %v1005 = vpop.f32.mrf.mxu0
        %v1006 = vadd.f32 0.0, %v1005
        %1007 = vmatmul.bf16.gmra.mxu0 %v805
        %v1008 = vpop.f32.mrf.mxu0
        %v1009 = vadd.f32 0.0, %v1008
        %v1010 = vpop.f32.mrf.mxu0
        %v1011 = vadd.f32 0.0, %v1010
        %1012 = vmatmul.bf16.gmra.mxu0 %v808
        %v1013 = vpop.f32.mrf.mxu0
        %v1014 = vadd.f32 0.0, %v1013
        %v1015 = vpop.f32.mrf.mxu0
        %v1016 = vadd.f32 0.0, %v1015
        %1017 = vmatmul.bf16.gmra.mxu0 %v811
        %v1018 = vpop.f32.mrf.mxu0
        %v1019 = vadd.f32 0.0, %v1018
        %v1020 = vpop.f32.mrf.mxu0
        %v1021 = vadd.f32 0.0, %v1020
        %1022 = vmatmul.bf16.gmra.mxu0 %v814
        %v1023 = vpop.f32.mrf.mxu0
        %v1024 = vadd.f32 0.0, %v1023
        %v1025 = vpop.f32.mrf.mxu0
        %v1026 = vadd.f32 0.0, %v1025
        %1027 = vmatmul.bf16.gmra.mxu0 %v817
        %v1028 = vpop.f32.mrf.mxu0
        %v1029 = vadd.f32 0.0, %v1028
        %v1030 = vpop.f32.mrf.mxu0
        %v1031 = vadd.f32 0.0, %v1030
        %1032 = vmatmul.bf16.gmra.mxu0 %v820
        %v1033 = vpop.f32.mrf.mxu0
        %v1034 = vadd.f32 0.0, %v1033
        %v1035 = vpop.f32.mrf.mxu0
        %v1036 = vadd.f32 0.0, %v1035
        %1037 = vmatmul.bf16.gmra.mxu0 %v823
        %v1038 = vpop.f32.mrf.mxu0
        %v1039 = vadd.f32 0.0, %v1038
        %v1040 = vpop.f32.mrf.mxu0
        %v1041 = vadd.f32 0.0, %v1040
        %1042 = vmatmul.bf16.gmra.mxu0 %v826
        %v1043 = vpop.f32.mrf.mxu0
        %v1044 = vadd.f32 0.0, %v1043
        %v1045 = vpop.f32.mrf.mxu0
        %v1046 = vadd.f32 0.0, %v1045
        %1047 = vmatmul.bf16.gmra.mxu0 %v829
        %v1048 = vpop.f32.mrf.mxu0
        %v1049 = vadd.f32 0.0, %v1048
        %v1050 = vpop.f32.mrf.mxu0
        %v1051 = vadd.f32 0.0, %v1050
        %1052 = vmatmul.bf16.gmra.mxu0 %v832
        %v1053 = vpop.f32.mrf.mxu0
        %v1054 = vadd.f32 0.0, %v1053
        %v1055 = vpop.f32.mrf.mxu0
        %v1056 = vadd.f32 0.0, %v1055
        %1057 = vmatmul.bf16.gmra.mxu0 %v835
        %v1058 = vpop.f32.mrf.mxu0
        %v1059 = vadd.f32 0.0, %v1058
        %v1060 = vpop.f32.mrf.mxu0
        %v1061 = vadd.f32 0.0, %v1060
        %1062 = vmatmul.bf16.gmra.mxu0 %v838
        %v1063 = vpop.f32.mrf.mxu0
        %v1064 = vadd.f32 0.0, %v1063
        %v1065 = vpop.f32.mrf.mxu0
        %v1066 = vadd.f32 0.0, %v1065
        %1067 = vmatmul.bf16.gmra.mxu0 %v841
        %v1068 = vpop.f32.mrf.mxu0
        %v1069 = vadd.f32 0.0, %v1068
        %v1070 = vpop.f32.mrf.mxu0
        %v1071 = vadd.f32 0.0, %v1070
        %1072 = vmatmul.bf16.gmra.mxu0 %v844
        %v1073 = vpop.f32.mrf.mxu0
        %v1074 = vadd.f32 0.0, %v1073
        %v1075 = vpop.f32.mrf.mxu0
        %v1076 = vadd.f32 0.0, %v1075
        %1077 = vmatmul.bf16.gmra.mxu0 %v847
        %v1078 = vpop.f32.mrf.mxu0
        %v1079 = vadd.f32 0.0, %v1078
        %v1080 = vpop.f32.mrf.mxu0
        %v1081 = vadd.f32 0.0, %v1080
        %1082 = vmatmul.bf16.gmra.mxu0 %v850
        %v1083 = vpop.f32.mrf.mxu0
        %v1084 = vadd.f32 0.0, %v1083
        %v1085 = vpop.f32.mrf.mxu0
        %v1086 = vadd.f32 0.0, %v1085
        %1087 = vmatmul.bf16.gmra.mxu0 %v853
        %v1088 = vpop.f32.mrf.mxu0
        %v1089 = vadd.f32 0.0, %v1088
        %v1090 = vpop.f32.mrf.mxu0
        %v1091 = vadd.f32 0.0, %v1090
        %1092 = vmatmul.bf16.gmra.mxu0 %v856
        %v1093 = vpop.f32.mrf.mxu0
        %v1094 = vadd.f32 0.0, %v1093
        %v1095 = vpop.f32.mrf.mxu0
        %v1096 = vadd.f32 0.0, %v1095
        %1097 = vmatmul.bf16.gmra.mxu0 %v859
        %v1098 = vpop.f32.mrf.mxu0
        %v1099 = vadd.f32 0.0, %v1098
        %v1100 = vpop.f32.mrf.mxu0
        %v1101 = vadd.f32 0.0, %v1100
        %1102 = vmatmul.bf16.gmra.mxu0 %v862
        %v1103 = vpop.f32.mrf.mxu0
        %v1104 = vadd.f32 0.0, %v1103
        %v1105 = vpop.f32.mrf.mxu0
        %v1106 = vadd.f32 0.0, %v1105
        %1107 = vmatmul.bf16.gmra.mxu0 %v865
        %v1108 = vpop.f32.mrf.mxu0
        %v1109 = vadd.f32 0.0, %v1108
        %v1110 = vpop.f32.mrf.mxu0
        %v1111 = vadd.f32 0.0, %v1110
        %1112 = vmatmul.bf16.gmra.mxu0 %v868
        %v1113 = vpop.f32.mrf.mxu0
        %v1114 = vadd.f32 0.0, %v1113
        %v1115 = vpop.f32.mrf.mxu0
        %v1116 = vadd.f32 0.0, %v1115
        %1117 = vmatmul.bf16.gmra.mxu0 %v871
        %v1118 = vpop.f32.mrf.mxu0
        %v1119 = vadd.f32 0.0, %v1118
        %v1120 = vpop.f32.mrf.mxu0
        %v1121 = vadd.f32 0.0, %v1120
        %1122 = vmatmul.bf16.gmra.mxu0 %v874
        %v1123 = vpop.f32.mrf.mxu0
        %v1124 = vadd.f32 0.0, %v1123
        %v1125 = vpop.f32.mrf.mxu0
        %v1126 = vadd.f32 0.0, %v1125
        %1127 = vmatmul.bf16.gmra.mxu0 %v877
        %v1128 = vpop.f32.mrf.mxu0
        %v1129 = vadd.f32 0.0, %v1128
        %v1130 = vpop.f32.mrf.mxu0
        %v1131 = vadd.f32 0.0, %v1130
        %1132 = vmatmul.bf16.gmra.mxu0 %v880
        %v1133 = vpop.f32.mrf.mxu0
        %v1134 = vadd.f32 0.0, %v1133
        %v1135 = vpop.f32.mrf.mxu0
        %v1136 = vadd.f32 0.0, %v1135
        %1137 = vmatmul.bf16.gmra.mxu0 %v883
        %v1138 = vpop.f32.mrf.mxu0
        %v1139 = vadd.f32 0.0, %v1138
        %v1140 = vpop.f32.mrf.mxu0
        %v1141 = vadd.f32 0.0, %v1140
        %1142 = vmatmul.bf16.gmra.mxu0 %v886
        %v1143 = vpop.f32.mrf.mxu0
        %v1144 = vadd.f32 0.0, %v1143
        %v1145 = vpop.f32.mrf.mxu0
        %v1146 = vadd.f32 0.0, %v1145
        %1147 = vmatmul.bf16.gmra.mxu0 %v889
        %v1148 = vpop.f32.mrf.mxu0
        %v1149 = vadd.f32 0.0, %v1148
        %v1150 = vpop.f32.mrf.mxu0
        %v1151 = vadd.f32 0.0, %v1150
        %1152 = vmatmul.bf16.gmra.mxu0 %v892
        %v1153 = vpop.f32.mrf.mxu0
        %v1154 = vadd.f32 0.0, %v1153
        %v1155 = vpop.f32.mrf.mxu0
        %v1156 = vadd.f32 0.0, %v1155
        %1157 = vmatmul.bf16.gmra.mxu0 %v895
        %v1158 = vpop.f32.mrf.mxu0
        %v1159 = vadd.f32 0.0, %v1158
        %v1160 = vpop.f32.mrf.mxu0
        %v1161 = vadd.f32 0.0, %v1160
        %1162 = vmatmul.bf16.gmra.mxu0 %v898
        %v1163 = vpop.f32.mrf.mxu0
        %v1164 = vadd.f32 0.0, %v1163
        %v1165 = vpop.f32.mrf.mxu0
        %v1166 = vadd.f32 0.0, %v1165
        %1167 = vmatmul.bf16.gmra.mxu0 %v901
        %v1168 = vpop.f32.mrf.mxu0
        %v1169 = vadd.f32 0.0, %v1168
        %v1170 = vpop.f32.mrf.mxu0
        %v1171 = vadd.f32 0.0, %v1170
        %1172 = vmatmul.bf16.gmra.mxu0 %v904
        %v1173 = vpop.f32.mrf.mxu0
        %v1174 = vadd.f32 0.0, %v1173
        %v1175 = vpop.f32.mrf.mxu0
        %v1176 = vadd.f32 0.0, %v1175
        %1177 = vmatmul.bf16.gmra.mxu0 %v907
        %v1178 = vpop.f32.mrf.mxu0
        %v1179 = vadd.f32 0.0, %v1178
        %v1180 = vpop.f32.mrf.mxu0
        %v1181 = vadd.f32 0.0, %v1180
        %1182 = vmatmul.bf16.gmra.mxu0 %v910
        %v1183 = vpop.f32.mrf.mxu0
        %v1184 = vadd.f32 0.0, %v1183
        %v1185 = vpop.f32.mrf.mxu0
        %v1186 = vadd.f32 0.0, %v1185
        %1187 = vmatmul.bf16.gmra.mxu0 %v913
        %v1188 = vpop.f32.mrf.mxu0
        %v1189 = vadd.f32 0.0, %v1188
        %v1190 = vpop.f32.mrf.mxu0
        %v1191 = vadd.f32 0.0, %v1190
        %1192 = vmatmul.bf16.gmra.mxu0 %v916
        %v1193 = vpop.f32.mrf.mxu0
        %v1194 = vadd.f32 0.0, %v1193
        %v1195 = vpop.f32.mrf.mxu0
        %v1196 = vadd.f32 0.0, %v1195
        %1197 = vmatmul.bf16.gmra.mxu0 %v919
        %v1198 = vpop.f32.mrf.mxu0
        %v1199 = vadd.f32 0.0, %v1198
        %v1200 = vpop.f32.mrf.mxu0
        %v1201 = vadd.f32 0.0, %v1200
        %1202 = vmatmul.bf16.gmra.mxu0 %v922
        %v1203 = vpop.f32.mrf.mxu0
        %v1204 = vadd.f32 0.0, %v1203
        %v1205 = vpop.f32.mrf.mxu0
        %v1206 = vadd.f32 0.0, %v1205
        %1207 = vmatmul.bf16.gmra.mxu0 %v925
        %v1208 = vpop.f32.mrf.mxu0
        %v1209 = vadd.f32 0.0, %v1208
        %v1210 = vpop.f32.mrf.mxu0
        %v1211 = vadd.f32 0.0, %v1210
        %1212 = vmatmul.bf16.gmra.mxu0 %v928
        %v1213 = vpop.f32.mrf.mxu0
        %v1214 = vadd.f32 0.0, %v1213
        %v1215 = vpop.f32.mrf.mxu0
        %v1216 = vadd.f32 0.0, %v1215
        %1217 = vmatmul.bf16.gmra.mxu0 %v931
        %v1218 = vpop.f32.mrf.mxu0
        %v1219 = vadd.f32 0.0, %v1218
        %v1220 = vpop.f32.mrf.mxu0
        %v1221 = vadd.f32 0.0, %v1220
        %1222 = vmatmul.bf16.gmra.mxu0 %v934
        %v1223 = vpop.f32.mrf.mxu0
        %v1224 = vadd.f32 0.0, %v1223
        %v1225 = vpop.f32.mrf.mxu0
        %v1226 = vadd.f32 0.0, %v1225
        %1227 = vmatmul.bf16.gmra.mxu0 %v937
        %v1228 = vpop.f32.mrf.mxu0
        %v1229 = vadd.f32 0.0, %v1228
        %v1230 = vpop.f32.mrf.mxu0
        %v1231 = vadd.f32 0.0, %v1230
        %1232 = vmatmul.bf16.gmra.mxu0 %v940
        %v1233 = vpop.f32.mrf.mxu0
        %v1234 = vadd.f32 0.0, %v1233
        %v1235 = vpop.f32.mrf.mxu0
        %v1236 = vadd.f32 0.0, %v1235
        %1237 = vmatmul.bf16.gmra.mxu0 %v943
        %v1238 = vpop.f32.mrf.mxu0
        %v1239 = vadd.f32 0.0, %v1238
        %v1240 = vpop.f32.mrf.mxu0
        %v1241 = vadd.f32 0.0, %v1240
        %1242 = vmatmul.bf16.gmra.mxu0 %v946
        %v1243 = vpop.f32.mrf.mxu0
        %v1244 = vadd.f32 0.0, %v1243
        %v1245 = vpop.f32.mrf.mxu0
        %v1246 = vadd.f32 0.0, %v1245
        %1247 = vmatmul.bf16.gmra.mxu0 %v949
        %v1248 = vpop.f32.mrf.mxu0
        %v1249 = vadd.f32 0.0, %v1248
        %v1250 = vpop.f32.mrf.mxu0
        %v1251 = vadd.f32 0.0, %v1250
        %1252 = vmatmul.bf16.gmra.mxu0 %v952
        %v1253 = vpop.f32.mrf.mxu0
        %v1254 = vadd.f32 0.0, %v1253
        %v1255 = vpop.f32.mrf.mxu0
        %v1256 = vadd.f32 0.0, %v1255
        %1257 = vmatmul.bf16.gmra.mxu0 %v955
        %v1258 = vpop.f32.mrf.mxu0
        %v1259 = vadd.f32 0.0, %v1258
        %v1260 = vpop.f32.mrf.mxu0
        %v1261 = vadd.f32 0.0, %v1260
        %1262 = vmatmul.bf16.gmra.mxu0 %v958
        %v1263 = vpop.f32.mrf.mxu0
        %v1264 = vadd.f32 0.0, %v1263
        %v1265 = vpop.f32.mrf.mxu0
        %v1266 = vadd.f32 0.0, %v1265
        %1267 = vmatmul.bf16.gmra.mxu0 %v961
        %v1268 = vpop.f32.mrf.mxu0
        %v1269 = vadd.f32 0.0, %v1268
        %v1270 = vpop.f32.mrf.mxu0
        %v1271 = vadd.f32 0.0, %v1270
        %1272 = vmatmul.bf16.gmra.mxu0 %v964
        %v1273 = vpop.f32.mrf.mxu0
        %v1274 = vadd.f32 0.0, %v1273
        %v1275 = vpop.f32.mrf.mxu0
        %v1276 = vadd.f32 0.0, %v1275
        %1277 = vmatmul.bf16.gmra.mxu0 %v967
        %v1278 = vpop.f32.mrf.mxu0
        %v1279 = vadd.f32 0.0, %v1278
        %v1280 = vpop.f32.mrf.mxu0
        %1281 = vdwg.mxu0
        %v1282 = vld [vmem:[%s328] sm:$0xf]
        %v1283 = vld [vmem:[%s328 + $0x4] sm:$0xf]
        %v1284 = vld [vmem:[%s328 + $0x8] sm:$0xf]
        %v1285 = vld [vmem:[%s328 + $0xc] sm:$0xf]
        %v1286 = vld [vmem:[%s328 + $0x10] sm:$0xf]
        %v1287 = vld [vmem:[%s328 + $0x14] sm:$0xf]
        %v1288 = vld [vmem:[%s328 + $0x18] sm:$0xf]
        %v1289 = vld [vmem:[%s328 + $0x1c] sm:$0xf]
        %v1290 = vld [vmem:[%s328 + $0x20] sm:$0xf]
        %v1291 = vld [vmem:[%s328 + $0x24] sm:$0xf]
        %v1292 = vld [vmem:[%s328 + $0x28] sm:$0xf]
        %v1293 = vld [vmem:[%s328 + $0x2c] sm:$0xf]
        %v1294 = vld [vmem:[%s328 + $0x30] sm:$0xf]
        %v1295 = vld [vmem:[%s328 + $0x34] sm:$0xf]
        %v1296 = vld [vmem:[%s328 + $0x38] sm:$0xf]
        %v1297 = vld [vmem:[%s328 + $0x3c] sm:$0xf]
        %v1298 = vld [vmem:[%s328 + $0x40] sm:$0xf]
        %v1299 = vld [vmem:[%s328 + $0x44] sm:$0xf]
        %v1300 = vld [vmem:[%s328 + $0x48] sm:$0xf]
        %v1301 = vld [vmem:[%s328 + $0x4c] sm:$0xf]
        %v1302 = vld [vmem:[%s328 + $0x50] sm:$0xf]
        %v1303 = vld [vmem:[%s328 + $0x54] sm:$0xf]
        %v1304 = vld [vmem:[%s328 + $0x58] sm:$0xf]
        %v1305 = vld [vmem:[%s328 + $0x5c] sm:$0xf]
        %v1306 = vld [vmem:[%s328 + $0x60] sm:$0xf]
        %v1307 = vld [vmem:[%s328 + $0x64] sm:$0xf]
        %v1308 = vld [vmem:[%s328 + $0x68] sm:$0xf]
        %v1309 = vld [vmem:[%s328 + $0x6c] sm:$0xf]
        %v1310 = vld [vmem:[%s328 + $0x70] sm:$0xf]
        %v1311 = vld [vmem:[%s328 + $0x74] sm:$0xf]
        %v1312 = vld [vmem:[%s328 + $0x78] sm:$0xf]
        %v1313 = vld [vmem:[%s328 + $0x7c] sm:$0xf]
        %v1314 = vld [vmem:[%s328 + $0x80] sm:$0xf]
        %v1315 = vld [vmem:[%s328 + $0x84] sm:$0xf]
        %v1316 = vld [vmem:[%s328 + $0x88] sm:$0xf]
        %v1317 = vld [vmem:[%s328 + $0x8c] sm:$0xf]
        %v1318 = vld [vmem:[%s328 + $0x90] sm:$0xf]
        %v1319 = vld [vmem:[%s328 + $0x94] sm:$0xf]
        %v1320 = vld [vmem:[%s328 + $0x98] sm:$0xf]
        %v1321 = vld [vmem:[%s328 + $0x9c] sm:$0xf]
        %v1322 = vld [vmem:[%s328 + $0xa0] sm:$0xf]
        %v1323 = vld [vmem:[%s328 + $0xa4] sm:$0xf]
        %v1324 = vld [vmem:[%s328 + $0xa8] sm:$0xf]
        %v1325 = vld [vmem:[%s328 + $0xac] sm:$0xf]
        %v1326 = vld [vmem:[%s328 + $0xb0] sm:$0xf]
        %v1327 = vld [vmem:[%s328 + $0xb4] sm:$0xf]
        %v1328 = vld [vmem:[%s328 + $0xb8] sm:$0xf]
        %v1329 = vld [vmem:[%s328 + $0xbc] sm:$0xf]
        %v1330 = vld [vmem:[%s328 + $0xc0] sm:$0xf]
        %v1331 = vld [vmem:[%s328 + $0xc4] sm:$0xf]
        %v1332 = vld [vmem:[%s328 + $0xc8] sm:$0xf]
        %v1333 = vld [vmem:[%s328 + $0xcc] sm:$0xf]
        %v1334 = vld [vmem:[%s328 + $0xd0] sm:$0xf]
        %v1335 = vld [vmem:[%s328 + $0xd4] sm:$0xf]
        %v1336 = vld [vmem:[%s328 + $0xd8] sm:$0xf]
        %v1337 = vld [vmem:[%s328 + $0xdc] sm:$0xf]
        %v1338 = vld [vmem:[%s328 + $0xe0] sm:$0xf]
        %v1339 = vld [vmem:[%s328 + $0xe4] sm:$0xf]
        %v1340 = vld [vmem:[%s328 + $0xe8] sm:$0xf]
        %v1341 = vld [vmem:[%s328 + $0xec] sm:$0xf]
        %v1342 = vld [vmem:[%s328 + $0xf0] sm:$0xf]
        %v1343 = vld [vmem:[%s328 + $0xf4] sm:$0xf]
        %v1344 = vld [vmem:[%s328 + $0xf8] sm:$0xf]
        %v1345 = vld [vmem:[%s328 + $0xfc] sm:$0xf]
        %v1346 = vld [vmem:[%s328 + $0x100] sm:$0xf]
        %v1347 = vld [vmem:[%s328 + $0x104] sm:$0xf]
        %v1348 = vld [vmem:[%s328 + $0x108] sm:$0xf]
        %v1349 = vld [vmem:[%s328 + $0x10c] sm:$0xf]
        %v1350 = vld [vmem:[%s328 + $0x110] sm:$0xf]
        %v1351 = vld [vmem:[%s328 + $0x114] sm:$0xf]
        %v1352 = vld [vmem:[%s328 + $0x118] sm:$0xf]
        %v1353 = vld [vmem:[%s328 + $0x11c] sm:$0xf]
        %v1354 = vld [vmem:[%s328 + $0x120] sm:$0xf]
        %v1355 = vld [vmem:[%s328 + $0x124] sm:$0xf]
        %v1356 = vld [vmem:[%s328 + $0x128] sm:$0xf]
        %v1357 = vld [vmem:[%s328 + $0x12c] sm:$0xf]
        %v1358 = vld [vmem:[%s328 + $0x130] sm:$0xf]
        %v1359 = vld [vmem:[%s328 + $0x134] sm:$0xf]
        %v1360 = vld [vmem:[%s328 + $0x138] sm:$0xf]
        %v1361 = vld [vmem:[%s328 + $0x13c] sm:$0xf]
        %v1362 = vld [vmem:[%s328 + $0x140] sm:$0xf]
        %v1363 = vld [vmem:[%s328 + $0x144] sm:$0xf]
        %v1364 = vld [vmem:[%s328 + $0x148] sm:$0xf]
        %v1365 = vld [vmem:[%s328 + $0x14c] sm:$0xf]
        %v1366 = vld [vmem:[%s328 + $0x150] sm:$0xf]
        %v1367 = vld [vmem:[%s328 + $0x154] sm:$0xf]
        %v1368 = vld [vmem:[%s328 + $0x158] sm:$0xf]
        %v1369 = vld [vmem:[%s328 + $0x15c] sm:$0xf]
        %v1370 = vld [vmem:[%s328 + $0x160] sm:$0xf]
        %v1371 = vld [vmem:[%s328 + $0x164] sm:$0xf]
        %v1372 = vld [vmem:[%s328 + $0x168] sm:$0xf]
        %v1373 = vld [vmem:[%s328 + $0x16c] sm:$0xf]
        %v1374 = vld [vmem:[%s328 + $0x170] sm:$0xf]
        %v1375 = vld [vmem:[%s328 + $0x174] sm:$0xf]
        %v1376 = vld [vmem:[%s328 + $0x178] sm:$0xf]
        %v1377 = vld [vmem:[%s328 + $0x17c] sm:$0xf]
        %v1378 = vld [vmem:[%s328 + $0x180] sm:$0xf]
        %v1379 = vld [vmem:[%s328 + $0x184] sm:$0xf]
        %v1380 = vld [vmem:[%s328 + $0x188] sm:$0xf]
        %v1381 = vld [vmem:[%s328 + $0x18c] sm:$0xf]
        %v1382 = vld [vmem:[%s328 + $0x190] sm:$0xf]
        %v1383 = vld [vmem:[%s328 + $0x194] sm:$0xf]
        %v1384 = vld [vmem:[%s328 + $0x198] sm:$0xf]
        %v1385 = vld [vmem:[%s328 + $0x19c] sm:$0xf]
        %v1386 = vld [vmem:[%s328 + $0x1a0] sm:$0xf]
        %v1387 = vld [vmem:[%s328 + $0x1a4] sm:$0xf]
        %v1388 = vld [vmem:[%s328 + $0x1a8] sm:$0xf]
        %v1389 = vld [vmem:[%s328 + $0x1ac] sm:$0xf]
        %v1390 = vld [vmem:[%s328 + $0x1b0] sm:$0xf]
        %v1391 = vld [vmem:[%s328 + $0x1b4] sm:$0xf]
        %v1392 = vld [vmem:[%s328 + $0x1b8] sm:$0xf]
        %v1393 = vld [vmem:[%s328 + $0x1bc] sm:$0xf]
        %v1394 = vld [vmem:[%s328 + $0x1c0] sm:$0xf]
        %v1395 = vld [vmem:[%s328 + $0x1c4] sm:$0xf]
        %v1396 = vld [vmem:[%s328 + $0x1c8] sm:$0xf]
        %v1397 = vld [vmem:[%s328 + $0x1cc] sm:$0xf]
        %v1398 = vld [vmem:[%s328 + $0x1d0] sm:$0xf]
        %v1399 = vld [vmem:[%s328 + $0x1d4] sm:$0xf]
        %v1400 = vld [vmem:[%s328 + $0x1d8] sm:$0xf]
        %v1401 = vld [vmem:[%s328 + $0x1dc] sm:$0xf]
        %v1402 = vld [vmem:[%s328 + $0x1e0] sm:$0x1]
        %v1524 = vunpack.c.l.b16 %v1282
        %v1525 = vunpack.c.l.b16 %v1283
        %v1526 = vunpack.c.l.b16 %v1284
        %v1527 = vunpack.c.l.b16 %v1285
        %v1528 = vunpack.c.l.b16 %v1286
        %v1529 = vunpack.c.l.b16 %v1287
        %v1530 = vunpack.c.l.b16 %v1288
        %v1531 = vunpack.c.l.b16 %v1289
        %v1532 = vunpack.c.l.b16 %v1290
        %v1533 = vunpack.c.l.b16 %v1291
        %v1534 = vunpack.c.l.b16 %v1292
        %v1535 = vunpack.c.l.b16 %v1293
        %v1536 = vunpack.c.l.b16 %v1294
        %v1537 = vunpack.c.l.b16 %v1295
        %v1538 = vunpack.c.l.b16 %v1296
        %v1539 = vunpack.c.l.b16 %v1297
        %v1540 = vunpack.c.l.b16 %v1298
        %v1541 = vunpack.c.l.b16 %v1299
        %v1542 = vunpack.c.l.b16 %v1300
        %v1543 = vunpack.c.l.b16 %v1301
        %v1544 = vunpack.c.l.b16 %v1302
        %v1545 = vunpack.c.l.b16 %v1303
        %v1546 = vunpack.c.l.b16 %v1304
        %v1547 = vunpack.c.l.b16 %v1305
        %v1548 = vunpack.c.l.b16 %v1306
        %v1549 = vunpack.c.l.b16 %v1307
        %v1550 = vunpack.c.l.b16 %v1308
        %v1551 = vunpack.c.l.b16 %v1309
        %v1552 = vunpack.c.l.b16 %v1310
        %v1553 = vunpack.c.l.b16 %v1311
        %v1554 = vunpack.c.l.b16 %v1312
        %v1555 = vunpack.c.l.b16 %v1313
        %v1556 = vunpack.c.l.b16 %v1314
        %v1557 = vunpack.c.l.b16 %v1315
        %v1558 = vunpack.c.l.b16 %v1316
        %v1559 = vunpack.c.l.b16 %v1317
        %v1560 = vunpack.c.l.b16 %v1318
        %v1561 = vunpack.c.l.b16 %v1319
        %v1562 = vunpack.c.l.b16 %v1320
        %v1563 = vunpack.c.l.b16 %v1321
        %v1564 = vunpack.c.l.b16 %v1322
        %v1565 = vunpack.c.l.b16 %v1323
        %v1566 = vunpack.c.l.b16 %v1324
        %v1567 = vunpack.c.l.b16 %v1325
        %v1568 = vunpack.c.l.b16 %v1326
        %v1569 = vunpack.c.l.b16 %v1327
        %v1570 = vunpack.c.l.b16 %v1328
        %v1571 = vunpack.c.l.b16 %v1329
        %v1572 = vunpack.c.l.b16 %v1330
        %v1573 = vunpack.c.l.b16 %v1331
        %v1574 = vunpack.c.l.b16 %v1332
        %v1575 = vunpack.c.l.b16 %v1333
        %v1576 = vunpack.c.l.b16 %v1334
        %v1577 = vunpack.c.l.b16 %v1335
        %v1578 = vunpack.c.l.b16 %v1336
        %v1579 = vunpack.c.l.b16 %v1337
        %v1580 = vunpack.c.l.b16 %v1338
        %v1581 = vunpack.c.l.b16 %v1339
        %v1582 = vunpack.c.l.b16 %v1340
        %v1583 = vunpack.c.l.b16 %v1341
        %v1584 = vunpack.c.l.b16 %v1342
        %v1585 = vunpack.c.l.b16 %v1343
        %v1586 = vunpack.c.l.b16 %v1344
        %v1587 = vunpack.c.l.b16 %v1345
        %v1588 = vunpack.c.l.b16 %v1346
        %v1589 = vunpack.c.l.b16 %v1347
        %v1590 = vunpack.c.l.b16 %v1348
        %v1591 = vunpack.c.l.b16 %v1349
        %v1592 = vunpack.c.l.b16 %v1350
        %v1593 = vunpack.c.l.b16 %v1351
        %v1594 = vunpack.c.l.b16 %v1352
        %v1595 = vunpack.c.l.b16 %v1353
        %v1596 = vunpack.c.l.b16 %v1354
        %v1597 = vunpack.c.l.b16 %v1355
        %v1598 = vunpack.c.l.b16 %v1356
        %v1599 = vunpack.c.l.b16 %v1357
        %v1600 = vunpack.c.l.b16 %v1358
        %v1601 = vunpack.c.l.b16 %v1359
        %v1602 = vunpack.c.l.b16 %v1360
        %v1603 = vunpack.c.l.b16 %v1361
        %v1604 = vunpack.c.l.b16 %v1362
        %v1605 = vunpack.c.l.b16 %v1363
        %v1606 = vunpack.c.l.b16 %v1364
        %v1607 = vunpack.c.l.b16 %v1365
        %v1608 = vunpack.c.l.b16 %v1366
        %v1609 = vunpack.c.l.b16 %v1367
        %v1610 = vunpack.c.l.b16 %v1368
        %v1611 = vunpack.c.l.b16 %v1369
        %v1612 = vunpack.c.l.b16 %v1370
        %v1613 = vunpack.c.l.b16 %v1371
        %v1614 = vunpack.c.l.b16 %v1372
        %v1615 = vunpack.c.l.b16 %v1373
        %v1616 = vunpack.c.l.b16 %v1374
        %v1617 = vunpack.c.l.b16 %v1375
        %v1618 = vunpack.c.l.b16 %v1376
        %v1619 = vunpack.c.l.b16 %v1377
        %v1620 = vunpack.c.l.b16 %v1378
        %v1621 = vunpack.c.l.b16 %v1379
        %v1622 = vunpack.c.l.b16 %v1380
        %v1623 = vunpack.c.l.b16 %v1381
        %v1624 = vunpack.c.l.b16 %v1382
        %v1625 = vunpack.c.l.b16 %v1383
        %v1626 = vunpack.c.l.b16 %v1384
        %v1627 = vunpack.c.l.b16 %v1385
        %v1628 = vunpack.c.l.b16 %v1386
        %v1629 = vunpack.c.l.b16 %v1387
        %v1630 = vunpack.c.l.b16 %v1388
        %v1631 = vunpack.c.l.b16 %v1389
        %v1632 = vunpack.c.l.b16 %v1390
        %v1633 = vunpack.c.l.b16 %v1391
        %v1634 = vunpack.c.l.b16 %v1392
        %v1635 = vunpack.c.l.b16 %v1393
        %v1636 = vunpack.c.l.b16 %v1394
        %v1637 = vunpack.c.l.b16 %v1395
        %v1638 = vunpack.c.l.b16 %v1396
        %v1639 = vunpack.c.l.b16 %v1397
        %v1640 = vunpack.c.l.b16 %v1398
        %v1641 = vunpack.c.l.b16 %v1399
        %v1642 = vunpack.c.l.b16 %v1400
        %v1643 = vunpack.c.l.b16 %v1401
        %v1644 = vunpack.c.l.b16 %v1402
        %v1645 = vpack.c.b16 %v1525, %v1524
        %v1646 = vpack.c.b16 %v1527, %v1526
        %v1647 = vpack.c.b16 %v1529, %v1528
        %v1648 = vpack.c.b16 %v1531, %v1530
        %v1649 = vpack.c.b16 %v1533, %v1532
        %v1650 = vpack.c.b16 %v1535, %v1534
        %v1651 = vpack.c.b16 %v1537, %v1536
        %v1652 = vpack.c.b16 %v1539, %v1538
        %v1653 = vpack.c.b16 %v1541, %v1540
        %v1654 = vpack.c.b16 %v1543, %v1542
        %v1655 = vpack.c.b16 %v1545, %v1544
        %v1656 = vpack.c.b16 %v1547, %v1546
        %v1657 = vpack.c.b16 %v1549, %v1548
        %v1658 = vpack.c.b16 %v1551, %v1550
        %v1659 = vpack.c.b16 %v1553, %v1552
        %v1660 = vpack.c.b16 %v1555, %v1554
        %v1661 = vpack.c.b16 %v1557, %v1556
        %v1662 = vpack.c.b16 %v1559, %v1558
        %v1663 = vpack.c.b16 %v1561, %v1560
        %v1664 = vpack.c.b16 %v1563, %v1562
        %v1665 = vpack.c.b16 %v1565, %v1564
        %v1666 = vpack.c.b16 %v1567, %v1566
        %v1667 = vpack.c.b16 %v1569, %v1568
        %v1668 = vpack.c.b16 %v1571, %v1570
        %v1669 = vpack.c.b16 %v1573, %v1572
        %v1670 = vpack.c.b16 %v1575, %v1574
        %v1671 = vpack.c.b16 %v1577, %v1576
        %v1672 = vpack.c.b16 %v1579, %v1578
        %v1673 = vpack.c.b16 %v1581, %v1580
        %v1674 = vpack.c.b16 %v1583, %v1582
        %v1675 = vpack.c.b16 %v1585, %v1584
        %v1676 = vpack.c.b16 %v1587, %v1586
        %v1677 = vpack.c.b16 %v1589, %v1588
        %v1678 = vpack.c.b16 %v1591, %v1590
        %v1679 = vpack.c.b16 %v1593, %v1592
        %v1680 = vpack.c.b16 %v1595, %v1594
        %v1681 = vpack.c.b16 %v1597, %v1596
        %v1682 = vpack.c.b16 %v1599, %v1598
        %v1683 = vpack.c.b16 %v1601, %v1600
        %v1684 = vpack.c.b16 %v1603, %v1602
        %v1685 = vpack.c.b16 %v1605, %v1604
        %v1686 = vpack.c.b16 %v1607, %v1606
        %v1687 = vpack.c.b16 %v1609, %v1608
        %v1688 = vpack.c.b16 %v1611, %v1610
        %v1689 = vpack.c.b16 %v1613, %v1612
        %v1690 = vpack.c.b16 %v1615, %v1614
        %v1691 = vpack.c.b16 %v1617, %v1616
        %v1692 = vpack.c.b16 %v1619, %v1618
        %v1693 = vpack.c.b16 %v1621, %v1620
        %v1694 = vpack.c.b16 %v1623, %v1622
        %v1695 = vpack.c.b16 %v1625, %v1624
        %v1696 = vpack.c.b16 %v1627, %v1626
        %v1697 = vpack.c.b16 %v1629, %v1628
        %v1698 = vpack.c.b16 %v1631, %v1630
        %v1699 = vpack.c.b16 %v1633, %v1632
        %v1700 = vpack.c.b16 %v1635, %v1634
        %v1701 = vpack.c.b16 %v1637, %v1636
        %v1702 = vpack.c.b16 %v1639, %v1638
        %v1703 = vpack.c.b16 %v1641, %v1640
        %v1704 = vpack.c.b16 %v1643, %v1642
        %v1705 = vpack.c.b16 %v1644, %v1644
        %v1707 = vsel %vm785, %v1645, 0
        %v1710 = vsel %vm785, %v1646, 0
        %v1713 = vsel %vm785, %v1647, 0
        %v1716 = vsel %vm785, %v1648, 0
        %v1719 = vsel %vm785, %v1649, 0
        %v1722 = vsel %vm785, %v1650, 0
        %v1725 = vsel %vm785, %v1651, 0
        %v1728 = vsel %vm785, %v1652, 0
        %v1731 = vsel %vm785, %v1653, 0
        %v1734 = vsel %vm785, %v1654, 0
        %v1737 = vsel %vm785, %v1655, 0
        %v1740 = vsel %vm785, %v1656, 0
        %v1743 = vsel %vm785, %v1657, 0
        %v1746 = vsel %vm785, %v1658, 0
        %v1749 = vsel %vm785, %v1659, 0
        %v1752 = vsel %vm785, %v1660, 0
        %v1755 = vsel %vm785, %v1661, 0
        %v1758 = vsel %vm785, %v1662, 0
        %v1761 = vsel %vm785, %v1663, 0
        %v1764 = vsel %vm785, %v1664, 0
        %v1767 = vsel %vm785, %v1665, 0
        %v1770 = vsel %vm785, %v1666, 0
        %v1773 = vsel %vm785, %v1667, 0
        %v1776 = vsel %vm785, %v1668, 0
        %v1779 = vsel %vm785, %v1669, 0
        %v1782 = vsel %vm785, %v1670, 0
        %v1785 = vsel %vm785, %v1671, 0
        %v1788 = vsel %vm785, %v1672, 0
        %v1791 = vsel %vm785, %v1673, 0
        %v1794 = vsel %vm785, %v1674, 0
        %v1797 = vsel %vm785, %v1675, 0
        %v1800 = vsel %vm785, %v1676, 0
        %v1803 = vsel %vm785, %v1677, 0
        %v1806 = vsel %vm785, %v1678, 0
        %v1809 = vsel %vm785, %v1679, 0
        %v1812 = vsel %vm785, %v1680, 0
        %v1815 = vsel %vm785, %v1681, 0
        %v1818 = vsel %vm785, %v1682, 0
        %v1821 = vsel %vm785, %v1683, 0
        %v1824 = vsel %vm785, %v1684, 0
        %v1827 = vsel %vm785, %v1685, 0
        %v1830 = vsel %vm785, %v1686, 0
        %v1833 = vsel %vm785, %v1687, 0
        %v1836 = vsel %vm785, %v1688, 0
        %v1839 = vsel %vm785, %v1689, 0
        %v1842 = vsel %vm785, %v1690, 0
        %v1845 = vsel %vm785, %v1691, 0
        %v1848 = vsel %vm785, %v1692, 0
        %v1851 = vsel %vm785, %v1693, 0
        %v1854 = vsel %vm785, %v1694, 0
        %v1857 = vsel %vm785, %v1695, 0
        %v1860 = vsel %vm785, %v1696, 0
        %v1863 = vsel %vm785, %v1697, 0
        %v1866 = vsel %vm785, %v1698, 0
        %v1869 = vsel %vm785, %v1699, 0
        %v1872 = vsel %vm785, %v1700, 0
        %v1875 = vsel %vm785, %v1701, 0
        %v1878 = vsel %vm785, %v1702, 0
        %v1881 = vsel %vm785, %v1703, 0
        %v1884 = vsel %vm785, %v1704, 0
        %v1887 = vsel %vm785, %v1705, 0
        %1889 = vmatpush.bf16.msra.mxu0 0
        %1890 = vmatpush.bf16.msra.mxu0 0
        %1891 = vmatpush.bf16.msra.mxu0 0
        %1892 = vmatpush.bf16.msra.mxu0 0
        %1893 = vmatpush.bf16.msra.mxu0 0
        %1894 = vmatpush.bf16.msra.mxu0 0
        %1895 = vmatpush.bf16.msra.mxu0 %v782
        %1896 = vmatpush.bf16.msra.mxu0 %v781
        %1897 = vmatmul.bf16.gmra.mxu0 %v1707
        %v1898 = vpop.f32.mrf.mxu0
        %v1899 = vadd.f32 0.0, %v1898
        %v1900 = vpop.f32.mrf.mxu0
        %v1901 = vadd.f32 0.0, %v1900
        %1902 = vmatmul.bf16.gmra.mxu0 %v1710
        %v1903 = vpop.f32.mrf.mxu0
        %v1904 = vadd.f32 0.0, %v1903
        %v1905 = vpop.f32.mrf.mxu0
        %v1906 = vadd.f32 0.0, %v1905
        %1907 = vmatmul.bf16.gmra.mxu0 %v1713
        %v1908 = vpop.f32.mrf.mxu0
        %v1909 = vadd.f32 0.0, %v1908
        %v1910 = vpop.f32.mrf.mxu0
        %v1911 = vadd.f32 0.0, %v1910
        %1912 = vmatmul.bf16.gmra.mxu0 %v1716
        %v1913 = vpop.f32.mrf.mxu0
        %v1914 = vadd.f32 0.0, %v1913
        %v1915 = vpop.f32.mrf.mxu0
        %v1916 = vadd.f32 0.0, %v1915
        %1917 = vmatmul.bf16.gmra.mxu0 %v1719
        %v1918 = vpop.f32.mrf.mxu0
        %v1919 = vadd.f32 0.0, %v1918
        %v1920 = vpop.f32.mrf.mxu0
        %v1921 = vadd.f32 0.0, %v1920
        %1922 = vmatmul.bf16.gmra.mxu0 %v1722
        %v1923 = vpop.f32.mrf.mxu0
        %v1924 = vadd.f32 0.0, %v1923
        %v1925 = vpop.f32.mrf.mxu0
        %v1926 = vadd.f32 0.0, %v1925
        %1927 = vmatmul.bf16.gmra.mxu0 %v1725
        %v1928 = vpop.f32.mrf.mxu0
        %v1929 = vadd.f32 0.0, %v1928
        %v1930 = vpop.f32.mrf.mxu0
        %v1931 = vadd.f32 0.0, %v1930
        %1932 = vmatmul.bf16.gmra.mxu0 %v1728
        %v1933 = vpop.f32.mrf.mxu0
        %v1934 = vadd.f32 0.0, %v1933
        %v1935 = vpop.f32.mrf.mxu0
        %v1936 = vadd.f32 0.0, %v1935
        %1937 = vmatmul.bf16.gmra.mxu0 %v1731
        %v1938 = vpop.f32.mrf.mxu0
        %v1939 = vadd.f32 0.0, %v1938
        %v1940 = vpop.f32.mrf.mxu0
        %v1941 = vadd.f32 0.0, %v1940
        %1942 = vmatmul.bf16.gmra.mxu0 %v1734
        %v1943 = vpop.f32.mrf.mxu0
        %v1944 = vadd.f32 0.0, %v1943
        %v1945 = vpop.f32.mrf.mxu0
        %v1946 = vadd.f32 0.0, %v1945
        %1947 = vmatmul.bf16.gmra.mxu0 %v1737
        %v1948 = vpop.f32.mrf.mxu0
        %v1949 = vadd.f32 0.0, %v1948
        %v1950 = vpop.f32.mrf.mxu0
        %v1951 = vadd.f32 0.0, %v1950
        %1952 = vmatmul.bf16.gmra.mxu0 %v1740
        %v1953 = vpop.f32.mrf.mxu0
        %v1954 = vadd.f32 0.0, %v1953
        %v1955 = vpop.f32.mrf.mxu0
        %v1956 = vadd.f32 0.0, %v1955
        %1957 = vmatmul.bf16.gmra.mxu0 %v1743
        %v1958 = vpop.f32.mrf.mxu0
        %v1959 = vadd.f32 0.0, %v1958
        %v1960 = vpop.f32.mrf.mxu0
        %v1961 = vadd.f32 0.0, %v1960
        %1962 = vmatmul.bf16.gmra.mxu0 %v1746
        %v1963 = vpop.f32.mrf.mxu0
        %v1964 = vadd.f32 0.0, %v1963
        %v1965 = vpop.f32.mrf.mxu0
        %v1966 = vadd.f32 0.0, %v1965
        %1967 = vmatmul.bf16.gmra.mxu0 %v1749
        %v1968 = vpop.f32.mrf.mxu0
        %v1969 = vadd.f32 0.0, %v1968
        %v1970 = vpop.f32.mrf.mxu0
        %v1971 = vadd.f32 0.0, %v1970
        %1972 = vmatmul.bf16.gmra.mxu0 %v1752
        %v1973 = vpop.f32.mrf.mxu0
        %v1974 = vadd.f32 0.0, %v1973
        %v1975 = vpop.f32.mrf.mxu0
        %v1976 = vadd.f32 0.0, %v1975
        %1977 = vmatmul.bf16.gmra.mxu0 %v1755
        %v1978 = vpop.f32.mrf.mxu0
        %v1979 = vadd.f32 0.0, %v1978
        %v1980 = vpop.f32.mrf.mxu0
        %v1981 = vadd.f32 0.0, %v1980
        %1982 = vmatmul.bf16.gmra.mxu0 %v1758
        %v1983 = vpop.f32.mrf.mxu0
        %v1984 = vadd.f32 0.0, %v1983
        %v1985 = vpop.f32.mrf.mxu0
        %v1986 = vadd.f32 0.0, %v1985
        %1987 = vmatmul.bf16.gmra.mxu0 %v1761
        %v1988 = vpop.f32.mrf.mxu0
        %v1989 = vadd.f32 0.0, %v1988
        %v1990 = vpop.f32.mrf.mxu0
        %v1991 = vadd.f32 0.0, %v1990
        %1992 = vmatmul.bf16.gmra.mxu0 %v1764
        %v1993 = vpop.f32.mrf.mxu0
        %v1994 = vadd.f32 0.0, %v1993
        %v1995 = vpop.f32.mrf.mxu0
        %v1996 = vadd.f32 0.0, %v1995
        %1997 = vmatmul.bf16.gmra.mxu0 %v1767
        %v1998 = vpop.f32.mrf.mxu0
        %v1999 = vadd.f32 0.0, %v1998
        %v2000 = vpop.f32.mrf.mxu0
        %v2001 = vadd.f32 0.0, %v2000
        %2002 = vmatmul.bf16.gmra.mxu0 %v1770
        %v2003 = vpop.f32.mrf.mxu0
        %v2004 = vadd.f32 0.0, %v2003
        %v2005 = vpop.f32.mrf.mxu0
        %v2006 = vadd.f32 0.0, %v2005
        %2007 = vmatmul.bf16.gmra.mxu0 %v1773
        %v2008 = vpop.f32.mrf.mxu0
        %v2009 = vadd.f32 0.0, %v2008
        %v2010 = vpop.f32.mrf.mxu0
        %v2011 = vadd.f32 0.0, %v2010
        %2012 = vmatmul.bf16.gmra.mxu0 %v1776
        %v2013 = vpop.f32.mrf.mxu0
        %v2014 = vadd.f32 0.0, %v2013
        %v2015 = vpop.f32.mrf.mxu0
        %v2016 = vadd.f32 0.0, %v2015
        %2017 = vmatmul.bf16.gmra.mxu0 %v1779
        %v2018 = vpop.f32.mrf.mxu0
        %v2019 = vadd.f32 0.0, %v2018
        %v2020 = vpop.f32.mrf.mxu0
        %v2021 = vadd.f32 0.0, %v2020
        %2022 = vmatmul.bf16.gmra.mxu0 %v1782
        %v2023 = vpop.f32.mrf.mxu0
        %v2024 = vadd.f32 0.0, %v2023
        %v2025 = vpop.f32.mrf.mxu0
        %v2026 = vadd.f32 0.0, %v2025
        %2027 = vmatmul.bf16.gmra.mxu0 %v1785
        %v2028 = vpop.f32.mrf.mxu0
        %v2029 = vadd.f32 0.0, %v2028
        %v2030 = vpop.f32.mrf.mxu0
        %v2031 = vadd.f32 0.0, %v2030
        %2032 = vmatmul.bf16.gmra.mxu0 %v1788
        %v2033 = vpop.f32.mrf.mxu0
        %v2034 = vadd.f32 0.0, %v2033
        %v2035 = vpop.f32.mrf.mxu0
        %v2036 = vadd.f32 0.0, %v2035
        %2037 = vmatmul.bf16.gmra.mxu0 %v1791
        %v2038 = vpop.f32.mrf.mxu0
        %v2039 = vadd.f32 0.0, %v2038
        %v2040 = vpop.f32.mrf.mxu0
        %v2041 = vadd.f32 0.0, %v2040
        %2042 = vmatmul.bf16.gmra.mxu0 %v1794
        %v2043 = vpop.f32.mrf.mxu0
        %v2044 = vadd.f32 0.0, %v2043
        %v2045 = vpop.f32.mrf.mxu0
        %v2046 = vadd.f32 0.0, %v2045
        %2047 = vmatmul.bf16.gmra.mxu0 %v1797
        %v2048 = vpop.f32.mrf.mxu0
        %v2049 = vadd.f32 0.0, %v2048
        %v2050 = vpop.f32.mrf.mxu0
        %v2051 = vadd.f32 0.0, %v2050
        %2052 = vmatmul.bf16.gmra.mxu0 %v1800
        %v2053 = vpop.f32.mrf.mxu0
        %v2054 = vadd.f32 0.0, %v2053
        %v2055 = vpop.f32.mrf.mxu0
        %v2056 = vadd.f32 0.0, %v2055
        %2057 = vmatmul.bf16.gmra.mxu0 %v1803
        %v2058 = vpop.f32.mrf.mxu0
        %v2059 = vadd.f32 0.0, %v2058
        %v2060 = vpop.f32.mrf.mxu0
        %v2061 = vadd.f32 0.0, %v2060
        %2062 = vmatmul.bf16.gmra.mxu0 %v1806
        %v2063 = vpop.f32.mrf.mxu0
        %v2064 = vadd.f32 0.0, %v2063
        %v2065 = vpop.f32.mrf.mxu0
        %v2066 = vadd.f32 0.0, %v2065
        %2067 = vmatmul.bf16.gmra.mxu0 %v1809
        %v2068 = vpop.f32.mrf.mxu0
        %v2069 = vadd.f32 0.0, %v2068
        %v2070 = vpop.f32.mrf.mxu0
        %v2071 = vadd.f32 0.0, %v2070
        %2072 = vmatmul.bf16.gmra.mxu0 %v1812
        %v2073 = vpop.f32.mrf.mxu0
        %v2074 = vadd.f32 0.0, %v2073
        %v2075 = vpop.f32.mrf.mxu0
        %v2076 = vadd.f32 0.0, %v2075
        %2077 = vmatmul.bf16.gmra.mxu0 %v1815
        %v2078 = vpop.f32.mrf.mxu0
        %v2079 = vadd.f32 0.0, %v2078
        %v2080 = vpop.f32.mrf.mxu0
        %v2081 = vadd.f32 0.0, %v2080
        %2082 = vmatmul.bf16.gmra.mxu0 %v1818
        %v2083 = vpop.f32.mrf.mxu0
        %v2084 = vadd.f32 0.0, %v2083
        %v2085 = vpop.f32.mrf.mxu0
        %v2086 = vadd.f32 0.0, %v2085
        %2087 = vmatmul.bf16.gmra.mxu0 %v1821
        %v2088 = vpop.f32.mrf.mxu0
        %v2089 = vadd.f32 0.0, %v2088
        %v2090 = vpop.f32.mrf.mxu0
        %v2091 = vadd.f32 0.0, %v2090
        %2092 = vmatmul.bf16.gmra.mxu0 %v1824
        %v2093 = vpop.f32.mrf.mxu0
        %v2094 = vadd.f32 0.0, %v2093
        %v2095 = vpop.f32.mrf.mxu0
        %v2096 = vadd.f32 0.0, %v2095
        %2097 = vmatmul.bf16.gmra.mxu0 %v1827
        %v2098 = vpop.f32.mrf.mxu0
        %v2099 = vadd.f32 0.0, %v2098
        %v2100 = vpop.f32.mrf.mxu0
        %v2101 = vadd.f32 0.0, %v2100
        %2102 = vmatmul.bf16.gmra.mxu0 %v1830
        %v2103 = vpop.f32.mrf.mxu0
        %v2104 = vadd.f32 0.0, %v2103
        %v2105 = vpop.f32.mrf.mxu0
        %v2106 = vadd.f32 0.0, %v2105
        %2107 = vmatmul.bf16.gmra.mxu0 %v1833
        %v2108 = vpop.f32.mrf.mxu0
        %v2109 = vadd.f32 0.0, %v2108
        %v2110 = vpop.f32.mrf.mxu0
        %v2111 = vadd.f32 0.0, %v2110
        %2112 = vmatmul.bf16.gmra.mxu0 %v1836
        %v2113 = vpop.f32.mrf.mxu0
        %v2114 = vadd.f32 0.0, %v2113
        %v2115 = vpop.f32.mrf.mxu0
        %v2116 = vadd.f32 0.0, %v2115
        %2117 = vmatmul.bf16.gmra.mxu0 %v1839
        %v2118 = vpop.f32.mrf.mxu0
        %v2119 = vadd.f32 0.0, %v2118
        %v2120 = vpop.f32.mrf.mxu0
        %v2121 = vadd.f32 0.0, %v2120
        %2122 = vmatmul.bf16.gmra.mxu0 %v1842
        %v2123 = vpop.f32.mrf.mxu0
        %v2124 = vadd.f32 0.0, %v2123
        %v2125 = vpop.f32.mrf.mxu0
        %v2126 = vadd.f32 0.0, %v2125
        %2127 = vmatmul.bf16.gmra.mxu0 %v1845
        %v2128 = vpop.f32.mrf.mxu0
        %v2129 = vadd.f32 0.0, %v2128
        %v2130 = vpop.f32.mrf.mxu0
        %v2131 = vadd.f32 0.0, %v2130
        %2132 = vmatmul.bf16.gmra.mxu0 %v1848
        %v2133 = vpop.f32.mrf.mxu0
        %v2134 = vadd.f32 0.0, %v2133
        %v2135 = vpop.f32.mrf.mxu0
        %v2136 = vadd.f32 0.0, %v2135
        %2137 = vmatmul.bf16.gmra.mxu0 %v1851
        %v2138 = vpop.f32.mrf.mxu0
        %v2139 = vadd.f32 0.0, %v2138
        %v2140 = vpop.f32.mrf.mxu0
        %v2141 = vadd.f32 0.0, %v2140
        %2142 = vmatmul.bf16.gmra.mxu0 %v1854
        %v2143 = vpop.f32.mrf.mxu0
        %v2144 = vadd.f32 0.0, %v2143
        %v2145 = vpop.f32.mrf.mxu0
        %v2146 = vadd.f32 0.0, %v2145
        %2147 = vmatmul.bf16.gmra.mxu0 %v1857
        %v2148 = vpop.f32.mrf.mxu0
        %v2149 = vadd.f32 0.0, %v2148
        %v2150 = vpop.f32.mrf.mxu0
        %v2151 = vadd.f32 0.0, %v2150
        %2152 = vmatmul.bf16.gmra.mxu0 %v1860
        %v2153 = vpop.f32.mrf.mxu0
        %v2154 = vadd.f32 0.0, %v2153
        %v2155 = vpop.f32.mrf.mxu0
        %v2156 = vadd.f32 0.0, %v2155
        %2157 = vmatmul.bf16.gmra.mxu0 %v1863
        %v2158 = vpop.f32.mrf.mxu0
        %v2159 = vadd.f32 0.0, %v2158
        %v2160 = vpop.f32.mrf.mxu0
        %v2161 = vadd.f32 0.0, %v2160
        %2162 = vmatmul.bf16.gmra.mxu0 %v1866
        %v2163 = vpop.f32.mrf.mxu0
        %v2164 = vadd.f32 0.0, %v2163
        %v2165 = vpop.f32.mrf.mxu0
        %v2166 = vadd.f32 0.0, %v2165
        %2167 = vmatmul.bf16.gmra.mxu0 %v1869
        %v2168 = vpop.f32.mrf.mxu0
        %v2169 = vadd.f32 0.0, %v2168
        %v2170 = vpop.f32.mrf.mxu0
        %v2171 = vadd.f32 0.0, %v2170
        %2172 = vmatmul.bf16.gmra.mxu0 %v1872
        %v2173 = vpop.f32.mrf.mxu0
        %v2174 = vadd.f32 0.0, %v2173
        %v2175 = vpop.f32.mrf.mxu0
        %v2176 = vadd.f32 0.0, %v2175
        %2177 = vmatmul.bf16.gmra.mxu0 %v1875
        %v2178 = vpop.f32.mrf.mxu0
        %v2179 = vadd.f32 0.0, %v2178
        %v2180 = vpop.f32.mrf.mxu0
        %v2181 = vadd.f32 0.0, %v2180
        %2182 = vmatmul.bf16.gmra.mxu0 %v1878
        %v2183 = vpop.f32.mrf.mxu0
        %v2184 = vadd.f32 0.0, %v2183
        %v2185 = vpop.f32.mrf.mxu0
        %v2186 = vadd.f32 0.0, %v2185
        %2187 = vmatmul.bf16.gmra.mxu0 %v1881
        %v2188 = vpop.f32.mrf.mxu0
        %v2189 = vadd.f32 0.0, %v2188
        %v2190 = vpop.f32.mrf.mxu0
        %v2191 = vadd.f32 0.0, %v2190
        %2192 = vmatmul.bf16.gmra.mxu0 %v1884
        %v2193 = vpop.f32.mrf.mxu0
        %v2194 = vadd.f32 0.0, %v2193
        %v2195 = vpop.f32.mrf.mxu0
        %v2196 = vadd.f32 0.0, %v2195
        %2197 = vmatmul.bf16.gmra.mxu0 %v1887
        %v2198 = vpop.f32.mrf.mxu0
        %v2199 = vadd.f32 0.0, %v2198
        %v2200 = vpop.f32.mrf.mxu0
        %2201 = vdwg.mxu0
        %v2202 = vmax.f32 %v979, %v1899
        %v2203 = vmax.f32 %v981, %v1901
        %v2204 = vmax.f32 %v984, %v1904
        %v2205 = vmax.f32 %v986, %v1906
        %v2206 = vmax.f32 %v989, %v1909
        %v2207 = vmax.f32 %v991, %v1911
        %v2208 = vmax.f32 %v994, %v1914
        %v2209 = vmax.f32 %v996, %v1916
        %v2210 = vmax.f32 %v999, %v1919
        %v2211 = vmax.f32 %v1001, %v1921
        %v2212 = vmax.f32 %v1004, %v1924
        %v2213 = vmax.f32 %v1006, %v1926
        %v2214 = vmax.f32 %v1009, %v1929
        %v2215 = vmax.f32 %v1011, %v1931
        %v2216 = vmax.f32 %v1014, %v1934
        %v2217 = vmax.f32 %v1016, %v1936
        %v2218 = vmax.f32 %v1019, %v1939
        %v2219 = vmax.f32 %v1021, %v1941
        %v2220 = vmax.f32 %v1024, %v1944
        %v2221 = vmax.f32 %v1026, %v1946
        %v2222 = vmax.f32 %v1029, %v1949
        %v2223 = vmax.f32 %v1031, %v1951
        %v2224 = vmax.f32 %v1034, %v1954
        %v2225 = vmax.f32 %v1036, %v1956
        %v2226 = vmax.f32 %v1039, %v1959
        %v2227 = vmax.f32 %v1041, %v1961
        %v2228 = vmax.f32 %v1044, %v1964
        %v2229 = vmax.f32 %v1046, %v1966
        %v2230 = vmax.f32 %v1049, %v1969
        %v2231 = vmax.f32 %v1051, %v1971
        %v2232 = vmax.f32 %v1054, %v1974
        %v2233 = vmax.f32 %v1056, %v1976
        %v2234 = vmax.f32 %v1059, %v1979
        %v2235 = vmax.f32 %v1061, %v1981
        %v2236 = vmax.f32 %v1064, %v1984
        %v2237 = vmax.f32 %v1066, %v1986
        %v2238 = vmax.f32 %v1069, %v1989
        %v2239 = vmax.f32 %v1071, %v1991
        %v2240 = vmax.f32 %v1074, %v1994
        %v2241 = vmax.f32 %v1076, %v1996
        %v2242 = vmax.f32 %v1079, %v1999
        %v2243 = vmax.f32 %v1081, %v2001
        %v2244 = vmax.f32 %v1084, %v2004
        %v2245 = vmax.f32 %v1086, %v2006
        %v2246 = vmax.f32 %v1089, %v2009
        %v2247 = vmax.f32 %v1091, %v2011
        %v2248 = vmax.f32 %v1094, %v2014
        %v2249 = vmax.f32 %v1096, %v2016
        %v2250 = vmax.f32 %v1099, %v2019
        %v2251 = vmax.f32 %v1101, %v2021
        %v2252 = vmax.f32 %v1104, %v2024
        %v2253 = vmax.f32 %v1106, %v2026
        %v2254 = vmax.f32 %v1109, %v2029
        %v2255 = vmax.f32 %v1111, %v2031
        %v2256 = vmax.f32 %v1114, %v2034
        %v2257 = vmax.f32 %v1116, %v2036
        %v2258 = vmax.f32 %v1119, %v2039
        %v2259 = vmax.f32 %v1121, %v2041
        %v2260 = vmax.f32 %v1124, %v2044
        %v2261 = vmax.f32 %v1126, %v2046
        %v2262 = vmax.f32 %v1129, %v2049
        %v2263 = vmax.f32 %v1131, %v2051
        %v2264 = vmax.f32 %v1134, %v2054
        %v2265 = vmax.f32 %v1136, %v2056
        %v2266 = vmax.f32 %v1139, %v2059
        %v2267 = vmax.f32 %v1141, %v2061
        %v2268 = vmax.f32 %v1144, %v2064
        %v2269 = vmax.f32 %v1146, %v2066
        %v2270 = vmax.f32 %v1149, %v2069
        %v2271 = vmax.f32 %v1151, %v2071
        %v2272 = vmax.f32 %v1154, %v2074
        %v2273 = vmax.f32 %v1156, %v2076
        %v2274 = vmax.f32 %v1159, %v2079
        %v2275 = vmax.f32 %v1161, %v2081
        %v2276 = vmax.f32 %v1164, %v2084
        %v2277 = vmax.f32 %v1166, %v2086
        %v2278 = vmax.f32 %v1169, %v2089
        %v2279 = vmax.f32 %v1171, %v2091
        %v2280 = vmax.f32 %v1174, %v2094
        %v2281 = vmax.f32 %v1176, %v2096
        %v2282 = vmax.f32 %v1179, %v2099
        %v2283 = vmax.f32 %v1181, %v2101
        %v2284 = vmax.f32 %v1184, %v2104
        %v2285 = vmax.f32 %v1186, %v2106
        %v2286 = vmax.f32 %v1189, %v2109
        %v2287 = vmax.f32 %v1191, %v2111
        %v2288 = vmax.f32 %v1194, %v2114
        %v2289 = vmax.f32 %v1196, %v2116
        %v2290 = vmax.f32 %v1199, %v2119
        %v2291 = vmax.f32 %v1201, %v2121
        %v2292 = vmax.f32 %v1204, %v2124
        %v2293 = vmax.f32 %v1206, %v2126
        %v2294 = vmax.f32 %v1209, %v2129
        %v2295 = vmax.f32 %v1211, %v2131
        %v2296 = vmax.f32 %v1214, %v2134
        %v2297 = vmax.f32 %v1216, %v2136
        %v2298 = vmax.f32 %v1219, %v2139
        %v2299 = vmax.f32 %v1221, %v2141
        %v2300 = vmax.f32 %v1224, %v2144
        %v2301 = vmax.f32 %v1226, %v2146
        %v2302 = vmax.f32 %v1229, %v2149
        %v2303 = vmax.f32 %v1231, %v2151
        %v2304 = vmax.f32 %v1234, %v2154
        %v2305 = vmax.f32 %v1236, %v2156
        %v2306 = vmax.f32 %v1239, %v2159
        %v2307 = vmax.f32 %v1241, %v2161
        %v2308 = vmax.f32 %v1244, %v2164
        %v2309 = vmax.f32 %v1246, %v2166
        %v2310 = vmax.f32 %v1249, %v2169
        %v2311 = vmax.f32 %v1251, %v2171
        %v2312 = vmax.f32 %v1254, %v2174
        %v2313 = vmax.f32 %v1256, %v2176
        %v2314 = vmax.f32 %v1259, %v2179
        %v2315 = vmax.f32 %v1261, %v2181
        %v2316 = vmax.f32 %v1264, %v2184
        %v2317 = vmax.f32 %v1266, %v2186
        %v2318 = vmax.f32 %v1269, %v2189
        %v2319 = vmax.f32 %v1271, %v2191
        %v2320 = vmax.f32 %v1274, %v2194
        %v2321 = vmax.f32 %v1276, %v2196
        %v2322 = vmax.f32 %v1279, %v2199
        %v2323 = vld [vmem:[%s333] sm:$0xf]
        %v2324 = vld [vmem:[%s333 + $0x4] sm:$0xf]
        %v2325 = vld [vmem:[%s333 + $0x8] sm:$0xf]
        %v2326 = vld [vmem:[%s333 + $0xc] sm:$0xf]
        %v2327 = vld [vmem:[%s333 + $0x10] sm:$0xf]
        %v2328 = vld [vmem:[%s333 + $0x14] sm:$0xf]
        %v2329 = vld [vmem:[%s333 + $0x18] sm:$0xf]
        %v2330 = vld [vmem:[%s333 + $0x1c] sm:$0xf]
        %v2331 = vld [vmem:[%s333 + $0x20] sm:$0xf]
        %v2332 = vld [vmem:[%s333 + $0x24] sm:$0xf]
        %v2333 = vld [vmem:[%s333 + $0x28] sm:$0xf]
        %v2334 = vld [vmem:[%s333 + $0x2c] sm:$0xf]
        %v2335 = vld [vmem:[%s333 + $0x30] sm:$0xf]
        %v2336 = vld [vmem:[%s333 + $0x34] sm:$0xf]
        %v2337 = vld [vmem:[%s333 + $0x38] sm:$0xf]
        %v2338 = vld [vmem:[%s333 + $0x3c] sm:$0xf]
        %v2339 = vld [vmem:[%s333 + $0x40] sm:$0xf]
        %v2340 = vld [vmem:[%s333 + $0x44] sm:$0xf]
        %v2341 = vld [vmem:[%s333 + $0x48] sm:$0xf]
        %v2342 = vld [vmem:[%s333 + $0x4c] sm:$0xf]
        %v2343 = vld [vmem:[%s333 + $0x50] sm:$0xf]
        %v2344 = vld [vmem:[%s333 + $0x54] sm:$0xf]
        %v2345 = vld [vmem:[%s333 + $0x58] sm:$0xf]
        %v2346 = vld [vmem:[%s333 + $0x5c] sm:$0xf]
        %v2347 = vld [vmem:[%s333 + $0x60] sm:$0xf]
        %v2348 = vld [vmem:[%s333 + $0x64] sm:$0xf]
        %v2349 = vld [vmem:[%s333 + $0x68] sm:$0xf]
        %v2350 = vld [vmem:[%s333 + $0x6c] sm:$0xf]
        %v2351 = vld [vmem:[%s333 + $0x70] sm:$0xf]
        %v2352 = vld [vmem:[%s333 + $0x74] sm:$0xf]
        %v2353 = vld [vmem:[%s333 + $0x78] sm:$0xf]
        %v2354 = vld [vmem:[%s333 + $0x7c] sm:$0xf]
        %v2355 = vld [vmem:[%s333 + $0x80] sm:$0xf]
        %v2356 = vld [vmem:[%s333 + $0x84] sm:$0xf]
        %v2357 = vld [vmem:[%s333 + $0x88] sm:$0xf]
        %v2358 = vld [vmem:[%s333 + $0x8c] sm:$0xf]
        %v2359 = vld [vmem:[%s333 + $0x90] sm:$0xf]
        %v2360 = vld [vmem:[%s333 + $0x94] sm:$0xf]
        %v2361 = vld [vmem:[%s333 + $0x98] sm:$0xf]
        %v2362 = vld [vmem:[%s333 + $0x9c] sm:$0xf]
        %v2363 = vld [vmem:[%s333 + $0xa0] sm:$0xf]
        %v2364 = vld [vmem:[%s333 + $0xa4] sm:$0xf]
        %v2365 = vld [vmem:[%s333 + $0xa8] sm:$0xf]
        %v2366 = vld [vmem:[%s333 + $0xac] sm:$0xf]
        %v2367 = vld [vmem:[%s333 + $0xb0] sm:$0xf]
        %v2368 = vld [vmem:[%s333 + $0xb4] sm:$0xf]
        %v2369 = vld [vmem:[%s333 + $0xb8] sm:$0xf]
        %v2370 = vld [vmem:[%s333 + $0xbc] sm:$0xf]
        %v2371 = vld [vmem:[%s333 + $0xc0] sm:$0xf]
        %v2372 = vld [vmem:[%s333 + $0xc4] sm:$0xf]
        %v2373 = vld [vmem:[%s333 + $0xc8] sm:$0xf]
        %v2374 = vld [vmem:[%s333 + $0xcc] sm:$0xf]
        %v2375 = vld [vmem:[%s333 + $0xd0] sm:$0xf]
        %v2376 = vld [vmem:[%s333 + $0xd4] sm:$0xf]
        %v2377 = vld [vmem:[%s333 + $0xd8] sm:$0xf]
        %v2378 = vld [vmem:[%s333 + $0xdc] sm:$0xf]
        %v2379 = vld [vmem:[%s333 + $0xe0] sm:$0xf]
        %v2380 = vld [vmem:[%s333 + $0xe4] sm:$0xf]
        %v2381 = vld [vmem:[%s333 + $0xe8] sm:$0xf]
        %v2382 = vld [vmem:[%s333 + $0xec] sm:$0xf]
        %v2383 = vld [vmem:[%s333 + $0xf0] sm:$0xf]
        %v2384 = vld [vmem:[%s333 + $0xf4] sm:$0xf]
        %v2385 = vld [vmem:[%s333 + $0xf8] sm:$0xf]
        %v2386 = vld [vmem:[%s333 + $0xfc] sm:$0xf]
        %v2387 = vld [vmem:[%s333 + $0x100] sm:$0xf]
        %v2388 = vld [vmem:[%s333 + $0x104] sm:$0xf]
        %v2389 = vld [vmem:[%s333 + $0x108] sm:$0xf]
        %v2390 = vld [vmem:[%s333 + $0x10c] sm:$0xf]
        %v2391 = vld [vmem:[%s333 + $0x110] sm:$0xf]
        %v2392 = vld [vmem:[%s333 + $0x114] sm:$0xf]
        %v2393 = vld [vmem:[%s333 + $0x118] sm:$0xf]
        %v2394 = vld [vmem:[%s333 + $0x11c] sm:$0xf]
        %v2395 = vld [vmem:[%s333 + $0x120] sm:$0xf]
        %v2396 = vld [vmem:[%s333 + $0x124] sm:$0xf]
        %v2397 = vld [vmem:[%s333 + $0x128] sm:$0xf]
        %v2398 = vld [vmem:[%s333 + $0x12c] sm:$0xf]
        %v2399 = vld [vmem:[%s333 + $0x130] sm:$0xf]
        %v2400 = vld [vmem:[%s333 + $0x134] sm:$0xf]
        %v2401 = vld [vmem:[%s333 + $0x138] sm:$0xf]
        %v2402 = vld [vmem:[%s333 + $0x13c] sm:$0xf]
        %v2403 = vld [vmem:[%s333 + $0x140] sm:$0xf]
        %v2404 = vld [vmem:[%s333 + $0x144] sm:$0xf]
        %v2405 = vld [vmem:[%s333 + $0x148] sm:$0xf]
        %v2406 = vld [vmem:[%s333 + $0x14c] sm:$0xf]
        %v2407 = vld [vmem:[%s333 + $0x150] sm:$0xf]
        %v2408 = vld [vmem:[%s333 + $0x154] sm:$0xf]
        %v2409 = vld [vmem:[%s333 + $0x158] sm:$0xf]
        %v2410 = vld [vmem:[%s333 + $0x15c] sm:$0xf]
        %v2411 = vld [vmem:[%s333 + $0x160] sm:$0xf]
        %v2412 = vld [vmem:[%s333 + $0x164] sm:$0xf]
        %v2413 = vld [vmem:[%s333 + $0x168] sm:$0xf]
        %v2414 = vld [vmem:[%s333 + $0x16c] sm:$0xf]
        %v2415 = vld [vmem:[%s333 + $0x170] sm:$0xf]
        %v2416 = vld [vmem:[%s333 + $0x174] sm:$0xf]
        %v2417 = vld [vmem:[%s333 + $0x178] sm:$0xf]
        %v2418 = vld [vmem:[%s333 + $0x17c] sm:$0xf]
        %v2419 = vld [vmem:[%s333 + $0x180] sm:$0xf]
        %v2420 = vld [vmem:[%s333 + $0x184] sm:$0xf]
        %v2421 = vld [vmem:[%s333 + $0x188] sm:$0xf]
        %v2422 = vld [vmem:[%s333 + $0x18c] sm:$0xf]
        %v2423 = vld [vmem:[%s333 + $0x190] sm:$0xf]
        %v2424 = vld [vmem:[%s333 + $0x194] sm:$0xf]
        %v2425 = vld [vmem:[%s333 + $0x198] sm:$0xf]
        %v2426 = vld [vmem:[%s333 + $0x19c] sm:$0xf]
        %v2427 = vld [vmem:[%s333 + $0x1a0] sm:$0xf]
        %v2428 = vld [vmem:[%s333 + $0x1a4] sm:$0xf]
        %v2429 = vld [vmem:[%s333 + $0x1a8] sm:$0xf]
        %v2430 = vld [vmem:[%s333 + $0x1ac] sm:$0xf]
        %v2431 = vld [vmem:[%s333 + $0x1b0] sm:$0xf]
        %v2432 = vld [vmem:[%s333 + $0x1b4] sm:$0xf]
        %v2433 = vld [vmem:[%s333 + $0x1b8] sm:$0xf]
        %v2434 = vld [vmem:[%s333 + $0x1bc] sm:$0xf]
        %v2435 = vld [vmem:[%s333 + $0x1c0] sm:$0xf]
        %v2436 = vld [vmem:[%s333 + $0x1c4] sm:$0xf]
        %v2437 = vld [vmem:[%s333 + $0x1c8] sm:$0xf]
        %v2438 = vld [vmem:[%s333 + $0x1cc] sm:$0xf]
        %v2439 = vld [vmem:[%s333 + $0x1d0] sm:$0xf]
        %v2440 = vld [vmem:[%s333 + $0x1d4] sm:$0xf]
        %v2441 = vld [vmem:[%s333 + $0x1d8] sm:$0xf]
        %v2442 = vld [vmem:[%s333 + $0x1dc] sm:$0xf]
        %v2443 = vld [vmem:[%s333 + $0x1e0] sm:$0x1]
        %v2565 = vunpack.c.l.b16 %v2323
        %v2566 = vunpack.c.l.b16 %v2324
        %v2567 = vunpack.c.l.b16 %v2325
        %v2568 = vunpack.c.l.b16 %v2326
        %v2569 = vunpack.c.l.b16 %v2327
        %v2570 = vunpack.c.l.b16 %v2328
        %v2571 = vunpack.c.l.b16 %v2329
        %v2572 = vunpack.c.l.b16 %v2330
        %v2573 = vunpack.c.l.b16 %v2331
        %v2574 = vunpack.c.l.b16 %v2332
        %v2575 = vunpack.c.l.b16 %v2333
        %v2576 = vunpack.c.l.b16 %v2334
        %v2577 = vunpack.c.l.b16 %v2335
        %v2578 = vunpack.c.l.b16 %v2336
        %v2579 = vunpack.c.l.b16 %v2337
        %v2580 = vunpack.c.l.b16 %v2338
        %v2581 = vunpack.c.l.b16 %v2339
        %v2582 = vunpack.c.l.b16 %v2340
        %v2583 = vunpack.c.l.b16 %v2341
        %v2584 = vunpack.c.l.b16 %v2342
        %v2585 = vunpack.c.l.b16 %v2343
        %v2586 = vunpack.c.l.b16 %v2344
        %v2587 = vunpack.c.l.b16 %v2345
        %v2588 = vunpack.c.l.b16 %v2346
        %v2589 = vunpack.c.l.b16 %v2347
        %v2590 = vunpack.c.l.b16 %v2348
        %v2591 = vunpack.c.l.b16 %v2349
        %v2592 = vunpack.c.l.b16 %v2350
        %v2593 = vunpack.c.l.b16 %v2351
        %v2594 = vunpack.c.l.b16 %v2352
        %v2595 = vunpack.c.l.b16 %v2353
        %v2596 = vunpack.c.l.b16 %v2354
        %v2597 = vunpack.c.l.b16 %v2355
        %v2598 = vunpack.c.l.b16 %v2356
        %v2599 = vunpack.c.l.b16 %v2357
        %v2600 = vunpack.c.l.b16 %v2358
        %v2601 = vunpack.c.l.b16 %v2359
        %v2602 = vunpack.c.l.b16 %v2360
        %v2603 = vunpack.c.l.b16 %v2361
        %v2604 = vunpack.c.l.b16 %v2362
        %v2605 = vunpack.c.l.b16 %v2363
        %v2606 = vunpack.c.l.b16 %v2364
        %v2607 = vunpack.c.l.b16 %v2365
        %v2608 = vunpack.c.l.b16 %v2366
        %v2609 = vunpack.c.l.b16 %v2367
        %v2610 = vunpack.c.l.b16 %v2368
        %v2611 = vunpack.c.l.b16 %v2369
        %v2612 = vunpack.c.l.b16 %v2370
        %v2613 = vunpack.c.l.b16 %v2371
        %v2614 = vunpack.c.l.b16 %v2372
        %v2615 = vunpack.c.l.b16 %v2373
        %v2616 = vunpack.c.l.b16 %v2374
        %v2617 = vunpack.c.l.b16 %v2375
        %v2618 = vunpack.c.l.b16 %v2376
        %v2619 = vunpack.c.l.b16 %v2377
        %v2620 = vunpack.c.l.b16 %v2378
        %v2621 = vunpack.c.l.b16 %v2379
        %v2622 = vunpack.c.l.b16 %v2380
        %v2623 = vunpack.c.l.b16 %v2381
        %v2624 = vunpack.c.l.b16 %v2382
        %v2625 = vunpack.c.l.b16 %v2383
        %v2626 = vunpack.c.l.b16 %v2384
        %v2627 = vunpack.c.l.b16 %v2385
        %v2628 = vunpack.c.l.b16 %v2386
        %v2629 = vunpack.c.l.b16 %v2387
        %v2630 = vunpack.c.l.b16 %v2388
        %v2631 = vunpack.c.l.b16 %v2389
        %v2632 = vunpack.c.l.b16 %v2390
        %v2633 = vunpack.c.l.b16 %v2391
        %v2634 = vunpack.c.l.b16 %v2392
        %v2635 = vunpack.c.l.b16 %v2393
        %v2636 = vunpack.c.l.b16 %v2394
        %v2637 = vunpack.c.l.b16 %v2395
        %v2638 = vunpack.c.l.b16 %v2396
        %v2639 = vunpack.c.l.b16 %v2397
        %v2640 = vunpack.c.l.b16 %v2398
        %v2641 = vunpack.c.l.b16 %v2399
        %v2642 = vunpack.c.l.b16 %v2400
        %v2643 = vunpack.c.l.b16 %v2401
        %v2644 = vunpack.c.l.b16 %v2402
        %v2645 = vunpack.c.l.b16 %v2403
        %v2646 = vunpack.c.l.b16 %v2404
        %v2647 = vunpack.c.l.b16 %v2405
        %v2648 = vunpack.c.l.b16 %v2406
        %v2649 = vunpack.c.l.b16 %v2407
        %v2650 = vunpack.c.l.b16 %v2408
        %v2651 = vunpack.c.l.b16 %v2409
        %v2652 = vunpack.c.l.b16 %v2410
        %v2653 = vunpack.c.l.b16 %v2411
        %v2654 = vunpack.c.l.b16 %v2412
        %v2655 = vunpack.c.l.b16 %v2413
        %v2656 = vunpack.c.l.b16 %v2414
        %v2657 = vunpack.c.l.b16 %v2415
        %v2658 = vunpack.c.l.b16 %v2416
        %v2659 = vunpack.c.l.b16 %v2417
        %v2660 = vunpack.c.l.b16 %v2418
        %v2661 = vunpack.c.l.b16 %v2419
        %v2662 = vunpack.c.l.b16 %v2420
        %v2663 = vunpack.c.l.b16 %v2421
        %v2664 = vunpack.c.l.b16 %v2422
        %v2665 = vunpack.c.l.b16 %v2423
        %v2666 = vunpack.c.l.b16 %v2424
        %v2667 = vunpack.c.l.b16 %v2425
        %v2668 = vunpack.c.l.b16 %v2426
        %v2669 = vunpack.c.l.b16 %v2427
        %v2670 = vunpack.c.l.b16 %v2428
        %v2671 = vunpack.c.l.b16 %v2429
        %v2672 = vunpack.c.l.b16 %v2430
        %v2673 = vunpack.c.l.b16 %v2431
        %v2674 = vunpack.c.l.b16 %v2432
        %v2675 = vunpack.c.l.b16 %v2433
        %v2676 = vunpack.c.l.b16 %v2434
        %v2677 = vunpack.c.l.b16 %v2435
        %v2678 = vunpack.c.l.b16 %v2436
        %v2679 = vunpack.c.l.b16 %v2437
        %v2680 = vunpack.c.l.b16 %v2438
        %v2681 = vunpack.c.l.b16 %v2439
        %v2682 = vunpack.c.l.b16 %v2440
        %v2683 = vunpack.c.l.b16 %v2441
        %v2684 = vunpack.c.l.b16 %v2442
        %v2685 = vunpack.c.l.b16 %v2443
        %v2686 = vpack.c.b16 %v2566, %v2565
        %v2687 = vpack.c.b16 %v2568, %v2567
        %v2688 = vpack.c.b16 %v2570, %v2569
        %v2689 = vpack.c.b16 %v2572, %v2571
        %v2690 = vpack.c.b16 %v2574, %v2573
        %v2691 = vpack.c.b16 %v2576, %v2575
        %v2692 = vpack.c.b16 %v2578, %v2577
        %v2693 = vpack.c.b16 %v2580, %v2579
        %v2694 = vpack.c.b16 %v2582, %v2581
        %v2695 = vpack.c.b16 %v2584, %v2583
        %v2696 = vpack.c.b16 %v2586, %v2585
        %v2697 = vpack.c.b16 %v2588, %v2587
        %v2698 = vpack.c.b16 %v2590, %v2589
        %v2699 = vpack.c.b16 %v2592, %v2591
        %v2700 = vpack.c.b16 %v2594, %v2593
        %v2701 = vpack.c.b16 %v2596, %v2595
        %v2702 = vpack.c.b16 %v2598, %v2597
        %v2703 = vpack.c.b16 %v2600, %v2599
        %v2704 = vpack.c.b16 %v2602, %v2601
        %v2705 = vpack.c.b16 %v2604, %v2603
        %v2706 = vpack.c.b16 %v2606, %v2605
        %v2707 = vpack.c.b16 %v2608, %v2607
        %v2708 = vpack.c.b16 %v2610, %v2609
        %v2709 = vpack.c.b16 %v2612, %v2611
        %v2710 = vpack.c.b16 %v2614, %v2613
        %v2711 = vpack.c.b16 %v2616, %v2615
        %v2712 = vpack.c.b16 %v2618, %v2617
        %v2713 = vpack.c.b16 %v2620, %v2619
        %v2714 = vpack.c.b16 %v2622, %v2621
        %v2715 = vpack.c.b16 %v2624, %v2623
        %v2716 = vpack.c.b16 %v2626, %v2625
        %v2717 = vpack.c.b16 %v2628, %v2627
        %v2718 = vpack.c.b16 %v2630, %v2629
        %v2719 = vpack.c.b16 %v2632, %v2631
        %v2720 = vpack.c.b16 %v2634, %v2633
        %v2721 = vpack.c.b16 %v2636, %v2635
        %v2722 = vpack.c.b16 %v2638, %v2637
        %v2723 = vpack.c.b16 %v2640, %v2639
        %v2724 = vpack.c.b16 %v2642, %v2641
        %v2725 = vpack.c.b16 %v2644, %v2643
        %v2726 = vpack.c.b16 %v2646, %v2645
        %v2727 = vpack.c.b16 %v2648, %v2647
        %v2728 = vpack.c.b16 %v2650, %v2649
        %v2729 = vpack.c.b16 %v2652, %v2651
        %v2730 = vpack.c.b16 %v2654, %v2653
        %v2731 = vpack.c.b16 %v2656, %v2655
        %v2732 = vpack.c.b16 %v2658, %v2657
        %v2733 = vpack.c.b16 %v2660, %v2659
        %v2734 = vpack.c.b16 %v2662, %v2661
        %v2735 = vpack.c.b16 %v2664, %v2663
        %v2736 = vpack.c.b16 %v2666, %v2665
        %v2737 = vpack.c.b16 %v2668, %v2667
        %v2738 = vpack.c.b16 %v2670, %v2669
        %v2739 = vpack.c.b16 %v2672, %v2671
        %v2740 = vpack.c.b16 %v2674, %v2673
        %v2741 = vpack.c.b16 %v2676, %v2675
        %v2742 = vpack.c.b16 %v2678, %v2677
        %v2743 = vpack.c.b16 %v2680, %v2679
        %v2744 = vpack.c.b16 %v2682, %v2681
        %v2745 = vpack.c.b16 %v2684, %v2683
        %v2746 = vpack.c.b16 %v2685, %v2685
        %v2748 = vsel %vm785, %v2686, 0
        %v2751 = vsel %vm785, %v2687, 0
        %v2754 = vsel %vm785, %v2688, 0
        %v2757 = vsel %vm785, %v2689, 0
        %v2760 = vsel %vm785, %v2690, 0
        %v2763 = vsel %vm785, %v2691, 0
        %v2766 = vsel %vm785, %v2692, 0
        %v2769 = vsel %vm785, %v2693, 0
        %v2772 = vsel %vm785, %v2694, 0
        %v2775 = vsel %vm785, %v2695, 0
        %v2778 = vsel %vm785, %v2696, 0
        %v2781 = vsel %vm785, %v2697, 0
        %v2784 = vsel %vm785, %v2698, 0
        %v2787 = vsel %vm785, %v2699, 0
        %v2790 = vsel %vm785, %v2700, 0
        %v2793 = vsel %vm785, %v2701, 0
        %v2796 = vsel %vm785, %v2702, 0
        %v2799 = vsel %vm785, %v2703, 0
        %v2802 = vsel %vm785, %v2704, 0
        %v2805 = vsel %vm785, %v2705, 0
        %v2808 = vsel %vm785, %v2706, 0
        %v2811 = vsel %vm785, %v2707, 0
        %v2814 = vsel %vm785, %v2708, 0
        %v2817 = vsel %vm785, %v2709, 0
        %v2820 = vsel %vm785, %v2710, 0
        %v2823 = vsel %vm785, %v2711, 0
        %v2826 = vsel %vm785, %v2712, 0
        %v2829 = vsel %vm785, %v2713, 0
        %v2832 = vsel %vm785, %v2714, 0
        %v2835 = vsel %vm785, %v2715, 0
        %v2838 = vsel %vm785, %v2716, 0
        %v2841 = vsel %vm785, %v2717, 0
        %v2844 = vsel %vm785, %v2718, 0
        %v2847 = vsel %vm785, %v2719, 0
        %v2850 = vsel %vm785, %v2720, 0
        %v2853 = vsel %vm785, %v2721, 0
        %v2856 = vsel %vm785, %v2722, 0
        %v2859 = vsel %vm785, %v2723, 0
        %v2862 = vsel %vm785, %v2724, 0
        %v2865 = vsel %vm785, %v2725, 0
        %v2868 = vsel %vm785, %v2726, 0
        %v2871 = vsel %vm785, %v2727, 0
        %v2874 = vsel %vm785, %v2728, 0
        %v2877 = vsel %vm785, %v2729, 0
        %v2880 = vsel %vm785, %v2730, 0
        %v2883 = vsel %vm785, %v2731, 0
        %v2886 = vsel %vm785, %v2732, 0
        %v2889 = vsel %vm785, %v2733, 0
        %v2892 = vsel %vm785, %v2734, 0
        %v2895 = vsel %vm785, %v2735, 0
        %v2898 = vsel %vm785, %v2736, 0
        %v2901 = vsel %vm785, %v2737, 0
        %v2904 = vsel %vm785, %v2738, 0
        %v2907 = vsel %vm785, %v2739, 0
        %v2910 = vsel %vm785, %v2740, 0
        %v2913 = vsel %vm785, %v2741, 0
        %v2916 = vsel %vm785, %v2742, 0
        %v2919 = vsel %vm785, %v2743, 0
        %v2922 = vsel %vm785, %v2744, 0
        %v2925 = vsel %vm785, %v2745, 0
        %v2928 = vsel %vm785, %v2746, 0
        %2930 = vmatpush.bf16.msra.mxu0 0
        %2931 = vmatpush.bf16.msra.mxu0 0
        %2932 = vmatpush.bf16.msra.mxu0 0
        %2933 = vmatpush.bf16.msra.mxu0 0
        %2934 = vmatpush.bf16.msra.mxu0 0
        %2935 = vmatpush.bf16.msra.mxu0 0
        %2936 = vmatpush.bf16.msra.mxu0 %v782
        %2937 = vmatpush.bf16.msra.mxu0 %v781
        %2938 = vmatmul.bf16.gmra.mxu0 %v2748
        %v2939 = vpop.f32.mrf.mxu0
        %v2940 = vadd.f32 0.0, %v2939
        %v2941 = vpop.f32.mrf.mxu0
        %v2942 = vadd.f32 0.0, %v2941
        %2943 = vmatmul.bf16.gmra.mxu0 %v2751
        %v2944 = vpop.f32.mrf.mxu0
        %v2945 = vadd.f32 0.0, %v2944
        %v2946 = vpop.f32.mrf.mxu0
        %v2947 = vadd.f32 0.0, %v2946
        %2948 = vmatmul.bf16.gmra.mxu0 %v2754
        %v2949 = vpop.f32.mrf.mxu0
        %v2950 = vadd.f32 0.0, %v2949
        %v2951 = vpop.f32.mrf.mxu0
        %v2952 = vadd.f32 0.0, %v2951
        %2953 = vmatmul.bf16.gmra.mxu0 %v2757
        %v2954 = vpop.f32.mrf.mxu0
        %v2955 = vadd.f32 0.0, %v2954
        %v2956 = vpop.f32.mrf.mxu0
        %v2957 = vadd.f32 0.0, %v2956
        %2958 = vmatmul.bf16.gmra.mxu0 %v2760
        %v2959 = vpop.f32.mrf.mxu0
        %v2960 = vadd.f32 0.0, %v2959
        %v2961 = vpop.f32.mrf.mxu0
        %v2962 = vadd.f32 0.0, %v2961
        %2963 = vmatmul.bf16.gmra.mxu0 %v2763
        %v2964 = vpop.f32.mrf.mxu0
        %v2965 = vadd.f32 0.0, %v2964
        %v2966 = vpop.f32.mrf.mxu0
        %v2967 = vadd.f32 0.0, %v2966
        %2968 = vmatmul.bf16.gmra.mxu0 %v2766
        %v2969 = vpop.f32.mrf.mxu0
        %v2970 = vadd.f32 0.0, %v2969
        %v2971 = vpop.f32.mrf.mxu0
        %v2972 = vadd.f32 0.0, %v2971
        %2973 = vmatmul.bf16.gmra.mxu0 %v2769
        %v2974 = vpop.f32.mrf.mxu0
        %v2975 = vadd.f32 0.0, %v2974
        %v2976 = vpop.f32.mrf.mxu0
        %v2977 = vadd.f32 0.0, %v2976
        %2978 = vmatmul.bf16.gmra.mxu0 %v2772
        %v2979 = vpop.f32.mrf.mxu0
        %v2980 = vadd.f32 0.0, %v2979
        %v2981 = vpop.f32.mrf.mxu0
        %v2982 = vadd.f32 0.0, %v2981
        %2983 = vmatmul.bf16.gmra.mxu0 %v2775
        %v2984 = vpop.f32.mrf.mxu0
        %v2985 = vadd.f32 0.0, %v2984
        %v2986 = vpop.f32.mrf.mxu0
        %v2987 = vadd.f32 0.0, %v2986
        %2988 = vmatmul.bf16.gmra.mxu0 %v2778
        %v2989 = vpop.f32.mrf.mxu0
        %v2990 = vadd.f32 0.0, %v2989
        %v2991 = vpop.f32.mrf.mxu0
        %v2992 = vadd.f32 0.0, %v2991
        %2993 = vmatmul.bf16.gmra.mxu0 %v2781
        %v2994 = vpop.f32.mrf.mxu0
        %v2995 = vadd.f32 0.0, %v2994
        %v2996 = vpop.f32.mrf.mxu0
        %v2997 = vadd.f32 0.0, %v2996
        %2998 = vmatmul.bf16.gmra.mxu0 %v2784
        %v2999 = vpop.f32.mrf.mxu0
        %v3000 = vadd.f32 0.0, %v2999
        %v3001 = vpop.f32.mrf.mxu0
        %v3002 = vadd.f32 0.0, %v3001
        %3003 = vmatmul.bf16.gmra.mxu0 %v2787
        %v3004 = vpop.f32.mrf.mxu0
        %v3005 = vadd.f32 0.0, %v3004
        %v3006 = vpop.f32.mrf.mxu0
        %v3007 = vadd.f32 0.0, %v3006
        %3008 = vmatmul.bf16.gmra.mxu0 %v2790
        %v3009 = vpop.f32.mrf.mxu0
        %v3010 = vadd.f32 0.0, %v3009
        %v3011 = vpop.f32.mrf.mxu0
        %v3012 = vadd.f32 0.0, %v3011
        %3013 = vmatmul.bf16.gmra.mxu0 %v2793
        %v3014 = vpop.f32.mrf.mxu0
        %v3015 = vadd.f32 0.0, %v3014
        %v3016 = vpop.f32.mrf.mxu0
        %v3017 = vadd.f32 0.0, %v3016
        %3018 = vmatmul.bf16.gmra.mxu0 %v2796
        %v3019 = vpop.f32.mrf.mxu0
        %v3020 = vadd.f32 0.0, %v3019
        %v3021 = vpop.f32.mrf.mxu0
        %v3022 = vadd.f32 0.0, %v3021
        %3023 = vmatmul.bf16.gmra.mxu0 %v2799
        %v3024 = vpop.f32.mrf.mxu0
        %v3025 = vadd.f32 0.0, %v3024
        %v3026 = vpop.f32.mrf.mxu0
        %v3027 = vadd.f32 0.0, %v3026
        %3028 = vmatmul.bf16.gmra.mxu0 %v2802
        %v3029 = vpop.f32.mrf.mxu0
        %v3030 = vadd.f32 0.0, %v3029
        %v3031 = vpop.f32.mrf.mxu0
        %v3032 = vadd.f32 0.0, %v3031
        %3033 = vmatmul.bf16.gmra.mxu0 %v2805
        %v3034 = vpop.f32.mrf.mxu0
        %v3035 = vadd.f32 0.0, %v3034
        %v3036 = vpop.f32.mrf.mxu0
        %v3037 = vadd.f32 0.0, %v3036
        %3038 = vmatmul.bf16.gmra.mxu0 %v2808
        %v3039 = vpop.f32.mrf.mxu0
        %v3040 = vadd.f32 0.0, %v3039
        %v3041 = vpop.f32.mrf.mxu0
        %v3042 = vadd.f32 0.0, %v3041
        %3043 = vmatmul.bf16.gmra.mxu0 %v2811
        %v3044 = vpop.f32.mrf.mxu0
        %v3045 = vadd.f32 0.0, %v3044
        %v3046 = vpop.f32.mrf.mxu0
        %v3047 = vadd.f32 0.0, %v3046
        %3048 = vmatmul.bf16.gmra.mxu0 %v2814
        %v3049 = vpop.f32.mrf.mxu0
        %v3050 = vadd.f32 0.0, %v3049
        %v3051 = vpop.f32.mrf.mxu0
        %v3052 = vadd.f32 0.0, %v3051
        %3053 = vmatmul.bf16.gmra.mxu0 %v2817
        %v3054 = vpop.f32.mrf.mxu0
        %v3055 = vadd.f32 0.0, %v3054
        %v3056 = vpop.f32.mrf.mxu0
        %v3057 = vadd.f32 0.0, %v3056
        %3058 = vmatmul.bf16.gmra.mxu0 %v2820
        %v3059 = vpop.f32.mrf.mxu0
        %v3060 = vadd.f32 0.0, %v3059
        %v3061 = vpop.f32.mrf.mxu0
        %v3062 = vadd.f32 0.0, %v3061
        %3063 = vmatmul.bf16.gmra.mxu0 %v2823
        %v3064 = vpop.f32.mrf.mxu0
        %v3065 = vadd.f32 0.0, %v3064
        %v3066 = vpop.f32.mrf.mxu0
        %v3067 = vadd.f32 0.0, %v3066
        %3068 = vmatmul.bf16.gmra.mxu0 %v2826
        %v3069 = vpop.f32.mrf.mxu0
        %v3070 = vadd.f32 0.0, %v3069
        %v3071 = vpop.f32.mrf.mxu0
        %v3072 = vadd.f32 0.0, %v3071
        %3073 = vmatmul.bf16.gmra.mxu0 %v2829
        %v3074 = vpop.f32.mrf.mxu0
        %v3075 = vadd.f32 0.0, %v3074
        %v3076 = vpop.f32.mrf.mxu0
        %v3077 = vadd.f32 0.0, %v3076
        %3078 = vmatmul.bf16.gmra.mxu0 %v2832
        %v3079 = vpop.f32.mrf.mxu0
        %v3080 = vadd.f32 0.0, %v3079
        %v3081 = vpop.f32.mrf.mxu0
        %v3082 = vadd.f32 0.0, %v3081
        %3083 = vmatmul.bf16.gmra.mxu0 %v2835
        %v3084 = vpop.f32.mrf.mxu0
        %v3085 = vadd.f32 0.0, %v3084
        %v3086 = vpop.f32.mrf.mxu0
        %v3087 = vadd.f32 0.0, %v3086
        %3088 = vmatmul.bf16.gmra.mxu0 %v2838
        %v3089 = vpop.f32.mrf.mxu0
        %v3090 = vadd.f32 0.0, %v3089
        %v3091 = vpop.f32.mrf.mxu0
        %v3092 = vadd.f32 0.0, %v3091
        %3093 = vmatmul.bf16.gmra.mxu0 %v2841
        %v3094 = vpop.f32.mrf.mxu0
        %v3095 = vadd.f32 0.0, %v3094
        %v3096 = vpop.f32.mrf.mxu0
        %v3097 = vadd.f32 0.0, %v3096
        %3098 = vmatmul.bf16.gmra.mxu0 %v2844
        %v3099 = vpop.f32.mrf.mxu0
        %v3100 = vadd.f32 0.0, %v3099
        %v3101 = vpop.f32.mrf.mxu0
        %v3102 = vadd.f32 0.0, %v3101
        %3103 = vmatmul.bf16.gmra.mxu0 %v2847
        %v3104 = vpop.f32.mrf.mxu0
        %v3105 = vadd.f32 0.0, %v3104
        %v3106 = vpop.f32.mrf.mxu0
        %v3107 = vadd.f32 0.0, %v3106
        %3108 = vmatmul.bf16.gmra.mxu0 %v2850
        %v3109 = vpop.f32.mrf.mxu0
        %v3110 = vadd.f32 0.0, %v3109
        %v3111 = vpop.f32.mrf.mxu0
        %v3112 = vadd.f32 0.0, %v3111
        %3113 = vmatmul.bf16.gmra.mxu0 %v2853
        %v3114 = vpop.f32.mrf.mxu0
        %v3115 = vadd.f32 0.0, %v3114
        %v3116 = vpop.f32.mrf.mxu0
        %v3117 = vadd.f32 0.0, %v3116
        %3118 = vmatmul.bf16.gmra.mxu0 %v2856
        %v3119 = vpop.f32.mrf.mxu0
        %v3120 = vadd.f32 0.0, %v3119
        %v3121 = vpop.f32.mrf.mxu0
        %v3122 = vadd.f32 0.0, %v3121
        %3123 = vmatmul.bf16.gmra.mxu0 %v2859
        %v3124 = vpop.f32.mrf.mxu0
        %v3125 = vadd.f32 0.0, %v3124
        %v3126 = vpop.f32.mrf.mxu0
        %v3127 = vadd.f32 0.0, %v3126
        %3128 = vmatmul.bf16.gmra.mxu0 %v2862
        %v3129 = vpop.f32.mrf.mxu0
        %v3130 = vadd.f32 0.0, %v3129
        %v3131 = vpop.f32.mrf.mxu0
        %v3132 = vadd.f32 0.0, %v3131
        %3133 = vmatmul.bf16.gmra.mxu0 %v2865
        %v3134 = vpop.f32.mrf.mxu0
        %v3135 = vadd.f32 0.0, %v3134
        %v3136 = vpop.f32.mrf.mxu0
        %v3137 = vadd.f32 0.0, %v3136
        %3138 = vmatmul.bf16.gmra.mxu0 %v2868
        %v3139 = vpop.f32.mrf.mxu0
        %v3140 = vadd.f32 0.0, %v3139
        %v3141 = vpop.f32.mrf.mxu0
        %v3142 = vadd.f32 0.0, %v3141
        %3143 = vmatmul.bf16.gmra.mxu0 %v2871
        %v3144 = vpop.f32.mrf.mxu0
        %v3145 = vadd.f32 0.0, %v3144
        %v3146 = vpop.f32.mrf.mxu0
        %v3147 = vadd.f32 0.0, %v3146
        %3148 = vmatmul.bf16.gmra.mxu0 %v2874
        %v3149 = vpop.f32.mrf.mxu0
        %v3150 = vadd.f32 0.0, %v3149
        %v3151 = vpop.f32.mrf.mxu0
        %v3152 = vadd.f32 0.0, %v3151
        %3153 = vmatmul.bf16.gmra.mxu0 %v2877
        %v3154 = vpop.f32.mrf.mxu0
        %v3155 = vadd.f32 0.0, %v3154
        %v3156 = vpop.f32.mrf.mxu0
        %v3157 = vadd.f32 0.0, %v3156
        %3158 = vmatmul.bf16.gmra.mxu0 %v2880
        %v3159 = vpop.f32.mrf.mxu0
        %v3160 = vadd.f32 0.0, %v3159
        %v3161 = vpop.f32.mrf.mxu0
        %v3162 = vadd.f32 0.0, %v3161
        %3163 = vmatmul.bf16.gmra.mxu0 %v2883
        %v3164 = vpop.f32.mrf.mxu0
        %v3165 = vadd.f32 0.0, %v3164
        %v3166 = vpop.f32.mrf.mxu0
        %v3167 = vadd.f32 0.0, %v3166
        %3168 = vmatmul.bf16.gmra.mxu0 %v2886
        %v3169 = vpop.f32.mrf.mxu0
        %v3170 = vadd.f32 0.0, %v3169
        %v3171 = vpop.f32.mrf.mxu0
        %v3172 = vadd.f32 0.0, %v3171
        %3173 = vmatmul.bf16.gmra.mxu0 %v2889
        %v3174 = vpop.f32.mrf.mxu0
        %v3175 = vadd.f32 0.0, %v3174
        %v3176 = vpop.f32.mrf.mxu0
        %v3177 = vadd.f32 0.0, %v3176
        %3178 = vmatmul.bf16.gmra.mxu0 %v2892
        %v3179 = vpop.f32.mrf.mxu0
        %v3180 = vadd.f32 0.0, %v3179
        %v3181 = vpop.f32.mrf.mxu0
        %v3182 = vadd.f32 0.0, %v3181
        %3183 = vmatmul.bf16.gmra.mxu0 %v2895
        %v3184 = vpop.f32.mrf.mxu0
        %v3185 = vadd.f32 0.0, %v3184
        %v3186 = vpop.f32.mrf.mxu0
        %v3187 = vadd.f32 0.0, %v3186
        %3188 = vmatmul.bf16.gmra.mxu0 %v2898
        %v3189 = vpop.f32.mrf.mxu0
        %v3190 = vadd.f32 0.0, %v3189
        %v3191 = vpop.f32.mrf.mxu0
        %v3192 = vadd.f32 0.0, %v3191
        %3193 = vmatmul.bf16.gmra.mxu0 %v2901
        %v3194 = vpop.f32.mrf.mxu0
        %v3195 = vadd.f32 0.0, %v3194
        %v3196 = vpop.f32.mrf.mxu0
        %v3197 = vadd.f32 0.0, %v3196
        %3198 = vmatmul.bf16.gmra.mxu0 %v2904
        %v3199 = vpop.f32.mrf.mxu0
        %v3200 = vadd.f32 0.0, %v3199
        %v3201 = vpop.f32.mrf.mxu0
        %v3202 = vadd.f32 0.0, %v3201
        %3203 = vmatmul.bf16.gmra.mxu0 %v2907
        %v3204 = vpop.f32.mrf.mxu0
        %v3205 = vadd.f32 0.0, %v3204
        %v3206 = vpop.f32.mrf.mxu0
        %v3207 = vadd.f32 0.0, %v3206
        %3208 = vmatmul.bf16.gmra.mxu0 %v2910
        %v3209 = vpop.f32.mrf.mxu0
        %v3210 = vadd.f32 0.0, %v3209
        %v3211 = vpop.f32.mrf.mxu0
        %v3212 = vadd.f32 0.0, %v3211
        %3213 = vmatmul.bf16.gmra.mxu0 %v2913
        %v3214 = vpop.f32.mrf.mxu0
        %v3215 = vadd.f32 0.0, %v3214
        %v3216 = vpop.f32.mrf.mxu0
        %v3217 = vadd.f32 0.0, %v3216
        %3218 = vmatmul.bf16.gmra.mxu0 %v2916
        %v3219 = vpop.f32.mrf.mxu0
        %v3220 = vadd.f32 0.0, %v3219
        %v3221 = vpop.f32.mrf.mxu0
        %v3222 = vadd.f32 0.0, %v3221
        %3223 = vmatmul.bf16.gmra.mxu0 %v2919
        %v3224 = vpop.f32.mrf.mxu0
        %v3225 = vadd.f32 0.0, %v3224
        %v3226 = vpop.f32.mrf.mxu0
        %v3227 = vadd.f32 0.0, %v3226
        %3228 = vmatmul.bf16.gmra.mxu0 %v2922
        %v3229 = vpop.f32.mrf.mxu0
        %v3230 = vadd.f32 0.0, %v3229
        %v3231 = vpop.f32.mrf.mxu0
        %v3232 = vadd.f32 0.0, %v3231
        %3233 = vmatmul.bf16.gmra.mxu0 %v2925
        %v3234 = vpop.f32.mrf.mxu0
        %v3235 = vadd.f32 0.0, %v3234
        %v3236 = vpop.f32.mrf.mxu0
        %v3237 = vadd.f32 0.0, %v3236
        %3238 = vmatmul.bf16.gmra.mxu0 %v2928
        %v3239 = vpop.f32.mrf.mxu0
        %v3240 = vadd.f32 0.0, %v3239
        %v3241 = vpop.f32.mrf.mxu0
        %3242 = vdwg.mxu0
        %v3243 = vmax.f32 %v2202, %v2940
        %v3244 = vmax.f32 %v2203, %v2942
        %v3245 = vmax.f32 %v2204, %v2945
        %v3246 = vmax.f32 %v2205, %v2947
        %v3247 = vmax.f32 %v2206, %v2950
        %v3248 = vmax.f32 %v2207, %v2952
        %v3249 = vmax.f32 %v2208, %v2955
        %v3250 = vmax.f32 %v2209, %v2957
        %v3251 = vmax.f32 %v2210, %v2960
        %v3252 = vmax.f32 %v2211, %v2962
        %v3253 = vmax.f32 %v2212, %v2965
        %v3254 = vmax.f32 %v2213, %v2967
        %v3255 = vmax.f32 %v2214, %v2970
        %v3256 = vmax.f32 %v2215, %v2972
        %v3257 = vmax.f32 %v2216, %v2975
        %v3258 = vmax.f32 %v2217, %v2977
        %v3259 = vmax.f32 %v2218, %v2980
        %v3260 = vmax.f32 %v2219, %v2982
        %v3261 = vmax.f32 %v2220, %v2985
        %v3262 = vmax.f32 %v2221, %v2987
        %v3263 = vmax.f32 %v2222, %v2990
        %v3264 = vmax.f32 %v2223, %v2992
        %v3265 = vmax.f32 %v2224, %v2995
        %v3266 = vmax.f32 %v2225, %v2997
        %v3267 = vmax.f32 %v2226, %v3000
        %v3268 = vmax.f32 %v2227, %v3002
        %v3269 = vmax.f32 %v2228, %v3005
        %v3270 = vmax.f32 %v2229, %v3007
        %v3271 = vmax.f32 %v2230, %v3010
        %v3272 = vmax.f32 %v2231, %v3012
        %v3273 = vmax.f32 %v2232, %v3015
        %v3274 = vmax.f32 %v2233, %v3017
        %v3275 = vmax.f32 %v2234, %v3020
        %v3276 = vmax.f32 %v2235, %v3022
        %v3277 = vmax.f32 %v2236, %v3025
        %v3278 = vmax.f32 %v2237, %v3027
        %v3279 = vmax.f32 %v2238, %v3030
        %v3280 = vmax.f32 %v2239, %v3032
        %v3281 = vmax.f32 %v2240, %v3035
        %v3282 = vmax.f32 %v2241, %v3037
        %v3283 = vmax.f32 %v2242, %v3040
        %v3284 = vmax.f32 %v2243, %v3042
        %v3285 = vmax.f32 %v2244, %v3045
        %v3286 = vmax.f32 %v2245, %v3047
        %v3287 = vmax.f32 %v2246, %v3050
        %v3288 = vmax.f32 %v2247, %v3052
        %v3289 = vmax.f32 %v2248, %v3055
        %v3290 = vmax.f32 %v2249, %v3057
        %v3291 = vmax.f32 %v2250, %v3060
        %v3292 = vmax.f32 %v2251, %v3062
        %v3293 = vmax.f32 %v2252, %v3065
        %v3294 = vmax.f32 %v2253, %v3067
        %v3295 = vmax.f32 %v2254, %v3070
        %v3296 = vmax.f32 %v2255, %v3072
        %v3297 = vmax.f32 %v2256, %v3075
        %v3298 = vmax.f32 %v2257, %v3077
        %v3299 = vmax.f32 %v2258, %v3080
        %v3300 = vmax.f32 %v2259, %v3082
        %v3301 = vmax.f32 %v2260, %v3085
        %v3302 = vmax.f32 %v2261, %v3087
        %v3303 = vmax.f32 %v2262, %v3090
        %v3304 = vmax.f32 %v2263, %v3092
        %v3305 = vmax.f32 %v2264, %v3095
        %v3306 = vmax.f32 %v2265, %v3097
        %v3307 = vmax.f32 %v2266, %v3100
        %v3308 = vmax.f32 %v2267, %v3102
        %v3309 = vmax.f32 %v2268, %v3105
        %v3310 = vmax.f32 %v2269, %v3107
        %v3311 = vmax.f32 %v2270, %v3110
        %v3312 = vmax.f32 %v2271, %v3112
        %v3313 = vmax.f32 %v2272, %v3115
        %v3314 = vmax.f32 %v2273, %v3117
        %v3315 = vmax.f32 %v2274, %v3120
        %v3316 = vmax.f32 %v2275, %v3122
        %v3317 = vmax.f32 %v2276, %v3125
        %v3318 = vmax.f32 %v2277, %v3127
        %v3319 = vmax.f32 %v2278, %v3130
        %v3320 = vmax.f32 %v2279, %v3132
        %v3321 = vmax.f32 %v2280, %v3135
        %v3322 = vmax.f32 %v2281, %v3137
        %v3323 = vmax.f32 %v2282, %v3140
        %v3324 = vmax.f32 %v2283, %v3142
        %v3325 = vmax.f32 %v2284, %v3145
        %v3326 = vmax.f32 %v2285, %v3147
        %v3327 = vmax.f32 %v2286, %v3150
        %v3328 = vmax.f32 %v2287, %v3152
        %v3329 = vmax.f32 %v2288, %v3155
        %v3330 = vmax.f32 %v2289, %v3157
        %v3331 = vmax.f32 %v2290, %v3160
        %v3332 = vmax.f32 %v2291, %v3162
        %v3333 = vmax.f32 %v2292, %v3165
        %v3334 = vmax.f32 %v2293, %v3167
        %v3335 = vmax.f32 %v2294, %v3170
        %v3336 = vmax.f32 %v2295, %v3172
        %v3337 = vmax.f32 %v2296, %v3175
        %v3338 = vmax.f32 %v2297, %v3177
        %v3339 = vmax.f32 %v2298, %v3180
        %v3340 = vmax.f32 %v2299, %v3182
        %v3341 = vmax.f32 %v2300, %v3185
        %v3342 = vmax.f32 %v2301, %v3187
        %v3343 = vmax.f32 %v2302, %v3190
        %v3344 = vmax.f32 %v2303, %v3192
        %v3345 = vmax.f32 %v2304, %v3195
        %v3346 = vmax.f32 %v2305, %v3197
        %v3347 = vmax.f32 %v2306, %v3200
        %v3348 = vmax.f32 %v2307, %v3202
        %v3349 = vmax.f32 %v2308, %v3205
        %v3350 = vmax.f32 %v2309, %v3207
        %v3351 = vmax.f32 %v2310, %v3210
        %v3352 = vmax.f32 %v2311, %v3212
        %v3353 = vmax.f32 %v2312, %v3215
        %v3354 = vmax.f32 %v2313, %v3217
        %v3355 = vmax.f32 %v2314, %v3220
        %v3356 = vmax.f32 %v2315, %v3222
        %v3357 = vmax.f32 %v2316, %v3225
        %v3358 = vmax.f32 %v2317, %v3227
        %v3359 = vmax.f32 %v2318, %v3230
        %v3360 = vmax.f32 %v2319, %v3232
        %v3361 = vmax.f32 %v2320, %v3235
        %v3362 = vmax.f32 %v2321, %v3237
        %v3363 = vmax.f32 %v2322, %v3240
        %v3364 = vld [vmem:[%s338] sm:$0xf]
        %v3365 = vld [vmem:[%s338 + $0x4] sm:$0xf]
        %v3366 = vld [vmem:[%s338 + $0x8] sm:$0xf]
        %v3367 = vld [vmem:[%s338 + $0xc] sm:$0xf]
        %v3368 = vld [vmem:[%s338 + $0x10] sm:$0xf]
        %v3369 = vld [vmem:[%s338 + $0x14] sm:$0xf]
        %v3370 = vld [vmem:[%s338 + $0x18] sm:$0xf]
        %v3371 = vld [vmem:[%s338 + $0x1c] sm:$0xf]
        %v3372 = vld [vmem:[%s338 + $0x20] sm:$0xf]
        %v3373 = vld [vmem:[%s338 + $0x24] sm:$0xf]
        %v3374 = vld [vmem:[%s338 + $0x28] sm:$0xf]
        %v3375 = vld [vmem:[%s338 + $0x2c] sm:$0xf]
        %v3376 = vld [vmem:[%s338 + $0x30] sm:$0xf]
        %v3377 = vld [vmem:[%s338 + $0x34] sm:$0xf]
        %v3378 = vld [vmem:[%s338 + $0x38] sm:$0xf]
        %v3379 = vld [vmem:[%s338 + $0x3c] sm:$0xf]
        %v3380 = vld [vmem:[%s338 + $0x40] sm:$0xf]
        %v3381 = vld [vmem:[%s338 + $0x44] sm:$0xf]
        %v3382 = vld [vmem:[%s338 + $0x48] sm:$0xf]
        %v3383 = vld [vmem:[%s338 + $0x4c] sm:$0xf]
        %v3384 = vld [vmem:[%s338 + $0x50] sm:$0xf]
        %v3385 = vld [vmem:[%s338 + $0x54] sm:$0xf]
        %v3386 = vld [vmem:[%s338 + $0x58] sm:$0xf]
        %v3387 = vld [vmem:[%s338 + $0x5c] sm:$0xf]
        %v3388 = vld [vmem:[%s338 + $0x60] sm:$0xf]
        %v3389 = vld [vmem:[%s338 + $0x64] sm:$0xf]
        %v3390 = vld [vmem:[%s338 + $0x68] sm:$0xf]
        %v3391 = vld [vmem:[%s338 + $0x6c] sm:$0xf]
        %v3392 = vld [vmem:[%s338 + $0x70] sm:$0xf]
        %v3393 = vld [vmem:[%s338 + $0x74] sm:$0xf]
        %v3394 = vld [vmem:[%s338 + $0x78] sm:$0xf]
        %v3395 = vld [vmem:[%s338 + $0x7c] sm:$0xf]
        %v3396 = vld [vmem:[%s338 + $0x80] sm:$0xf]
        %v3397 = vld [vmem:[%s338 + $0x84] sm:$0xf]
        %v3398 = vld [vmem:[%s338 + $0x88] sm:$0xf]
        %v3399 = vld [vmem:[%s338 + $0x8c] sm:$0xf]
        %v3400 = vld [vmem:[%s338 + $0x90] sm:$0xf]
        %v3401 = vld [vmem:[%s338 + $0x94] sm:$0xf]
        %v3402 = vld [vmem:[%s338 + $0x98] sm:$0xf]
        %v3403 = vld [vmem:[%s338 + $0x9c] sm:$0xf]
        %v3404 = vld [vmem:[%s338 + $0xa0] sm:$0xf]
        %v3405 = vld [vmem:[%s338 + $0xa4] sm:$0xf]
        %v3406 = vld [vmem:[%s338 + $0xa8] sm:$0xf]
        %v3407 = vld [vmem:[%s338 + $0xac] sm:$0xf]
        %v3408 = vld [vmem:[%s338 + $0xb0] sm:$0xf]
        %v3409 = vld [vmem:[%s338 + $0xb4] sm:$0xf]
        %v3410 = vld [vmem:[%s338 + $0xb8] sm:$0xf]
        %v3411 = vld [vmem:[%s338 + $0xbc] sm:$0xf]
        %v3412 = vld [vmem:[%s338 + $0xc0] sm:$0xf]
        %v3413 = vld [vmem:[%s338 + $0xc4] sm:$0xf]
        %v3414 = vld [vmem:[%s338 + $0xc8] sm:$0xf]
        %v3415 = vld [vmem:[%s338 + $0xcc] sm:$0xf]
        %v3416 = vld [vmem:[%s338 + $0xd0] sm:$0xf]
        %v3417 = vld [vmem:[%s338 + $0xd4] sm:$0xf]
        %v3418 = vld [vmem:[%s338 + $0xd8] sm:$0xf]
        %v3419 = vld [vmem:[%s338 + $0xdc] sm:$0xf]
        %v3420 = vld [vmem:[%s338 + $0xe0] sm:$0xf]
        %v3421 = vld [vmem:[%s338 + $0xe4] sm:$0xf]
        %v3422 = vld [vmem:[%s338 + $0xe8] sm:$0xf]
        %v3423 = vld [vmem:[%s338 + $0xec] sm:$0xf]
        %v3424 = vld [vmem:[%s338 + $0xf0] sm:$0xf]
        %v3425 = vld [vmem:[%s338 + $0xf4] sm:$0xf]
        %v3426 = vld [vmem:[%s338 + $0xf8] sm:$0xf]
        %v3427 = vld [vmem:[%s338 + $0xfc] sm:$0xf]
        %v3428 = vld [vmem:[%s338 + $0x100] sm:$0xf]
        %v3429 = vld [vmem:[%s338 + $0x104] sm:$0xf]
        %v3430 = vld [vmem:[%s338 + $0x108] sm:$0xf]
        %v3431 = vld [vmem:[%s338 + $0x10c] sm:$0xf]
        %v3432 = vld [vmem:[%s338 + $0x110] sm:$0xf]
        %v3433 = vld [vmem:[%s338 + $0x114] sm:$0xf]
        %v3434 = vld [vmem:[%s338 + $0x118] sm:$0xf]
        %v3435 = vld [vmem:[%s338 + $0x11c] sm:$0xf]
        %v3436 = vld [vmem:[%s338 + $0x120] sm:$0xf]
        %v3437 = vld [vmem:[%s338 + $0x124] sm:$0xf]
        %v3438 = vld [vmem:[%s338 + $0x128] sm:$0xf]
        %v3439 = vld [vmem:[%s338 + $0x12c] sm:$0xf]
        %v3440 = vld [vmem:[%s338 + $0x130] sm:$0xf]
        %v3441 = vld [vmem:[%s338 + $0x134] sm:$0xf]
        %v3442 = vld [vmem:[%s338 + $0x138] sm:$0xf]
        %v3443 = vld [vmem:[%s338 + $0x13c] sm:$0xf]
        %v3444 = vld [vmem:[%s338 + $0x140] sm:$0xf]
        %v3445 = vld [vmem:[%s338 + $0x144] sm:$0xf]
        %v3446 = vld [vmem:[%s338 + $0x148] sm:$0xf]
        %v3447 = vld [vmem:[%s338 + $0x14c] sm:$0xf]
        %v3448 = vld [vmem:[%s338 + $0x150] sm:$0xf]
        %v3449 = vld [vmem:[%s338 + $0x154] sm:$0xf]
        %v3450 = vld [vmem:[%s338 + $0x158] sm:$0xf]
        %v3451 = vld [vmem:[%s338 + $0x15c] sm:$0xf]
        %v3452 = vld [vmem:[%s338 + $0x160] sm:$0xf]
        %v3453 = vld [vmem:[%s338 + $0x164] sm:$0xf]
        %v3454 = vld [vmem:[%s338 + $0x168] sm:$0xf]
        %v3455 = vld [vmem:[%s338 + $0x16c] sm:$0xf]
        %v3456 = vld [vmem:[%s338 + $0x170] sm:$0xf]
        %v3457 = vld [vmem:[%s338 + $0x174] sm:$0xf]
        %v3458 = vld [vmem:[%s338 + $0x178] sm:$0xf]
        %v3459 = vld [vmem:[%s338 + $0x17c] sm:$0xf]
        %v3460 = vld [vmem:[%s338 + $0x180] sm:$0xf]
        %v3461 = vld [vmem:[%s338 + $0x184] sm:$0xf]
        %v3462 = vld [vmem:[%s338 + $0x188] sm:$0xf]
        %v3463 = vld [vmem:[%s338 + $0x18c] sm:$0xf]
        %v3464 = vld [vmem:[%s338 + $0x190] sm:$0xf]
        %v3465 = vld [vmem:[%s338 + $0x194] sm:$0xf]
        %v3466 = vld [vmem:[%s338 + $0x198] sm:$0xf]
        %v3467 = vld [vmem:[%s338 + $0x19c] sm:$0xf]
        %v3468 = vld [vmem:[%s338 + $0x1a0] sm:$0xf]
        %v3469 = vld [vmem:[%s338 + $0x1a4] sm:$0xf]
        %v3470 = vld [vmem:[%s338 + $0x1a8] sm:$0xf]
        %v3471 = vld [vmem:[%s338 + $0x1ac] sm:$0xf]
        %v3472 = vld [vmem:[%s338 + $0x1b0] sm:$0xf]
        %v3473 = vld [vmem:[%s338 + $0x1b4] sm:$0xf]
        %v3474 = vld [vmem:[%s338 + $0x1b8] sm:$0xf]
        %v3475 = vld [vmem:[%s338 + $0x1bc] sm:$0xf]
        %v3476 = vld [vmem:[%s338 + $0x1c0] sm:$0xf]
        %v3477 = vld [vmem:[%s338 + $0x1c4] sm:$0xf]
        %v3478 = vld [vmem:[%s338 + $0x1c8] sm:$0xf]
        %v3479 = vld [vmem:[%s338 + $0x1cc] sm:$0xf]
        %v3480 = vld [vmem:[%s338 + $0x1d0] sm:$0xf]
        %v3481 = vld [vmem:[%s338 + $0x1d4] sm:$0xf]
        %v3482 = vld [vmem:[%s338 + $0x1d8] sm:$0xf]
        %v3483 = vld [vmem:[%s338 + $0x1dc] sm:$0xf]
        %v3484 = vld [vmem:[%s338 + $0x1e0] sm:$0x1]
        %v3606 = vunpack.c.l.b16 %v3364
        %v3607 = vunpack.c.l.b16 %v3365
        %v3608 = vunpack.c.l.b16 %v3366
        %v3609 = vunpack.c.l.b16 %v3367
        %v3610 = vunpack.c.l.b16 %v3368
        %v3611 = vunpack.c.l.b16 %v3369
        %v3612 = vunpack.c.l.b16 %v3370
        %v3613 = vunpack.c.l.b16 %v3371
        %v3614 = vunpack.c.l.b16 %v3372
        %v3615 = vunpack.c.l.b16 %v3373
        %v3616 = vunpack.c.l.b16 %v3374
        %v3617 = vunpack.c.l.b16 %v3375
        %v3618 = vunpack.c.l.b16 %v3376
        %v3619 = vunpack.c.l.b16 %v3377
        %v3620 = vunpack.c.l.b16 %v3378
        %v3621 = vunpack.c.l.b16 %v3379
        %v3622 = vunpack.c.l.b16 %v3380
        %v3623 = vunpack.c.l.b16 %v3381
        %v3624 = vunpack.c.l.b16 %v3382
        %v3625 = vunpack.c.l.b16 %v3383
        %v3626 = vunpack.c.l.b16 %v3384
        %v3627 = vunpack.c.l.b16 %v3385
        %v3628 = vunpack.c.l.b16 %v3386
        %v3629 = vunpack.c.l.b16 %v3387
        %v3630 = vunpack.c.l.b16 %v3388
        %v3631 = vunpack.c.l.b16 %v3389
        %v3632 = vunpack.c.l.b16 %v3390
        %v3633 = vunpack.c.l.b16 %v3391
        %v3634 = vunpack.c.l.b16 %v3392
        %v3635 = vunpack.c.l.b16 %v3393
        %v3636 = vunpack.c.l.b16 %v3394
        %v3637 = vunpack.c.l.b16 %v3395
        %v3638 = vunpack.c.l.b16 %v3396
        %v3639 = vunpack.c.l.b16 %v3397
        %v3640 = vunpack.c.l.b16 %v3398
        %v3641 = vunpack.c.l.b16 %v3399
        %v3642 = vunpack.c.l.b16 %v3400
        %v3643 = vunpack.c.l.b16 %v3401
        %v3644 = vunpack.c.l.b16 %v3402
        %v3645 = vunpack.c.l.b16 %v3403
        %v3646 = vunpack.c.l.b16 %v3404
        %v3647 = vunpack.c.l.b16 %v3405
        %v3648 = vunpack.c.l.b16 %v3406
        %v3649 = vunpack.c.l.b16 %v3407
        %v3650 = vunpack.c.l.b16 %v3408
        %v3651 = vunpack.c.l.b16 %v3409
        %v3652 = vunpack.c.l.b16 %v3410
        %v3653 = vunpack.c.l.b16 %v3411
        %v3654 = vunpack.c.l.b16 %v3412
        %v3655 = vunpack.c.l.b16 %v3413
        %v3656 = vunpack.c.l.b16 %v3414
        %v3657 = vunpack.c.l.b16 %v3415
        %v3658 = vunpack.c.l.b16 %v3416
        %v3659 = vunpack.c.l.b16 %v3417
        %v3660 = vunpack.c.l.b16 %v3418
        %v3661 = vunpack.c.l.b16 %v3419
        %v3662 = vunpack.c.l.b16 %v3420
        %v3663 = vunpack.c.l.b16 %v3421
        %v3664 = vunpack.c.l.b16 %v3422
        %v3665 = vunpack.c.l.b16 %v3423
        %v3666 = vunpack.c.l.b16 %v3424
        %v3667 = vunpack.c.l.b16 %v3425
        %v3668 = vunpack.c.l.b16 %v3426
        %v3669 = vunpack.c.l.b16 %v3427
        %v3670 = vunpack.c.l.b16 %v3428
        %v3671 = vunpack.c.l.b16 %v3429
        %v3672 = vunpack.c.l.b16 %v3430
        %v3673 = vunpack.c.l.b16 %v3431
        %v3674 = vunpack.c.l.b16 %v3432
        %v3675 = vunpack.c.l.b16 %v3433
        %v3676 = vunpack.c.l.b16 %v3434
        %v3677 = vunpack.c.l.b16 %v3435
        %v3678 = vunpack.c.l.b16 %v3436
        %v3679 = vunpack.c.l.b16 %v3437
        %v3680 = vunpack.c.l.b16 %v3438
        %v3681 = vunpack.c.l.b16 %v3439
        %v3682 = vunpack.c.l.b16 %v3440
        %v3683 = vunpack.c.l.b16 %v3441
        %v3684 = vunpack.c.l.b16 %v3442
        %v3685 = vunpack.c.l.b16 %v3443
        %v3686 = vunpack.c.l.b16 %v3444
        %v3687 = vunpack.c.l.b16 %v3445
        %v3688 = vunpack.c.l.b16 %v3446
        %v3689 = vunpack.c.l.b16 %v3447
        %v3690 = vunpack.c.l.b16 %v3448
        %v3691 = vunpack.c.l.b16 %v3449
        %v3692 = vunpack.c.l.b16 %v3450
        %v3693 = vunpack.c.l.b16 %v3451
        %v3694 = vunpack.c.l.b16 %v3452
        %v3695 = vunpack.c.l.b16 %v3453
        %v3696 = vunpack.c.l.b16 %v3454
        %v3697 = vunpack.c.l.b16 %v3455
        %v3698 = vunpack.c.l.b16 %v3456
        %v3699 = vunpack.c.l.b16 %v3457
        %v3700 = vunpack.c.l.b16 %v3458
        %v3701 = vunpack.c.l.b16 %v3459
        %v3702 = vunpack.c.l.b16 %v3460
        %v3703 = vunpack.c.l.b16 %v3461
        %v3704 = vunpack.c.l.b16 %v3462
        %v3705 = vunpack.c.l.b16 %v3463
        %v3706 = vunpack.c.l.b16 %v3464
        %v3707 = vunpack.c.l.b16 %v3465
        %v3708 = vunpack.c.l.b16 %v3466
        %v3709 = vunpack.c.l.b16 %v3467
        %v3710 = vunpack.c.l.b16 %v3468
        %v3711 = vunpack.c.l.b16 %v3469
        %v3712 = vunpack.c.l.b16 %v3470
        %v3713 = vunpack.c.l.b16 %v3471
        %v3714 = vunpack.c.l.b16 %v3472
        %v3715 = vunpack.c.l.b16 %v3473
        %v3716 = vunpack.c.l.b16 %v3474
        %v3717 = vunpack.c.l.b16 %v3475
        %v3718 = vunpack.c.l.b16 %v3476
        %v3719 = vunpack.c.l.b16 %v3477
        %v3720 = vunpack.c.l.b16 %v3478
        %v3721 = vunpack.c.l.b16 %v3479
        %v3722 = vunpack.c.l.b16 %v3480
        %v3723 = vunpack.c.l.b16 %v3481
        %v3724 = vunpack.c.l.b16 %v3482
        %v3725 = vunpack.c.l.b16 %v3483
        %v3726 = vunpack.c.l.b16 %v3484
        %v3727 = vpack.c.b16 %v3607, %v3606
        %v3728 = vpack.c.b16 %v3609, %v3608
        %v3729 = vpack.c.b16 %v3611, %v3610
        %v3730 = vpack.c.b16 %v3613, %v3612
        %v3731 = vpack.c.b16 %v3615, %v3614
        %v3732 = vpack.c.b16 %v3617, %v3616
        %v3733 = vpack.c.b16 %v3619, %v3618
        %v3734 = vpack.c.b16 %v3621, %v3620
        %v3735 = vpack.c.b16 %v3623, %v3622
        %v3736 = vpack.c.b16 %v3625, %v3624
        %v3737 = vpack.c.b16 %v3627, %v3626
        %v3738 = vpack.c.b16 %v3629, %v3628
        %v3739 = vpack.c.b16 %v3631, %v3630
        %v3740 = vpack.c.b16 %v3633, %v3632
        %v3741 = vpack.c.b16 %v3635, %v3634
        %v3742 = vpack.c.b16 %v3637, %v3636
        %v3743 = vpack.c.b16 %v3639, %v3638
        %v3744 = vpack.c.b16 %v3641, %v3640
        %v3745 = vpack.c.b16 %v3643, %v3642
        %v3746 = vpack.c.b16 %v3645, %v3644
        %v3747 = vpack.c.b16 %v3647, %v3646
        %v3748 = vpack.c.b16 %v3649, %v3648
        %v3749 = vpack.c.b16 %v3651, %v3650
        %v3750 = vpack.c.b16 %v3653, %v3652
        %v3751 = vpack.c.b16 %v3655, %v3654
        %v3752 = vpack.c.b16 %v3657, %v3656
        %v3753 = vpack.c.b16 %v3659, %v3658
        %v3754 = vpack.c.b16 %v3661, %v3660
        %v3755 = vpack.c.b16 %v3663, %v3662
        %v3756 = vpack.c.b16 %v3665, %v3664
        %v3757 = vpack.c.b16 %v3667, %v3666
        %v3758 = vpack.c.b16 %v3669, %v3668
        %v3759 = vpack.c.b16 %v3671, %v3670
        %v3760 = vpack.c.b16 %v3673, %v3672
        %v3761 = vpack.c.b16 %v3675, %v3674
        %v3762 = vpack.c.b16 %v3677, %v3676
        %v3763 = vpack.c.b16 %v3679, %v3678
        %v3764 = vpack.c.b16 %v3681, %v3680
        %v3765 = vpack.c.b16 %v3683, %v3682
        %v3766 = vpack.c.b16 %v3685, %v3684
        %v3767 = vpack.c.b16 %v3687, %v3686
        %v3768 = vpack.c.b16 %v3689, %v3688
        %v3769 = vpack.c.b16 %v3691, %v3690
        %v3770 = vpack.c.b16 %v3693, %v3692
        %v3771 = vpack.c.b16 %v3695, %v3694
        %v3772 = vpack.c.b16 %v3697, %v3696
        %v3773 = vpack.c.b16 %v3699, %v3698
        %v3774 = vpack.c.b16 %v3701, %v3700
        %v3775 = vpack.c.b16 %v3703, %v3702
        %v3776 = vpack.c.b16 %v3705, %v3704
        %v3777 = vpack.c.b16 %v3707, %v3706
        %v3778 = vpack.c.b16 %v3709, %v3708
        %v3779 = vpack.c.b16 %v3711, %v3710
        %v3780 = vpack.c.b16 %v3713, %v3712
        %v3781 = vpack.c.b16 %v3715, %v3714
        %v3782 = vpack.c.b16 %v3717, %v3716
        %v3783 = vpack.c.b16 %v3719, %v3718
        %v3784 = vpack.c.b16 %v3721, %v3720
        %v3785 = vpack.c.b16 %v3723, %v3722
        %v3786 = vpack.c.b16 %v3725, %v3724
        %v3787 = vpack.c.b16 %v3726, %v3726
        %v3789 = vsel %vm785, %v3727, 0
        %v3792 = vsel %vm785, %v3728, 0
        %v3795 = vsel %vm785, %v3729, 0
        %v3798 = vsel %vm785, %v3730, 0
        %v3801 = vsel %vm785, %v3731, 0
        %v3804 = vsel %vm785, %v3732, 0
        %v3807 = vsel %vm785, %v3733, 0
        %v3810 = vsel %vm785, %v3734, 0
        %v3813 = vsel %vm785, %v3735, 0
        %v3816 = vsel %vm785, %v3736, 0
        %v3819 = vsel %vm785, %v3737, 0
        %v3822 = vsel %vm785, %v3738, 0
        %v3825 = vsel %vm785, %v3739, 0
        %v3828 = vsel %vm785, %v3740, 0
        %v3831 = vsel %vm785, %v3741, 0
        %v3834 = vsel %vm785, %v3742, 0
        %v3837 = vsel %vm785, %v3743, 0
        %v3840 = vsel %vm785, %v3744, 0
        %v3843 = vsel %vm785, %v3745, 0
        %v3846 = vsel %vm785, %v3746, 0
        %v3849 = vsel %vm785, %v3747, 0
        %v3852 = vsel %vm785, %v3748, 0
        %v3855 = vsel %vm785, %v3749, 0
        %v3858 = vsel %vm785, %v3750, 0
        %v3861 = vsel %vm785, %v3751, 0
        %v3864 = vsel %vm785, %v3752, 0
        %v3867 = vsel %vm785, %v3753, 0
        %v3870 = vsel %vm785, %v3754, 0
        %v3873 = vsel %vm785, %v3755, 0
        %v3876 = vsel %vm785, %v3756, 0
        %v3879 = vsel %vm785, %v3757, 0
        %v3882 = vsel %vm785, %v3758, 0
        %v3885 = vsel %vm785, %v3759, 0
        %v3888 = vsel %vm785, %v3760, 0
        %v3891 = vsel %vm785, %v3761, 0
        %v3894 = vsel %vm785, %v3762, 0
        %v3897 = vsel %vm785, %v3763, 0
        %v3900 = vsel %vm785, %v3764, 0
        %v3903 = vsel %vm785, %v3765, 0
        %v3906 = vsel %vm785, %v3766, 0
        %v3909 = vsel %vm785, %v3767, 0
        %v3912 = vsel %vm785, %v3768, 0
        %v3915 = vsel %vm785, %v3769, 0
        %v3918 = vsel %vm785, %v3770, 0
        %v3921 = vsel %vm785, %v3771, 0
        %v3924 = vsel %vm785, %v3772, 0
        %v3927 = vsel %vm785, %v3773, 0
        %v3930 = vsel %vm785, %v3774, 0
        %v3933 = vsel %vm785, %v3775, 0
        %v3936 = vsel %vm785, %v3776, 0
        %v3939 = vsel %vm785, %v3777, 0
        %v3942 = vsel %vm785, %v3778, 0
        %v3945 = vsel %vm785, %v3779, 0
        %v3948 = vsel %vm785, %v3780, 0
        %v3951 = vsel %vm785, %v3781, 0
        %v3954 = vsel %vm785, %v3782, 0
        %v3957 = vsel %vm785, %v3783, 0
        %v3960 = vsel %vm785, %v3784, 0
        %v3963 = vsel %vm785, %v3785, 0
        %v3966 = vsel %vm785, %v3786, 0
        %v3969 = vsel %vm785, %v3787, 0
        %3971 = vmatpush.bf16.msra.mxu0 0
        %3972 = vmatpush.bf16.msra.mxu0 0
        %3973 = vmatpush.bf16.msra.mxu0 0
        %3974 = vmatpush.bf16.msra.mxu0 0
        %3975 = vmatpush.bf16.msra.mxu0 0
        %3976 = vmatpush.bf16.msra.mxu0 0
        %3977 = vmatpush.bf16.msra.mxu0 %v782
        %3978 = vmatpush.bf16.msra.mxu0 %v781
        %3979 = vmatmul.bf16.gmra.mxu0 %v3789
        %v3980 = vpop.f32.mrf.mxu0
        %v3981 = vadd.f32 0.0, %v3980
        %v3982 = vpop.f32.mrf.mxu0
        %v3983 = vadd.f32 0.0, %v3982
        %3984 = vmatmul.bf16.gmra.mxu0 %v3792
        %v3985 = vpop.f32.mrf.mxu0
        %v3986 = vadd.f32 0.0, %v3985
        %v3987 = vpop.f32.mrf.mxu0
        %v3988 = vadd.f32 0.0, %v3987
        %3989 = vmatmul.bf16.gmra.mxu0 %v3795
        %v3990 = vpop.f32.mrf.mxu0
        %v3991 = vadd.f32 0.0, %v3990
        %v3992 = vpop.f32.mrf.mxu0
        %v3993 = vadd.f32 0.0, %v3992
        %3994 = vmatmul.bf16.gmra.mxu0 %v3798
        %v3995 = vpop.f32.mrf.mxu0
        %v3996 = vadd.f32 0.0, %v3995
        %v3997 = vpop.f32.mrf.mxu0
        %v3998 = vadd.f32 0.0, %v3997
        %3999 = vmatmul.bf16.gmra.mxu0 %v3801
        %v4000 = vpop.f32.mrf.mxu0
        %v4001 = vadd.f32 0.0, %v4000
        %v4002 = vpop.f32.mrf.mxu0
        %v4003 = vadd.f32 0.0, %v4002
        %4004 = vmatmul.bf16.gmra.mxu0 %v3804
        %v4005 = vpop.f32.mrf.mxu0
        %v4006 = vadd.f32 0.0, %v4005
        %v4007 = vpop.f32.mrf.mxu0
        %v4008 = vadd.f32 0.0, %v4007
        %4009 = vmatmul.bf16.gmra.mxu0 %v3807
        %v4010 = vpop.f32.mrf.mxu0
        %v4011 = vadd.f32 0.0, %v4010
        %v4012 = vpop.f32.mrf.mxu0
        %v4013 = vadd.f32 0.0, %v4012
        %4014 = vmatmul.bf16.gmra.mxu0 %v3810
        %v4015 = vpop.f32.mrf.mxu0
        %v4016 = vadd.f32 0.0, %v4015
        %v4017 = vpop.f32.mrf.mxu0
        %v4018 = vadd.f32 0.0, %v4017
        %4019 = vmatmul.bf16.gmra.mxu0 %v3813
        %v4020 = vpop.f32.mrf.mxu0
        %v4021 = vadd.f32 0.0, %v4020
        %v4022 = vpop.f32.mrf.mxu0
        %v4023 = vadd.f32 0.0, %v4022
        %4024 = vmatmul.bf16.gmra.mxu0 %v3816
        %v4025 = vpop.f32.mrf.mxu0
        %v4026 = vadd.f32 0.0, %v4025
        %v4027 = vpop.f32.mrf.mxu0
        %v4028 = vadd.f32 0.0, %v4027
        %4029 = vmatmul.bf16.gmra.mxu0 %v3819
        %v4030 = vpop.f32.mrf.mxu0
        %v4031 = vadd.f32 0.0, %v4030
        %v4032 = vpop.f32.mrf.mxu0
        %v4033 = vadd.f32 0.0, %v4032
        %4034 = vmatmul.bf16.gmra.mxu0 %v3822
        %v4035 = vpop.f32.mrf.mxu0
        %v4036 = vadd.f32 0.0, %v4035
        %v4037 = vpop.f32.mrf.mxu0
        %v4038 = vadd.f32 0.0, %v4037
        %4039 = vmatmul.bf16.gmra.mxu0 %v3825
        %v4040 = vpop.f32.mrf.mxu0
        %v4041 = vadd.f32 0.0, %v4040
        %v4042 = vpop.f32.mrf.mxu0
        %v4043 = vadd.f32 0.0, %v4042
        %4044 = vmatmul.bf16.gmra.mxu0 %v3828
        %v4045 = vpop.f32.mrf.mxu0
        %v4046 = vadd.f32 0.0, %v4045
        %v4047 = vpop.f32.mrf.mxu0
        %v4048 = vadd.f32 0.0, %v4047
        %4049 = vmatmul.bf16.gmra.mxu0 %v3831
        %v4050 = vpop.f32.mrf.mxu0
        %v4051 = vadd.f32 0.0, %v4050
        %v4052 = vpop.f32.mrf.mxu0
        %v4053 = vadd.f32 0.0, %v4052
        %4054 = vmatmul.bf16.gmra.mxu0 %v3834
        %v4055 = vpop.f32.mrf.mxu0
        %v4056 = vadd.f32 0.0, %v4055
        %v4057 = vpop.f32.mrf.mxu0
        %v4058 = vadd.f32 0.0, %v4057
        %4059 = vmatmul.bf16.gmra.mxu0 %v3837
        %v4060 = vpop.f32.mrf.mxu0
        %v4061 = vadd.f32 0.0, %v4060
        %v4062 = vpop.f32.mrf.mxu0
        %v4063 = vadd.f32 0.0, %v4062
        %4064 = vmatmul.bf16.gmra.mxu0 %v3840
        %v4065 = vpop.f32.mrf.mxu0
        %v4066 = vadd.f32 0.0, %v4065
        %v4067 = vpop.f32.mrf.mxu0
        %v4068 = vadd.f32 0.0, %v4067
        %4069 = vmatmul.bf16.gmra.mxu0 %v3843
        %v4070 = vpop.f32.mrf.mxu0
        %v4071 = vadd.f32 0.0, %v4070
        %v4072 = vpop.f32.mrf.mxu0
        %v4073 = vadd.f32 0.0, %v4072
        %4074 = vmatmul.bf16.gmra.mxu0 %v3846
        %v4075 = vpop.f32.mrf.mxu0
        %v4076 = vadd.f32 0.0, %v4075
        %v4077 = vpop.f32.mrf.mxu0
        %v4078 = vadd.f32 0.0, %v4077
        %4079 = vmatmul.bf16.gmra.mxu0 %v3849
        %v4080 = vpop.f32.mrf.mxu0
        %v4081 = vadd.f32 0.0, %v4080
        %v4082 = vpop.f32.mrf.mxu0
        %v4083 = vadd.f32 0.0, %v4082
        %4084 = vmatmul.bf16.gmra.mxu0 %v3852
        %v4085 = vpop.f32.mrf.mxu0
        %v4086 = vadd.f32 0.0, %v4085
        %v4087 = vpop.f32.mrf.mxu0
        %v4088 = vadd.f32 0.0, %v4087
        %4089 = vmatmul.bf16.gmra.mxu0 %v3855
        %v4090 = vpop.f32.mrf.mxu0
        %v4091 = vadd.f32 0.0, %v4090
        %v4092 = vpop.f32.mrf.mxu0
        %v4093 = vadd.f32 0.0, %v4092
        %4094 = vmatmul.bf16.gmra.mxu0 %v3858
        %v4095 = vpop.f32.mrf.mxu0
        %v4096 = vadd.f32 0.0, %v4095
        %v4097 = vpop.f32.mrf.mxu0
        %v4098 = vadd.f32 0.0, %v4097
        %4099 = vmatmul.bf16.gmra.mxu0 %v3861
        %v4100 = vpop.f32.mrf.mxu0
        %v4101 = vadd.f32 0.0, %v4100
        %v4102 = vpop.f32.mrf.mxu0
        %v4103 = vadd.f32 0.0, %v4102
        %4104 = vmatmul.bf16.gmra.mxu0 %v3864
        %v4105 = vpop.f32.mrf.mxu0
        %v4106 = vadd.f32 0.0, %v4105
        %v4107 = vpop.f32.mrf.mxu0
        %v4108 = vadd.f32 0.0, %v4107
        %4109 = vmatmul.bf16.gmra.mxu0 %v3867
        %v4110 = vpop.f32.mrf.mxu0
        %v4111 = vadd.f32 0.0, %v4110
        %v4112 = vpop.f32.mrf.mxu0
        %v4113 = vadd.f32 0.0, %v4112
        %4114 = vmatmul.bf16.gmra.mxu0 %v3870
        %v4115 = vpop.f32.mrf.mxu0
        %v4116 = vadd.f32 0.0, %v4115
        %v4117 = vpop.f32.mrf.mxu0
        %v4118 = vadd.f32 0.0, %v4117
        %4119 = vmatmul.bf16.gmra.mxu0 %v3873
        %v4120 = vpop.f32.mrf.mxu0
        %v4121 = vadd.f32 0.0, %v4120
        %v4122 = vpop.f32.mrf.mxu0
        %v4123 = vadd.f32 0.0, %v4122
        %4124 = vmatmul.bf16.gmra.mxu0 %v3876
        %v4125 = vpop.f32.mrf.mxu0
        %v4126 = vadd.f32 0.0, %v4125
        %v4127 = vpop.f32.mrf.mxu0
        %v4128 = vadd.f32 0.0, %v4127
        %4129 = vmatmul.bf16.gmra.mxu0 %v3879
        %v4130 = vpop.f32.mrf.mxu0
        %v4131 = vadd.f32 0.0, %v4130
        %v4132 = vpop.f32.mrf.mxu0
        %v4133 = vadd.f32 0.0, %v4132
        %4134 = vmatmul.bf16.gmra.mxu0 %v3882
        %v4135 = vpop.f32.mrf.mxu0
        %v4136 = vadd.f32 0.0, %v4135
        %v4137 = vpop.f32.mrf.mxu0
        %v4138 = vadd.f32 0.0, %v4137
        %4139 = vmatmul.bf16.gmra.mxu0 %v3885
        %v4140 = vpop.f32.mrf.mxu0
        %v4141 = vadd.f32 0.0, %v4140
        %v4142 = vpop.f32.mrf.mxu0
        %v4143 = vadd.f32 0.0, %v4142
        %4144 = vmatmul.bf16.gmra.mxu0 %v3888
        %v4145 = vpop.f32.mrf.mxu0
        %v4146 = vadd.f32 0.0, %v4145
        %v4147 = vpop.f32.mrf.mxu0
        %v4148 = vadd.f32 0.0, %v4147
        %4149 = vmatmul.bf16.gmra.mxu0 %v3891
        %v4150 = vpop.f32.mrf.mxu0
        %v4151 = vadd.f32 0.0, %v4150
        %v4152 = vpop.f32.mrf.mxu0
        %v4153 = vadd.f32 0.0, %v4152
        %4154 = vmatmul.bf16.gmra.mxu0 %v3894
        %v4155 = vpop.f32.mrf.mxu0
        %v4156 = vadd.f32 0.0, %v4155
        %v4157 = vpop.f32.mrf.mxu0
        %v4158 = vadd.f32 0.0, %v4157
        %4159 = vmatmul.bf16.gmra.mxu0 %v3897
        %v4160 = vpop.f32.mrf.mxu0
        %v4161 = vadd.f32 0.0, %v4160
        %v4162 = vpop.f32.mrf.mxu0
        %v4163 = vadd.f32 0.0, %v4162
        %4164 = vmatmul.bf16.gmra.mxu0 %v3900
        %v4165 = vpop.f32.mrf.mxu0
        %v4166 = vadd.f32 0.0, %v4165
        %v4167 = vpop.f32.mrf.mxu0
        %v4168 = vadd.f32 0.0, %v4167
        %4169 = vmatmul.bf16.gmra.mxu0 %v3903
        %v4170 = vpop.f32.mrf.mxu0
        %v4171 = vadd.f32 0.0, %v4170
        %v4172 = vpop.f32.mrf.mxu0
        %v4173 = vadd.f32 0.0, %v4172
        %4174 = vmatmul.bf16.gmra.mxu0 %v3906
        %v4175 = vpop.f32.mrf.mxu0
        %v4176 = vadd.f32 0.0, %v4175
        %v4177 = vpop.f32.mrf.mxu0
        %v4178 = vadd.f32 0.0, %v4177
        %4179 = vmatmul.bf16.gmra.mxu0 %v3909
        %v4180 = vpop.f32.mrf.mxu0
        %v4181 = vadd.f32 0.0, %v4180
        %v4182 = vpop.f32.mrf.mxu0
        %v4183 = vadd.f32 0.0, %v4182
        %4184 = vmatmul.bf16.gmra.mxu0 %v3912
        %v4185 = vpop.f32.mrf.mxu0
        %v4186 = vadd.f32 0.0, %v4185
        %v4187 = vpop.f32.mrf.mxu0
        %v4188 = vadd.f32 0.0, %v4187
        %4189 = vmatmul.bf16.gmra.mxu0 %v3915
        %v4190 = vpop.f32.mrf.mxu0
        %v4191 = vadd.f32 0.0, %v4190
        %v4192 = vpop.f32.mrf.mxu0
        %v4193 = vadd.f32 0.0, %v4192
        %4194 = vmatmul.bf16.gmra.mxu0 %v3918
        %v4195 = vpop.f32.mrf.mxu0
        %v4196 = vadd.f32 0.0, %v4195
        %v4197 = vpop.f32.mrf.mxu0
        %v4198 = vadd.f32 0.0, %v4197
        %4199 = vmatmul.bf16.gmra.mxu0 %v3921
        %v4200 = vpop.f32.mrf.mxu0
        %v4201 = vadd.f32 0.0, %v4200
        %v4202 = vpop.f32.mrf.mxu0
        %v4203 = vadd.f32 0.0, %v4202
        %4204 = vmatmul.bf16.gmra.mxu0 %v3924
        %v4205 = vpop.f32.mrf.mxu0
        %v4206 = vadd.f32 0.0, %v4205
        %v4207 = vpop.f32.mrf.mxu0
        %v4208 = vadd.f32 0.0, %v4207
        %4209 = vmatmul.bf16.gmra.mxu0 %v3927
        %v4210 = vpop.f32.mrf.mxu0
        %v4211 = vadd.f32 0.0, %v4210
        %v4212 = vpop.f32.mrf.mxu0
        %v4213 = vadd.f32 0.0, %v4212
        %4214 = vmatmul.bf16.gmra.mxu0 %v3930
        %v4215 = vpop.f32.mrf.mxu0
        %v4216 = vadd.f32 0.0, %v4215
        %v4217 = vpop.f32.mrf.mxu0
        %v4218 = vadd.f32 0.0, %v4217
        %4219 = vmatmul.bf16.gmra.mxu0 %v3933
        %v4220 = vpop.f32.mrf.mxu0
        %v4221 = vadd.f32 0.0, %v4220
        %v4222 = vpop.f32.mrf.mxu0
        %v4223 = vadd.f32 0.0, %v4222
        %4224 = vmatmul.bf16.gmra.mxu0 %v3936
        %v4225 = vpop.f32.mrf.mxu0
        %v4226 = vadd.f32 0.0, %v4225
        %v4227 = vpop.f32.mrf.mxu0
        %v4228 = vadd.f32 0.0, %v4227
        %4229 = vmatmul.bf16.gmra.mxu0 %v3939
        %v4230 = vpop.f32.mrf.mxu0
        %v4231 = vadd.f32 0.0, %v4230
        %v4232 = vpop.f32.mrf.mxu0
        %v4233 = vadd.f32 0.0, %v4232
        %4234 = vmatmul.bf16.gmra.mxu0 %v3942
        %v4235 = vpop.f32.mrf.mxu0
        %v4236 = vadd.f32 0.0, %v4235
        %v4237 = vpop.f32.mrf.mxu0
        %v4238 = vadd.f32 0.0, %v4237
        %4239 = vmatmul.bf16.gmra.mxu0 %v3945
        %v4240 = vpop.f32.mrf.mxu0
        %v4241 = vadd.f32 0.0, %v4240
        %v4242 = vpop.f32.mrf.mxu0
        %v4243 = vadd.f32 0.0, %v4242
        %4244 = vmatmul.bf16.gmra.mxu0 %v3948
        %v4245 = vpop.f32.mrf.mxu0
        %v4246 = vadd.f32 0.0, %v4245
        %v4247 = vpop.f32.mrf.mxu0
        %v4248 = vadd.f32 0.0, %v4247
        %4249 = vmatmul.bf16.gmra.mxu0 %v3951
        %v4250 = vpop.f32.mrf.mxu0
        %v4251 = vadd.f32 0.0, %v4250
        %v4252 = vpop.f32.mrf.mxu0
        %v4253 = vadd.f32 0.0, %v4252
        %4254 = vmatmul.bf16.gmra.mxu0 %v3954
        %v4255 = vpop.f32.mrf.mxu0
        %v4256 = vadd.f32 0.0, %v4255
        %v4257 = vpop.f32.mrf.mxu0
        %v4258 = vadd.f32 0.0, %v4257
        %4259 = vmatmul.bf16.gmra.mxu0 %v3957
        %v4260 = vpop.f32.mrf.mxu0
        %v4261 = vadd.f32 0.0, %v4260
        %v4262 = vpop.f32.mrf.mxu0
        %v4263 = vadd.f32 0.0, %v4262
        %4264 = vmatmul.bf16.gmra.mxu0 %v3960
        %v4265 = vpop.f32.mrf.mxu0
        %v4266 = vadd.f32 0.0, %v4265
        %v4267 = vpop.f32.mrf.mxu0
        %v4268 = vadd.f32 0.0, %v4267
        %4269 = vmatmul.bf16.gmra.mxu0 %v3963
        %v4270 = vpop.f32.mrf.mxu0
        %v4271 = vadd.f32 0.0, %v4270
        %v4272 = vpop.f32.mrf.mxu0
        %v4273 = vadd.f32 0.0, %v4272
        %4274 = vmatmul.bf16.gmra.mxu0 %v3966
        %v4275 = vpop.f32.mrf.mxu0
        %v4276 = vadd.f32 0.0, %v4275
        %v4277 = vpop.f32.mrf.mxu0
        %v4278 = vadd.f32 0.0, %v4277
        %4279 = vmatmul.bf16.gmra.mxu0 %v3969
        %v4280 = vpop.f32.mrf.mxu0
        %v4281 = vadd.f32 0.0, %v4280
        %v4282 = vpop.f32.mrf.mxu0
        %4283 = vdwg.mxu0
        %v4284 = vmax.f32 %v3243, %v3981
        %v4285 = vmax.f32 %v3244, %v3983
        %v4286 = vmax.f32 %v3245, %v3986
        %v4287 = vmax.f32 %v3246, %v3988
        %v4288 = vmax.f32 %v3247, %v3991
        %v4289 = vmax.f32 %v3248, %v3993
        %v4290 = vmax.f32 %v3249, %v3996
        %v4291 = vmax.f32 %v3250, %v3998
        %v4292 = vmax.f32 %v3251, %v4001
        %v4293 = vmax.f32 %v3252, %v4003
        %v4294 = vmax.f32 %v3253, %v4006
        %v4295 = vmax.f32 %v3254, %v4008
        %v4296 = vmax.f32 %v3255, %v4011
        %v4297 = vmax.f32 %v3256, %v4013
        %v4298 = vmax.f32 %v3257, %v4016
        %v4299 = vmax.f32 %v3258, %v4018
        %v4300 = vmax.f32 %v3259, %v4021
        %v4301 = vmax.f32 %v3260, %v4023
        %v4302 = vmax.f32 %v3261, %v4026
        %v4303 = vmax.f32 %v3262, %v4028
        %v4304 = vmax.f32 %v3263, %v4031
        %v4305 = vmax.f32 %v3264, %v4033
        %v4306 = vmax.f32 %v3265, %v4036
        %v4307 = vmax.f32 %v3266, %v4038
        %v4308 = vmax.f32 %v3267, %v4041
        %v4309 = vmax.f32 %v3268, %v4043
        %v4310 = vmax.f32 %v3269, %v4046
        %v4311 = vmax.f32 %v3270, %v4048
        %v4312 = vmax.f32 %v3271, %v4051
        %v4313 = vmax.f32 %v3272, %v4053
        %v4314 = vmax.f32 %v3273, %v4056
        %v4315 = vmax.f32 %v3274, %v4058
        %v4316 = vmax.f32 %v3275, %v4061
        %v4317 = vmax.f32 %v3276, %v4063
        %v4318 = vmax.f32 %v3277, %v4066
        %v4319 = vmax.f32 %v3278, %v4068
        %v4320 = vmax.f32 %v3279, %v4071
        %v4321 = vmax.f32 %v3280, %v4073
        %v4322 = vmax.f32 %v3281, %v4076
        %v4323 = vmax.f32 %v3282, %v4078
        %v4324 = vmax.f32 %v3283, %v4081
        %v4325 = vmax.f32 %v3284, %v4083
        %v4326 = vmax.f32 %v3285, %v4086
        %v4327 = vmax.f32 %v3286, %v4088
        %v4328 = vmax.f32 %v3287, %v4091
        %v4329 = vmax.f32 %v3288, %v4093
        %v4330 = vmax.f32 %v3289, %v4096
        %v4331 = vmax.f32 %v3290, %v4098
        %v4332 = vmax.f32 %v3291, %v4101
        %v4333 = vmax.f32 %v3292, %v4103
        %v4334 = vmax.f32 %v3293, %v4106
        %v4335 = vmax.f32 %v3294, %v4108
        %v4336 = vmax.f32 %v3295, %v4111
        %v4337 = vmax.f32 %v3296, %v4113
        %v4338 = vmax.f32 %v3297, %v4116
        %v4339 = vmax.f32 %v3298, %v4118
        %v4340 = vmax.f32 %v3299, %v4121
        %v4341 = vmax.f32 %v3300, %v4123
        %v4342 = vmax.f32 %v3301, %v4126
        %v4343 = vmax.f32 %v3302, %v4128
        %v4344 = vmax.f32 %v3303, %v4131
        %v4345 = vmax.f32 %v3304, %v4133
        %v4346 = vmax.f32 %v3305, %v4136
        %v4347 = vmax.f32 %v3306, %v4138
        %v4348 = vmax.f32 %v3307, %v4141
        %v4349 = vmax.f32 %v3308, %v4143
        %v4350 = vmax.f32 %v3309, %v4146
        %v4351 = vmax.f32 %v3310, %v4148
        %v4352 = vmax.f32 %v3311, %v4151
        %v4353 = vmax.f32 %v3312, %v4153
        %v4354 = vmax.f32 %v3313, %v4156
        %v4355 = vmax.f32 %v3314, %v4158
        %v4356 = vmax.f32 %v3315, %v4161
        %v4357 = vmax.f32 %v3316, %v4163
        %v4358 = vmax.f32 %v3317, %v4166
        %v4359 = vmax.f32 %v3318, %v4168
        %v4360 = vmax.f32 %v3319, %v4171
        %v4361 = vmax.f32 %v3320, %v4173
        %v4362 = vmax.f32 %v3321, %v4176
        %v4363 = vmax.f32 %v3322, %v4178
        %v4364 = vmax.f32 %v3323, %v4181
        %v4365 = vmax.f32 %v3324, %v4183
        %v4366 = vmax.f32 %v3325, %v4186
        %v4367 = vmax.f32 %v3326, %v4188
        %v4368 = vmax.f32 %v3327, %v4191
        %v4369 = vmax.f32 %v3328, %v4193
        %v4370 = vmax.f32 %v3329, %v4196
        %v4371 = vmax.f32 %v3330, %v4198
        %v4372 = vmax.f32 %v3331, %v4201
        %v4373 = vmax.f32 %v3332, %v4203
        %v4374 = vmax.f32 %v3333, %v4206
        %v4375 = vmax.f32 %v3334, %v4208
        %v4376 = vmax.f32 %v3335, %v4211
        %v4377 = vmax.f32 %v3336, %v4213
        %v4378 = vmax.f32 %v3337, %v4216
        %v4379 = vmax.f32 %v3338, %v4218
        %v4380 = vmax.f32 %v3339, %v4221
        %v4381 = vmax.f32 %v3340, %v4223
        %v4382 = vmax.f32 %v3341, %v4226
        %v4383 = vmax.f32 %v3342, %v4228
        %v4384 = vmax.f32 %v3343, %v4231
        %v4385 = vmax.f32 %v3344, %v4233
        %v4386 = vmax.f32 %v3345, %v4236
        %v4387 = vmax.f32 %v3346, %v4238
        %v4388 = vmax.f32 %v3347, %v4241
        %v4389 = vmax.f32 %v3348, %v4243
        %v4390 = vmax.f32 %v3349, %v4246
        %v4391 = vmax.f32 %v3350, %v4248
        %v4392 = vmax.f32 %v3351, %v4251
        %v4393 = vmax.f32 %v3352, %v4253
        %v4394 = vmax.f32 %v3353, %v4256
        %v4395 = vmax.f32 %v3354, %v4258
        %v4396 = vmax.f32 %v3355, %v4261
        %v4397 = vmax.f32 %v3356, %v4263
        %v4398 = vmax.f32 %v3357, %v4266
        %v4399 = vmax.f32 %v3358, %v4268
        %v4400 = vmax.f32 %v3359, %v4271
        %v4401 = vmax.f32 %v3360, %v4273
        %v4402 = vmax.f32 %v3361, %v4276
        %v4403 = vmax.f32 %v3362, %v4278
        %v4404 = vmax.f32 %v3363, %v4281
        %v4405 = vld [vmem:[#allocation4] sm:$0x1]
        %v4407 = vperm.slane %v4405, 0
        %v4409 = vadd.f32 %v4284, %v4407
        %v4410 = vadd.f32 %v4285, %v4407
        %v4411 = vadd.f32 %v4286, %v4407
        %v4412 = vadd.f32 %v4287, %v4407
        %v4413 = vadd.f32 %v4288, %v4407
        %v4414 = vadd.f32 %v4289, %v4407
        %v4415 = vadd.f32 %v4290, %v4407
        %v4416 = vadd.f32 %v4291, %v4407
        %v4417 = vadd.f32 %v4292, %v4407
        %v4418 = vadd.f32 %v4293, %v4407
        %v4419 = vadd.f32 %v4294, %v4407
        %v4420 = vadd.f32 %v4295, %v4407
        %v4421 = vadd.f32 %v4296, %v4407
        %v4422 = vadd.f32 %v4297, %v4407
        %v4423 = vadd.f32 %v4298, %v4407
        %v4424 = vadd.f32 %v4299, %v4407
        %v4425 = vadd.f32 %v4300, %v4407
        %v4426 = vadd.f32 %v4301, %v4407
        %v4427 = vadd.f32 %v4302, %v4407
        %v4428 = vadd.f32 %v4303, %v4407
        %v4429 = vadd.f32 %v4304, %v4407
        %v4430 = vadd.f32 %v4305, %v4407
        %v4431 = vadd.f32 %v4306, %v4407
        %v4432 = vadd.f32 %v4307, %v4407
        %v4433 = vadd.f32 %v4308, %v4407
        %v4434 = vadd.f32 %v4309, %v4407
        %v4435 = vadd.f32 %v4310, %v4407
        %v4436 = vadd.f32 %v4311, %v4407
        %v4437 = vadd.f32 %v4312, %v4407
        %v4438 = vadd.f32 %v4313, %v4407
        %v4439 = vadd.f32 %v4314, %v4407
        %v4440 = vadd.f32 %v4315, %v4407
        %v4441 = vadd.f32 %v4316, %v4407
        %v4442 = vadd.f32 %v4317, %v4407
        %v4443 = vadd.f32 %v4318, %v4407
        %v4444 = vadd.f32 %v4319, %v4407
        %v4445 = vadd.f32 %v4320, %v4407
        %v4446 = vadd.f32 %v4321, %v4407
        %v4447 = vadd.f32 %v4322, %v4407
        %v4448 = vadd.f32 %v4323, %v4407
        %v4449 = vadd.f32 %v4324, %v4407
        %v4450 = vadd.f32 %v4325, %v4407
        %v4451 = vadd.f32 %v4326, %v4407
        %v4452 = vadd.f32 %v4327, %v4407
        %v4453 = vadd.f32 %v4328, %v4407
        %v4454 = vadd.f32 %v4329, %v4407
        %v4455 = vadd.f32 %v4330, %v4407
        %v4456 = vadd.f32 %v4331, %v4407
        %v4457 = vadd.f32 %v4332, %v4407
        %v4458 = vadd.f32 %v4333, %v4407
        %v4459 = vadd.f32 %v4334, %v4407
        %v4460 = vadd.f32 %v4335, %v4407
        %v4461 = vadd.f32 %v4336, %v4407
        %v4462 = vadd.f32 %v4337, %v4407
        %v4463 = vadd.f32 %v4338, %v4407
        %v4464 = vadd.f32 %v4339, %v4407
        %v4465 = vadd.f32 %v4340, %v4407
        %v4466 = vadd.f32 %v4341, %v4407
        %v4467 = vadd.f32 %v4342, %v4407
        %v4468 = vadd.f32 %v4343, %v4407
        %v4469 = vadd.f32 %v4344, %v4407
        %v4470 = vadd.f32 %v4345, %v4407
        %v4471 = vadd.f32 %v4346, %v4407
        %v4472 = vadd.f32 %v4347, %v4407
        %v4473 = vadd.f32 %v4348, %v4407
        %v4474 = vadd.f32 %v4349, %v4407
        %v4475 = vadd.f32 %v4350, %v4407
        %v4476 = vadd.f32 %v4351, %v4407
        %v4477 = vadd.f32 %v4352, %v4407
        %v4478 = vadd.f32 %v4353, %v4407
        %v4479 = vadd.f32 %v4354, %v4407
        %v4480 = vadd.f32 %v4355, %v4407
        %v4481 = vadd.f32 %v4356, %v4407
        %v4482 = vadd.f32 %v4357, %v4407
        %v4483 = vadd.f32 %v4358, %v4407
        %v4484 = vadd.f32 %v4359, %v4407
        %v4485 = vadd.f32 %v4360, %v4407
        %v4486 = vadd.f32 %v4361, %v4407
        %v4487 = vadd.f32 %v4362, %v4407
        %v4488 = vadd.f32 %v4363, %v4407
        %v4489 = vadd.f32 %v4364, %v4407
        %v4490 = vadd.f32 %v4365, %v4407
        %v4491 = vadd.f32 %v4366, %v4407
        %v4492 = vadd.f32 %v4367, %v4407
        %v4493 = vadd.f32 %v4368, %v4407
        %v4494 = vadd.f32 %v4369, %v4407
        %v4495 = vadd.f32 %v4370, %v4407
        %v4496 = vadd.f32 %v4371, %v4407
        %v4497 = vadd.f32 %v4372, %v4407
        %v4498 = vadd.f32 %v4373, %v4407
        %v4499 = vadd.f32 %v4374, %v4407
        %v4500 = vadd.f32 %v4375, %v4407
        %v4501 = vadd.f32 %v4376, %v4407
        %v4502 = vadd.f32 %v4377, %v4407
        %v4503 = vadd.f32 %v4378, %v4407
        %v4504 = vadd.f32 %v4379, %v4407
        %v4505 = vadd.f32 %v4380, %v4407
        %v4506 = vadd.f32 %v4381, %v4407
        %v4507 = vadd.f32 %v4382, %v4407
        %v4508 = vadd.f32 %v4383, %v4407
        %v4509 = vadd.f32 %v4384, %v4407
        %v4510 = vadd.f32 %v4385, %v4407
        %v4511 = vadd.f32 %v4386, %v4407
        %v4512 = vadd.f32 %v4387, %v4407
        %v4513 = vadd.f32 %v4388, %v4407
        %v4514 = vadd.f32 %v4389, %v4407
        %v4515 = vadd.f32 %v4390, %v4407
        %v4516 = vadd.f32 %v4391, %v4407
        %v4517 = vadd.f32 %v4392, %v4407
        %v4518 = vadd.f32 %v4393, %v4407
        %v4519 = vadd.f32 %v4394, %v4407
        %v4520 = vadd.f32 %v4395, %v4407
        %v4521 = vadd.f32 %v4396, %v4407
        %v4522 = vadd.f32 %v4397, %v4407
        %v4523 = vadd.f32 %v4398, %v4407
        %v4524 = vadd.f32 %v4399, %v4407
        %v4525 = vadd.f32 %v4400, %v4407
        %v4526 = vadd.f32 %v4401, %v4407
        %v4527 = vadd.f32 %v4402, %v4407
        %v4528 = vadd.f32 %v4403, %v4407
        %v4529 = vadd.f32 %v4404, %v4407
        %v4530 = vmax.f32 %v4409, 0.0
        %v4531 = vmax.f32 %v4410, 0.0
        %v4532 = vmax.f32 %v4411, 0.0
        %v4533 = vmax.f32 %v4412, 0.0
        %v4534 = vmax.f32 %v4413, 0.0
        %v4535 = vmax.f32 %v4414, 0.0
        %v4536 = vmax.f32 %v4415, 0.0
        %v4537 = vmax.f32 %v4416, 0.0
        %v4538 = vmax.f32 %v4417, 0.0
        %v4539 = vmax.f32 %v4418, 0.0
        %v4540 = vmax.f32 %v4419, 0.0
        %v4541 = vmax.f32 %v4420, 0.0
        %v4542 = vmax.f32 %v4421, 0.0
        %v4543 = vmax.f32 %v4422, 0.0
        %v4544 = vmax.f32 %v4423, 0.0
        %v4545 = vmax.f32 %v4424, 0.0
        %v4546 = vmax.f32 %v4425, 0.0
        %v4547 = vmax.f32 %v4426, 0.0
        %v4548 = vmax.f32 %v4427, 0.0
        %v4549 = vmax.f32 %v4428, 0.0
        %v4550 = vmax.f32 %v4429, 0.0
        %v4551 = vmax.f32 %v4430, 0.0
        %v4552 = vmax.f32 %v4431, 0.0
        %v4553 = vmax.f32 %v4432, 0.0
        %v4554 = vmax.f32 %v4433, 0.0
        %v4555 = vmax.f32 %v4434, 0.0
        %v4556 = vmax.f32 %v4435, 0.0
        %v4557 = vmax.f32 %v4436, 0.0
        %v4558 = vmax.f32 %v4437, 0.0
        %v4559 = vmax.f32 %v4438, 0.0
        %v4560 = vmax.f32 %v4439, 0.0
        %v4561 = vmax.f32 %v4440, 0.0
        %v4562 = vmax.f32 %v4441, 0.0
        %v4563 = vmax.f32 %v4442, 0.0
        %v4564 = vmax.f32 %v4443, 0.0
        %v4565 = vmax.f32 %v4444, 0.0
        %v4566 = vmax.f32 %v4445, 0.0
        %v4567 = vmax.f32 %v4446, 0.0
        %v4568 = vmax.f32 %v4447, 0.0
        %v4569 = vmax.f32 %v4448, 0.0
        %v4570 = vmax.f32 %v4449, 0.0
        %v4571 = vmax.f32 %v4450, 0.0
        %v4572 = vmax.f32 %v4451, 0.0
        %v4573 = vmax.f32 %v4452, 0.0
        %v4574 = vmax.f32 %v4453, 0.0
        %v4575 = vmax.f32 %v4454, 0.0
        %v4576 = vmax.f32 %v4455, 0.0
        %v4577 = vmax.f32 %v4456, 0.0
        %v4578 = vmax.f32 %v4457, 0.0
        %v4579 = vmax.f32 %v4458, 0.0
        %v4580 = vmax.f32 %v4459, 0.0
        %v4581 = vmax.f32 %v4460, 0.0
        %v4582 = vmax.f32 %v4461, 0.0
        %v4583 = vmax.f32 %v4462, 0.0
        %v4584 = vmax.f32 %v4463, 0.0
        %v4585 = vmax.f32 %v4464, 0.0
        %v4586 = vmax.f32 %v4465, 0.0
        %v4587 = vmax.f32 %v4466, 0.0
        %v4588 = vmax.f32 %v4467, 0.0
        %v4589 = vmax.f32 %v4468, 0.0
        %v4590 = vmax.f32 %v4469, 0.0
        %v4591 = vmax.f32 %v4470, 0.0
        %v4592 = vmax.f32 %v4471, 0.0
        %v4593 = vmax.f32 %v4472, 0.0
        %v4594 = vmax.f32 %v4473, 0.0
        %v4595 = vmax.f32 %v4474, 0.0
        %v4596 = vmax.f32 %v4475, 0.0
        %v4597 = vmax.f32 %v4476, 0.0
        %v4598 = vmax.f32 %v4477, 0.0
        %v4599 = vmax.f32 %v4478, 0.0
        %v4600 = vmax.f32 %v4479, 0.0
        %v4601 = vmax.f32 %v4480, 0.0
        %v4602 = vmax.f32 %v4481, 0.0
        %v4603 = vmax.f32 %v4482, 0.0
        %v4604 = vmax.f32 %v4483, 0.0
        %v4605 = vmax.f32 %v4484, 0.0
        %v4606 = vmax.f32 %v4485, 0.0
        %v4607 = vmax.f32 %v4486, 0.0
        %v4608 = vmax.f32 %v4487, 0.0
        %v4609 = vmax.f32 %v4488, 0.0
        %v4610 = vmax.f32 %v4489, 0.0
        %v4611 = vmax.f32 %v4490, 0.0
        %v4612 = vmax.f32 %v4491, 0.0
        %v4613 = vmax.f32 %v4492, 0.0
        %v4614 = vmax.f32 %v4493, 0.0
        %v4615 = vmax.f32 %v4494, 0.0
        %v4616 = vmax.f32 %v4495, 0.0
        %v4617 = vmax.f32 %v4496, 0.0
        %v4618 = vmax.f32 %v4497, 0.0
        %v4619 = vmax.f32 %v4498, 0.0
        %v4620 = vmax.f32 %v4499, 0.0
        %v4621 = vmax.f32 %v4500, 0.0
        %v4622 = vmax.f32 %v4501, 0.0
        %v4623 = vmax.f32 %v4502, 0.0
        %v4624 = vmax.f32 %v4503, 0.0
        %v4625 = vmax.f32 %v4504, 0.0
        %v4626 = vmax.f32 %v4505, 0.0
        %v4627 = vmax.f32 %v4506, 0.0
        %v4628 = vmax.f32 %v4507, 0.0
        %v4629 = vmax.f32 %v4508, 0.0
        %v4630 = vmax.f32 %v4509, 0.0
        %v4631 = vmax.f32 %v4510, 0.0
        %v4632 = vmax.f32 %v4511, 0.0
        %v4633 = vmax.f32 %v4512, 0.0
        %v4634 = vmax.f32 %v4513, 0.0
        %v4635 = vmax.f32 %v4514, 0.0
        %v4636 = vmax.f32 %v4515, 0.0
        %v4637 = vmax.f32 %v4516, 0.0
        %v4638 = vmax.f32 %v4517, 0.0
        %v4639 = vmax.f32 %v4518, 0.0
        %v4640 = vmax.f32 %v4519, 0.0
        %v4641 = vmax.f32 %v4520, 0.0
        %v4642 = vmax.f32 %v4521, 0.0
        %v4643 = vmax.f32 %v4522, 0.0
        %v4644 = vmax.f32 %v4523, 0.0
        %v4645 = vmax.f32 %v4524, 0.0
        %v4646 = vmax.f32 %v4525, 0.0
        %v4647 = vmax.f32 %v4526, 0.0
        %v4648 = vmax.f32 %v4527, 0.0
        %v4649 = vmax.f32 %v4528, 0.0
        %v4650 = vmax.f32 %v4529, 0.0
        %v4651 = vpack.c.bf16 %v4530, %v4530
        %v4652 = vpack.c.bf16 %v4531, %v4531
        %v4653 = vpack.c.bf16 %v4532, %v4532
        %v4654 = vpack.c.bf16 %v4533, %v4533
        %v4655 = vpack.c.bf16 %v4534, %v4534
        %v4656 = vpack.c.bf16 %v4535, %v4535
        %v4657 = vpack.c.bf16 %v4536, %v4536
        %v4658 = vpack.c.bf16 %v4537, %v4537
        %v4659 = vpack.c.bf16 %v4538, %v4538
        %v4660 = vpack.c.bf16 %v4539, %v4539
        %v4661 = vpack.c.bf16 %v4540, %v4540
        %v4662 = vpack.c.bf16 %v4541, %v4541
        %v4663 = vpack.c.bf16 %v4542, %v4542
        %v4664 = vpack.c.bf16 %v4543, %v4543
        %v4665 = vpack.c.bf16 %v4544, %v4544
        %v4666 = vpack.c.bf16 %v4545, %v4545
        %v4667 = vpack.c.bf16 %v4546, %v4546
        %v4668 = vpack.c.bf16 %v4547, %v4547
        %v4669 = vpack.c.bf16 %v4548, %v4548
        %v4670 = vpack.c.bf16 %v4549, %v4549
        %v4671 = vpack.c.bf16 %v4550, %v4550
        %v4672 = vpack.c.bf16 %v4551, %v4551
        %v4673 = vpack.c.bf16 %v4552, %v4552
        %v4674 = vpack.c.bf16 %v4553, %v4553
        %v4675 = vpack.c.bf16 %v4554, %v4554
        %v4676 = vpack.c.bf16 %v4555, %v4555
        %v4677 = vpack.c.bf16 %v4556, %v4556
        %v4678 = vpack.c.bf16 %v4557, %v4557
        %v4679 = vpack.c.bf16 %v4558, %v4558
        %v4680 = vpack.c.bf16 %v4559, %v4559
        %v4681 = vpack.c.bf16 %v4560, %v4560
        %v4682 = vpack.c.bf16 %v4561, %v4561
        %v4683 = vpack.c.bf16 %v4562, %v4562
        %v4684 = vpack.c.bf16 %v4563, %v4563
        %v4685 = vpack.c.bf16 %v4564, %v4564
        %v4686 = vpack.c.bf16 %v4565, %v4565
        %v4687 = vpack.c.bf16 %v4566, %v4566
        %v4688 = vpack.c.bf16 %v4567, %v4567
        %v4689 = vpack.c.bf16 %v4568, %v4568
        %v4690 = vpack.c.bf16 %v4569, %v4569
        %v4691 = vpack.c.bf16 %v4570, %v4570
        %v4692 = vpack.c.bf16 %v4571, %v4571
        %v4693 = vpack.c.bf16 %v4572, %v4572
        %v4694 = vpack.c.bf16 %v4573, %v4573
        %v4695 = vpack.c.bf16 %v4574, %v4574
        %v4696 = vpack.c.bf16 %v4575, %v4575
        %v4697 = vpack.c.bf16 %v4576, %v4576
        %v4698 = vpack.c.bf16 %v4577, %v4577
        %v4699 = vpack.c.bf16 %v4578, %v4578
        %v4700 = vpack.c.bf16 %v4579, %v4579
        %v4701 = vpack.c.bf16 %v4580, %v4580
        %v4702 = vpack.c.bf16 %v4581, %v4581
        %v4703 = vpack.c.bf16 %v4582, %v4582
        %v4704 = vpack.c.bf16 %v4583, %v4583
        %v4705 = vpack.c.bf16 %v4584, %v4584
        %v4706 = vpack.c.bf16 %v4585, %v4585
        %v4707 = vpack.c.bf16 %v4586, %v4586
        %v4708 = vpack.c.bf16 %v4587, %v4587
        %v4709 = vpack.c.bf16 %v4588, %v4588
        %v4710 = vpack.c.bf16 %v4589, %v4589
        %v4711 = vpack.c.bf16 %v4590, %v4590
        %v4712 = vpack.c.bf16 %v4591, %v4591
        %v4713 = vpack.c.bf16 %v4592, %v4592
        %v4714 = vpack.c.bf16 %v4593, %v4593
        %v4715 = vpack.c.bf16 %v4594, %v4594
        %v4716 = vpack.c.bf16 %v4595, %v4595
        %v4717 = vpack.c.bf16 %v4596, %v4596
        %v4718 = vpack.c.bf16 %v4597, %v4597
        %v4719 = vpack.c.bf16 %v4598, %v4598
        %v4720 = vpack.c.bf16 %v4599, %v4599
        %v4721 = vpack.c.bf16 %v4600, %v4600
        %v4722 = vpack.c.bf16 %v4601, %v4601
        %v4723 = vpack.c.bf16 %v4602, %v4602
        %v4724 = vpack.c.bf16 %v4603, %v4603
        %v4725 = vpack.c.bf16 %v4604, %v4604
        %v4726 = vpack.c.bf16 %v4605, %v4605
        %v4727 = vpack.c.bf16 %v4606, %v4606
        %v4728 = vpack.c.bf16 %v4607, %v4607
        %v4729 = vpack.c.bf16 %v4608, %v4608
        %v4730 = vpack.c.bf16 %v4609, %v4609
        %v4731 = vpack.c.bf16 %v4610, %v4610
        %v4732 = vpack.c.bf16 %v4611, %v4611
        %v4733 = vpack.c.bf16 %v4612, %v4612
        %v4734 = vpack.c.bf16 %v4613, %v4613
        %v4735 = vpack.c.bf16 %v4614, %v4614
        %v4736 = vpack.c.bf16 %v4615, %v4615
        %v4737 = vpack.c.bf16 %v4616, %v4616
        %v4738 = vpack.c.bf16 %v4617, %v4617
        %v4739 = vpack.c.bf16 %v4618, %v4618
        %v4740 = vpack.c.bf16 %v4619, %v4619
        %v4741 = vpack.c.bf16 %v4620, %v4620
        %v4742 = vpack.c.bf16 %v4621, %v4621
        %v4743 = vpack.c.bf16 %v4622, %v4622
        %v4744 = vpack.c.bf16 %v4623, %v4623
        %v4745 = vpack.c.bf16 %v4624, %v4624
        %v4746 = vpack.c.bf16 %v4625, %v4625
        %v4747 = vpack.c.bf16 %v4626, %v4626
        %v4748 = vpack.c.bf16 %v4627, %v4627
        %v4749 = vpack.c.bf16 %v4628, %v4628
        %v4750 = vpack.c.bf16 %v4629, %v4629
        %v4751 = vpack.c.bf16 %v4630, %v4630
        %v4752 = vpack.c.bf16 %v4631, %v4631
        %v4753 = vpack.c.bf16 %v4632, %v4632
        %v4754 = vpack.c.bf16 %v4633, %v4633
        %v4755 = vpack.c.bf16 %v4634, %v4634
        %v4756 = vpack.c.bf16 %v4635, %v4635
        %v4757 = vpack.c.bf16 %v4636, %v4636
        %v4758 = vpack.c.bf16 %v4637, %v4637
        %v4759 = vpack.c.bf16 %v4638, %v4638
        %v4760 = vpack.c.bf16 %v4639, %v4639
        %v4761 = vpack.c.bf16 %v4640, %v4640
        %v4762 = vpack.c.bf16 %v4641, %v4641
        %v4763 = vpack.c.bf16 %v4642, %v4642
        %v4764 = vpack.c.bf16 %v4643, %v4643
        %v4765 = vpack.c.bf16 %v4644, %v4644
        %v4766 = vpack.c.bf16 %v4645, %v4645
        %v4767 = vpack.c.bf16 %v4646, %v4646
        %v4768 = vpack.c.bf16 %v4647, %v4647
        %v4769 = vpack.c.bf16 %v4648, %v4648
        %v4770 = vpack.c.bf16 %v4649, %v4649
        %v4771 = vpack.c.bf16 %v4650, %v4650
        %4772 = vst [vmem:[%s343] sm:$0xf] %v4651
        %4773 = vst [vmem:[%s343 + $0x4] sm:$0xf] %v4652
        %4774 = vst [vmem:[%s343 + $0x8] sm:$0xf] %v4653
        %4775 = vst [vmem:[%s343 + $0xc] sm:$0xf] %v4654
        %4776 = vst [vmem:[%s343 + $0x10] sm:$0xf] %v4655
        %4777 = vst [vmem:[%s343 + $0x14] sm:$0xf] %v4656
        %4778 = vst [vmem:[%s343 + $0x18] sm:$0xf] %v4657
        %4779 = vst [vmem:[%s343 + $0x1c] sm:$0xf] %v4658
        %4780 = vst [vmem:[%s343 + $0x20] sm:$0xf] %v4659
        %4781 = vst [vmem:[%s343 + $0x24] sm:$0xf] %v4660
        %4782 = vst [vmem:[%s343 + $0x28] sm:$0xf] %v4661
        %4783 = vst [vmem:[%s343 + $0x2c] sm:$0xf] %v4662
        %4784 = vst [vmem:[%s343 + $0x30] sm:$0xf] %v4663
        %4785 = vst [vmem:[%s343 + $0x34] sm:$0xf] %v4664
        %4786 = vst [vmem:[%s343 + $0x38] sm:$0xf] %v4665
        %4787 = vst [vmem:[%s343 + $0x3c] sm:$0xf] %v4666
        %4788 = vst [vmem:[%s343 + $0x40] sm:$0xf] %v4667
        %4789 = vst [vmem:[%s343 + $0x44] sm:$0xf] %v4668
        %4790 = vst [vmem:[%s343 + $0x48] sm:$0xf] %v4669
        %4791 = vst [vmem:[%s343 + $0x4c] sm:$0xf] %v4670
        %4792 = vst [vmem:[%s343 + $0x50] sm:$0xf] %v4671
        %4793 = vst [vmem:[%s343 + $0x54] sm:$0xf] %v4672
        %4794 = vst [vmem:[%s343 + $0x58] sm:$0xf] %v4673
        %4795 = vst [vmem:[%s343 + $0x5c] sm:$0xf] %v4674
        %4796 = vst [vmem:[%s343 + $0x60] sm:$0xf] %v4675
        %4797 = vst [vmem:[%s343 + $0x64] sm:$0xf] %v4676
        %4798 = vst [vmem:[%s343 + $0x68] sm:$0xf] %v4677
        %4799 = vst [vmem:[%s343 + $0x6c] sm:$0xf] %v4678
        %4800 = vst [vmem:[%s343 + $0x70] sm:$0xf] %v4679
        %4801 = vst [vmem:[%s343 + $0x74] sm:$0xf] %v4680
        %4802 = vst [vmem:[%s343 + $0x78] sm:$0xf] %v4681
        %4803 = vst [vmem:[%s343 + $0x7c] sm:$0xf] %v4682
        %4804 = vst [vmem:[%s343 + $0x80] sm:$0xf] %v4683
        %4805 = vst [vmem:[%s343 + $0x84] sm:$0xf] %v4684
        %4806 = vst [vmem:[%s343 + $0x88] sm:$0xf] %v4685
        %4807 = vst [vmem:[%s343 + $0x8c] sm:$0xf] %v4686
        %4808 = vst [vmem:[%s343 + $0x90] sm:$0xf] %v4687
        %4809 = vst [vmem:[%s343 + $0x94] sm:$0xf] %v4688
        %4810 = vst [vmem:[%s343 + $0x98] sm:$0xf] %v4689
        %4811 = vst [vmem:[%s343 + $0x9c] sm:$0xf] %v4690
        %4812 = vst [vmem:[%s343 + $0xa0] sm:$0xf] %v4691
        %4813 = vst [vmem:[%s343 + $0xa4] sm:$0xf] %v4692
        %4814 = vst [vmem:[%s343 + $0xa8] sm:$0xf] %v4693
        %4815 = vst [vmem:[%s343 + $0xac] sm:$0xf] %v4694
        %4816 = vst [vmem:[%s343 + $0xb0] sm:$0xf] %v4695
        %4817 = vst [vmem:[%s343 + $0xb4] sm:$0xf] %v4696
        %4818 = vst [vmem:[%s343 + $0xb8] sm:$0xf] %v4697
        %4819 = vst [vmem:[%s343 + $0xbc] sm:$0xf] %v4698
        %4820 = vst [vmem:[%s343 + $0xc0] sm:$0xf] %v4699
        %4821 = vst [vmem:[%s343 + $0xc4] sm:$0xf] %v4700
        %4822 = vst [vmem:[%s343 + $0xc8] sm:$0xf] %v4701
        %4823 = vst [vmem:[%s343 + $0xcc] sm:$0xf] %v4702
        %4824 = vst [vmem:[%s343 + $0xd0] sm:$0xf] %v4703
        %4825 = vst [vmem:[%s343 + $0xd4] sm:$0xf] %v4704
        %4826 = vst [vmem:[%s343 + $0xd8] sm:$0xf] %v4705
        %4827 = vst [vmem:[%s343 + $0xdc] sm:$0xf] %v4706
        %4828 = vst [vmem:[%s343 + $0xe0] sm:$0xf] %v4707
        %4829 = vst [vmem:[%s343 + $0xe4] sm:$0xf] %v4708
        %4830 = vst [vmem:[%s343 + $0xe8] sm:$0xf] %v4709
        %4831 = vst [vmem:[%s343 + $0xec] sm:$0xf] %v4710
        %4832 = vst [vmem:[%s343 + $0xf0] sm:$0xf] %v4711
        %4833 = vst [vmem:[%s343 + $0xf4] sm:$0xf] %v4712
        %4834 = vst [vmem:[%s343 + $0xf8] sm:$0xf] %v4713
        %4835 = vst [vmem:[%s343 + $0xfc] sm:$0xf] %v4714
        %4836 = vst [vmem:[%s343 + $0x100] sm:$0xf] %v4715
        %4837 = vst [vmem:[%s343 + $0x104] sm:$0xf] %v4716
        %4838 = vst [vmem:[%s343 + $0x108] sm:$0xf] %v4717
        %4839 = vst [vmem:[%s343 + $0x10c] sm:$0xf] %v4718
        %4840 = vst [vmem:[%s343 + $0x110] sm:$0xf] %v4719
        %4841 = vst [vmem:[%s343 + $0x114] sm:$0xf] %v4720
        %4842 = vst [vmem:[%s343 + $0x118] sm:$0xf] %v4721
        %4843 = vst [vmem:[%s343 + $0x11c] sm:$0xf] %v4722
        %4844 = vst [vmem:[%s343 + $0x120] sm:$0xf] %v4723
        %4845 = vst [vmem:[%s343 + $0x124] sm:$0xf] %v4724
        %4846 = vst [vmem:[%s343 + $0x128] sm:$0xf] %v4725
        %4847 = vst [vmem:[%s343 + $0x12c] sm:$0xf] %v4726
        %4848 = vst [vmem:[%s343 + $0x130] sm:$0xf] %v4727
        %4849 = vst [vmem:[%s343 + $0x134] sm:$0xf] %v4728
        %4850 = vst [vmem:[%s343 + $0x138] sm:$0xf] %v4729
        %4851 = vst [vmem:[%s343 + $0x13c] sm:$0xf] %v4730
        %4852 = vst [vmem:[%s343 + $0x140] sm:$0xf] %v4731
        %4853 = vst [vmem:[%s343 + $0x144] sm:$0xf] %v4732
        %4854 = vst [vmem:[%s343 + $0x148] sm:$0xf] %v4733
        %4855 = vst [vmem:[%s343 + $0x14c] sm:$0xf] %v4734
        %4856 = vst [vmem:[%s343 + $0x150] sm:$0xf] %v4735
        %4857 = vst [vmem:[%s343 + $0x154] sm:$0xf] %v4736
        %4858 = vst [vmem:[%s343 + $0x158] sm:$0xf] %v4737
        %4859 = vst [vmem:[%s343 + $0x15c] sm:$0xf] %v4738
        %4860 = vst [vmem:[%s343 + $0x160] sm:$0xf] %v4739
        %4861 = vst [vmem:[%s343 + $0x164] sm:$0xf] %v4740
        %4862 = vst [vmem:[%s343 + $0x168] sm:$0xf] %v4741
        %4863 = vst [vmem:[%s343 + $0x16c] sm:$0xf] %v4742
        %4864 = vst [vmem:[%s343 + $0x170] sm:$0xf] %v4743
        %4865 = vst [vmem:[%s343 + $0x174] sm:$0xf] %v4744
        %4866 = vst [vmem:[%s343 + $0x178] sm:$0xf] %v4745
        %4867 = vst [vmem:[%s343 + $0x17c] sm:$0xf] %v4746
        %4868 = vst [vmem:[%s343 + $0x180] sm:$0xf] %v4747
        %4869 = vst [vmem:[%s343 + $0x184] sm:$0xf] %v4748
        %4870 = vst [vmem:[%s343 + $0x188] sm:$0xf] %v4749
        %4871 = vst [vmem:[%s343 + $0x18c] sm:$0xf] %v4750
        %4872 = vst [vmem:[%s343 + $0x190] sm:$0xf] %v4751
        %4873 = vst [vmem:[%s343 + $0x194] sm:$0xf] %v4752
        %4874 = vst [vmem:[%s343 + $0x198] sm:$0xf] %v4753
        %4875 = vst [vmem:[%s343 + $0x19c] sm:$0xf] %v4754
        %4876 = vst [vmem:[%s343 + $0x1a0] sm:$0xf] %v4755
        %4877 = vst [vmem:[%s343 + $0x1a4] sm:$0xf] %v4756
        %4878 = vst [vmem:[%s343 + $0x1a8] sm:$0xf] %v4757
        %4879 = vst [vmem:[%s343 + $0x1ac] sm:$0xf] %v4758
        %4880 = vst [vmem:[%s343 + $0x1b0] sm:$0xf] %v4759
        %4881 = vst [vmem:[%s343 + $0x1b4] sm:$0xf] %v4760
        %4882 = vst [vmem:[%s343 + $0x1b8] sm:$0xf] %v4761
        %4883 = vst [vmem:[%s343 + $0x1bc] sm:$0xf] %v4762
        %4884 = vst [vmem:[%s343 + $0x1c0] sm:$0xf] %v4763
        %4885 = vst [vmem:[%s343 + $0x1c4] sm:$0xf] %v4764
        %4886 = vst [vmem:[%s343 + $0x1c8] sm:$0xf] %v4765
        %4887 = vst [vmem:[%s343 + $0x1cc] sm:$0xf] %v4766
        %4888 = vst [vmem:[%s343 + $0x1d0] sm:$0xf] %v4767
        %4889 = vst [vmem:[%s343 + $0x1d4] sm:$0xf] %v4768
        %4890 = vst [vmem:[%s343 + $0x1d8] sm:$0xf] %v4769
        %4891 = vst [vmem:[%s343 + $0x1dc] sm:$0xf] %v4770
        %vm4892 = vcmask 1040384
        %vm4893 = vsmask.f32 256
        %vm4894 = vmand %vm4892, %vm4893
        %v4895 = vld [vmem:[%s343 + $0x1e0] sm:$0x1]
        %v4896 = vsel %vm4894, %v4771, %v4895
        %4897 = vst [vmem:[%s343 + $0x1e0] sm:$0x1] %v4896
        %p4898 = scmp.lt.s32.totalorder %s19, 1
        %s4899 = scalar_select %p4898, %s19, 1
        %s4900 = smul.addr %s4899, 121
        %s4901 = smul.addr %s4900, 4
        %s4902 = scalar_lea.vmem %s6, %s4901
        // Predicated region
        $region53: #{net1_forward.3} parent=43 // pred_check
          %p4903 = pneg %p183
        $region54: #{net1_forward.3} parent=43 // pred_check_branch
          %4905 = sbr.rel (%p4903) target = $region56
        $region55: #{net1_forward.3} parent=43 // pred_region
          _
        $region56: #{net1_forward.3} parent=43 // pred_fallthru
          _
      $region44: #{net1_forward.3} parent=5 // pred_fallthru
        _
      %p4906 = scmp.le.s32.totalorder 2, %s14
      // Predicated region
      $region57: #{net1_forward.3} parent=5 // pred_check
        %p4907 = pneg %p4906
      $region58: #{net1_forward.3} parent=5 // pred_check_branch
        %4909 = sbr.rel (%p4907) target = $region60
      $region59: #{net1_forward.3} parent=5 // pred_region
        %s4910 = ssub.s32 %s14, 2
        // Predicated region
        $region61: #{net1_forward.3} parent=59 // pred_check
          %p4911 = pneg %p189
        $region62: #{net1_forward.3} parent=59 // pred_check_branch
          %4913 = sbr.rel (%p4911) target = $region64
        $region63: #{net1_forward.3} parent=59 // pred_region
          %p4914 = scmp.lt.s32.totalorder %s20, 1
          %s4915 = scalar_select %p4914, %s20, 1
          %s4916 = smul.addr %s4915, 121
          %s4917 = smul.addr %s4916, 4
          %s4918 = scalar_lea.vmem %s6, %s4917
        $region64: #{net1_forward.3} parent=59 // pred_fallthru
          _
      $region60: #{net1_forward.3} parent=5 // pred_fallthru
        _
    $region6: #{net1_forward.3} parent=1 // loop_footer
      %s18 = sadd.s32 1, %s14
    $region7: #{net1_forward.3} parent=1 // loop_footer_branch
      %13 = sbr.rel target = $region3
    $region8: #{net1_forward.3} parent=1 // loop_exit
      _
    %4919 = vsyncpa [#allocation3], 1
    %s4920 = scalar_lea.sflag [#allocation3], 1
    %4921 = vsyncpa %s4920, 1
    %4922 = vsyncpa [#allocation5], 1

// kernel: net1_forward.4
$region0: #{net1_forward.4}
  #allocation0 [shape = 'u32[]', space=smem, size = 0x4, offset = 0x4, fixed_abs, tag = 'smem constant byte address 0x4 - core index']
  #allocation1 [shape = 'u32[72,128]{1,0:T(1,128)}', space=vmem, size = 0x9000, scoped, tag = 'internal scratch']
  #allocation2 [shape = 'f32[2,512]{1,0:T(2,128)}', space=vmem, size = 0x1000, scoped, tag = 'scratch operand']
  %s0 = inlined_call_operand.vmem [shape: bf16[2,123008], index: 0, kind: input, shape index: {}]
  %s1 = inlined_call_operand.hbm [shape: bf16[123008,1024], index: 1, kind: input, shape index: {}]
  %s2 = inlined_call_operand.hbm [shape: f32[1,1024], index: 2, kind: input, shape index: {}]
  %s3 = inlined_call_operand.vmem [shape: f32[2,1024], index: 3, kind: output, shape index: {}]
  %s4 = sld [smem:[#allocation0]]
  $region61: #{net1_forward.4} parent=0
    _
  %s6 = ssub.s32 1, %s4
  %s7 = scalar_select 0, %s6, %s4
  $region1: #{net1_forward.4} parent=0
    #allocation3 [shape = 'u8[8126464]{0}', space=vmem, size = 0x7c0000, scoped, tag = 'input window, operand 1']
    #allocation4 [shape = 's32[2]{0}', space=sflag, size = 0x8, scoped, tag = 'scoped memory for net1_forward.4']
    #allocation5 [shape = 'u8[4096]{0}', space=vmem, size = 0x1000, scoped, tag = 'input window, operand 2']
    #allocation6 [shape = 's32[2]{0}', space=sflag, size = 0x8, scoped, tag = 'scoped memory for net1_forward.4']
    %8 = vsyncpa [#allocation4], 0
    %s9 = scalar_lea.sflag [#allocation4], 1
    %10 = vsyncpa %s9, 0
    %11 = vsyncpa [#allocation6], 0
    %s12 = scalar_lea.sflag [#allocation6], 1
    %13 = vsyncpa %s12, 0
    loop: start=0, step=1, limit=64
    $region2: #{net1_forward.4} parent=1 // loop_pre_header
      _
    $region3: #{net1_forward.4} parent=1 // loop_header
      %s15 = sphi 0, %s19
      %p16 = scmp.ge.s32.totalorder %s15, 64
      %s22 = sphi 0, %s34
      %s23 = sphi 0, %s30
      %s24 = sphi 0, %s22
      %s25 = sphi 0, %s23
      %s26 = sphi 0, %s24
      %s27 = sphi 0, %s25
      %s37 = sphi 0, %s39
      %s40 = sphi 0, %s37
      %s41 = sphi 0, %s40
      %s57 = sphi 0, %s41
      %s65 = sphi 0, %s67
      %s68 = sphi 0, %s65
      %s69 = sphi 0, %s68
      %s85 = sphi 0, %s69
      %s91 = sphi 0, %s93
      %s94 = sphi 0, %s91
      %s95 = sphi 0, %s94
      %s111 = sphi 0, %s95
      %s117 = sphi 0, %s119
      %s120 = sphi 0, %s117
      %s121 = sphi 0, %s120
      %s137 = sphi 0, %s121
    $region4: #{net1_forward.4} parent=1 // loop_header_branch
      %18 = sbr.rel (%p16) target = $region8
    $region5: #{net1_forward.4} parent=1 // loop_body
      %s20 = ssub.s32 %s15, 1
      %s21 = ssub.s32 %s15, 2
      %s28 = sadd.s32 1, %s23
      %p29 = scmp.ge.s32.totalorder %s28, 31
      %s30 = scalar_select %p29, 0, %s28
      %s31 = sadd.s32 1, %s22
      %s32 = scalar_select %p29, %s31, %s22
      %p33 = scmp.ge.s32.totalorder %s32, 2
      %s34 = scalar_select %p33, 0, %s32
      %s35 = ssub.s32 %s23, %s30
      %p36 = scmp.eq.s32.totalorder %s35, 0
      %s38 = sadd.s32 %s37, 1
      %s39 = scalar_select %p36, %s37, %s38
      %p42 = pneg %p36
      %p43 = scmp.eq.s32.totalorder %s15, 61
      %p44 = por %p42, %p43
      %p45 = scmp.ne.s32.totalorder %s37, %s40
      %p46 = scmp.eq.s32.totalorder %s15, 0
      %p47 = por %p45, %p46
      %p48 = scmp.ne.s32.totalorder %s37, %s40
      %p49 = scmp.eq.s32.totalorder %s20, 61
      %p50 = por %p48, %p49
      %p51 = scmp.ne.s32.totalorder %s40, %s41
      %p52 = scmp.eq.s32.totalorder %s20, 0
      %p53 = por %p51, %p52
      %p54 = scmp.ne.s32.totalorder %s40, %s41
      %p55 = scmp.eq.s32.totalorder %s21, 61
      %p56 = por %p54, %p55
      %p58 = scmp.ne.s32.totalorder %s41, %s57
      %p59 = scmp.eq.s32.totalorder %s21, 0
      %p60 = por %p58, %p59
      %s61 = ssub.s32 %s23, %s30
      %s62 = ssub.s32 %s22, %s34
      %s63 = sor.u32 %s61, %s62
      %p64 = scmp.eq.s32.totalorder %s63, 0
      %s66 = sadd.s32 %s65, 1
      %s67 = scalar_select %p64, %s65, %s66
      %p70 = pneg %p64
      %p71 = scmp.eq.s32.totalorder %s15, 61
      %p72 = por %p70, %p71
      %p73 = scmp.ne.s32.totalorder %s65, %s68
      %p74 = scmp.eq.s32.totalorder %s15, 0
      %p75 = por %p73, %p74
      %p76 = scmp.ne.s32.totalorder %s65, %s68
      %p77 = scmp.eq.s32.totalorder %s20, 61
      %p78 = por %p76, %p77
      %p79 = scmp.ne.s32.totalorder %s68, %s69
      %p80 = scmp.eq.s32.totalorder %s20, 0
      %p81 = por %p79, %p80
      %p82 = scmp.ne.s32.totalorder %s68, %s69
      %p83 = scmp.eq.s32.totalorder %s21, 61
      %p84 = por %p82, %p83
      %p86 = scmp.ne.s32.totalorder %s69, %s85
      %p87 = scmp.eq.s32.totalorder %s21, 0
      %p88 = por %p86, %p87
      %s89 = ssub.s32 %s22, %s34
      %p90 = scmp.eq.s32.totalorder %s89, 0
      %s92 = sadd.s32 %s91, 1
      %s93 = scalar_select %p90, %s91, %s92
      %p96 = pneg %p90
      %p97 = scmp.eq.s32.totalorder %s15, 61
      %p98 = por %p96, %p97
      %p99 = scmp.ne.s32.totalorder %s91, %s94
      %p100 = scmp.eq.s32.totalorder %s15, 0
      %p101 = por %p99, %p100
      %p102 = scmp.ne.s32.totalorder %s91, %s94
      %p103 = scmp.eq.s32.totalorder %s20, 61
      %p104 = por %p102, %p103
      %p105 = scmp.ne.s32.totalorder %s94, %s95
      %p106 = scmp.eq.s32.totalorder %s20, 0
      %p107 = por %p105, %p106
      %p108 = scmp.ne.s32.totalorder %s94, %s95
      %p109 = scmp.eq.s32.totalorder %s21, 61
      %p110 = por %p108, %p109
      %p112 = scmp.ne.s32.totalorder %s95, %s111
      %p113 = scmp.eq.s32.totalorder %s21, 0
      %p114 = por %p112, %p113
      %s115 = ssub.s32 %s22, %s34
      %p116 = scmp.eq.s32.totalorder %s115, 0
      %s118 = sadd.s32 %s117, 1
      %s119 = scalar_select %p116, %s117, %s118
      %p122 = pneg %p116
      %p123 = scmp.eq.s32.totalorder %s15, 61
      %p124 = por %p122, %p123
      %p125 = scmp.ne.s32.totalorder %s117, %s120
      %p126 = scmp.eq.s32.totalorder %s15, 0
      %p127 = por %p125, %p126
      %p128 = scmp.ne.s32.totalorder %s117, %s120
      %p129 = scmp.eq.s32.totalorder %s20, 61
      %p130 = por %p128, %p129
      %p131 = scmp.ne.s32.totalorder %s120, %s121
      %p132 = scmp.eq.s32.totalorder %s20, 0
      %p133 = por %p131, %p132
      %p134 = scmp.ne.s32.totalorder %s120, %s121
      %p135 = scmp.eq.s32.totalorder %s21, 61
      %p136 = por %p134, %p135
      %p138 = scmp.ne.s32.totalorder %s121, %s137
      %p139 = scmp.eq.s32.totalorder %s21, 0
      %p140 = por %p138, %p139
      %p141 = scmp.le.s32.totalorder 1, %s15
      %p142 = scmp.lt.s32.totalorder %s15, 63
      %p143 = pnand %p141, %p142
      %p144 = pneg %p143
      // Predicated region
      $region9: #{net1_forward.4} parent=5 // pred_check
        _
      $region10: #{net1_forward.4} parent=5 // pred_check_branch
        %146 = sbr.rel (%p143) target = $region12
      $region11: #{net1_forward.4} parent=5 // pred_region
        %s147 = ssub.s32 %s15, 1
      $region12: #{net1_forward.4} parent=5 // pred_fallthru
        _
      %p148 = scmp.lt.s32.totalorder %s15, 62
      // Predicated region
      $region13: #{net1_forward.4} parent=5 // pred_check
        %p149 = pneg %p148
      $region14: #{net1_forward.4} parent=5 // pred_check_branch
        %151 = sbr.rel (%p149) target = $region16
      $region15: #{net1_forward.4} parent=5 // pred_region
        // Predicated region
        $region17: #{net1_forward.4} parent=15 // pred_check
          %p152 = pneg %p47
        $region18: #{net1_forward.4} parent=15 // pred_check_branch
          %154 = sbr.rel (%p152) target = $region20
        $region19: #{net1_forward.4} parent=15 // pred_region
          %s155 = smul.u32 31, %s23
          %p156 = scmp.lt.s32.totalorder %s155, 960
          %s157 = scalar_select %p156, %s155, 960
          %s158 = scalar_lea.vmem %s0, %s157
          %s159 = smul.u32 31, %s23
        $region20: #{net1_forward.4} parent=15 // pred_fallthru
          _
        // Predicated region
        $region21: #{net1_forward.4} parent=15 // pred_check
          %p160 = pneg %p75
        $region22: #{net1_forward.4} parent=15 // pred_check_branch
          %162 = sbr.rel (%p160) target = $region24
        $region23: #{net1_forward.4} parent=15 // pred_region
          %s163 = sand.u32 %s65, 1
          %s164 = scalar_lea.sflag [#allocation4], %s163
          %s165 = sand.u32 %s65, 1
          %s166 = smul.addr %s165, 7936
          %s167 = scalar_lea.vmem [#allocation3], %s166
          %s168 = smul.u32 496, %s23
          %s169 = smul.u32 4, %s22
          %171 = vsyncadd %s164, 0
          %s172 = smul.addr %s168, 8
          %s173 = sadd.s32 %s169, %s172
          %s174 = smul.addr %s173, 4
          %s175 = scalar_lea.hbm %s1, %s174
          %s176 = sshll.u32 %s175, 4
          %s177 = int_to_ptr.hbm [resolvable:$true] %s176
          %s178 = sshll.u32 %s167, 4
          %s179 = int_to_ptr.vmem [resolvable:$true] %s178
          %184 = dma.hbm_to_vmem [thread:$0]  %s177, 126976, %s179, %s164, 512, 256, 16
        $region24: #{net1_forward.4} parent=15 // pred_fallthru
          _
        // Predicated region
        $region25: #{net1_forward.4} parent=15 // pred_check
          %p185 = pneg %p101
        $region26: #{net1_forward.4} parent=15 // pred_check_branch
          %187 = sbr.rel (%p185) target = $region28
        $region27: #{net1_forward.4} parent=15 // pred_region
          %s188 = sand.u32 %s91, 1
          %s189 = scalar_lea.sflag [#allocation6], %s188
          %s190 = sand.u32 %s91, 1
          %s191 = smul.addr %s190, 4
          %s192 = scalar_lea.vmem [#allocation5], %s191
          %s193 = smul.u32 4, %s22
          %195 = vsyncadd %s189, 0
          %s196 = scalar_lea.hbm %s2, %s193
          %s198 = sshll.u32 %s196, 4
          %s199 = int_to_ptr.hbm [resolvable:$true] %s198
          %s200 = sshll.u32 %s192, 4
          %s201 = int_to_ptr.vmem [resolvable:$true] %s200
          %203 = dma.hbm_to_vmem [thread:$0]  %s199, 64, %s201, %s189
        $region28: #{net1_forward.4} parent=15 // pred_fallthru
          _
      $region16: #{net1_forward.4} parent=5 // pred_fallthru
        _
      %p204 = scmp.le.s32.totalorder 1, %s15
      %p205 = scmp.lt.s32.totalorder %s15, 63
      %p206 = pnand %p204, %p205
      %p207 = pneg %p206
      // Predicated region
      $region29: #{net1_forward.4} parent=5 // pred_check
        _
      $region30: #{net1_forward.4} parent=5 // pred_check_branch
        %209 = sbr.rel (%p206) target = $region32
      $region31: #{net1_forward.4} parent=5 // pred_region
        %s210 = ssub.s32 %s15, 1
        %s211 = sand.u32 %s68, 1
        %s212 = scalar_lea.sflag [#allocation4], %s211
        %s213 = sand.u32 %s68, 1
        %s214 = smul.addr %s213, 7936
        %s215 = scalar_lea.vmem [#allocation3], %s214
        // Predicated region
        $region33: #{net1_forward.4} parent=31 // pred_check
          %p216 = pneg %p81
        $region34: #{net1_forward.4} parent=31 // pred_check_branch
          %218 = sbr.rel (%p216) target = $region36
        $region35: #{net1_forward.4} parent=31 // pred_region
          %220 = dma.done %s212, 126976
        $region36: #{net1_forward.4} parent=31 // pred_fallthru
          _
        %s221 = sand.u32 %s94, 1
        %s222 = scalar_lea.sflag [#allocation6], %s221
        %s223 = sand.u32 %s94, 1
        %s224 = smul.addr %s223, 4
        %s225 = scalar_lea.vmem [#allocation5], %s224
        // Predicated region
        $region37: #{net1_forward.4} parent=31 // pred_check
          %p226 = pneg %p107
        $region38: #{net1_forward.4} parent=31 // pred_check_branch
          %228 = sbr.rel (%p226) target = $region40
        $region39: #{net1_forward.4} parent=31 // pred_region
          %230 = dma.done %s222, 64
        $region40: #{net1_forward.4} parent=31 // pred_fallthru
          _
        %s231 = smul.u32 31, %s25
        %p232 = scmp.lt.s32.totalorder %s231, 960
        %s233 = scalar_select %p232, %s231, 960
        %s234 = scalar_lea.vmem %s0, %s233
        %p235 = pneg %p53
        %p236 = pneg %p50
        %s237 = sand.u32 %s68, 1
        %s238 = scalar_lea.sflag [#allocation4], %s237
        %s239 = sand.u32 %s68, 1
        %s240 = smul.addr %s239, 7936
        %s241 = scalar_lea.vmem [#allocation3], %s240
        %p242 = pneg %p81
        %p243 = pneg %p78
        %s244 = sand.u32 %s94, 1
        %s245 = scalar_lea.sflag [#allocation6], %s244
        %s246 = sand.u32 %s94, 1
        %s247 = smul.addr %s246, 4
        %s248 = scalar_lea.vmem [#allocation5], %s247
        %p249 = pneg %p107
        %p250 = pneg %p104
        %p251 = pneg %p133
        %p252 = pneg %p130
        %s253 = smul.u32 4, %s24
        %p254 = scmp.lt.s32.totalorder %s253, 7
        %s255 = scalar_select %p254, %s253, 7
        %s256 = smul.addr %s255, 2
        %s257 = scalar_lea.vmem %s3, %s256
        %s258 = smul.u32 31, %s25
        %p259 = scmp.lt.s32.totalorder %s258, 960
        %s260 = scalar_select %p259, %s258, 960
        %s261 = scalar_lea.vmem %s0, %s260
        %s262 = smul.u32 31, %s25
        %s263 = smul.u32 496, %s25
        %s264 = smul.u32 4, %s24
        %s265 = smul.u32 4, %s24
        %s266 = smul.u32 4, %s24
        %p267 = scmp.lt.s32.totalorder %s266, 7
        %s268 = scalar_select %p267, %s266, 7
        %s269 = smul.addr %s268, 2
        %s270 = scalar_lea.vmem %s3, %s269
        %s271 = smul.u32 4, %s24
        %p272 = scmp.eq.s32.totalorder %s25, 0
        // Predicated region
        $region41: #{net1_forward.4} parent=31 // pred_check
          %p273 = pneg %p272
        $region42: #{net1_forward.4} parent=31 // pred_check_branch
          %275 = sbr.rel (%p273) target = $region44
        $region43: #{net1_forward.4} parent=31 // pred_region
          %276 = vst [vmem:[#allocation2] sm:$0xff] 0.0
        $region44: #{net1_forward.4} parent=31 // pred_fallthru
          _
        %v277 = vld [vmem:[#allocation2] sm:$0xff]
        %v278 = vld [vmem:[%s261] sm:$0xff]
        %v279 = vld [vmem:[%s261 + $0x8] sm:$0xff]
        %v280 = vld [vmem:[%s261 + $0x10] sm:$0xff]
        %v281 = vld [vmem:[%s261 + $0x18] sm:$0x7f]
        %v282 = vld [vmem:[%s215] sm:$0xff]
        %v283 = vld [vmem:[%s215 + $0x8] sm:$0xff]
        %v284 = vld [vmem:[%s215 + $0x10] sm:$0xff]
        %v285 = vld [vmem:[%s215 + $0x18] sm:$0xff]
        %v286 = vld [vmem:[%s215 + $0x20] sm:$0xff]
        %v287 = vld [vmem:[%s215 + $0x28] sm:$0xff]
        %v288 = vld [vmem:[%s215 + $0x30] sm:$0xff]
        %v289 = vld [vmem:[%s215 + $0x38] sm:$0xff]
        %v290 = vld [vmem:[%s215 + $0x40] sm:$0xff]
        %v291 = vld [vmem:[%s215 + $0x48] sm:$0xff]
        %v292 = vld [vmem:[%s215 + $0x50] sm:$0xff]
        %v293 = vld [vmem:[%s215 + $0x58] sm:$0xff]
        %v294 = vld [vmem:[%s215 + $0x60] sm:$0xff]
        %v295 = vld [vmem:[%s215 + $0x68] sm:$0xff]
        %v296 = vld [vmem:[%s215 + $0x70] sm:$0xff]
        %v297 = vld [vmem:[%s215 + $0x78] sm:$0xff]
        %v298 = vld [vmem:[%s215 + $0x80] sm:$0xff]
        %v299 = vld [vmem:[%s215 + $0x88] sm:$0xff]
        %v300 = vld [vmem:[%s215 + $0x90] sm:$0xff]
        %v301 = vld [vmem:[%s215 + $0x98] sm:$0xff]
        %v302 = vld [vmem:[%s215 + $0xa0] sm:$0xff]
        %v303 = vld [vmem:[%s215 + $0xa8] sm:$0xff]
        %v304 = vld [vmem:[%s215 + $0xb0] sm:$0xff]
        %v305 = vld [vmem:[%s215 + $0xb8] sm:$0xff]
        %v306 = vld [vmem:[%s215 + $0xc0] sm:$0xff]
        %v307 = vld [vmem:[%s215 + $0xc8] sm:$0xff]
        %v308 = vld [vmem:[%s215 + $0xd0] sm:$0xff]
        %v309 = vld [vmem:[%s215 + $0xd8] sm:$0xff]
        %v310 = vld [vmem:[%s215 + $0xe0] sm:$0xff]
        %v311 = vld [vmem:[%s215 + $0xe8] sm:$0xff]
        %v312 = vld [vmem:[%s215 + $0xf0] sm:$0xff]
        %v313 = vld [vmem:[%s215 + $0xf8] sm:$0xff]
        %v314 = vld [vmem:[%s215 + $0x100] sm:$0xff]
        %v315 = vld [vmem:[%s215 + $0x108] sm:$0xff]
        %v316 = vld [vmem:[%s215 + $0x110] sm:$0xff]
        %v317 = vld [vmem:[%s215 + $0x118] sm:$0xff]
        %v318 = vld [vmem:[%s215 + $0x120] sm:$0xff]
        %v319 = vld [vmem:[%s215 + $0x128] sm:$0xff]
        %v320 = vld [vmem:[%s215 + $0x130] sm:$0xff]
        %v321 = vld [vmem:[%s215 + $0x138] sm:$0xff]
        %v322 = vld [vmem:[%s215 + $0x140] sm:$0xff]
        %v323 = vld [vmem:[%s215 + $0x148] sm:$0xff]
        %v324 = vld [vmem:[%s215 + $0x150] sm:$0xff]
        %v325 = vld [vmem:[%s215 + $0x158] sm:$0xff]
        %v326 = vld [vmem:[%s215 + $0x160] sm:$0xff]
        %v327 = vld [vmem:[%s215 + $0x168] sm:$0xff]
        %v328 = vld [vmem:[%s215 + $0x170] sm:$0xff]
        %v329 = vld [vmem:[%s215 + $0x178] sm:$0xff]
        %v330 = vld [vmem:[%s215 + $0x180] sm:$0xff]
        %v331 = vld [vmem:[%s215 + $0x188] sm:$0xff]
        %v332 = vld [vmem:[%s215 + $0x190] sm:$0xff]
        %v333 = vld [vmem:[%s215 + $0x198] sm:$0xff]
        %v334 = vld [vmem:[%s215 + $0x1a0] sm:$0xff]
        %v335 = vld [vmem:[%s215 + $0x1a8] sm:$0xff]
        %v336 = vld [vmem:[%s215 + $0x1b0] sm:$0xff]
        %v337 = vld [vmem:[%s215 + $0x1b8] sm:$0xff]
        %v338 = vld [vmem:[%s215 + $0x1c0] sm:$0xff]
        %v339 = vld [vmem:[%s215 + $0x1c8] sm:$0xff]
        %v340 = vld [vmem:[%s215 + $0x1d0] sm:$0xff]
        %v341 = vld [vmem:[%s215 + $0x1d8] sm:$0xff]
        %v342 = vld [vmem:[%s215 + $0x1e0] sm:$0xff]
        %v343 = vld [vmem:[%s215 + $0x1e8] sm:$0xff]
        %v344 = vld [vmem:[%s215 + $0x1f0] sm:$0xff]
        %v345 = vld [vmem:[%s215 + $0x1f8] sm:$0xff]
        %v346 = vld [vmem:[%s215 + $0x200] sm:$0xff]
        %v347 = vld [vmem:[%s215 + $0x208] sm:$0xff]
        %v348 = vld [vmem:[%s215 + $0x210] sm:$0xff]
        %v349 = vld [vmem:[%s215 + $0x218] sm:$0xff]
        %v350 = vld [vmem:[%s215 + $0x220] sm:$0xff]
        %v351 = vld [vmem:[%s215 + $0x228] sm:$0xff]
        %v352 = vld [vmem:[%s215 + $0x230] sm:$0xff]
        %v353 = vld [vmem:[%s215 + $0x238] sm:$0xff]
        %v354 = vld [vmem:[%s215 + $0x240] sm:$0xff]
        %v355 = vld [vmem:[%s215 + $0x248] sm:$0xff]
        %v356 = vld [vmem:[%s215 + $0x250] sm:$0xff]
        %v357 = vld [vmem:[%s215 + $0x258] sm:$0xff]
        %v358 = vld [vmem:[%s215 + $0x260] sm:$0xff]
        %v359 = vld [vmem:[%s215 + $0x268] sm:$0xff]
        %v360 = vld [vmem:[%s215 + $0x270] sm:$0xff]
        %v361 = vld [vmem:[%s215 + $0x278] sm:$0xff]
        %v362 = vld [vmem:[%s215 + $0x280] sm:$0xff]
        %v363 = vld [vmem:[%s215 + $0x288] sm:$0xff]
        %v364 = vld [vmem:[%s215 + $0x290] sm:$0xff]
        %v365 = vld [vmem:[%s215 + $0x298] sm:$0xff]
        %v366 = vld [vmem:[%s215 + $0x2a0] sm:$0xff]
        %v367 = vld [vmem:[%s215 + $0x2a8] sm:$0xff]
        %v368 = vld [vmem:[%s215 + $0x2b0] sm:$0xff]
        %v369 = vld [vmem:[%s215 + $0x2b8] sm:$0xff]
        %v370 = vld [vmem:[%s215 + $0x2c0] sm:$0xff]
        %v371 = vld [vmem:[%s215 + $0x2c8] sm:$0xff]
        %v372 = vld [vmem:[%s215 + $0x2d0] sm:$0xff]
        %v373 = vld [vmem:[%s215 + $0x2d8] sm:$0xff]
        %v374 = vld [vmem:[%s215 + $0x2e0] sm:$0xff]
        %v375 = vld [vmem:[%s215 + $0x2e8] sm:$0xff]
        %v376 = vld [vmem:[%s215 + $0x2f0] sm:$0xff]
        %v377 = vld [vmem:[%s215 + $0x2f8] sm:$0xff]
        %v378 = vld [vmem:[%s215 + $0x300] sm:$0xff]
        %v379 = vld [vmem:[%s215 + $0x308] sm:$0xff]
        %v380 = vld [vmem:[%s215 + $0x310] sm:$0xff]
        %v381 = vld [vmem:[%s215 + $0x318] sm:$0xff]
        %v382 = vld [vmem:[%s215 + $0x320] sm:$0xff]
        %v383 = vld [vmem:[%s215 + $0x328] sm:$0xff]
        %v384 = vld [vmem:[%s215 + $0x330] sm:$0xff]
        %v385 = vld [vmem:[%s215 + $0x338] sm:$0xff]
        %v386 = vld [vmem:[%s215 + $0x340] sm:$0xff]
        %v387 = vld [vmem:[%s215 + $0x348] sm:$0xff]
        %v388 = vld [vmem:[%s215 + $0x350] sm:$0xff]
        %v389 = vld [vmem:[%s215 + $0x358] sm:$0xff]
        %v390 = vld [vmem:[%s215 + $0x360] sm:$0xff]
        %v391 = vld [vmem:[%s215 + $0x368] sm:$0xff]
        %v392 = vld [vmem:[%s215 + $0x370] sm:$0xff]
        %v393 = vld [vmem:[%s215 + $0x378] sm:$0xff]
        %v394 = vld [vmem:[%s215 + $0x380] sm:$0xff]
        %v395 = vld [vmem:[%s215 + $0x388] sm:$0xff]
        %v396 = vld [vmem:[%s215 + $0x390] sm:$0xff]
        %v397 = vld [vmem:[%s215 + $0x398] sm:$0xff]
        %v398 = vld [vmem:[%s215 + $0x3a0] sm:$0xff]
        %v399 = vld [vmem:[%s215 + $0x3a8] sm:$0xff]
        %v400 = vld [vmem:[%s215 + $0x3b0] sm:$0xff]
        %v401 = vld [vmem:[%s215 + $0x3b8] sm:$0xff]
        %v402 = vld [vmem:[%s215 + $0x3c0] sm:$0xff]
        %v403 = vld [vmem:[%s215 + $0x3c8] sm:$0xff]
        %v404 = vld [vmem:[%s215 + $0x3d0] sm:$0xff]
        %v405 = vld [vmem:[%s215 + $0x3d8] sm:$0xff]
        %v406 = vld [vmem:[%s215 + $0x3e0] sm:$0xff]
        %v407 = vld [vmem:[%s215 + $0x3e8] sm:$0xff]
        %v408 = vld [vmem:[%s215 + $0x3f0] sm:$0xff]
        %v409 = vld [vmem:[%s215 + $0x3f8] sm:$0xff]
        %v410 = vld [vmem:[%s215 + $0x400] sm:$0xff]
        %v411 = vld [vmem:[%s215 + $0x408] sm:$0xff]
        %v412 = vld [vmem:[%s215 + $0x410] sm:$0xff]
        %v413 = vld [vmem:[%s215 + $0x418] sm:$0xff]
        %v414 = vld [vmem:[%s215 + $0x420] sm:$0xff]
        %v415 = vld [vmem:[%s215 + $0x428] sm:$0xff]
        %v416 = vld [vmem:[%s215 + $0x430] sm:$0xff]
        %v417 = vld [vmem:[%s215 + $0x438] sm:$0xff]
        %v418 = vld [vmem:[%s215 + $0x440] sm:$0xff]
        %v419 = vld [vmem:[%s215 + $0x448] sm:$0xff]
        %v420 = vld [vmem:[%s215 + $0x450] sm:$0xff]
        %v421 = vld [vmem:[%s215 + $0x458] sm:$0xff]
        %v422 = vld [vmem:[%s215 + $0x460] sm:$0xff]
        %v423 = vld [vmem:[%s215 + $0x468] sm:$0xff]
        %v424 = vld [vmem:[%s215 + $0x470] sm:$0xff]
        %v425 = vld [vmem:[%s215 + $0x478] sm:$0xff]
        %v426 = vld [vmem:[%s215 + $0x480] sm:$0xff]
        %v427 = vld [vmem:[%s215 + $0x488] sm:$0xff]
        %v428 = vld [vmem:[%s215 + $0x490] sm:$0xff]
        %v429 = vld [vmem:[%s215 + $0x498] sm:$0xff]
        %v430 = vld [vmem:[%s215 + $0x4a0] sm:$0xff]
        %v431 = vld [vmem:[%s215 + $0x4a8] sm:$0xff]
        %v432 = vld [vmem:[%s215 + $0x4b0] sm:$0xff]
        %v433 = vld [vmem:[%s215 + $0x4b8] sm:$0xff]
        %v434 = vld [vmem:[%s215 + $0x4c0] sm:$0xff]
        %v435 = vld [vmem:[%s215 + $0x4c8] sm:$0xff]
        %v436 = vld [vmem:[%s215 + $0x4d0] sm:$0xff]
        %v437 = vld [vmem:[%s215 + $0x4d8] sm:$0xff]
        %v438 = vld [vmem:[%s215 + $0x4e0] sm:$0xff]
        %v439 = vld [vmem:[%s215 + $0x4e8] sm:$0xff]
        %v440 = vld [vmem:[%s215 + $0x4f0] sm:$0xff]
        %v441 = vld [vmem:[%s215 + $0x4f8] sm:$0xff]
        %v442 = vld [vmem:[%s215 + $0x500] sm:$0xff]
        %v443 = vld [vmem:[%s215 + $0x508] sm:$0xff]
        %v444 = vld [vmem:[%s215 + $0x510] sm:$0xff]
        %v445 = vld [vmem:[%s215 + $0x518] sm:$0xff]
        %v446 = vld [vmem:[%s215 + $0x520] sm:$0xff]
        %v447 = vld [vmem:[%s215 + $0x528] sm:$0xff]
        %v448 = vld [vmem:[%s215 + $0x530] sm:$0xff]
        %v449 = vld [vmem:[%s215 + $0x538] sm:$0xff]
        %v450 = vld [vmem:[%s215 + $0x540] sm:$0xff]
        %v451 = vld [vmem:[%s215 + $0x548] sm:$0xff]
        %v452 = vld [vmem:[%s215 + $0x550] sm:$0xff]
        %v453 = vld [vmem:[%s215 + $0x558] sm:$0xff]
        %v454 = vld [vmem:[%s215 + $0x560] sm:$0xff]
        %v455 = vld [vmem:[%s215 + $0x568] sm:$0xff]
        %v456 = vld [vmem:[%s215 + $0x570] sm:$0xff]
        %v457 = vld [vmem:[%s215 + $0x578] sm:$0xff]
        %v458 = vld [vmem:[%s215 + $0x580] sm:$0xff]
        %v459 = vld [vmem:[%s215 + $0x588] sm:$0xff]
        %v460 = vld [vmem:[%s215 + $0x590] sm:$0xff]
        %v461 = vld [vmem:[%s215 + $0x598] sm:$0xff]
        %v462 = vld [vmem:[%s215 + $0x5a0] sm:$0xff]
        %v463 = vld [vmem:[%s215 + $0x5a8] sm:$0xff]
        %v464 = vld [vmem:[%s215 + $0x5b0] sm:$0xff]
        %v465 = vld [vmem:[%s215 + $0x5b8] sm:$0xff]
        %v466 = vld [vmem:[%s215 + $0x5c0] sm:$0xff]
        %v467 = vld [vmem:[%s215 + $0x5c8] sm:$0xff]
        %v468 = vld [vmem:[%s215 + $0x5d0] sm:$0xff]
        %v469 = vld [vmem:[%s215 + $0x5d8] sm:$0xff]
        %v470 = vld [vmem:[%s215 + $0x5e0] sm:$0xff]
        %v471 = vld [vmem:[%s215 + $0x5e8] sm:$0xff]
        %v472 = vld [vmem:[%s215 + $0x5f0] sm:$0xff]
        %v473 = vld [vmem:[%s215 + $0x5f8] sm:$0xff]
        %v474 = vld [vmem:[%s215 + $0x600] sm:$0xff]
        %v475 = vld [vmem:[%s215 + $0x608] sm:$0xff]
        %v476 = vld [vmem:[%s215 + $0x610] sm:$0xff]
        %v477 = vld [vmem:[%s215 + $0x618] sm:$0xff]
        %v478 = vld [vmem:[%s215 + $0x620] sm:$0xff]
        %v479 = vld [vmem:[%s215 + $0x628] sm:$0xff]
        %v480 = vld [vmem:[%s215 + $0x630] sm:$0xff]
        %v481 = vld [vmem:[%s215 + $0x638] sm:$0xff]
        %v482 = vld [vmem:[%s215 + $0x640] sm:$0xff]
        %v483 = vld [vmem:[%s215 + $0x648] sm:$0xff]
        %v484 = vld [vmem:[%s215 + $0x650] sm:$0xff]
        %v485 = vld [vmem:[%s215 + $0x658] sm:$0xff]
        %v486 = vld [vmem:[%s215 + $0x660] sm:$0xff]
        %v487 = vld [vmem:[%s215 + $0x668] sm:$0xff]
        %v488 = vld [vmem:[%s215 + $0x670] sm:$0xff]
        %v489 = vld [vmem:[%s215 + $0x678] sm:$0xff]
        %v490 = vld [vmem:[%s215 + $0x680] sm:$0xff]
        %v491 = vld [vmem:[%s215 + $0x688] sm:$0xff]
        %v492 = vld [vmem:[%s215 + $0x690] sm:$0xff]
        %v493 = vld [vmem:[%s215 + $0x698] sm:$0xff]
        %v494 = vld [vmem:[%s215 + $0x6a0] sm:$0xff]
        %v495 = vld [vmem:[%s215 + $0x6a8] sm:$0xff]
        %v496 = vld [vmem:[%s215 + $0x6b0] sm:$0xff]
        %v497 = vld [vmem:[%s215 + $0x6b8] sm:$0xff]
        %v498 = vld [vmem:[%s215 + $0x6c0] sm:$0xff]
        %v499 = vld [vmem:[%s215 + $0x6c8] sm:$0xff]
        %v500 = vld [vmem:[%s215 + $0x6d0] sm:$0xff]
        %v501 = vld [vmem:[%s215 + $0x6d8] sm:$0xff]
        %v502 = vld [vmem:[%s215 + $0x6e0] sm:$0xff]
        %v503 = vld [vmem:[%s215 + $0x6e8] sm:$0xff]
        %v504 = vld [vmem:[%s215 + $0x6f0] sm:$0xff]
        %v505 = vld [vmem:[%s215 + $0x6f8] sm:$0xff]
        %v506 = vld [vmem:[%s215 + $0x700] sm:$0xff]
        %v507 = vld [vmem:[%s215 + $0x708] sm:$0xff]
        %v508 = vld [vmem:[%s215 + $0x710] sm:$0xff]
        %v509 = vld [vmem:[%s215 + $0x718] sm:$0xff]
        %v510 = vld [vmem:[%s215 + $0x720] sm:$0xff]
        %v511 = vld [vmem:[%s215 + $0x728] sm:$0xff]
        %v512 = vld [vmem:[%s215 + $0x730] sm:$0xff]
        %v513 = vld [vmem:[%s215 + $0x738] sm:$0xff]
        %v514 = vld [vmem:[%s215 + $0x740] sm:$0xff]
        %v515 = vld [vmem:[%s215 + $0x748] sm:$0xff]
        %v516 = vld [vmem:[%s215 + $0x750] sm:$0xff]
        %v517 = vld [vmem:[%s215 + $0x758] sm:$0xff]
        %v518 = vld [vmem:[%s215 + $0x760] sm:$0xff]
        %v519 = vld [vmem:[%s215 + $0x768] sm:$0xff]
        %v520 = vld [vmem:[%s215 + $0x770] sm:$0xff]
        %v521 = vld [vmem:[%s215 + $0x778] sm:$0xff]
        %v522 = vld [vmem:[%s215 + $0x780] sm:$0xff]
        %v523 = vld [vmem:[%s215 + $0x788] sm:$0xff]
        %v524 = vld [vmem:[%s215 + $0x790] sm:$0xff]
        %v525 = vld [vmem:[%s215 + $0x798] sm:$0xff]
        %v526 = vld [vmem:[%s215 + $0x7a0] sm:$0xff]
        %v527 = vld [vmem:[%s215 + $0x7a8] sm:$0xff]
        %v528 = vld [vmem:[%s215 + $0x7b0] sm:$0xff]
        %v529 = vld [vmem:[%s215 + $0x7b8] sm:$0xff]
        %v530 = vld [vmem:[%s215 + $0x7c0] sm:$0xff]
        %v531 = vld [vmem:[%s215 + $0x7c8] sm:$0xff]
        %v532 = vld [vmem:[%s215 + $0x7d0] sm:$0xff]
        %v533 = vld [vmem:[%s215 + $0x7d8] sm:$0xff]
        %v534 = vld [vmem:[%s215 + $0x7e0] sm:$0xff]
        %v535 = vld [vmem:[%s215 + $0x7e8] sm:$0xff]
        %v536 = vld [vmem:[%s215 + $0x7f0] sm:$0xff]
        %v537 = vld [vmem:[%s215 + $0x7f8] sm:$0xff]
        %v538 = vld [vmem:[%s215 + $0x800] sm:$0xff]
        %v539 = vld [vmem:[%s215 + $0x808] sm:$0xff]
        %v540 = vld [vmem:[%s215 + $0x810] sm:$0xff]
        %v541 = vld [vmem:[%s215 + $0x818] sm:$0xff]
        %v542 = vld [vmem:[%s215 + $0x820] sm:$0xff]
        %v543 = vld [vmem:[%s215 + $0x828] sm:$0xff]
        %v544 = vld [vmem:[%s215 + $0x830] sm:$0xff]
        %v545 = vld [vmem:[%s215 + $0x838] sm:$0xff]
        %v546 = vld [vmem:[%s215 + $0x840] sm:$0xff]
        %v547 = vld [vmem:[%s215 + $0x848] sm:$0xff]
        %v548 = vld [vmem:[%s215 + $0x850] sm:$0xff]
        %v549 = vld [vmem:[%s215 + $0x858] sm:$0xff]
        %v550 = vld [vmem:[%s215 + $0x860] sm:$0xff]
        %v551 = vld [vmem:[%s215 + $0x868] sm:$0xff]
        %v552 = vld [vmem:[%s215 + $0x870] sm:$0xff]
        %v553 = vld [vmem:[%s215 + $0x878] sm:$0xff]
        %v554 = vld [vmem:[%s215 + $0x880] sm:$0xff]
        %v555 = vld [vmem:[%s215 + $0x888] sm:$0xff]
        %v556 = vld [vmem:[%s215 + $0x890] sm:$0xff]
        %v557 = vld [vmem:[%s215 + $0x898] sm:$0xff]
        %v558 = vld [vmem:[%s215 + $0x8a0] sm:$0xff]
        %v559 = vld [vmem:[%s215 + $0x8a8] sm:$0xff]
        %v560 = vld [vmem:[%s215 + $0x8b0] sm:$0xff]
        %v561 = vld [vmem:[%s215 + $0x8b8] sm:$0xff]
        %v562 = vld [vmem:[%s215 + $0x8c0] sm:$0xff]
        %v563 = vld [vmem:[%s215 + $0x8c8] sm:$0xff]
        %v564 = vld [vmem:[%s215 + $0x8d0] sm:$0xff]
        %v565 = vld [vmem:[%s215 + $0x8d8] sm:$0xff]
        %v566 = vld [vmem:[%s215 + $0x8e0] sm:$0xff]
        %v567 = vld [vmem:[%s215 + $0x8e8] sm:$0xff]
        %v568 = vld [vmem:[%s215 + $0x8f0] sm:$0xff]
        %v569 = vld [vmem:[%s215 + $0x8f8] sm:$0xff]
        %v570 = vld [vmem:[%s215 + $0x900] sm:$0xff]
        %v571 = vld [vmem:[%s215 + $0x908] sm:$0xff]
        %v572 = vld [vmem:[%s215 + $0x910] sm:$0xff]
        %v573 = vld [vmem:[%s215 + $0x918] sm:$0xff]
        %v574 = vld [vmem:[%s215 + $0x920] sm:$0xff]
        %v575 = vld [vmem:[%s215 + $0x928] sm:$0xff]
        %v576 = vld [vmem:[%s215 + $0x930] sm:$0xff]
        %v577 = vld [vmem:[%s215 + $0x938] sm:$0xff]
        %v578 = vld [vmem:[%s215 + $0x940] sm:$0xff]
        %v579 = vld [vmem:[%s215 + $0x948] sm:$0xff]
        %v580 = vld [vmem:[%s215 + $0x950] sm:$0xff]
        %v581 = vld [vmem:[%s215 + $0x958] sm:$0xff]
        %v582 = vld [vmem:[%s215 + $0x960] sm:$0xff]
        %v583 = vld [vmem:[%s215 + $0x968] sm:$0xff]
        %v584 = vld [vmem:[%s215 + $0x970] sm:$0xff]
        %v585 = vld [vmem:[%s215 + $0x978] sm:$0xff]
        %v586 = vld [vmem:[%s215 + $0x980] sm:$0xff]
        %v587 = vld [vmem:[%s215 + $0x988] sm:$0xff]
        %v588 = vld [vmem:[%s215 + $0x990] sm:$0xff]
        %v589 = vld [vmem:[%s215 + $0x998] sm:$0xff]
        %v590 = vld [vmem:[%s215 + $0x9a0] sm:$0xff]
        %v591 = vld [vmem:[%s215 + $0x9a8] sm:$0xff]
        %v592 = vld [vmem:[%s215 + $0x9b0] sm:$0xff]
        %v593 = vld [vmem:[%s215 + $0x9b8] sm:$0xff]
        %v594 = vld [vmem:[%s215 + $0x9c0] sm:$0xff]
        %v595 = vld [vmem:[%s215 + $0x9c8] sm:$0xff]
        %v596 = vld [vmem:[%s215 + $0x9d0] sm:$0xff]
        %v597 = vld [vmem:[%s215 + $0x9d8] sm:$0xff]
        %v598 = vld [vmem:[%s215 + $0x9e0] sm:$0xff]
        %v599 = vld [vmem:[%s215 + $0x9e8] sm:$0xff]
        %v600 = vld [vmem:[%s215 + $0x9f0] sm:$0xff]
        %v601 = vld [vmem:[%s215 + $0x9f8] sm:$0xff]
        %v602 = vld [vmem:[%s215 + $0xa00] sm:$0xff]
        %v603 = vld [vmem:[%s215 + $0xa08] sm:$0xff]
        %v604 = vld [vmem:[%s215 + $0xa10] sm:$0xff]
        %v605 = vld [vmem:[%s215 + $0xa18] sm:$0xff]
        %v606 = vld [vmem:[%s215 + $0xa20] sm:$0xff]
        %v607 = vld [vmem:[%s215 + $0xa28] sm:$0xff]
        %v608 = vld [vmem:[%s215 + $0xa30] sm:$0xff]
        %v609 = vld [vmem:[%s215 + $0xa38] sm:$0xff]
        %v610 = vld [vmem:[%s215 + $0xa40] sm:$0xff]
        %v611 = vld [vmem:[%s215 + $0xa48] sm:$0xff]
        %v612 = vld [vmem:[%s215 + $0xa50] sm:$0xff]
        %v613 = vld [vmem:[%s215 + $0xa58] sm:$0xff]
        %v614 = vld [vmem:[%s215 + $0xa60] sm:$0xff]
        %v615 = vld [vmem:[%s215 + $0xa68] sm:$0xff]
        %v616 = vld [vmem:[%s215 + $0xa70] sm:$0xff]
        %v617 = vld [vmem:[%s215 + $0xa78] sm:$0xff]
        %v618 = vld [vmem:[%s215 + $0xa80] sm:$0xff]
        %v619 = vld [vmem:[%s215 + $0xa88] sm:$0xff]
        %v620 = vld [vmem:[%s215 + $0xa90] sm:$0xff]
        %v621 = vld [vmem:[%s215 + $0xa98] sm:$0xff]
        %v622 = vld [vmem:[%s215 + $0xaa0] sm:$0xff]
        %v623 = vld [vmem:[%s215 + $0xaa8] sm:$0xff]
        %v624 = vld [vmem:[%s215 + $0xab0] sm:$0xff]
        %v625 = vld [vmem:[%s215 + $0xab8] sm:$0xff]
        %v626 = vld [vmem:[%s215 + $0xac0] sm:$0xff]
        %v627 = vld [vmem:[%s215 + $0xac8] sm:$0xff]
        %v628 = vld [vmem:[%s215 + $0xad0] sm:$0xff]
        %v629 = vld [vmem:[%s215 + $0xad8] sm:$0xff]
        %v630 = vld [vmem:[%s215 + $0xae0] sm:$0xff]
        %v631 = vld [vmem:[%s215 + $0xae8] sm:$0xff]
        %v632 = vld [vmem:[%s215 + $0xaf0] sm:$0xff]
        %v633 = vld [vmem:[%s215 + $0xaf8] sm:$0xff]
        %v634 = vld [vmem:[%s215 + $0xb00] sm:$0xff]
        %v635 = vld [vmem:[%s215 + $0xb08] sm:$0xff]
        %v636 = vld [vmem:[%s215 + $0xb10] sm:$0xff]
        %v637 = vld [vmem:[%s215 + $0xb18] sm:$0xff]
        %v638 = vld [vmem:[%s215 + $0xb20] sm:$0xff]
        %v639 = vld [vmem:[%s215 + $0xb28] sm:$0xff]
        %v640 = vld [vmem:[%s215 + $0xb30] sm:$0xff]
        %v641 = vld [vmem:[%s215 + $0xb38] sm:$0xff]
        %v642 = vld [vmem:[%s215 + $0xb40] sm:$0xff]
        %v643 = vld [vmem:[%s215 + $0xb48] sm:$0xff]
        %v644 = vld [vmem:[%s215 + $0xb50] sm:$0xff]
        %v645 = vld [vmem:[%s215 + $0xb58] sm:$0xff]
        %v646 = vld [vmem:[%s215 + $0xb60] sm:$0xff]
        %v647 = vld [vmem:[%s215 + $0xb68] sm:$0xff]
        %v648 = vld [vmem:[%s215 + $0xb70] sm:$0xff]
        %v649 = vld [vmem:[%s215 + $0xb78] sm:$0xff]
        %v650 = vld [vmem:[%s215 + $0xb80] sm:$0xff]
        %v651 = vld [vmem:[%s215 + $0xb88] sm:$0xff]
        %v652 = vld [vmem:[%s215 + $0xb90] sm:$0xff]
        %v653 = vld [vmem:[%s215 + $0xb98] sm:$0xff]
        %v654 = vld [vmem:[%s215 + $0xba0] sm:$0xff]
        %v655 = vld [vmem:[%s215 + $0xba8] sm:$0xff]
        %v656 = vld [vmem:[%s215 + $0xbb0] sm:$0xff]
        %v657 = vld [vmem:[%s215 + $0xbb8] sm:$0xff]
        %v658 = vld [vmem:[%s215 + $0xbc0] sm:$0xff]
        %v659 = vld [vmem:[%s215 + $0xbc8] sm:$0xff]
        %v660 = vld [vmem:[%s215 + $0xbd0] sm:$0xff]
        %v661 = vld [vmem:[%s215 + $0xbd8] sm:$0xff]
        %v662 = vld [vmem:[%s215 + $0xbe0] sm:$0xff]
        %v663 = vld [vmem:[%s215 + $0xbe8] sm:$0xff]
        %v664 = vld [vmem:[%s215 + $0xbf0] sm:$0xff]
        %v665 = vld [vmem:[%s215 + $0xbf8] sm:$0xff]
        %v666 = vld [vmem:[%s215 + $0xc00] sm:$0xff]
        %v667 = vld [vmem:[%s215 + $0xc08] sm:$0xff]
        %v668 = vld [vmem:[%s215 + $0xc10] sm:$0xff]
        %v669 = vld [vmem:[%s215 + $0xc18] sm:$0xff]
        %v670 = vld [vmem:[%s215 + $0xc20] sm:$0xff]
        %v671 = vld [vmem:[%s215 + $0xc28] sm:$0xff]
        %v672 = vld [vmem:[%s215 + $0xc30] sm:$0xff]
        %v673 = vld [vmem:[%s215 + $0xc38] sm:$0xff]
        %v674 = vld [vmem:[%s215 + $0xc40] sm:$0xff]
        %v675 = vld [vmem:[%s215 + $0xc48] sm:$0xff]
        %v676 = vld [vmem:[%s215 + $0xc50] sm:$0xff]
        %v677 = vld [vmem:[%s215 + $0xc58] sm:$0xff]
        %v678 = vld [vmem:[%s215 + $0xc60] sm:$0xff]
        %v679 = vld [vmem:[%s215 + $0xc68] sm:$0xff]
        %v680 = vld [vmem:[%s215 + $0xc70] sm:$0xff]
        %v681 = vld [vmem:[%s215 + $0xc78] sm:$0xff]
        %v682 = vld [vmem:[%s215 + $0xc80] sm:$0xff]
        %v683 = vld [vmem:[%s215 + $0xc88] sm:$0xff]
        %v684 = vld [vmem:[%s215 + $0xc90] sm:$0xff]
        %v685 = vld [vmem:[%s215 + $0xc98] sm:$0xff]
        %v686 = vld [vmem:[%s215 + $0xca0] sm:$0xff]
        %v687 = vld [vmem:[%s215 + $0xca8] sm:$0xff]
        %v688 = vld [vmem:[%s215 + $0xcb0] sm:$0xff]
        %v689 = vld [vmem:[%s215 + $0xcb8] sm:$0xff]
        %v690 = vld [vmem:[%s215 + $0xcc0] sm:$0xff]
        %v691 = vld [vmem:[%s215 + $0xcc8] sm:$0xff]
        %v692 = vld [vmem:[%s215 + $0xcd0] sm:$0xff]
        %v693 = vld [vmem:[%s215 + $0xcd8] sm:$0xff]
        %v694 = vld [vmem:[%s215 + $0xce0] sm:$0xff]
        %v695 = vld [vmem:[%s215 + $0xce8] sm:$0xff]
        %v696 = vld [vmem:[%s215 + $0xcf0] sm:$0xff]
        %v697 = vld [vmem:[%s215 + $0xcf8] sm:$0xff]
        %v698 = vld [vmem:[%s215 + $0xd00] sm:$0xff]
        %v699 = vld [vmem:[%s215 + $0xd08] sm:$0xff]
        %v700 = vld [vmem:[%s215 + $0xd10] sm:$0xff]
        %v701 = vld [vmem:[%s215 + $0xd18] sm:$0xff]
        %v702 = vld [vmem:[%s215 + $0xd20] sm:$0xff]
        %v703 = vld [vmem:[%s215 + $0xd28] sm:$0xff]
        %v704 = vld [vmem:[%s215 + $0xd30] sm:$0xff]
        %v705 = vld [vmem:[%s215 + $0xd38] sm:$0xff]
        %v706 = vld [vmem:[%s215 + $0xd40] sm:$0xff]
        %v707 = vld [vmem:[%s215 + $0xd48] sm:$0xff]
        %v708 = vld [vmem:[%s215 + $0xd50] sm:$0xff]
        %v709 = vld [vmem:[%s215 + $0xd58] sm:$0xff]
        %v710 = vld [vmem:[%s215 + $0xd60] sm:$0xff]
        %v711 = vld [vmem:[%s215 + $0xd68] sm:$0xff]
        %v712 = vld [vmem:[%s215 + $0xd70] sm:$0xff]
        %v713 = vld [vmem:[%s215 + $0xd78] sm:$0xff]
        %v714 = vld [vmem:[%s215 + $0xd80] sm:$0xff]
        %v715 = vld [vmem:[%s215 + $0xd88] sm:$0xff]
        %v716 = vld [vmem:[%s215 + $0xd90] sm:$0xff]
        %v717 = vld [vmem:[%s215 + $0xd98] sm:$0xff]
        %v718 = vld [vmem:[%s215 + $0xda0] sm:$0xff]
        %v719 = vld [vmem:[%s215 + $0xda8] sm:$0xff]
        %v720 = vld [vmem:[%s215 + $0xdb0] sm:$0xff]
        %v721 = vld [vmem:[%s215 + $0xdb8] sm:$0xff]
        %v722 = vld [vmem:[%s215 + $0xdc0] sm:$0xff]
        %v723 = vld [vmem:[%s215 + $0xdc8] sm:$0xff]
        %v724 = vld [vmem:[%s215 + $0xdd0] sm:$0xff]
        %v725 = vld [vmem:[%s215 + $0xdd8] sm:$0xff]
        %v726 = vld [vmem:[%s215 + $0xde0] sm:$0xff]
        %v727 = vld [vmem:[%s215 + $0xde8] sm:$0xff]
        %v728 = vld [vmem:[%s215 + $0xdf0] sm:$0xff]
        %v729 = vld [vmem:[%s215 + $0xdf8] sm:$0xff]
        %v730 = vld [vmem:[%s215 + $0xe00] sm:$0xff]
        %v731 = vld [vmem:[%s215 + $0xe08] sm:$0xff]
        %v732 = vld [vmem:[%s215 + $0xe10] sm:$0xff]
        %v733 = vld [vmem:[%s215 + $0xe18] sm:$0xff]
        %v734 = vld [vmem:[%s215 + $0xe20] sm:$0xff]
        %v735 = vld [vmem:[%s215 + $0xe28] sm:$0xff]
        %v736 = vld [vmem:[%s215 + $0xe30] sm:$0xff]
        %v737 = vld [vmem:[%s215 + $0xe38] sm:$0xff]
        %v738 = vld [vmem:[%s215 + $0xe40] sm:$0xff]
        %v739 = vld [vmem:[%s215 + $0xe48] sm:$0xff]
        %v740 = vld [vmem:[%s215 + $0xe50] sm:$0xff]
        %v741 = vld [vmem:[%s215 + $0xe58] sm:$0xff]
        %v742 = vld [vmem:[%s215 + $0xe60] sm:$0xff]
        %v743 = vld [vmem:[%s215 + $0xe68] sm:$0xff]
        %v744 = vld [vmem:[%s215 + $0xe70] sm:$0xff]
        %v745 = vld [vmem:[%s215 + $0xe78] sm:$0xff]
        %v746 = vld [vmem:[%s215 + $0xe80] sm:$0xff]
        %v747 = vld [vmem:[%s215 + $0xe88] sm:$0xff]
        %v748 = vld [vmem:[%s215 + $0xe90] sm:$0xff]
        %v749 = vld [vmem:[%s215 + $0xe98] sm:$0xff]
        %v750 = vld [vmem:[%s215 + $0xea0] sm:$0xff]
        %v751 = vld [vmem:[%s215 + $0xea8] sm:$0xff]
        %v752 = vld [vmem:[%s215 + $0xeb0] sm:$0xff]
        %v753 = vld [vmem:[%s215 + $0xeb8] sm:$0xff]
        %v754 = vld [vmem:[%s215 + $0xec0] sm:$0xff]
        %v755 = vld [vmem:[%s215 + $0xec8] sm:$0xff]
        %v756 = vld [vmem:[%s215 + $0xed0] sm:$0xff]
        %v757 = vld [vmem:[%s215 + $0xed8] sm:$0xff]
        %v758 = vld [vmem:[%s215 + $0xee0] sm:$0xff]
        %v759 = vld [vmem:[%s215 + $0xee8] sm:$0xff]
        %v760 = vld [vmem:[%s215 + $0xef0] sm:$0xff]
        %v761 = vld [vmem:[%s215 + $0xef8] sm:$0xff]
        %v762 = vld [vmem:[%s215 + $0xf00] sm:$0xff]
        %v763 = vld [vmem:[%s215 + $0xf08] sm:$0xff]
        %v764 = vld [vmem:[%s215 + $0xf10] sm:$0xff]
        %v765 = vld [vmem:[%s215 + $0xf18] sm:$0xff]
        %v766 = vld [vmem:[%s215 + $0xf20] sm:$0xff]
        %v767 = vld [vmem:[%s215 + $0xf28] sm:$0xff]
        %v768 = vld [vmem:[%s215 + $0xf30] sm:$0xff]
        %v769 = vld [vmem:[%s215 + $0xf38] sm:$0xff]
        %v770 = vld [vmem:[%s215 + $0xf40] sm:$0xff]
        %v771 = vld [vmem:[%s215 + $0xf48] sm:$0xff]
        %v772 = vld [vmem:[%s215 + $0xf50] sm:$0xff]
        %v773 = vld [vmem:[%s215 + $0xf58] sm:$0xff]
        %v774 = vld [vmem:[%s215 + $0xf60] sm:$0xff]
        %v775 = vld [vmem:[%s215 + $0xf68] sm:$0xff]
        %v776 = vld [vmem:[%s215 + $0xf70] sm:$0xff]
        %v777 = vld [vmem:[%s215 + $0xf78] sm:$0xff]
        %v778 = vld [vmem:[%s215 + $0xf80] sm:$0xff]
        %v779 = vld [vmem:[%s215 + $0xf88] sm:$0xff]
        %v780 = vld [vmem:[%s215 + $0xf90] sm:$0xff]
        %v781 = vld [vmem:[%s215 + $0xf98] sm:$0xff]
        %v782 = vld [vmem:[%s215 + $0xfa0] sm:$0xff]
        %v783 = vld [vmem:[%s215 + $0xfa8] sm:$0xff]
        %v784 = vld [vmem:[%s215 + $0xfb0] sm:$0xff]
        %v785 = vld [vmem:[%s215 + $0xfb8] sm:$0xff]
        %v786 = vld [vmem:[%s215 + $0xfc0] sm:$0xff]
        %v787 = vld [vmem:[%s215 + $0xfc8] sm:$0xff]
        %v788 = vld [vmem:[%s215 + $0xfd0] sm:$0xff]
        %v789 = vld [vmem:[%s215 + $0xfd8] sm:$0xff]
        %v790 = vld [vmem:[%s215 + $0xfe0] sm:$0xff]
        %v791 = vld [vmem:[%s215 + $0xfe8] sm:$0xff]
        %v792 = vld [vmem:[%s215 + $0xff0] sm:$0xff]
        %v793 = vld [vmem:[%s215 + $0xff8] sm:$0xff]
        %v794 = vld [vmem:[%s215 + $0x1000] sm:$0xff]
        %v795 = vld [vmem:[%s215 + $0x1008] sm:$0xff]
        %v796 = vld [vmem:[%s215 + $0x1010] sm:$0xff]
        %v797 = vld [vmem:[%s215 + $0x1018] sm:$0xff]
        %v798 = vld [vmem:[%s215 + $0x1020] sm:$0xff]
        %v799 = vld [vmem:[%s215 + $0x1028] sm:$0xff]
        %v800 = vld [vmem:[%s215 + $0x1030] sm:$0xff]
        %v801 = vld [vmem:[%s215 + $0x1038] sm:$0xff]
        %v802 = vld [vmem:[%s215 + $0x1040] sm:$0xff]
        %v803 = vld [vmem:[%s215 + $0x1048] sm:$0xff]
        %v804 = vld [vmem:[%s215 + $0x1050] sm:$0xff]
        %v805 = vld [vmem:[%s215 + $0x1058] sm:$0xff]
        %v806 = vld [vmem:[%s215 + $0x1060] sm:$0xff]
        %v807 = vld [vmem:[%s215 + $0x1068] sm:$0xff]
        %v808 = vld [vmem:[%s215 + $0x1070] sm:$0xff]
        %v809 = vld [vmem:[%s215 + $0x1078] sm:$0xff]
        %v810 = vld [vmem:[%s215 + $0x1080] sm:$0xff]
        %v811 = vld [vmem:[%s215 + $0x1088] sm:$0xff]
        %v812 = vld [vmem:[%s215 + $0x1090] sm:$0xff]
        %v813 = vld [vmem:[%s215 + $0x1098] sm:$0xff]
        %v814 = vld [vmem:[%s215 + $0x10a0] sm:$0xff]
        %v815 = vld [vmem:[%s215 + $0x10a8] sm:$0xff]
        %v816 = vld [vmem:[%s215 + $0x10b0] sm:$0xff]
        %v817 = vld [vmem:[%s215 + $0x10b8] sm:$0xff]
        %v818 = vld [vmem:[%s215 + $0x10c0] sm:$0xff]
        %v819 = vld [vmem:[%s215 + $0x10c8] sm:$0xff]
        %v820 = vld [vmem:[%s215 + $0x10d0] sm:$0xff]
        %v821 = vld [vmem:[%s215 + $0x10d8] sm:$0xff]
        %v822 = vld [vmem:[%s215 + $0x10e0] sm:$0xff]
        %v823 = vld [vmem:[%s215 + $0x10e8] sm:$0xff]
        %v824 = vld [vmem:[%s215 + $0x10f0] sm:$0xff]
        %v825 = vld [vmem:[%s215 + $0x10f8] sm:$0xff]
        %v826 = vld [vmem:[%s215 + $0x1100] sm:$0xff]
        %v827 = vld [vmem:[%s215 + $0x1108] sm:$0xff]
        %v828 = vld [vmem:[%s215 + $0x1110] sm:$0xff]
        %v829 = vld [vmem:[%s215 + $0x1118] sm:$0xff]
        %v830 = vld [vmem:[%s215 + $0x1120] sm:$0xff]
        %v831 = vld [vmem:[%s215 + $0x1128] sm:$0xff]
        %v832 = vld [vmem:[%s215 + $0x1130] sm:$0xff]
        %v833 = vld [vmem:[%s215 + $0x1138] sm:$0xff]
        %v834 = vld [vmem:[%s215 + $0x1140] sm:$0xff]
        %v835 = vld [vmem:[%s215 + $0x1148] sm:$0xff]
        %v836 = vld [vmem:[%s215 + $0x1150] sm:$0xff]
        %v837 = vld [vmem:[%s215 + $0x1158] sm:$0xff]
        %v838 = vld [vmem:[%s215 + $0x1160] sm:$0xff]
        %v839 = vld [vmem:[%s215 + $0x1168] sm:$0xff]
        %v840 = vld [vmem:[%s215 + $0x1170] sm:$0xff]
        %v841 = vld [vmem:[%s215 + $0x1178] sm:$0xff]
        %v842 = vld [vmem:[%s215 + $0x1180] sm:$0xff]
        %v843 = vld [vmem:[%s215 + $0x1188] sm:$0xff]
        %v844 = vld [vmem:[%s215 + $0x1190] sm:$0xff]
        %v845 = vld [vmem:[%s215 + $0x1198] sm:$0xff]
        %v846 = vld [vmem:[%s215 + $0x11a0] sm:$0xff]
        %v847 = vld [vmem:[%s215 + $0x11a8] sm:$0xff]
        %v848 = vld [vmem:[%s215 + $0x11b0] sm:$0xff]
        %v849 = vld [vmem:[%s215 + $0x11b8] sm:$0xff]
        %v850 = vld [vmem:[%s215 + $0x11c0] sm:$0xff]
        %v851 = vld [vmem:[%s215 + $0x11c8] sm:$0xff]
        %v852 = vld [vmem:[%s215 + $0x11d0] sm:$0xff]
        %v853 = vld [vmem:[%s215 + $0x11d8] sm:$0xff]
        %v854 = vld [vmem:[%s215 + $0x11e0] sm:$0xff]
        %v855 = vld [vmem:[%s215 + $0x11e8] sm:$0xff]
        %v856 = vld [vmem:[%s215 + $0x11f0] sm:$0xff]
        %v857 = vld [vmem:[%s215 + $0x11f8] sm:$0xff]
        %v858 = vld [vmem:[%s215 + $0x1200] sm:$0xff]
        %v859 = vld [vmem:[%s215 + $0x1208] sm:$0xff]
        %v860 = vld [vmem:[%s215 + $0x1210] sm:$0xff]
        %v861 = vld [vmem:[%s215 + $0x1218] sm:$0xff]
        %v862 = vld [vmem:[%s215 + $0x1220] sm:$0xff]
        %v863 = vld [vmem:[%s215 + $0x1228] sm:$0xff]
        %v864 = vld [vmem:[%s215 + $0x1230] sm:$0xff]
        %v865 = vld [vmem:[%s215 + $0x1238] sm:$0xff]
        %v866 = vld [vmem:[%s215 + $0x1240] sm:$0xff]
        %v867 = vld [vmem:[%s215 + $0x1248] sm:$0xff]
        %v868 = vld [vmem:[%s215 + $0x1250] sm:$0xff]
        %v869 = vld [vmem:[%s215 + $0x1258] sm:$0xff]
        %v870 = vld [vmem:[%s215 + $0x1260] sm:$0xff]
        %v871 = vld [vmem:[%s215 + $0x1268] sm:$0xff]
        %v872 = vld [vmem:[%s215 + $0x1270] sm:$0xff]
        %v873 = vld [vmem:[%s215 + $0x1278] sm:$0xff]
        %v874 = vld [vmem:[%s215 + $0x1280] sm:$0xff]
        %v875 = vld [vmem:[%s215 + $0x1288] sm:$0xff]
        %v876 = vld [vmem:[%s215 + $0x1290] sm:$0xff]
        %v877 = vld [vmem:[%s215 + $0x1298] sm:$0xff]
        %v878 = vld [vmem:[%s215 + $0x12a0] sm:$0xff]
        %v879 = vld [vmem:[%s215 + $0x12a8] sm:$0xff]
        %v880 = vld [vmem:[%s215 + $0x12b0] sm:$0xff]
        %v881 = vld [vmem:[%s215 + $0x12b8] sm:$0xff]
        %v882 = vld [vmem:[%s215 + $0x12c0] sm:$0xff]
        %v883 = vld [vmem:[%s215 + $0x12c8] sm:$0xff]
        %v884 = vld [vmem:[%s215 + $0x12d0] sm:$0xff]
        %v885 = vld [vmem:[%s215 + $0x12d8] sm:$0xff]
        %v886 = vld [vmem:[%s215 + $0x12e0] sm:$0xff]
        %v887 = vld [vmem:[%s215 + $0x12e8] sm:$0xff]
        %v888 = vld [vmem:[%s215 + $0x12f0] sm:$0xff]
        %v889 = vld [vmem:[%s215 + $0x12f8] sm:$0xff]
        %v890 = vld [vmem:[%s215 + $0x1300] sm:$0xff]
        %v891 = vld [vmem:[%s215 + $0x1308] sm:$0xff]
        %v892 = vld [vmem:[%s215 + $0x1310] sm:$0xff]
        %v893 = vld [vmem:[%s215 + $0x1318] sm:$0xff]
        %v894 = vld [vmem:[%s215 + $0x1320] sm:$0xff]
        %v895 = vld [vmem:[%s215 + $0x1328] sm:$0xff]
        %v896 = vld [vmem:[%s215 + $0x1330] sm:$0xff]
        %v897 = vld [vmem:[%s215 + $0x1338] sm:$0xff]
        %v898 = vld [vmem:[%s215 + $0x1340] sm:$0xff]
        %v899 = vld [vmem:[%s215 + $0x1348] sm:$0xff]
        %v900 = vld [vmem:[%s215 + $0x1350] sm:$0xff]
        %v901 = vld [vmem:[%s215 + $0x1358] sm:$0xff]
        %v902 = vld [vmem:[%s215 + $0x1360] sm:$0xff]
        %v903 = vld [vmem:[%s215 + $0x1368] sm:$0xff]
        %v904 = vld [vmem:[%s215 + $0x1370] sm:$0xff]
        %v905 = vld [vmem:[%s215 + $0x1378] sm:$0xff]
        %v906 = vld [vmem:[%s215 + $0x1380] sm:$0xff]
        %v907 = vld [vmem:[%s215 + $0x1388] sm:$0xff]
        %v908 = vld [vmem:[%s215 + $0x1390] sm:$0xff]
        %v909 = vld [vmem:[%s215 + $0x1398] sm:$0xff]
        %v910 = vld [vmem:[%s215 + $0x13a0] sm:$0xff]
        %v911 = vld [vmem:[%s215 + $0x13a8] sm:$0xff]
        %v912 = vld [vmem:[%s215 + $0x13b0] sm:$0xff]
        %v913 = vld [vmem:[%s215 + $0x13b8] sm:$0xff]
        %v914 = vld [vmem:[%s215 + $0x13c0] sm:$0xff]
        %v915 = vld [vmem:[%s215 + $0x13c8] sm:$0xff]
        %v916 = vld [vmem:[%s215 + $0x13d0] sm:$0xff]
        %v917 = vld [vmem:[%s215 + $0x13d8] sm:$0xff]
        %v918 = vld [vmem:[%s215 + $0x13e0] sm:$0xff]
        %v919 = vld [vmem:[%s215 + $0x13e8] sm:$0xff]
        %v920 = vld [vmem:[%s215 + $0x13f0] sm:$0xff]
        %v921 = vld [vmem:[%s215 + $0x13f8] sm:$0xff]
        %v922 = vld [vmem:[%s215 + $0x1400] sm:$0xff]
        %v923 = vld [vmem:[%s215 + $0x1408] sm:$0xff]
        %v924 = vld [vmem:[%s215 + $0x1410] sm:$0xff]
        %v925 = vld [vmem:[%s215 + $0x1418] sm:$0xff]
        %v926 = vld [vmem:[%s215 + $0x1420] sm:$0xff]
        %v927 = vld [vmem:[%s215 + $0x1428] sm:$0xff]
        %v928 = vld [vmem:[%s215 + $0x1430] sm:$0xff]
        %v929 = vld [vmem:[%s215 + $0x1438] sm:$0xff]
        %v930 = vld [vmem:[%s215 + $0x1440] sm:$0xff]
        %v931 = vld [vmem:[%s215 + $0x1448] sm:$0xff]
        %v932 = vld [vmem:[%s215 + $0x1450] sm:$0xff]
        %v933 = vld [vmem:[%s215 + $0x1458] sm:$0xff]
        %v934 = vld [vmem:[%s215 + $0x1460] sm:$0xff]
        %v935 = vld [vmem:[%s215 + $0x1468] sm:$0xff]
        %v936 = vld [vmem:[%s215 + $0x1470] sm:$0xff]
        %v937 = vld [vmem:[%s215 + $0x1478] sm:$0xff]
        %v938 = vld [vmem:[%s215 + $0x1480] sm:$0xff]
        %v939 = vld [vmem:[%s215 + $0x1488] sm:$0xff]
        %v940 = vld [vmem:[%s215 + $0x1490] sm:$0xff]
        %v941 = vld [vmem:[%s215 + $0x1498] sm:$0xff]
        %v942 = vld [vmem:[%s215 + $0x14a0] sm:$0xff]
        %v943 = vld [vmem:[%s215 + $0x14a8] sm:$0xff]
        %v944 = vld [vmem:[%s215 + $0x14b0] sm:$0xff]
        %v945 = vld [vmem:[%s215 + $0x14b8] sm:$0xff]
        %v946 = vld [vmem:[%s215 + $0x14c0] sm:$0xff]
        %v947 = vld [vmem:[%s215 + $0x14c8] sm:$0xff]
        %v948 = vld [vmem:[%s215 + $0x14d0] sm:$0xff]
        %v949 = vld [vmem:[%s215 + $0x14d8] sm:$0xff]
        %v950 = vld [vmem:[%s215 + $0x14e0] sm:$0xff]
        %v951 = vld [vmem:[%s215 + $0x14e8] sm:$0xff]
        %v952 = vld [vmem:[%s215 + $0x14f0] sm:$0xff]
        %v953 = vld [vmem:[%s215 + $0x14f8] sm:$0xff]
        %v954 = vld [vmem:[%s215 + $0x1500] sm:$0xff]
        %v955 = vld [vmem:[%s215 + $0x1508] sm:$0xff]
        %v956 = vld [vmem:[%s215 + $0x1510] sm:$0xff]
        %v957 = vld [vmem:[%s215 + $0x1518] sm:$0xff]
        %v958 = vld [vmem:[%s215 + $0x1520] sm:$0xff]
        %v959 = vld [vmem:[%s215 + $0x1528] sm:$0xff]
        %v960 = vld [vmem:[%s215 + $0x1530] sm:$0xff]
        %v961 = vld [vmem:[%s215 + $0x1538] sm:$0xff]
        %v962 = vld [vmem:[%s215 + $0x1540] sm:$0xff]
        %v963 = vld [vmem:[%s215 + $0x1548] sm:$0xff]
        %v964 = vld [vmem:[%s215 + $0x1550] sm:$0xff]
        %v965 = vld [vmem:[%s215 + $0x1558] sm:$0xff]
        %v966 = vld [vmem:[%s215 + $0x1560] sm:$0xff]
        %v967 = vld [vmem:[%s215 + $0x1568] sm:$0xff]
        %v968 = vld [vmem:[%s215 + $0x1570] sm:$0xff]
        %v969 = vld [vmem:[%s215 + $0x1578] sm:$0xff]
        %v970 = vld [vmem:[%s215 + $0x1580] sm:$0xff]
        %v971 = vld [vmem:[%s215 + $0x1588] sm:$0xff]
        %v972 = vld [vmem:[%s215 + $0x1590] sm:$0xff]
        %v973 = vld [vmem:[%s215 + $0x1598] sm:$0xff]
        %v974 = vld [vmem:[%s215 + $0x15a0] sm:$0xff]
        %v975 = vld [vmem:[%s215 + $0x15a8] sm:$0xff]
        %v976 = vld [vmem:[%s215 + $0x15b0] sm:$0xff]
        %v977 = vld [vmem:[%s215 + $0x15b8] sm:$0xff]
        %v978 = vld [vmem:[%s215 + $0x15c0] sm:$0xff]
        %v979 = vld [vmem:[%s215 + $0x15c8] sm:$0xff]
        %v980 = vld [vmem:[%s215 + $0x15d0] sm:$0xff]
        %v981 = vld [vmem:[%s215 + $0x15d8] sm:$0xff]
        %v982 = vld [vmem:[%s215 + $0x15e0] sm:$0xff]
        %v983 = vld [vmem:[%s215 + $0x15e8] sm:$0xff]
        %v984 = vld [vmem:[%s215 + $0x15f0] sm:$0xff]
        %v985 = vld [vmem:[%s215 + $0x15f8] sm:$0xff]
        %v986 = vld [vmem:[%s215 + $0x1600] sm:$0xff]
        %v987 = vld [vmem:[%s215 + $0x1608] sm:$0xff]
        %v988 = vld [vmem:[%s215 + $0x1610] sm:$0xff]
        %v989 = vld [vmem:[%s215 + $0x1618] sm:$0xff]
        %v990 = vld [vmem:[%s215 + $0x1620] sm:$0xff]
        %v991 = vld [vmem:[%s215 + $0x1628] sm:$0xff]
        %v992 = vld [vmem:[%s215 + $0x1630] sm:$0xff]
        %v993 = vld [vmem:[%s215 + $0x1638] sm:$0xff]
        %v994 = vld [vmem:[%s215 + $0x1640] sm:$0xff]
        %v995 = vld [vmem:[%s215 + $0x1648] sm:$0xff]
        %v996 = vld [vmem:[%s215 + $0x1650] sm:$0xff]
        %v997 = vld [vmem:[%s215 + $0x1658] sm:$0xff]
        %v998 = vld [vmem:[%s215 + $0x1660] sm:$0xff]
        %v999 = vld [vmem:[%s215 + $0x1668] sm:$0xff]
        %v1000 = vld [vmem:[%s215 + $0x1670] sm:$0xff]
        %v1001 = vld [vmem:[%s215 + $0x1678] sm:$0xff]
        %v1002 = vld [vmem:[%s215 + $0x1680] sm:$0xff]
        %v1003 = vld [vmem:[%s215 + $0x1688] sm:$0xff]
        %v1004 = vld [vmem:[%s215 + $0x1690] sm:$0xff]
        %v1005 = vld [vmem:[%s215 + $0x1698] sm:$0xff]
        %v1006 = vld [vmem:[%s215 + $0x16a0] sm:$0xff]
        %v1007 = vld [vmem:[%s215 + $0x16a8] sm:$0xff]
        %v1008 = vld [vmem:[%s215 + $0x16b0] sm:$0xff]
        %v1009 = vld [vmem:[%s215 + $0x16b8] sm:$0xff]
        %v1010 = vld [vmem:[%s215 + $0x16c0] sm:$0xff]
        %v1011 = vld [vmem:[%s215 + $0x16c8] sm:$0xff]
        %v1012 = vld [vmem:[%s215 + $0x16d0] sm:$0xff]
        %v1013 = vld [vmem:[%s215 + $0x16d8] sm:$0xff]
        %v1014 = vld [vmem:[%s215 + $0x16e0] sm:$0xff]
        %v1015 = vld [vmem:[%s215 + $0x16e8] sm:$0xff]
        %v1016 = vld [vmem:[%s215 + $0x16f0] sm:$0xff]
        %v1017 = vld [vmem:[%s215 + $0x16f8] sm:$0xff]
        %v1018 = vld [vmem:[%s215 + $0x1700] sm:$0xff]
        %v1019 = vld [vmem:[%s215 + $0x1708] sm:$0xff]
        %v1020 = vld [vmem:[%s215 + $0x1710] sm:$0xff]
        %v1021 = vld [vmem:[%s215 + $0x1718] sm:$0xff]
        %v1022 = vld [vmem:[%s215 + $0x1720] sm:$0xff]
        %v1023 = vld [vmem:[%s215 + $0x1728] sm:$0xff]
        %v1024 = vld [vmem:[%s215 + $0x1730] sm:$0xff]
        %v1025 = vld [vmem:[%s215 + $0x1738] sm:$0xff]
        %v1026 = vld [vmem:[%s215 + $0x1740] sm:$0xff]
        %v1027 = vld [vmem:[%s215 + $0x1748] sm:$0xff]
        %v1028 = vld [vmem:[%s215 + $0x1750] sm:$0xff]
        %v1029 = vld [vmem:[%s215 + $0x1758] sm:$0xff]
        %v1030 = vld [vmem:[%s215 + $0x1760] sm:$0xff]
        %v1031 = vld [vmem:[%s215 + $0x1768] sm:$0xff]
        %v1032 = vld [vmem:[%s215 + $0x1770] sm:$0xff]
        %v1033 = vld [vmem:[%s215 + $0x1778] sm:$0xff]
        %v1034 = vld [vmem:[%s215 + $0x1780] sm:$0xff]
        %v1035 = vld [vmem:[%s215 + $0x1788] sm:$0xff]
        %v1036 = vld [vmem:[%s215 + $0x1790] sm:$0xff]
        %v1037 = vld [vmem:[%s215 + $0x1798] sm:$0xff]
        %v1038 = vld [vmem:[%s215 + $0x17a0] sm:$0xff]
        %v1039 = vld [vmem:[%s215 + $0x17a8] sm:$0xff]
        %v1040 = vld [vmem:[%s215 + $0x17b0] sm:$0xff]
        %v1041 = vld [vmem:[%s215 + $0x17b8] sm:$0xff]
        %v1042 = vld [vmem:[%s215 + $0x17c0] sm:$0xff]
        %v1043 = vld [vmem:[%s215 + $0x17c8] sm:$0xff]
        %v1044 = vld [vmem:[%s215 + $0x17d0] sm:$0xff]
        %v1045 = vld [vmem:[%s215 + $0x17d8] sm:$0xff]
        %v1046 = vld [vmem:[%s215 + $0x17e0] sm:$0xff]
        %v1047 = vld [vmem:[%s215 + $0x17e8] sm:$0xff]
        %v1048 = vld [vmem:[%s215 + $0x17f0] sm:$0xff]
        %v1049 = vld [vmem:[%s215 + $0x17f8] sm:$0xff]
        %v1050 = vld [vmem:[%s215 + $0x1800] sm:$0xff]
        %v1051 = vld [vmem:[%s215 + $0x1808] sm:$0xff]
        %v1052 = vld [vmem:[%s215 + $0x1810] sm:$0xff]
        %v1053 = vld [vmem:[%s215 + $0x1818] sm:$0xff]
        %v1054 = vld [vmem:[%s215 + $0x1820] sm:$0xff]
        %v1055 = vld [vmem:[%s215 + $0x1828] sm:$0xff]
        %v1056 = vld [vmem:[%s215 + $0x1830] sm:$0xff]
        %v1057 = vld [vmem:[%s215 + $0x1838] sm:$0xff]
        %v1058 = vld [vmem:[%s215 + $0x1840] sm:$0xff]
        %v1059 = vld [vmem:[%s215 + $0x1848] sm:$0xff]
        %v1060 = vld [vmem:[%s215 + $0x1850] sm:$0xff]
        %v1061 = vld [vmem:[%s215 + $0x1858] sm:$0xff]
        %v1062 = vld [vmem:[%s215 + $0x1860] sm:$0xff]
        %v1063 = vld [vmem:[%s215 + $0x1868] sm:$0xff]
        %v1064 = vld [vmem:[%s215 + $0x1870] sm:$0xff]
        %v1065 = vld [vmem:[%s215 + $0x1878] sm:$0xff]
        %v1066 = vld [vmem:[%s215 + $0x1880] sm:$0xff]
        %v1067 = vld [vmem:[%s215 + $0x1888] sm:$0xff]
        %v1068 = vld [vmem:[%s215 + $0x1890] sm:$0xff]
        %v1069 = vld [vmem:[%s215 + $0x1898] sm:$0xff]
        %v1070 = vld [vmem:[%s215 + $0x18a0] sm:$0xff]
        %v1071 = vld [vmem:[%s215 + $0x18a8] sm:$0xff]
        %v1072 = vld [vmem:[%s215 + $0x18b0] sm:$0xff]
        %v1073 = vld [vmem:[%s215 + $0x18b8] sm:$0xff]
        %v1074 = vld [vmem:[%s215 + $0x18c0] sm:$0xff]
        %v1075 = vld [vmem:[%s215 + $0x18c8] sm:$0xff]
        %v1076 = vld [vmem:[%s215 + $0x18d0] sm:$0xff]
        %v1077 = vld [vmem:[%s215 + $0x18d8] sm:$0xff]
        %v1078 = vld [vmem:[%s215 + $0x18e0] sm:$0xff]
        %v1079 = vld [vmem:[%s215 + $0x18e8] sm:$0xff]
        %v1080 = vld [vmem:[%s215 + $0x18f0] sm:$0xff]
        %v1081 = vld [vmem:[%s215 + $0x18f8] sm:$0xff]
        %v1082 = vld [vmem:[%s215 + $0x1900] sm:$0xff]
        %v1083 = vld [vmem:[%s215 + $0x1908] sm:$0xff]
        %v1084 = vld [vmem:[%s215 + $0x1910] sm:$0xff]
        %v1085 = vld [vmem:[%s215 + $0x1918] sm:$0xff]
        %v1086 = vld [vmem:[%s215 + $0x1920] sm:$0xff]
        %v1087 = vld [vmem:[%s215 + $0x1928] sm:$0xff]
        %v1088 = vld [vmem:[%s215 + $0x1930] sm:$0xff]
        %v1089 = vld [vmem:[%s215 + $0x1938] sm:$0xff]
        %v1090 = vld [vmem:[%s215 + $0x1940] sm:$0xff]
        %v1091 = vld [vmem:[%s215 + $0x1948] sm:$0xff]
        %v1092 = vld [vmem:[%s215 + $0x1950] sm:$0xff]
        %v1093 = vld [vmem:[%s215 + $0x1958] sm:$0xff]
        %v1094 = vld [vmem:[%s215 + $0x1960] sm:$0xff]
        %v1095 = vld [vmem:[%s215 + $0x1968] sm:$0xff]
        %v1096 = vld [vmem:[%s215 + $0x1970] sm:$0xff]
        %v1097 = vld [vmem:[%s215 + $0x1978] sm:$0xff]
        %v1098 = vld [vmem:[%s215 + $0x1980] sm:$0xff]
        %v1099 = vld [vmem:[%s215 + $0x1988] sm:$0xff]
        %v1100 = vld [vmem:[%s215 + $0x1990] sm:$0xff]
        %v1101 = vld [vmem:[%s215 + $0x1998] sm:$0xff]
        %v1102 = vld [vmem:[%s215 + $0x19a0] sm:$0xff]
        %v1103 = vld [vmem:[%s215 + $0x19a8] sm:$0xff]
        %v1104 = vld [vmem:[%s215 + $0x19b0] sm:$0xff]
        %v1105 = vld [vmem:[%s215 + $0x19b8] sm:$0xff]
        %v1106 = vld [vmem:[%s215 + $0x19c0] sm:$0xff]
        %v1107 = vld [vmem:[%s215 + $0x19c8] sm:$0xff]
        %v1108 = vld [vmem:[%s215 + $0x19d0] sm:$0xff]
        %v1109 = vld [vmem:[%s215 + $0x19d8] sm:$0xff]
        %v1110 = vld [vmem:[%s215 + $0x19e0] sm:$0xff]
        %v1111 = vld [vmem:[%s215 + $0x19e8] sm:$0xff]
        %v1112 = vld [vmem:[%s215 + $0x19f0] sm:$0xff]
        %v1113 = vld [vmem:[%s215 + $0x19f8] sm:$0xff]
        %v1114 = vld [vmem:[%s215 + $0x1a00] sm:$0xff]
        %v1115 = vld [vmem:[%s215 + $0x1a08] sm:$0xff]
        %v1116 = vld [vmem:[%s215 + $0x1a10] sm:$0xff]
        %v1117 = vld [vmem:[%s215 + $0x1a18] sm:$0xff]
        %v1118 = vld [vmem:[%s215 + $0x1a20] sm:$0xff]
        %v1119 = vld [vmem:[%s215 + $0x1a28] sm:$0xff]
        %v1120 = vld [vmem:[%s215 + $0x1a30] sm:$0xff]
        %v1121 = vld [vmem:[%s215 + $0x1a38] sm:$0xff]
        %v1122 = vld [vmem:[%s215 + $0x1a40] sm:$0xff]
        %v1123 = vld [vmem:[%s215 + $0x1a48] sm:$0xff]
        %v1124 = vld [vmem:[%s215 + $0x1a50] sm:$0xff]
        %v1125 = vld [vmem:[%s215 + $0x1a58] sm:$0xff]
        %v1126 = vld [vmem:[%s215 + $0x1a60] sm:$0xff]
        %v1127 = vld [vmem:[%s215 + $0x1a68] sm:$0xff]
        %v1128 = vld [vmem:[%s215 + $0x1a70] sm:$0xff]
        %v1129 = vld [vmem:[%s215 + $0x1a78] sm:$0xff]
        %v1130 = vld [vmem:[%s215 + $0x1a80] sm:$0xff]
        %v1131 = vld [vmem:[%s215 + $0x1a88] sm:$0xff]
        %v1132 = vld [vmem:[%s215 + $0x1a90] sm:$0xff]
        %v1133 = vld [vmem:[%s215 + $0x1a98] sm:$0xff]
        %v1134 = vld [vmem:[%s215 + $0x1aa0] sm:$0xff]
        %v1135 = vld [vmem:[%s215 + $0x1aa8] sm:$0xff]
        %v1136 = vld [vmem:[%s215 + $0x1ab0] sm:$0xff]
        %v1137 = vld [vmem:[%s215 + $0x1ab8] sm:$0xff]
        %v1138 = vld [vmem:[%s215 + $0x1ac0] sm:$0xff]
        %v1139 = vld [vmem:[%s215 + $0x1ac8] sm:$0xff]
        %v1140 = vld [vmem:[%s215 + $0x1ad0] sm:$0xff]
        %v1141 = vld [vmem:[%s215 + $0x1ad8] sm:$0xff]
        %v1142 = vld [vmem:[%s215 + $0x1ae0] sm:$0xff]
        %v1143 = vld [vmem:[%s215 + $0x1ae8] sm:$0xff]
        %v1144 = vld [vmem:[%s215 + $0x1af0] sm:$0xff]
        %v1145 = vld [vmem:[%s215 + $0x1af8] sm:$0xff]
        %v1146 = vld [vmem:[%s215 + $0x1b00] sm:$0xff]
        %v1147 = vld [vmem:[%s215 + $0x1b08] sm:$0xff]
        %v1148 = vld [vmem:[%s215 + $0x1b10] sm:$0xff]
        %v1149 = vld [vmem:[%s215 + $0x1b18] sm:$0xff]
        %v1150 = vld [vmem:[%s215 + $0x1b20] sm:$0xff]
        %v1151 = vld [vmem:[%s215 + $0x1b28] sm:$0xff]
        %v1152 = vld [vmem:[%s215 + $0x1b30] sm:$0xff]
        %v1153 = vld [vmem:[%s215 + $0x1b38] sm:$0xff]
        %v1154 = vld [vmem:[%s215 + $0x1b40] sm:$0xff]
        %v1155 = vld [vmem:[%s215 + $0x1b48] sm:$0xff]
        %v1156 = vld [vmem:[%s215 + $0x1b50] sm:$0xff]
        %v1157 = vld [vmem:[%s215 + $0x1b58] sm:$0xff]
        %v1158 = vld [vmem:[%s215 + $0x1b60] sm:$0xff]
        %v1159 = vld [vmem:[%s215 + $0x1b68] sm:$0xff]
        %v1160 = vld [vmem:[%s215 + $0x1b70] sm:$0xff]
        %v1161 = vld [vmem:[%s215 + $0x1b78] sm:$0xff]
        %v1162 = vld [vmem:[%s215 + $0x1b80] sm:$0xff]
        %v1163 = vld [vmem:[%s215 + $0x1b88] sm:$0xff]
        %v1164 = vld [vmem:[%s215 + $0x1b90] sm:$0xff]
        %v1165 = vld [vmem:[%s215 + $0x1b98] sm:$0xff]
        %v1166 = vld [vmem:[%s215 + $0x1ba0] sm:$0xff]
        %v1167 = vld [vmem:[%s215 + $0x1ba8] sm:$0xff]
        %v1168 = vld [vmem:[%s215 + $0x1bb0] sm:$0xff]
        %v1169 = vld [vmem:[%s215 + $0x1bb8] sm:$0xff]
        %v1170 = vld [vmem:[%s215 + $0x1bc0] sm:$0xff]
        %v1171 = vld [vmem:[%s215 + $0x1bc8] sm:$0xff]
        %v1172 = vld [vmem:[%s215 + $0x1bd0] sm:$0xff]
        %v1173 = vld [vmem:[%s215 + $0x1bd8] sm:$0xff]
        %v1174 = vld [vmem:[%s215 + $0x1be0] sm:$0xff]
        %v1175 = vld [vmem:[%s215 + $0x1be8] sm:$0xff]
        %v1176 = vld [vmem:[%s215 + $0x1bf0] sm:$0xff]
        %v1177 = vld [vmem:[%s215 + $0x1bf8] sm:$0xff]
        %v1178 = vld [vmem:[%s215 + $0x1c00] sm:$0xff]
        %v1179 = vld [vmem:[%s215 + $0x1c08] sm:$0xff]
        %v1180 = vld [vmem:[%s215 + $0x1c10] sm:$0xff]
        %v1181 = vld [vmem:[%s215 + $0x1c18] sm:$0xff]
        %v1182 = vld [vmem:[%s215 + $0x1c20] sm:$0xff]
        %v1183 = vld [vmem:[%s215 + $0x1c28] sm:$0xff]
        %v1184 = vld [vmem:[%s215 + $0x1c30] sm:$0xff]
        %v1185 = vld [vmem:[%s215 + $0x1c38] sm:$0xff]
        %v1186 = vld [vmem:[%s215 + $0x1c40] sm:$0xff]
        %v1187 = vld [vmem:[%s215 + $0x1c48] sm:$0xff]
        %v1188 = vld [vmem:[%s215 + $0x1c50] sm:$0xff]
        %v1189 = vld [vmem:[%s215 + $0x1c58] sm:$0xff]
        %v1190 = vld [vmem:[%s215 + $0x1c60] sm:$0xff]
        %v1191 = vld [vmem:[%s215 + $0x1c68] sm:$0xff]
        %v1192 = vld [vmem:[%s215 + $0x1c70] sm:$0xff]
        %v1193 = vld [vmem:[%s215 + $0x1c78] sm:$0xff]
        %v1194 = vld [vmem:[%s215 + $0x1c80] sm:$0xff]
        %v1195 = vld [vmem:[%s215 + $0x1c88] sm:$0xff]
        %v1196 = vld [vmem:[%s215 + $0x1c90] sm:$0xff]
        %v1197 = vld [vmem:[%s215 + $0x1c98] sm:$0xff]
        %v1198 = vld [vmem:[%s215 + $0x1ca0] sm:$0xff]
        %v1199 = vld [vmem:[%s215 + $0x1ca8] sm:$0xff]
        %v1200 = vld [vmem:[%s215 + $0x1cb0] sm:$0xff]
        %v1201 = vld [vmem:[%s215 + $0x1cb8] sm:$0xff]
        %v1202 = vld [vmem:[%s215 + $0x1cc0] sm:$0xff]
        %v1203 = vld [vmem:[%s215 + $0x1cc8] sm:$0xff]
        %v1204 = vld [vmem:[%s215 + $0x1cd0] sm:$0xff]
        %v1205 = vld [vmem:[%s215 + $0x1cd8] sm:$0xff]
        %v1206 = vld [vmem:[%s215 + $0x1ce0] sm:$0xff]
        %v1207 = vld [vmem:[%s215 + $0x1ce8] sm:$0xff]
        %v1208 = vld [vmem:[%s215 + $0x1cf0] sm:$0xff]
        %v1209 = vld [vmem:[%s215 + $0x1cf8] sm:$0xff]
        %v1210 = vld [vmem:[%s215 + $0x1d00] sm:$0xff]
        %v1211 = vld [vmem:[%s215 + $0x1d08] sm:$0xff]
        %v1212 = vld [vmem:[%s215 + $0x1d10] sm:$0xff]
        %v1213 = vld [vmem:[%s215 + $0x1d18] sm:$0xff]
        %v1214 = vld [vmem:[%s215 + $0x1d20] sm:$0xff]
        %v1215 = vld [vmem:[%s215 + $0x1d28] sm:$0xff]
        %v1216 = vld [vmem:[%s215 + $0x1d30] sm:$0xff]
        %v1217 = vld [vmem:[%s215 + $0x1d38] sm:$0xff]
        %v1218 = vld [vmem:[%s215 + $0x1d40] sm:$0xff]
        %v1219 = vld [vmem:[%s215 + $0x1d48] sm:$0xff]
        %v1220 = vld [vmem:[%s215 + $0x1d50] sm:$0xff]
        %v1221 = vld [vmem:[%s215 + $0x1d58] sm:$0xff]
        %v1222 = vld [vmem:[%s215 + $0x1d60] sm:$0xff]
        %v1223 = vld [vmem:[%s215 + $0x1d68] sm:$0xff]
        %v1224 = vld [vmem:[%s215 + $0x1d70] sm:$0xff]
        %v1225 = vld [vmem:[%s215 + $0x1d78] sm:$0xff]
        %v1226 = vld [vmem:[%s215 + $0x1d80] sm:$0xff]
        %v1227 = vld [vmem:[%s215 + $0x1d88] sm:$0xff]
        %v1228 = vld [vmem:[%s215 + $0x1d90] sm:$0xff]
        %v1229 = vld [vmem:[%s215 + $0x1d98] sm:$0xff]
        %v1230 = vld [vmem:[%s215 + $0x1da0] sm:$0xff]
        %v1231 = vld [vmem:[%s215 + $0x1da8] sm:$0xff]
        %v1232 = vld [vmem:[%s215 + $0x1db0] sm:$0xff]
        %v1233 = vld [vmem:[%s215 + $0x1db8] sm:$0xff]
        %v1234 = vld [vmem:[%s215 + $0x1dc0] sm:$0xff]
        %v1235 = vld [vmem:[%s215 + $0x1dc8] sm:$0xff]
        %v1236 = vld [vmem:[%s215 + $0x1dd0] sm:$0xff]
        %v1237 = vld [vmem:[%s215 + $0x1dd8] sm:$0xff]
        %v1238 = vld [vmem:[%s215 + $0x1de0] sm:$0xff]
        %v1239 = vld [vmem:[%s215 + $0x1de8] sm:$0xff]
        %v1240 = vld [vmem:[%s215 + $0x1df0] sm:$0xff]
        %v1241 = vld [vmem:[%s215 + $0x1df8] sm:$0xff]
        %v1242 = vld [vmem:[%s215 + $0x1e00] sm:$0xff]
        %v1243 = vld [vmem:[%s215 + $0x1e08] sm:$0xff]
        %v1244 = vld [vmem:[%s215 + $0x1e10] sm:$0xff]
        %v1245 = vld [vmem:[%s215 + $0x1e18] sm:$0xff]
        %v1246 = vld [vmem:[%s215 + $0x1e20] sm:$0xff]
        %v1247 = vld [vmem:[%s215 + $0x1e28] sm:$0xff]
        %v1248 = vld [vmem:[%s215 + $0x1e30] sm:$0xff]
        %v1249 = vld [vmem:[%s215 + $0x1e38] sm:$0xff]
        %v1250 = vld [vmem:[%s215 + $0x1e40] sm:$0xff]
        %v1251 = vld [vmem:[%s215 + $0x1e48] sm:$0xff]
        %v1252 = vld [vmem:[%s215 + $0x1e50] sm:$0xff]
        %v1253 = vld [vmem:[%s215 + $0x1e58] sm:$0xff]
        %v1254 = vld [vmem:[%s215 + $0x1e60] sm:$0xff]
        %v1255 = vld [vmem:[%s215 + $0x1e68] sm:$0xff]
        %v1256 = vld [vmem:[%s215 + $0x1e70] sm:$0xff]
        %v1257 = vld [vmem:[%s215 + $0x1e78] sm:$0xff]
        %v1258 = vld [vmem:[%s215 + $0x1e80] sm:$0xff]
        %v1259 = vld [vmem:[%s215 + $0x1e88] sm:$0xff]
        %v1260 = vld [vmem:[%s215 + $0x1e90] sm:$0xff]
        %v1261 = vld [vmem:[%s215 + $0x1e98] sm:$0xff]
        %v1262 = vld [vmem:[%s215 + $0x1ea0] sm:$0xff]
        %v1263 = vld [vmem:[%s215 + $0x1ea8] sm:$0xff]
        %v1264 = vld [vmem:[%s215 + $0x1eb0] sm:$0xff]
        %v1265 = vld [vmem:[%s215 + $0x1eb8] sm:$0xff]
        %v1266 = vld [vmem:[%s215 + $0x1ec0] sm:$0xff]
        %v1267 = vld [vmem:[%s215 + $0x1ec8] sm:$0xff]
        %v1268 = vld [vmem:[%s215 + $0x1ed0] sm:$0xff]
        %v1269 = vld [vmem:[%s215 + $0x1ed8] sm:$0xff]
        %v1270 = vld [vmem:[%s215 + $0x1ee0] sm:$0xff]
        %v1271 = vld [vmem:[%s215 + $0x1ee8] sm:$0xff]
        %v1272 = vld [vmem:[%s215 + $0x1ef0] sm:$0xff]
        %v1273 = vld [vmem:[%s215 + $0x1ef8] sm:$0xff]
        %1275 = vst [vmem:[#allocation1] ss:$9 sm:$0xff] %v278
        %v1276 = vld [vmem:[#allocation1] sm:$0xff]
        %v1277 = vld [vmem:[#allocation1 + $0x9] sm:$0xff]
        %v1278 = vld [vmem:[#allocation1 + $0x12] sm:$0xff]
        %v1279 = vld [vmem:[#allocation1 + $0x1b] sm:$0xff]
        %v1280 = vld [vmem:[#allocation1 + $0x24] sm:$0xff]
        %v1281 = vld [vmem:[#allocation1 + $0x2d] sm:$0xff]
        %v1282 = vld [vmem:[#allocation1 + $0x36] sm:$0xff]
        %v1283 = vld [vmem:[#allocation1 + $0x3f] sm:$0xff]
        %1285 = vst [vmem:[#allocation1] ss:$9 sm:$0xff] %v279
        %v1286 = vld [vmem:[#allocation1] sm:$0xff]
        %v1287 = vld [vmem:[#allocation1 + $0x9] sm:$0xff]
        %v1288 = vld [vmem:[#allocation1 + $0x12] sm:$0xff]
        %v1289 = vld [vmem:[#allocation1 + $0x1b] sm:$0xff]
        %v1290 = vld [vmem:[#allocation1 + $0x24] sm:$0xff]
        %v1291 = vld [vmem:[#allocation1 + $0x2d] sm:$0xff]
        %v1292 = vld [vmem:[#allocation1 + $0x36] sm:$0xff]
        %v1293 = vld [vmem:[#allocation1 + $0x3f] sm:$0xff]
        %1295 = vst [vmem:[#allocation1] ss:$9 sm:$0xff] %v280
        %v1296 = vld [vmem:[#allocation1] sm:$0xff]
        %v1297 = vld [vmem:[#allocation1 + $0x9] sm:$0xff]
        %v1298 = vld [vmem:[#allocation1 + $0x12] sm:$0xff]
        %v1299 = vld [vmem:[#allocation1 + $0x1b] sm:$0xff]
        %v1300 = vld [vmem:[#allocation1 + $0x24] sm:$0xff]
        %v1301 = vld [vmem:[#allocation1 + $0x2d] sm:$0xff]
        %v1302 = vld [vmem:[#allocation1 + $0x36] sm:$0xff]
        %v1303 = vld [vmem:[#allocation1 + $0x3f] sm:$0xff]
        %1305 = vst [vmem:[#allocation1] ss:$9 sm:$0xff] %v281
        %v1306 = vld [vmem:[#allocation1] sm:$0xff]
        %v1307 = vld [vmem:[#allocation1 + $0x9] sm:$0xff]
        %v1308 = vld [vmem:[#allocation1 + $0x12] sm:$0xff]
        %v1309 = vld [vmem:[#allocation1 + $0x1b] sm:$0xff]
        %v1310 = vld [vmem:[#allocation1 + $0x24] sm:$0xff]
        %v1311 = vld [vmem:[#allocation1 + $0x2d] sm:$0xff]
        %v1312 = vld [vmem:[#allocation1 + $0x36] sm:$0xff]
        %v2336 = vunpack.c.l.b16 %v282
        %v2337 = vunpack.c.h.b16 %v282
        %v2338 = vunpack.c.l.b16 %v283
        %v2339 = vunpack.c.h.b16 %v283
        %v2340 = vunpack.c.l.b16 %v284
        %v2341 = vunpack.c.h.b16 %v284
        %v2342 = vunpack.c.l.b16 %v285
        %v2343 = vunpack.c.h.b16 %v285
        %v2344 = vunpack.c.l.b16 %v286
        %v2345 = vunpack.c.h.b16 %v286
        %v2346 = vunpack.c.l.b16 %v287
        %v2347 = vunpack.c.h.b16 %v287
        %v2348 = vunpack.c.l.b16 %v288
        %v2349 = vunpack.c.h.b16 %v288
        %v2350 = vunpack.c.l.b16 %v289
        %v2351 = vunpack.c.h.b16 %v289
        %v2352 = vunpack.c.l.b16 %v290
        %v2353 = vunpack.c.h.b16 %v290
        %v2354 = vunpack.c.l.b16 %v291
        %v2355 = vunpack.c.h.b16 %v291
        %v2356 = vunpack.c.l.b16 %v292
        %v2357 = vunpack.c.h.b16 %v292
        %v2358 = vunpack.c.l.b16 %v293
        %v2359 = vunpack.c.h.b16 %v293
        %v2360 = vunpack.c.l.b16 %v294
        %v2361 = vunpack.c.h.b16 %v294
        %v2362 = vunpack.c.l.b16 %v295
        %v2363 = vunpack.c.h.b16 %v295
        %v2364 = vunpack.c.l.b16 %v296
        %v2365 = vunpack.c.h.b16 %v296
        %v2366 = vunpack.c.l.b16 %v297
        %v2367 = vunpack.c.h.b16 %v297
        %v2368 = vunpack.c.l.b16 %v298
        %v2369 = vunpack.c.h.b16 %v298
        %v2370 = vunpack.c.l.b16 %v299
        %v2371 = vunpack.c.h.b16 %v299
        %v2372 = vunpack.c.l.b16 %v300
        %v2373 = vunpack.c.h.b16 %v300
        %v2374 = vunpack.c.l.b16 %v301
        %v2375 = vunpack.c.h.b16 %v301
        %v2376 = vunpack.c.l.b16 %v302
        %v2377 = vunpack.c.h.b16 %v302
        %v2378 = vunpack.c.l.b16 %v303
        %v2379 = vunpack.c.h.b16 %v303
        %v2380 = vunpack.c.l.b16 %v304
        %v2381 = vunpack.c.h.b16 %v304
        %v2382 = vunpack.c.l.b16 %v305
        %v2383 = vunpack.c.h.b16 %v305
        %v2384 = vunpack.c.l.b16 %v306
        %v2385 = vunpack.c.h.b16 %v306
        %v2386 = vunpack.c.l.b16 %v307
        %v2387 = vunpack.c.h.b16 %v307
        %v2388 = vunpack.c.l.b16 %v308
        %v2389 = vunpack.c.h.b16 %v308
        %v2390 = vunpack.c.l.b16 %v309
        %v2391 = vunpack.c.h.b16 %v309
        %v2392 = vunpack.c.l.b16 %v310
        %v2393 = vunpack.c.h.b16 %v310
        %v2394 = vunpack.c.l.b16 %v311
        %v2395 = vunpack.c.h.b16 %v311
        %v2396 = vunpack.c.l.b16 %v312
        %v2397 = vunpack.c.h.b16 %v312
        %v2398 = vunpack.c.l.b16 %v313
        %v2399 = vunpack.c.h.b16 %v313
        %v2400 = vunpack.c.l.b16 %v314
        %v2401 = vunpack.c.h.b16 %v314
        %v2402 = vunpack.c.l.b16 %v315
        %v2403 = vunpack.c.h.b16 %v315
        %v2404 = vunpack.c.l.b16 %v316
        %v2405 = vunpack.c.h.b16 %v316
        %v2406 = vunpack.c.l.b16 %v317
        %v2407 = vunpack.c.h.b16 %v317
        %v2408 = vunpack.c.l.b16 %v318
        %v2409 = vunpack.c.h.b16 %v318
        %v2410 = vunpack.c.l.b16 %v319
        %v2411 = vunpack.c.h.b16 %v319
        %v2412 = vunpack.c.l.b16 %v320
        %v2413 = vunpack.c.h.b16 %v320
        %v2414 = vunpack.c.l.b16 %v321
        %v2415 = vunpack.c.h.b16 %v321
        %v2416 = vunpack.c.l.b16 %v322
        %v2417 = vunpack.c.h.b16 %v322
        %v2418 = vunpack.c.l.b16 %v323
        %v2419 = vunpack.c.h.b16 %v323
        %v2420 = vunpack.c.l.b16 %v324
        %v2421 = vunpack.c.h.b16 %v324
        %v2422 = vunpack.c.l.b16 %v325
        %v2423 = vunpack.c.h.b16 %v325
        %v2424 = vunpack.c.l.b16 %v326
        %v2425 = vunpack.c.h.b16 %v326
        %v2426 = vunpack.c.l.b16 %v327
        %v2427 = vunpack.c.h.b16 %v327
        %v2428 = vunpack.c.l.b16 %v328
        %v2429 = vunpack.c.h.b16 %v328
        %v2430 = vunpack.c.l.b16 %v329
        %v2431 = vunpack.c.h.b16 %v329
        %v2432 = vunpack.c.l.b16 %v330
        %v2433 = vunpack.c.h.b16 %v330
        %v2434 = vunpack.c.l.b16 %v331
        %v2435 = vunpack.c.h.b16 %v331
        %v2436 = vunpack.c.l.b16 %v332
        %v2437 = vunpack.c.h.b16 %v332
        %v2438 = vunpack.c.l.b16 %v333
        %v2439 = vunpack.c.h.b16 %v333
        %v2440 = vunpack.c.l.b16 %v334
        %v2441 = vunpack.c.h.b16 %v334
        %v2442 = vunpack.c.l.b16 %v335
        %v2443 = vunpack.c.h.b16 %v335
        %v2444 = vunpack.c.l.b16 %v336
        %v2445 = vunpack.c.h.b16 %v336
        %v2446 = vunpack.c.l.b16 %v337
        %v2447 = vunpack.c.h.b16 %v337
        %v2448 = vunpack.c.l.b16 %v338
        %v2449 = vunpack.c.h.b16 %v338
        %v2450 = vunpack.c.l.b16 %v339
        %v2451 = vunpack.c.h.b16 %v339
        %v2452 = vunpack.c.l.b16 %v340
        %v2453 = vunpack.c.h.b16 %v340
        %v2454 = vunpack.c.l.b16 %v341
        %v2455 = vunpack.c.h.b16 %v341
        %v2456 = vunpack.c.l.b16 %v342
        %v2457 = vunpack.c.h.b16 %v342
        %v2458 = vunpack.c.l.b16 %v343
        %v2459 = vunpack.c.h.b16 %v343
        %v2460 = vunpack.c.l.b16 %v344
        %v2461 = vunpack.c.h.b16 %v344
        %v2462 = vunpack.c.l.b16 %v345
        %v2463 = vunpack.c.h.b16 %v345
        %v2464 = vunpack.c.l.b16 %v346
        %v2465 = vunpack.c.h.b16 %v346
        %v2466 = vunpack.c.l.b16 %v347
        %v2467 = vunpack.c.h.b16 %v347
        %v2468 = vunpack.c.l.b16 %v348
        %v2469 = vunpack.c.h.b16 %v348
        %v2470 = vunpack.c.l.b16 %v349
        %v2471 = vunpack.c.h.b16 %v349
        %v2472 = vunpack.c.l.b16 %v350
        %v2473 = vunpack.c.h.b16 %v350
        %v2474 = vunpack.c.l.b16 %v351
        %v2475 = vunpack.c.h.b16 %v351
        %v2476 = vunpack.c.l.b16 %v352
        %v2477 = vunpack.c.h.b16 %v352
        %v2478 = vunpack.c.l.b16 %v353
        %v2479 = vunpack.c.h.b16 %v353
        %v2480 = vunpack.c.l.b16 %v354
        %v2481 = vunpack.c.h.b16 %v354
        %v2482 = vunpack.c.l.b16 %v355
        %v2483 = vunpack.c.h.b16 %v355
        %v2484 = vunpack.c.l.b16 %v356
        %v2485 = vunpack.c.h.b16 %v356
        %v2486 = vunpack.c.l.b16 %v357
        %v2487 = vunpack.c.h.b16 %v357
        %v2488 = vunpack.c.l.b16 %v358
        %v2489 = vunpack.c.h.b16 %v358
        %v2490 = vunpack.c.l.b16 %v359
        %v2491 = vunpack.c.h.b16 %v359
        %v2492 = vunpack.c.l.b16 %v360
        %v2493 = vunpack.c.h.b16 %v360
        %v2494 = vunpack.c.l.b16 %v361
        %v2495 = vunpack.c.h.b16 %v361
        %v2496 = vunpack.c.l.b16 %v362
        %v2497 = vunpack.c.h.b16 %v362
        %v2498 = vunpack.c.l.b16 %v363
        %v2499 = vunpack.c.h.b16 %v363
        %v2500 = vunpack.c.l.b16 %v364
        %v2501 = vunpack.c.h.b16 %v364
        %v2502 = vunpack.c.l.b16 %v365
        %v2503 = vunpack.c.h.b16 %v365
        %v2504 = vunpack.c.l.b16 %v366
        %v2505 = vunpack.c.h.b16 %v366
        %v2506 = vunpack.c.l.b16 %v367
        %v2507 = vunpack.c.h.b16 %v367
        %v2508 = vunpack.c.l.b16 %v368
        %v2509 = vunpack.c.h.b16 %v368
        %v2510 = vunpack.c.l.b16 %v369
        %v2511 = vunpack.c.h.b16 %v369
        %v2512 = vunpack.c.l.b16 %v370
        %v2513 = vunpack.c.h.b16 %v370
        %v2514 = vunpack.c.l.b16 %v371
        %v2515 = vunpack.c.h.b16 %v371
        %v2516 = vunpack.c.l.b16 %v372
        %v2517 = vunpack.c.h.b16 %v372
        %v2518 = vunpack.c.l.b16 %v373
        %v2519 = vunpack.c.h.b16 %v373
        %v2520 = vunpack.c.l.b16 %v374
        %v2521 = vunpack.c.h.b16 %v374
        %v2522 = vunpack.c.l.b16 %v375
        %v2523 = vunpack.c.h.b16 %v375
        %v2524 = vunpack.c.l.b16 %v376
        %v2525 = vunpack.c.h.b16 %v376
        %v2526 = vunpack.c.l.b16 %v377
        %v2527 = vunpack.c.h.b16 %v377
        %v2528 = vunpack.c.l.b16 %v378
        %v2529 = vunpack.c.h.b16 %v378
        %v2530 = vunpack.c.l.b16 %v379
        %v2531 = vunpack.c.h.b16 %v379
        %v2532 = vunpack.c.l.b16 %v380
        %v2533 = vunpack.c.h.b16 %v380
        %v2534 = vunpack.c.l.b16 %v381
        %v2535 = vunpack.c.h.b16 %v381
        %v2536 = vunpack.c.l.b16 %v382
        %v2537 = vunpack.c.h.b16 %v382
        %v2538 = vunpack.c.l.b16 %v383
        %v2539 = vunpack.c.h.b16 %v383
        %v2540 = vunpack.c.l.b16 %v384
        %v2541 = vunpack.c.h.b16 %v384
        %v2542 = vunpack.c.l.b16 %v385
        %v2543 = vunpack.c.h.b16 %v385
        %v2544 = vunpack.c.l.b16 %v386
        %v2545 = vunpack.c.h.b16 %v386
        %v2546 = vunpack.c.l.b16 %v387
        %v2547 = vunpack.c.h.b16 %v387
        %v2548 = vunpack.c.l.b16 %v388
        %v2549 = vunpack.c.h.b16 %v388
        %v2550 = vunpack.c.l.b16 %v389
        %v2551 = vunpack.c.h.b16 %v389
        %v2552 = vunpack.c.l.b16 %v390
        %v2553 = vunpack.c.h.b16 %v390
        %v2554 = vunpack.c.l.b16 %v391
        %v2555 = vunpack.c.h.b16 %v391
        %v2556 = vunpack.c.l.b16 %v392
        %v2557 = vunpack.c.h.b16 %v392
        %v2558 = vunpack.c.l.b16 %v393
        %v2559 = vunpack.c.h.b16 %v393
        %v2560 = vunpack.c.l.b16 %v394
        %v2561 = vunpack.c.h.b16 %v394
        %v2562 = vunpack.c.l.b16 %v395
        %v2563 = vunpack.c.h.b16 %v395
        %v2564 = vunpack.c.l.b16 %v396
        %v2565 = vunpack.c.h.b16 %v396
        %v2566 = vunpack.c.l.b16 %v397
        %v2567 = vunpack.c.h.b16 %v397
        %v2568 = vunpack.c.l.b16 %v398
        %v2569 = vunpack.c.h.b16 %v398
        %v2570 = vunpack.c.l.b16 %v399
        %v2571 = vunpack.c.h.b16 %v399
        %v2572 = vunpack.c.l.b16 %v400
        %v2573 = vunpack.c.h.b16 %v400
        %v2574 = vunpack.c.l.b16 %v401
        %v2575 = vunpack.c.h.b16 %v401
        %v2576 = vunpack.c.l.b16 %v402
        %v2577 = vunpack.c.h.b16 %v402
        %v2578 = vunpack.c.l.b16 %v403
        %v2579 = vunpack.c.h.b16 %v403
        %v2580 = vunpack.c.l.b16 %v404
        %v2581 = vunpack.c.h.b16 %v404
        %v2582 = vunpack.c.l.b16 %v405
        %v2583 = vunpack.c.h.b16 %v405
        %v2584 = vunpack.c.l.b16 %v406
        %v2585 = vunpack.c.h.b16 %v406
        %v2586 = vunpack.c.l.b16 %v407
        %v2587 = vunpack.c.h.b16 %v407
        %v2588 = vunpack.c.l.b16 %v408
        %v2589 = vunpack.c.h.b16 %v408
        %v2590 = vunpack.c.l.b16 %v409
        %v2591 = vunpack.c.h.b16 %v409
        %v2592 = vunpack.c.l.b16 %v410
        %v2593 = vunpack.c.h.b16 %v410
        %v2594 = vunpack.c.l.b16 %v411
        %v2595 = vunpack.c.h.b16 %v411
        %v2596 = vunpack.c.l.b16 %v412
        %v2597 = vunpack.c.h.b16 %v412
        %v2598 = vunpack.c.l.b16 %v413
        %v2599 = vunpack.c.h.b16 %v413
        %v2600 = vunpack.c.l.b16 %v414
        %v2601 = vunpack.c.h.b16 %v414
        %v2602 = vunpack.c.l.b16 %v415
        %v2603 = vunpack.c.h.b16 %v415
        %v2604 = vunpack.c.l.b16 %v416
        %v2605 = vunpack.c.h.b16 %v416
        %v2606 = vunpack.c.l.b16 %v417
        %v2607 = vunpack.c.h.b16 %v417
        %v2608 = vunpack.c.l.b16 %v418
        %v2609 = vunpack.c.h.b16 %v418
        %v2610 = vunpack.c.l.b16 %v419
        %v2611 = vunpack.c.h.b16 %v419
        %v2612 = vunpack.c.l.b16 %v420
        %v2613 = vunpack.c.h.b16 %v420
        %v2614 = vunpack.c.l.b16 %v421
        %v2615 = vunpack.c.h.b16 %v421
        %v2616 = vunpack.c.l.b16 %v422
        %v2617 = vunpack.c.h.b16 %v422
        %v2618 = vunpack.c.l.b16 %v423
        %v2619 = vunpack.c.h.b16 %v423
        %v2620 = vunpack.c.l.b16 %v424
        %v2621 = vunpack.c.h.b16 %v424
        %v2622 = vunpack.c.l.b16 %v425
        %v2623 = vunpack.c.h.b16 %v425
        %v2624 = vunpack.c.l.b16 %v426
        %v2625 = vunpack.c.h.b16 %v426
        %v2626 = vunpack.c.l.b16 %v427
        %v2627 = vunpack.c.h.b16 %v427
        %v2628 = vunpack.c.l.b16 %v428
        %v2629 = vunpack.c.h.b16 %v428
        %v2630 = vunpack.c.l.b16 %v429
        %v2631 = vunpack.c.h.b16 %v429
        %v2632 = vunpack.c.l.b16 %v430
        %v2633 = vunpack.c.h.b16 %v430
        %v2634 = vunpack.c.l.b16 %v431
        %v2635 = vunpack.c.h.b16 %v431
        %v2636 = vunpack.c.l.b16 %v432
        %v2637 = vunpack.c.h.b16 %v432
        %v2638 = vunpack.c.l.b16 %v433
        %v2639 = vunpack.c.h.b16 %v433
        %v2640 = vunpack.c.l.b16 %v434
        %v2641 = vunpack.c.h.b16 %v434
        %v2642 = vunpack.c.l.b16 %v435
        %v2643 = vunpack.c.h.b16 %v435
        %v2644 = vunpack.c.l.b16 %v436
        %v2645 = vunpack.c.h.b16 %v436
        %v2646 = vunpack.c.l.b16 %v437
        %v2647 = vunpack.c.h.b16 %v437
        %v2648 = vunpack.c.l.b16 %v438
        %v2649 = vunpack.c.h.b16 %v438
        %v2650 = vunpack.c.l.b16 %v439
        %v2651 = vunpack.c.h.b16 %v439
        %v2652 = vunpack.c.l.b16 %v440
        %v2653 = vunpack.c.h.b16 %v440
        %v2654 = vunpack.c.l.b16 %v441
        %v2655 = vunpack.c.h.b16 %v441
        %v2656 = vunpack.c.l.b16 %v442
        %v2657 = vunpack.c.h.b16 %v442
        %v2658 = vunpack.c.l.b16 %v443
        %v2659 = vunpack.c.h.b16 %v443
        %v2660 = vunpack.c.l.b16 %v444
        %v2661 = vunpack.c.h.b16 %v444
        %v2662 = vunpack.c.l.b16 %v445
        %v2663 = vunpack.c.h.b16 %v445
        %v2664 = vunpack.c.l.b16 %v446
        %v2665 = vunpack.c.h.b16 %v446
        %v2666 = vunpack.c.l.b16 %v447
        %v2667 = vunpack.c.h.b16 %v447
        %v2668 = vunpack.c.l.b16 %v448
        %v2669 = vunpack.c.h.b16 %v448
        %v2670 = vunpack.c.l.b16 %v449
        %v2671 = vunpack.c.h.b16 %v449
        %v2672 = vunpack.c.l.b16 %v450
        %v2673 = vunpack.c.h.b16 %v450
        %v2674 = vunpack.c.l.b16 %v451
        %v2675 = vunpack.c.h.b16 %v451
        %v2676 = vunpack.c.l.b16 %v452
        %v2677 = vunpack.c.h.b16 %v452
        %v2678 = vunpack.c.l.b16 %v453
        %v2679 = vunpack.c.h.b16 %v453
        %v2680 = vunpack.c.l.b16 %v454
        %v2681 = vunpack.c.h.b16 %v454
        %v2682 = vunpack.c.l.b16 %v455
        %v2683 = vunpack.c.h.b16 %v455
        %v2684 = vunpack.c.l.b16 %v456
        %v2685 = vunpack.c.h.b16 %v456
        %v2686 = vunpack.c.l.b16 %v457
        %v2687 = vunpack.c.h.b16 %v457
        %v2688 = vunpack.c.l.b16 %v458
        %v2689 = vunpack.c.h.b16 %v458
        %v2690 = vunpack.c.l.b16 %v459
        %v2691 = vunpack.c.h.b16 %v459
        %v2692 = vunpack.c.l.b16 %v460
        %v2693 = vunpack.c.h.b16 %v460
        %v2694 = vunpack.c.l.b16 %v461
        %v2695 = vunpack.c.h.b16 %v461
        %v2696 = vunpack.c.l.b16 %v462
        %v2697 = vunpack.c.h.b16 %v462
        %v2698 = vunpack.c.l.b16 %v463
        %v2699 = vunpack.c.h.b16 %v463
        %v2700 = vunpack.c.l.b16 %v464
        %v2701 = vunpack.c.h.b16 %v464
        %v2702 = vunpack.c.l.b16 %v465
        %v2703 = vunpack.c.h.b16 %v465
        %v2704 = vunpack.c.l.b16 %v466
        %v2705 = vunpack.c.h.b16 %v466
        %v2706 = vunpack.c.l.b16 %v467
        %v2707 = vunpack.c.h.b16 %v467
        %v2708 = vunpack.c.l.b16 %v468
        %v2709 = vunpack.c.h.b16 %v468
        %v2710 = vunpack.c.l.b16 %v469
        %v2711 = vunpack.c.h.b16 %v469
        %v2712 = vunpack.c.l.b16 %v470
        %v2713 = vunpack.c.h.b16 %v470
        %v2714 = vunpack.c.l.b16 %v471
        %v2715 = vunpack.c.h.b16 %v471
        %v2716 = vunpack.c.l.b16 %v472
        %v2717 = vunpack.c.h.b16 %v472
        %v2718 = vunpack.c.l.b16 %v473
        %v2719 = vunpack.c.h.b16 %v473
        %v2720 = vunpack.c.l.b16 %v474
        %v2721 = vunpack.c.h.b16 %v474
        %v2722 = vunpack.c.l.b16 %v475
        %v2723 = vunpack.c.h.b16 %v475
        %v2724 = vunpack.c.l.b16 %v476
        %v2725 = vunpack.c.h.b16 %v476
        %v2726 = vunpack.c.l.b16 %v477
        %v2727 = vunpack.c.h.b16 %v477
        %v2728 = vunpack.c.l.b16 %v478
        %v2729 = vunpack.c.h.b16 %v478
        %v2730 = vunpack.c.l.b16 %v479
        %v2731 = vunpack.c.h.b16 %v479
        %v2732 = vunpack.c.l.b16 %v480
        %v2733 = vunpack.c.h.b16 %v480
        %v2734 = vunpack.c.l.b16 %v481
        %v2735 = vunpack.c.h.b16 %v481
        %v2736 = vunpack.c.l.b16 %v482
        %v2737 = vunpack.c.h.b16 %v482
        %v2738 = vunpack.c.l.b16 %v483
        %v2739 = vunpack.c.h.b16 %v483
        %v2740 = vunpack.c.l.b16 %v484
        %v2741 = vunpack.c.h.b16 %v484
        %v2742 = vunpack.c.l.b16 %v485
        %v2743 = vunpack.c.h.b16 %v485
        %v2744 = vunpack.c.l.b16 %v486
        %v2745 = vunpack.c.h.b16 %v486
        %v2746 = vunpack.c.l.b16 %v487
        %v2747 = vunpack.c.h.b16 %v487
        %v2748 = vunpack.c.l.b16 %v488
        %v2749 = vunpack.c.h.b16 %v488
        %v2750 = vunpack.c.l.b16 %v489
        %v2751 = vunpack.c.h.b16 %v489
        %v2752 = vunpack.c.l.b16 %v490
        %v2753 = vunpack.c.h.b16 %v490
        %v2754 = vunpack.c.l.b16 %v491
        %v2755 = vunpack.c.h.b16 %v491
        %v2756 = vunpack.c.l.b16 %v492
        %v2757 = vunpack.c.h.b16 %v492
        %v2758 = vunpack.c.l.b16 %v493
        %v2759 = vunpack.c.h.b16 %v493
        %v2760 = vunpack.c.l.b16 %v494
        %v2761 = vunpack.c.h.b16 %v494
        %v2762 = vunpack.c.l.b16 %v495
        %v2763 = vunpack.c.h.b16 %v495
        %v2764 = vunpack.c.l.b16 %v496
        %v2765 = vunpack.c.h.b16 %v496
        %v2766 = vunpack.c.l.b16 %v497
        %v2767 = vunpack.c.h.b16 %v497
        %v2768 = vunpack.c.l.b16 %v498
        %v2769 = vunpack.c.h.b16 %v498
        %v2770 = vunpack.c.l.b16 %v499
        %v2771 = vunpack.c.h.b16 %v499
        %v2772 = vunpack.c.l.b16 %v500
        %v2773 = vunpack.c.h.b16 %v500
        %v2774 = vunpack.c.l.b16 %v501
        %v2775 = vunpack.c.h.b16 %v501
        %v2776 = vunpack.c.l.b16 %v502
        %v2777 = vunpack.c.h.b16 %v502
        %v2778 = vunpack.c.l.b16 %v503
        %v2779 = vunpack.c.h.b16 %v503
        %v2780 = vunpack.c.l.b16 %v504
        %v2781 = vunpack.c.h.b16 %v504
        %v2782 = vunpack.c.l.b16 %v505
        %v2783 = vunpack.c.h.b16 %v505
        %v2784 = vunpack.c.l.b16 %v506
        %v2785 = vunpack.c.h.b16 %v506
        %v2786 = vunpack.c.l.b16 %v507
        %v2787 = vunpack.c.h.b16 %v507
        %v2788 = vunpack.c.l.b16 %v508
        %v2789 = vunpack.c.h.b16 %v508
        %v2790 = vunpack.c.l.b16 %v509
        %v2791 = vunpack.c.h.b16 %v509
        %v2792 = vunpack.c.l.b16 %v510
        %v2793 = vunpack.c.h.b16 %v510
        %v2794 = vunpack.c.l.b16 %v511
        %v2795 = vunpack.c.h.b16 %v511
        %v2796 = vunpack.c.l.b16 %v512
        %v2797 = vunpack.c.h.b16 %v512
        %v2798 = vunpack.c.l.b16 %v513
        %v2799 = vunpack.c.h.b16 %v513
        %v2800 = vunpack.c.l.b16 %v514
        %v2801 = vunpack.c.h.b16 %v514
        %v2802 = vunpack.c.l.b16 %v515
        %v2803 = vunpack.c.h.b16 %v515
        %v2804 = vunpack.c.l.b16 %v516
        %v2805 = vunpack.c.h.b16 %v516
        %v2806 = vunpack.c.l.b16 %v517
        %v2807 = vunpack.c.h.b16 %v517
        %v2808 = vunpack.c.l.b16 %v518
        %v2809 = vunpack.c.h.b16 %v518
        %v2810 = vunpack.c.l.b16 %v519
        %v2811 = vunpack.c.h.b16 %v519
        %v2812 = vunpack.c.l.b16 %v520
        %v2813 = vunpack.c.h.b16 %v520
        %v2814 = vunpack.c.l.b16 %v521
        %v2815 = vunpack.c.h.b16 %v521
        %v2816 = vunpack.c.l.b16 %v522
        %v2817 = vunpack.c.h.b16 %v522
        %v2818 = vunpack.c.l.b16 %v523
        %v2819 = vunpack.c.h.b16 %v523
        %v2820 = vunpack.c.l.b16 %v524
        %v2821 = vunpack.c.h.b16 %v524
        %v2822 = vunpack.c.l.b16 %v525
        %v2823 = vunpack.c.h.b16 %v525
        %v2824 = vunpack.c.l.b16 %v526
        %v2825 = vunpack.c.h.b16 %v526
        %v2826 = vunpack.c.l.b16 %v527
        %v2827 = vunpack.c.h.b16 %v527
        %v2828 = vunpack.c.l.b16 %v528
        %v2829 = vunpack.c.h.b16 %v528
        %v2830 = vunpack.c.l.b16 %v529
        %v2831 = vunpack.c.h.b16 %v529
        %v2832 = vunpack.c.l.b16 %v530
        %v2833 = vunpack.c.h.b16 %v530
        %v2834 = vunpack.c.l.b16 %v531
        %v2835 = vunpack.c.h.b16 %v531
        %v2836 = vunpack.c.l.b16 %v532
        %v2837 = vunpack.c.h.b16 %v532
        %v2838 = vunpack.c.l.b16 %v533
        %v2839 = vunpack.c.h.b16 %v533
        %v2840 = vunpack.c.l.b16 %v534
        %v2841 = vunpack.c.h.b16 %v534
        %v2842 = vunpack.c.l.b16 %v535
        %v2843 = vunpack.c.h.b16 %v535
        %v2844 = vunpack.c.l.b16 %v536
        %v2845 = vunpack.c.h.b16 %v536
        %v2846 = vunpack.c.l.b16 %v537
        %v2847 = vunpack.c.h.b16 %v537
        %v2848 = vunpack.c.l.b16 %v538
        %v2849 = vunpack.c.h.b16 %v538
        %v2850 = vunpack.c.l.b16 %v539
        %v2851 = vunpack.c.h.b16 %v539
        %v2852 = vunpack.c.l.b16 %v540
        %v2853 = vunpack.c.h.b16 %v540
        %v2854 = vunpack.c.l.b16 %v541
        %v2855 = vunpack.c.h.b16 %v541
        %v2856 = vunpack.c.l.b16 %v542
        %v2857 = vunpack.c.h.b16 %v542
        %v2858 = vunpack.c.l.b16 %v543
        %v2859 = vunpack.c.h.b16 %v543
        %v2860 = vunpack.c.l.b16 %v544
        %v2861 = vunpack.c.h.b16 %v544
        %v2862 = vunpack.c.l.b16 %v545
        %v2863 = vunpack.c.h.b16 %v545
        %v2864 = vunpack.c.l.b16 %v546
        %v2865 = vunpack.c.h.b16 %v546
        %v2866 = vunpack.c.l.b16 %v547
        %v2867 = vunpack.c.h.b16 %v547
        %v2868 = vunpack.c.l.b16 %v548
        %v2869 = vunpack.c.h.b16 %v548
        %v2870 = vunpack.c.l.b16 %v549
        %v2871 = vunpack.c.h.b16 %v549
        %v2872 = vunpack.c.l.b16 %v550
        %v2873 = vunpack.c.h.b16 %v550
        %v2874 = vunpack.c.l.b16 %v551
        %v2875 = vunpack.c.h.b16 %v551
        %v2876 = vunpack.c.l.b16 %v552
        %v2877 = vunpack.c.h.b16 %v552
        %v2878 = vunpack.c.l.b16 %v553
        %v2879 = vunpack.c.h.b16 %v553
        %v2880 = vunpack.c.l.b16 %v554
        %v2881 = vunpack.c.h.b16 %v554
        %v2882 = vunpack.c.l.b16 %v555
        %v2883 = vunpack.c.h.b16 %v555
        %v2884 = vunpack.c.l.b16 %v556
        %v2885 = vunpack.c.h.b16 %v556
        %v2886 = vunpack.c.l.b16 %v557
        %v2887 = vunpack.c.h.b16 %v557
        %v2888 = vunpack.c.l.b16 %v558
        %v2889 = vunpack.c.h.b16 %v558
        %v2890 = vunpack.c.l.b16 %v559
        %v2891 = vunpack.c.h.b16 %v559
        %v2892 = vunpack.c.l.b16 %v560
        %v2893 = vunpack.c.h.b16 %v560
        %v2894 = vunpack.c.l.b16 %v561
        %v2895 = vunpack.c.h.b16 %v561
        %v2896 = vunpack.c.l.b16 %v562
        %v2897 = vunpack.c.h.b16 %v562
        %v2898 = vunpack.c.l.b16 %v563
        %v2899 = vunpack.c.h.b16 %v563
        %v2900 = vunpack.c.l.b16 %v564
        %v2901 = vunpack.c.h.b16 %v564
        %v2902 = vunpack.c.l.b16 %v565
        %v2903 = vunpack.c.h.b16 %v565
        %v2904 = vunpack.c.l.b16 %v566
        %v2905 = vunpack.c.h.b16 %v566
        %v2906 = vunpack.c.l.b16 %v567
        %v2907 = vunpack.c.h.b16 %v567
        %v2908 = vunpack.c.l.b16 %v568
        %v2909 = vunpack.c.h.b16 %v568
        %v2910 = vunpack.c.l.b16 %v569
        %v2911 = vunpack.c.h.b16 %v569
        %v2912 = vunpack.c.l.b16 %v570
        %v2913 = vunpack.c.h.b16 %v570
        %v2914 = vunpack.c.l.b16 %v571
        %v2915 = vunpack.c.h.b16 %v571
        %v2916 = vunpack.c.l.b16 %v572
        %v2917 = vunpack.c.h.b16 %v572
        %v2918 = vunpack.c.l.b16 %v573
        %v2919 = vunpack.c.h.b16 %v573
        %v2920 = vunpack.c.l.b16 %v574
        %v2921 = vunpack.c.h.b16 %v574
        %v2922 = vunpack.c.l.b16 %v575
        %v2923 = vunpack.c.h.b16 %v575
        %v2924 = vunpack.c.l.b16 %v576
        %v2925 = vunpack.c.h.b16 %v576
        %v2926 = vunpack.c.l.b16 %v577
        %v2927 = vunpack.c.h.b16 %v577
        %v2928 = vunpack.c.l.b16 %v578
        %v2929 = vunpack.c.h.b16 %v578
        %v2930 = vunpack.c.l.b16 %v579
        %v2931 = vunpack.c.h.b16 %v579
        %v2932 = vunpack.c.l.b16 %v580
        %v2933 = vunpack.c.h.b16 %v580
        %v2934 = vunpack.c.l.b16 %v581
        %v2935 = vunpack.c.h.b16 %v581
        %v2936 = vunpack.c.l.b16 %v582
        %v2937 = vunpack.c.h.b16 %v582
        %v2938 = vunpack.c.l.b16 %v583
        %v2939 = vunpack.c.h.b16 %v583
        %v2940 = vunpack.c.l.b16 %v584
        %v2941 = vunpack.c.h.b16 %v584
        %v2942 = vunpack.c.l.b16 %v585
        %v2943 = vunpack.c.h.b16 %v585
        %v2944 = vunpack.c.l.b16 %v586
        %v2945 = vunpack.c.h.b16 %v586
        %v2946 = vunpack.c.l.b16 %v587
        %v2947 = vunpack.c.h.b16 %v587
        %v2948 = vunpack.c.l.b16 %v588
        %v2949 = vunpack.c.h.b16 %v588
        %v2950 = vunpack.c.l.b16 %v589
        %v2951 = vunpack.c.h.b16 %v589
        %v2952 = vunpack.c.l.b16 %v590
        %v2953 = vunpack.c.h.b16 %v590
        %v2954 = vunpack.c.l.b16 %v591
        %v2955 = vunpack.c.h.b16 %v591
        %v2956 = vunpack.c.l.b16 %v592
        %v2957 = vunpack.c.h.b16 %v592
        %v2958 = vunpack.c.l.b16 %v593
        %v2959 = vunpack.c.h.b16 %v593
        %v2960 = vunpack.c.l.b16 %v594
        %v2961 = vunpack.c.h.b16 %v594
        %v2962 = vunpack.c.l.b16 %v595
        %v2963 = vunpack.c.h.b16 %v595
        %v2964 = vunpack.c.l.b16 %v596
        %v2965 = vunpack.c.h.b16 %v596
        %v2966 = vunpack.c.l.b16 %v597
        %v2967 = vunpack.c.h.b16 %v597
        %v2968 = vunpack.c.l.b16 %v598
        %v2969 = vunpack.c.h.b16 %v598
        %v2970 = vunpack.c.l.b16 %v599
        %v2971 = vunpack.c.h.b16 %v599
        %v2972 = vunpack.c.l.b16 %v600
        %v2973 = vunpack.c.h.b16 %v600
        %v2974 = vunpack.c.l.b16 %v601
        %v2975 = vunpack.c.h.b16 %v601
        %v2976 = vunpack.c.l.b16 %v602
        %v2977 = vunpack.c.h.b16 %v602
        %v2978 = vunpack.c.l.b16 %v603
        %v2979 = vunpack.c.h.b16 %v603
        %v2980 = vunpack.c.l.b16 %v604
        %v2981 = vunpack.c.h.b16 %v604
        %v2982 = vunpack.c.l.b16 %v605
        %v2983 = vunpack.c.h.b16 %v605
        %v2984 = vunpack.c.l.b16 %v606
        %v2985 = vunpack.c.h.b16 %v606
        %v2986 = vunpack.c.l.b16 %v607
        %v2987 = vunpack.c.h.b16 %v607
        %v2988 = vunpack.c.l.b16 %v608
        %v2989 = vunpack.c.h.b16 %v608
        %v2990 = vunpack.c.l.b16 %v609
        %v2991 = vunpack.c.h.b16 %v609
        %v2992 = vunpack.c.l.b16 %v610
        %v2993 = vunpack.c.h.b16 %v610
        %v2994 = vunpack.c.l.b16 %v611
        %v2995 = vunpack.c.h.b16 %v611
        %v2996 = vunpack.c.l.b16 %v612
        %v2997 = vunpack.c.h.b16 %v612
        %v2998 = vunpack.c.l.b16 %v613
        %v2999 = vunpack.c.h.b16 %v613
        %v3000 = vunpack.c.l.b16 %v614
        %v3001 = vunpack.c.h.b16 %v614
        %v3002 = vunpack.c.l.b16 %v615
        %v3003 = vunpack.c.h.b16 %v615
        %v3004 = vunpack.c.l.b16 %v616
        %v3005 = vunpack.c.h.b16 %v616
        %v3006 = vunpack.c.l.b16 %v617
        %v3007 = vunpack.c.h.b16 %v617
        %v3008 = vunpack.c.l.b16 %v618
        %v3009 = vunpack.c.h.b16 %v618
        %v3010 = vunpack.c.l.b16 %v619
        %v3011 = vunpack.c.h.b16 %v619
        %v3012 = vunpack.c.l.b16 %v620
        %v3013 = vunpack.c.h.b16 %v620
        %v3014 = vunpack.c.l.b16 %v621
        %v3015 = vunpack.c.h.b16 %v621
        %v3016 = vunpack.c.l.b16 %v622
        %v3017 = vunpack.c.h.b16 %v622
        %v3018 = vunpack.c.l.b16 %v623
        %v3019 = vunpack.c.h.b16 %v623
        %v3020 = vunpack.c.l.b16 %v624
        %v3021 = vunpack.c.h.b16 %v624
        %v3022 = vunpack.c.l.b16 %v625
        %v3023 = vunpack.c.h.b16 %v625
        %v3024 = vunpack.c.l.b16 %v626
        %v3025 = vunpack.c.h.b16 %v626
        %v3026 = vunpack.c.l.b16 %v627
        %v3027 = vunpack.c.h.b16 %v627
        %v3028 = vunpack.c.l.b16 %v628
        %v3029 = vunpack.c.h.b16 %v628
        %v3030 = vunpack.c.l.b16 %v629
        %v3031 = vunpack.c.h.b16 %v629
        %v3032 = vunpack.c.l.b16 %v630
        %v3033 = vunpack.c.h.b16 %v630
        %v3034 = vunpack.c.l.b16 %v631
        %v3035 = vunpack.c.h.b16 %v631
        %v3036 = vunpack.c.l.b16 %v632
        %v3037 = vunpack.c.h.b16 %v632
        %v3038 = vunpack.c.l.b16 %v633
        %v3039 = vunpack.c.h.b16 %v633
        %v3040 = vunpack.c.l.b16 %v634
        %v3041 = vunpack.c.h.b16 %v634
        %v3042 = vunpack.c.l.b16 %v635
        %v3043 = vunpack.c.h.b16 %v635
        %v3044 = vunpack.c.l.b16 %v636
        %v3045 = vunpack.c.h.b16 %v636
        %v3046 = vunpack.c.l.b16 %v637
        %v3047 = vunpack.c.h.b16 %v637
        %v3048 = vunpack.c.l.b16 %v638
        %v3049 = vunpack.c.h.b16 %v638
        %v3050 = vunpack.c.l.b16 %v639
        %v3051 = vunpack.c.h.b16 %v639
        %v3052 = vunpack.c.l.b16 %v640
        %v3053 = vunpack.c.h.b16 %v640
        %v3054 = vunpack.c.l.b16 %v641
        %v3055 = vunpack.c.h.b16 %v641
        %v3056 = vunpack.c.l.b16 %v642
        %v3057 = vunpack.c.h.b16 %v642
        %v3058 = vunpack.c.l.b16 %v643
        %v3059 = vunpack.c.h.b16 %v643
        %v3060 = vunpack.c.l.b16 %v644
        %v3061 = vunpack.c.h.b16 %v644
        %v3062 = vunpack.c.l.b16 %v645
        %v3063 = vunpack.c.h.b16 %v645
        %v3064 = vunpack.c.l.b16 %v646
        %v3065 = vunpack.c.h.b16 %v646
        %v3066 = vunpack.c.l.b16 %v647
        %v3067 = vunpack.c.h.b16 %v647
        %v3068 = vunpack.c.l.b16 %v648
        %v3069 = vunpack.c.h.b16 %v648
        %v3070 = vunpack.c.l.b16 %v649
        %v3071 = vunpack.c.h.b16 %v649
        %v3072 = vunpack.c.l.b16 %v650
        %v3073 = vunpack.c.h.b16 %v650
        %v3074 = vunpack.c.l.b16 %v651
        %v3075 = vunpack.c.h.b16 %v651
        %v3076 = vunpack.c.l.b16 %v652
        %v3077 = vunpack.c.h.b16 %v652
        %v3078 = vunpack.c.l.b16 %v653
        %v3079 = vunpack.c.h.b16 %v653
        %v3080 = vunpack.c.l.b16 %v654
        %v3081 = vunpack.c.h.b16 %v654
        %v3082 = vunpack.c.l.b16 %v655
        %v3083 = vunpack.c.h.b16 %v655
        %v3084 = vunpack.c.l.b16 %v656
        %v3085 = vunpack.c.h.b16 %v656
        %v3086 = vunpack.c.l.b16 %v657
        %v3087 = vunpack.c.h.b16 %v657
        %v3088 = vunpack.c.l.b16 %v658
        %v3089 = vunpack.c.h.b16 %v658
        %v3090 = vunpack.c.l.b16 %v659
        %v3091 = vunpack.c.h.b16 %v659
        %v3092 = vunpack.c.l.b16 %v660
        %v3093 = vunpack.c.h.b16 %v660
        %v3094 = vunpack.c.l.b16 %v661
        %v3095 = vunpack.c.h.b16 %v661
        %v3096 = vunpack.c.l.b16 %v662
        %v3097 = vunpack.c.h.b16 %v662
        %v3098 = vunpack.c.l.b16 %v663
        %v3099 = vunpack.c.h.b16 %v663
        %v3100 = vunpack.c.l.b16 %v664
        %v3101 = vunpack.c.h.b16 %v664
        %v3102 = vunpack.c.l.b16 %v665
        %v3103 = vunpack.c.h.b16 %v665
        %v3104 = vunpack.c.l.b16 %v666
        %v3105 = vunpack.c.h.b16 %v666
        %v3106 = vunpack.c.l.b16 %v667
        %v3107 = vunpack.c.h.b16 %v667
        %v3108 = vunpack.c.l.b16 %v668
        %v3109 = vunpack.c.h.b16 %v668
        %v3110 = vunpack.c.l.b16 %v669
        %v3111 = vunpack.c.h.b16 %v669
        %v3112 = vunpack.c.l.b16 %v670
        %v3113 = vunpack.c.h.b16 %v670
        %v3114 = vunpack.c.l.b16 %v671
        %v3115 = vunpack.c.h.b16 %v671
        %v3116 = vunpack.c.l.b16 %v672
        %v3117 = vunpack.c.h.b16 %v672
        %v3118 = vunpack.c.l.b16 %v673
        %v3119 = vunpack.c.h.b16 %v673
        %v3120 = vunpack.c.l.b16 %v674
        %v3121 = vunpack.c.h.b16 %v674
        %v3122 = vunpack.c.l.b16 %v675
        %v3123 = vunpack.c.h.b16 %v675
        %v3124 = vunpack.c.l.b16 %v676
        %v3125 = vunpack.c.h.b16 %v676
        %v3126 = vunpack.c.l.b16 %v677
        %v3127 = vunpack.c.h.b16 %v677
        %v3128 = vunpack.c.l.b16 %v678
        %v3129 = vunpack.c.h.b16 %v678
        %v3130 = vunpack.c.l.b16 %v679
        %v3131 = vunpack.c.h.b16 %v679
        %v3132 = vunpack.c.l.b16 %v680
        %v3133 = vunpack.c.h.b16 %v680
        %v3134 = vunpack.c.l.b16 %v681
        %v3135 = vunpack.c.h.b16 %v681
        %v3136 = vunpack.c.l.b16 %v682
        %v3137 = vunpack.c.h.b16 %v682
        %v3138 = vunpack.c.l.b16 %v683
        %v3139 = vunpack.c.h.b16 %v683
        %v3140 = vunpack.c.l.b16 %v684
        %v3141 = vunpack.c.h.b16 %v684
        %v3142 = vunpack.c.l.b16 %v685
        %v3143 = vunpack.c.h.b16 %v685
        %v3144 = vunpack.c.l.b16 %v686
        %v3145 = vunpack.c.h.b16 %v686
        %v3146 = vunpack.c.l.b16 %v687
        %v3147 = vunpack.c.h.b16 %v687
        %v3148 = vunpack.c.l.b16 %v688
        %v3149 = vunpack.c.h.b16 %v688
        %v3150 = vunpack.c.l.b16 %v689
        %v3151 = vunpack.c.h.b16 %v689
        %v3152 = vunpack.c.l.b16 %v690
        %v3153 = vunpack.c.h.b16 %v690
        %v3154 = vunpack.c.l.b16 %v691
        %v3155 = vunpack.c.h.b16 %v691
        %v3156 = vunpack.c.l.b16 %v692
        %v3157 = vunpack.c.h.b16 %v692
        %v3158 = vunpack.c.l.b16 %v693
        %v3159 = vunpack.c.h.b16 %v693
        %v3160 = vunpack.c.l.b16 %v694
        %v3161 = vunpack.c.h.b16 %v694
        %v3162 = vunpack.c.l.b16 %v695
        %v3163 = vunpack.c.h.b16 %v695
        %v3164 = vunpack.c.l.b16 %v696
        %v3165 = vunpack.c.h.b16 %v696
        %v3166 = vunpack.c.l.b16 %v697
        %v3167 = vunpack.c.h.b16 %v697
        %v3168 = vunpack.c.l.b16 %v698
        %v3169 = vunpack.c.h.b16 %v698
        %v3170 = vunpack.c.l.b16 %v699
        %v3171 = vunpack.c.h.b16 %v699
        %v3172 = vunpack.c.l.b16 %v700
        %v3173 = vunpack.c.h.b16 %v700
        %v3174 = vunpack.c.l.b16 %v701
        %v3175 = vunpack.c.h.b16 %v701
        %v3176 = vunpack.c.l.b16 %v702
        %v3177 = vunpack.c.h.b16 %v702
        %v3178 = vunpack.c.l.b16 %v703
        %v3179 = vunpack.c.h.b16 %v703
        %v3180 = vunpack.c.l.b16 %v704
        %v3181 = vunpack.c.h.b16 %v704
        %v3182 = vunpack.c.l.b16 %v705
        %v3183 = vunpack.c.h.b16 %v705
        %v3184 = vunpack.c.l.b16 %v706
        %v3185 = vunpack.c.h.b16 %v706
        %v3186 = vunpack.c.l.b16 %v707
        %v3187 = vunpack.c.h.b16 %v707
        %v3188 = vunpack.c.l.b16 %v708
        %v3189 = vunpack.c.h.b16 %v708
        %v3190 = vunpack.c.l.b16 %v709
        %v3191 = vunpack.c.h.b16 %v709
        %v3192 = vunpack.c.l.b16 %v710
        %v3193 = vunpack.c.h.b16 %v710
        %v3194 = vunpack.c.l.b16 %v711
        %v3195 = vunpack.c.h.b16 %v711
        %v3196 = vunpack.c.l.b16 %v712
        %v3197 = vunpack.c.h.b16 %v712
        %v3198 = vunpack.c.l.b16 %v713
        %v3199 = vunpack.c.h.b16 %v713
        %v3200 = vunpack.c.l.b16 %v714
        %v3201 = vunpack.c.h.b16 %v714
        %v3202 = vunpack.c.l.b16 %v715
        %v3203 = vunpack.c.h.b16 %v715
        %v3204 = vunpack.c.l.b16 %v716
        %v3205 = vunpack.c.h.b16 %v716
        %v3206 = vunpack.c.l.b16 %v717
        %v3207 = vunpack.c.h.b16 %v717
        %v3208 = vunpack.c.l.b16 %v718
        %v3209 = vunpack.c.h.b16 %v718
        %v3210 = vunpack.c.l.b16 %v719
        %v3211 = vunpack.c.h.b16 %v719
        %v3212 = vunpack.c.l.b16 %v720
        %v3213 = vunpack.c.h.b16 %v720
        %v3214 = vunpack.c.l.b16 %v721
        %v3215 = vunpack.c.h.b16 %v721
        %v3216 = vunpack.c.l.b16 %v722
        %v3217 = vunpack.c.h.b16 %v722
        %v3218 = vunpack.c.l.b16 %v723
        %v3219 = vunpack.c.h.b16 %v723
        %v3220 = vunpack.c.l.b16 %v724
        %v3221 = vunpack.c.h.b16 %v724
        %v3222 = vunpack.c.l.b16 %v725
        %v3223 = vunpack.c.h.b16 %v725
        %v3224 = vunpack.c.l.b16 %v726
        %v3225 = vunpack.c.h.b16 %v726
        %v3226 = vunpack.c.l.b16 %v727
        %v3227 = vunpack.c.h.b16 %v727
        %v3228 = vunpack.c.l.b16 %v728
        %v3229 = vunpack.c.h.b16 %v728
        %v3230 = vunpack.c.l.b16 %v729
        %v3231 = vunpack.c.h.b16 %v729
        %v3232 = vunpack.c.l.b16 %v730
        %v3233 = vunpack.c.h.b16 %v730
        %v3234 = vunpack.c.l.b16 %v731
        %v3235 = vunpack.c.h.b16 %v731
        %v3236 = vunpack.c.l.b16 %v732
        %v3237 = vunpack.c.h.b16 %v732
        %v3238 = vunpack.c.l.b16 %v733
        %v3239 = vunpack.c.h.b16 %v733
        %v3240 = vunpack.c.l.b16 %v734
        %v3241 = vunpack.c.h.b16 %v734
        %v3242 = vunpack.c.l.b16 %v735
        %v3243 = vunpack.c.h.b16 %v735
        %v3244 = vunpack.c.l.b16 %v736
        %v3245 = vunpack.c.h.b16 %v736
        %v3246 = vunpack.c.l.b16 %v737
        %v3247 = vunpack.c.h.b16 %v737
        %v3248 = vunpack.c.l.b16 %v738
        %v3249 = vunpack.c.h.b16 %v738
        %v3250 = vunpack.c.l.b16 %v739
        %v3251 = vunpack.c.h.b16 %v739
        %v3252 = vunpack.c.l.b16 %v740
        %v3253 = vunpack.c.h.b16 %v740
        %v3254 = vunpack.c.l.b16 %v741
        %v3255 = vunpack.c.h.b16 %v741
        %v3256 = vunpack.c.l.b16 %v742
        %v3257 = vunpack.c.h.b16 %v742
        %v3258 = vunpack.c.l.b16 %v743
        %v3259 = vunpack.c.h.b16 %v743
        %v3260 = vunpack.c.l.b16 %v744
        %v3261 = vunpack.c.h.b16 %v744
        %v3262 = vunpack.c.l.b16 %v745
        %v3263 = vunpack.c.h.b16 %v745
        %v3264 = vunpack.c.l.b16 %v746
        %v3265 = vunpack.c.h.b16 %v746
        %v3266 = vunpack.c.l.b16 %v747
        %v3267 = vunpack.c.h.b16 %v747
        %v3268 = vunpack.c.l.b16 %v748
        %v3269 = vunpack.c.h.b16 %v748
        %v3270 = vunpack.c.l.b16 %v749
        %v3271 = vunpack.c.h.b16 %v749
        %v3272 = vunpack.c.l.b16 %v750
        %v3273 = vunpack.c.h.b16 %v750
        %v3274 = vunpack.c.l.b16 %v751
        %v3275 = vunpack.c.h.b16 %v751
        %v3276 = vunpack.c.l.b16 %v752
        %v3277 = vunpack.c.h.b16 %v752
        %v3278 = vunpack.c.l.b16 %v753
        %v3279 = vunpack.c.h.b16 %v753
        %v3280 = vunpack.c.l.b16 %v754
        %v3281 = vunpack.c.h.b16 %v754
        %v3282 = vunpack.c.l.b16 %v755
        %v3283 = vunpack.c.h.b16 %v755
        %v3284 = vunpack.c.l.b16 %v756
        %v3285 = vunpack.c.h.b16 %v756
        %v3286 = vunpack.c.l.b16 %v757
        %v3287 = vunpack.c.h.b16 %v757
        %v3288 = vunpack.c.l.b16 %v758
        %v3289 = vunpack.c.h.b16 %v758
        %v3290 = vunpack.c.l.b16 %v759
        %v3291 = vunpack.c.h.b16 %v759
        %v3292 = vunpack.c.l.b16 %v760
        %v3293 = vunpack.c.h.b16 %v760
        %v3294 = vunpack.c.l.b16 %v761
        %v3295 = vunpack.c.h.b16 %v761
        %v3296 = vunpack.c.l.b16 %v762
        %v3297 = vunpack.c.h.b16 %v762
        %v3298 = vunpack.c.l.b16 %v763
        %v3299 = vunpack.c.h.b16 %v763
        %v3300 = vunpack.c.l.b16 %v764
        %v3301 = vunpack.c.h.b16 %v764
        %v3302 = vunpack.c.l.b16 %v765
        %v3303 = vunpack.c.h.b16 %v765
        %v3304 = vunpack.c.l.b16 %v766
        %v3305 = vunpack.c.h.b16 %v766
        %v3306 = vunpack.c.l.b16 %v767
        %v3307 = vunpack.c.h.b16 %v767
        %v3308 = vunpack.c.l.b16 %v768
        %v3309 = vunpack.c.h.b16 %v768
        %v3310 = vunpack.c.l.b16 %v769
        %v3311 = vunpack.c.h.b16 %v769
        %v3312 = vunpack.c.l.b16 %v770
        %v3313 = vunpack.c.h.b16 %v770
        %v3314 = vunpack.c.l.b16 %v771
        %v3315 = vunpack.c.h.b16 %v771
        %v3316 = vunpack.c.l.b16 %v772
        %v3317 = vunpack.c.h.b16 %v772
        %v3318 = vunpack.c.l.b16 %v773
        %v3319 = vunpack.c.h.b16 %v773
        %v3320 = vunpack.c.l.b16 %v774
        %v3321 = vunpack.c.h.b16 %v774
        %v3322 = vunpack.c.l.b16 %v775
        %v3323 = vunpack.c.h.b16 %v775
        %v3324 = vunpack.c.l.b16 %v776
        %v3325 = vunpack.c.h.b16 %v776
        %v3326 = vunpack.c.l.b16 %v777
        %v3327 = vunpack.c.h.b16 %v777
        %v3328 = vunpack.c.l.b16 %v778
        %v3329 = vunpack.c.h.b16 %v778
        %v3330 = vunpack.c.l.b16 %v779
        %v3331 = vunpack.c.h.b16 %v779
        %v3332 = vunpack.c.l.b16 %v780
        %v3333 = vunpack.c.h.b16 %v780
        %v3334 = vunpack.c.l.b16 %v781
        %v3335 = vunpack.c.h.b16 %v781
        %v3336 = vunpack.c.l.b16 %v782
        %v3337 = vunpack.c.h.b16 %v782
        %v3338 = vunpack.c.l.b16 %v783
        %v3339 = vunpack.c.h.b16 %v783
        %v3340 = vunpack.c.l.b16 %v784
        %v3341 = vunpack.c.h.b16 %v784
        %v3342 = vunpack.c.l.b16 %v785
        %v3343 = vunpack.c.h.b16 %v785
        %v3344 = vunpack.c.l.b16 %v786
        %v3345 = vunpack.c.h.b16 %v786
        %v3346 = vunpack.c.l.b16 %v787
        %v3347 = vunpack.c.h.b16 %v787
        %v3348 = vunpack.c.l.b16 %v788
        %v3349 = vunpack.c.h.b16 %v788
        %v3350 = vunpack.c.l.b16 %v789
        %v3351 = vunpack.c.h.b16 %v789
        %v3352 = vunpack.c.l.b16 %v790
        %v3353 = vunpack.c.h.b16 %v790
        %v3354 = vunpack.c.l.b16 %v791
        %v3355 = vunpack.c.h.b16 %v791
        %v3356 = vunpack.c.l.b16 %v792
        %v3357 = vunpack.c.h.b16 %v792
        %v3358 = vunpack.c.l.b16 %v793
        %v3359 = vunpack.c.h.b16 %v793
        %v3360 = vunpack.c.l.b16 %v794
        %v3361 = vunpack.c.h.b16 %v794
        %v3362 = vunpack.c.l.b16 %v795
        %v3363 = vunpack.c.h.b16 %v795
        %v3364 = vunpack.c.l.b16 %v796
        %v3365 = vunpack.c.h.b16 %v796
        %v3366 = vunpack.c.l.b16 %v797
        %v3367 = vunpack.c.h.b16 %v797
        %v3368 = vunpack.c.l.b16 %v798
        %v3369 = vunpack.c.h.b16 %v798
        %v3370 = vunpack.c.l.b16 %v799
        %v3371 = vunpack.c.h.b16 %v799
        %v3372 = vunpack.c.l.b16 %v800
        %v3373 = vunpack.c.h.b16 %v800
        %v3374 = vunpack.c.l.b16 %v801
        %v3375 = vunpack.c.h.b16 %v801
        %v3376 = vunpack.c.l.b16 %v802
        %v3377 = vunpack.c.h.b16 %v802
        %v3378 = vunpack.c.l.b16 %v803
        %v3379 = vunpack.c.h.b16 %v803
        %v3380 = vunpack.c.l.b16 %v804
        %v3381 = vunpack.c.h.b16 %v804
        %v3382 = vunpack.c.l.b16 %v805
        %v3383 = vunpack.c.h.b16 %v805
        %v3384 = vunpack.c.l.b16 %v806
        %v3385 = vunpack.c.h.b16 %v806
        %v3386 = vunpack.c.l.b16 %v807
        %v3387 = vunpack.c.h.b16 %v807
        %v3388 = vunpack.c.l.b16 %v808
        %v3389 = vunpack.c.h.b16 %v808
        %v3390 = vunpack.c.l.b16 %v809
        %v3391 = vunpack.c.h.b16 %v809
        %v3392 = vunpack.c.l.b16 %v810
        %v3393 = vunpack.c.h.b16 %v810
        %v3394 = vunpack.c.l.b16 %v811
        %v3395 = vunpack.c.h.b16 %v811
        %v3396 = vunpack.c.l.b16 %v812
        %v3397 = vunpack.c.h.b16 %v812
        %v3398 = vunpack.c.l.b16 %v813
        %v3399 = vunpack.c.h.b16 %v813
        %v3400 = vunpack.c.l.b16 %v814
        %v3401 = vunpack.c.h.b16 %v814
        %v3402 = vunpack.c.l.b16 %v815
        %v3403 = vunpack.c.h.b16 %v815
        %v3404 = vunpack.c.l.b16 %v816
        %v3405 = vunpack.c.h.b16 %v816
        %v3406 = vunpack.c.l.b16 %v817
        %v3407 = vunpack.c.h.b16 %v817
        %v3408 = vunpack.c.l.b16 %v818
        %v3409 = vunpack.c.h.b16 %v818
        %v3410 = vunpack.c.l.b16 %v819
        %v3411 = vunpack.c.h.b16 %v819
        %v3412 = vunpack.c.l.b16 %v820
        %v3413 = vunpack.c.h.b16 %v820
        %v3414 = vunpack.c.l.b16 %v821
        %v3415 = vunpack.c.h.b16 %v821
        %v3416 = vunpack.c.l.b16 %v822
        %v3417 = vunpack.c.h.b16 %v822
        %v3418 = vunpack.c.l.b16 %v823
        %v3419 = vunpack.c.h.b16 %v823
        %v3420 = vunpack.c.l.b16 %v824
        %v3421 = vunpack.c.h.b16 %v824
        %v3422 = vunpack.c.l.b16 %v825
        %v3423 = vunpack.c.h.b16 %v825
        %v3424 = vunpack.c.l.b16 %v826
        %v3425 = vunpack.c.h.b16 %v826
        %v3426 = vunpack.c.l.b16 %v827
        %v3427 = vunpack.c.h.b16 %v827
        %v3428 = vunpack.c.l.b16 %v828
        %v3429 = vunpack.c.h.b16 %v828
        %v3430 = vunpack.c.l.b16 %v829
        %v3431 = vunpack.c.h.b16 %v829
        %v3432 = vunpack.c.l.b16 %v830
        %v3433 = vunpack.c.h.b16 %v830
        %v3434 = vunpack.c.l.b16 %v831
        %v3435 = vunpack.c.h.b16 %v831
        %v3436 = vunpack.c.l.b16 %v832
        %v3437 = vunpack.c.h.b16 %v832
        %v3438 = vunpack.c.l.b16 %v833
        %v3439 = vunpack.c.h.b16 %v833
        %v3440 = vunpack.c.l.b16 %v834
        %v3441 = vunpack.c.h.b16 %v834
        %v3442 = vunpack.c.l.b16 %v835
        %v3443 = vunpack.c.h.b16 %v835
        %v3444 = vunpack.c.l.b16 %v836
        %v3445 = vunpack.c.h.b16 %v836
        %v3446 = vunpack.c.l.b16 %v837
        %v3447 = vunpack.c.h.b16 %v837
        %v3448 = vunpack.c.l.b16 %v838
        %v3449 = vunpack.c.h.b16 %v838
        %v3450 = vunpack.c.l.b16 %v839
        %v3451 = vunpack.c.h.b16 %v839
        %v3452 = vunpack.c.l.b16 %v840
        %v3453 = vunpack.c.h.b16 %v840
        %v3454 = vunpack.c.l.b16 %v841
        %v3455 = vunpack.c.h.b16 %v841
        %v3456 = vunpack.c.l.b16 %v842
        %v3457 = vunpack.c.h.b16 %v842
        %v3458 = vunpack.c.l.b16 %v843
        %v3459 = vunpack.c.h.b16 %v843
        %v3460 = vunpack.c.l.b16 %v844
        %v3461 = vunpack.c.h.b16 %v844
        %v3462 = vunpack.c.l.b16 %v845
        %v3463 = vunpack.c.h.b16 %v845
        %v3464 = vunpack.c.l.b16 %v846
        %v3465 = vunpack.c.h.b16 %v846
        %v3466 = vunpack.c.l.b16 %v847
        %v3467 = vunpack.c.h.b16 %v847
        %v3468 = vunpack.c.l.b16 %v848
        %v3469 = vunpack.c.h.b16 %v848
        %v3470 = vunpack.c.l.b16 %v849
        %v3471 = vunpack.c.h.b16 %v849
        %v3472 = vunpack.c.l.b16 %v850
        %v3473 = vunpack.c.h.b16 %v850
        %v3474 = vunpack.c.l.b16 %v851
        %v3475 = vunpack.c.h.b16 %v851
        %v3476 = vunpack.c.l.b16 %v852
        %v3477 = vunpack.c.h.b16 %v852
        %v3478 = vunpack.c.l.b16 %v853
        %v3479 = vunpack.c.h.b16 %v853
        %v3480 = vunpack.c.l.b16 %v854
        %v3481 = vunpack.c.h.b16 %v854
        %v3482 = vunpack.c.l.b16 %v855
        %v3483 = vunpack.c.h.b16 %v855
        %v3484 = vunpack.c.l.b16 %v856
        %v3485 = vunpack.c.h.b16 %v856
        %v3486 = vunpack.c.l.b16 %v857
        %v3487 = vunpack.c.h.b16 %v857
        %v3488 = vunpack.c.l.b16 %v858
        %v3489 = vunpack.c.h.b16 %v858
        %v3490 = vunpack.c.l.b16 %v859
        %v3491 = vunpack.c.h.b16 %v859
        %v3492 = vunpack.c.l.b16 %v860
        %v3493 = vunpack.c.h.b16 %v860
        %v3494 = vunpack.c.l.b16 %v861
        %v3495 = vunpack.c.h.b16 %v861
        %v3496 = vunpack.c.l.b16 %v862
        %v3497 = vunpack.c.h.b16 %v862
        %v3498 = vunpack.c.l.b16 %v863
        %v3499 = vunpack.c.h.b16 %v863
        %v3500 = vunpack.c.l.b16 %v864
        %v3501 = vunpack.c.h.b16 %v864
        %v3502 = vunpack.c.l.b16 %v865
        %v3503 = vunpack.c.h.b16 %v865
        %v3504 = vunpack.c.l.b16 %v866
        %v3505 = vunpack.c.h.b16 %v866
        %v3506 = vunpack.c.l.b16 %v867
        %v3507 = vunpack.c.h.b16 %v867
        %v3508 = vunpack.c.l.b16 %v868
        %v3509 = vunpack.c.h.b16 %v868
        %v3510 = vunpack.c.l.b16 %v869
        %v3511 = vunpack.c.h.b16 %v869
        %v3512 = vunpack.c.l.b16 %v870
        %v3513 = vunpack.c.h.b16 %v870
        %v3514 = vunpack.c.l.b16 %v871
        %v3515 = vunpack.c.h.b16 %v871
        %v3516 = vunpack.c.l.b16 %v872
        %v3517 = vunpack.c.h.b16 %v872
        %v3518 = vunpack.c.l.b16 %v873
        %v3519 = vunpack.c.h.b16 %v873
        %v3520 = vunpack.c.l.b16 %v874
        %v3521 = vunpack.c.h.b16 %v874
        %v3522 = vunpack.c.l.b16 %v875
        %v3523 = vunpack.c.h.b16 %v875
        %v3524 = vunpack.c.l.b16 %v876
        %v3525 = vunpack.c.h.b16 %v876
        %v3526 = vunpack.c.l.b16 %v877
        %v3527 = vunpack.c.h.b16 %v877
        %v3528 = vunpack.c.l.b16 %v878
        %v3529 = vunpack.c.h.b16 %v878
        %v3530 = vunpack.c.l.b16 %v879
        %v3531 = vunpack.c.h.b16 %v879
        %v3532 = vunpack.c.l.b16 %v880
        %v3533 = vunpack.c.h.b16 %v880
        %v3534 = vunpack.c.l.b16 %v881
        %v3535 = vunpack.c.h.b16 %v881
        %v3536 = vunpack.c.l.b16 %v882
        %v3537 = vunpack.c.h.b16 %v882
        %v3538 = vunpack.c.l.b16 %v883
        %v3539 = vunpack.c.h.b16 %v883
        %v3540 = vunpack.c.l.b16 %v884
        %v3541 = vunpack.c.h.b16 %v884
        %v3542 = vunpack.c.l.b16 %v885
        %v3543 = vunpack.c.h.b16 %v885
        %v3544 = vunpack.c.l.b16 %v886
        %v3545 = vunpack.c.h.b16 %v886
        %v3546 = vunpack.c.l.b16 %v887
        %v3547 = vunpack.c.h.b16 %v887
        %v3548 = vunpack.c.l.b16 %v888
        %v3549 = vunpack.c.h.b16 %v888
        %v3550 = vunpack.c.l.b16 %v889
        %v3551 = vunpack.c.h.b16 %v889
        %v3552 = vunpack.c.l.b16 %v890
        %v3553 = vunpack.c.h.b16 %v890
        %v3554 = vunpack.c.l.b16 %v891
        %v3555 = vunpack.c.h.b16 %v891
        %v3556 = vunpack.c.l.b16 %v892
        %v3557 = vunpack.c.h.b16 %v892
        %v3558 = vunpack.c.l.b16 %v893
        %v3559 = vunpack.c.h.b16 %v893
        %v3560 = vunpack.c.l.b16 %v894
        %v3561 = vunpack.c.h.b16 %v894
        %v3562 = vunpack.c.l.b16 %v895
        %v3563 = vunpack.c.h.b16 %v895
        %v3564 = vunpack.c.l.b16 %v896
        %v3565 = vunpack.c.h.b16 %v896
        %v3566 = vunpack.c.l.b16 %v897
        %v3567 = vunpack.c.h.b16 %v897
        %v3568 = vunpack.c.l.b16 %v898
        %v3569 = vunpack.c.h.b16 %v898
        %v3570 = vunpack.c.l.b16 %v899
        %v3571 = vunpack.c.h.b16 %v899
        %v3572 = vunpack.c.l.b16 %v900
        %v3573 = vunpack.c.h.b16 %v900
        %v3574 = vunpack.c.l.b16 %v901
        %v3575 = vunpack.c.h.b16 %v901
        %v3576 = vunpack.c.l.b16 %v902
        %v3577 = vunpack.c.h.b16 %v902
        %v3578 = vunpack.c.l.b16 %v903
        %v3579 = vunpack.c.h.b16 %v903
        %v3580 = vunpack.c.l.b16 %v904
        %v3581 = vunpack.c.h.b16 %v904
        %v3582 = vunpack.c.l.b16 %v905
        %v3583 = vunpack.c.h.b16 %v905
        %v3584 = vunpack.c.l.b16 %v906
        %v3585 = vunpack.c.h.b16 %v906
        %v3586 = vunpack.c.l.b16 %v907
        %v3587 = vunpack.c.h.b16 %v907
        %v3588 = vunpack.c.l.b16 %v908
        %v3589 = vunpack.c.h.b16 %v908
        %v3590 = vunpack.c.l.b16 %v909
        %v3591 = vunpack.c.h.b16 %v909
        %v3592 = vunpack.c.l.b16 %v910
        %v3593 = vunpack.c.h.b16 %v910
        %v3594 = vunpack.c.l.b16 %v911
        %v3595 = vunpack.c.h.b16 %v911
        %v3596 = vunpack.c.l.b16 %v912
        %v3597 = vunpack.c.h.b16 %v912
        %v3598 = vunpack.c.l.b16 %v913
        %v3599 = vunpack.c.h.b16 %v913
        %v3600 = vunpack.c.l.b16 %v914
        %v3601 = vunpack.c.h.b16 %v914
        %v3602 = vunpack.c.l.b16 %v915
        %v3603 = vunpack.c.h.b16 %v915
        %v3604 = vunpack.c.l.b16 %v916
        %v3605 = vunpack.c.h.b16 %v916
        %v3606 = vunpack.c.l.b16 %v917
        %v3607 = vunpack.c.h.b16 %v917
        %v3608 = vunpack.c.l.b16 %v918
        %v3609 = vunpack.c.h.b16 %v918
        %v3610 = vunpack.c.l.b16 %v919
        %v3611 = vunpack.c.h.b16 %v919
        %v3612 = vunpack.c.l.b16 %v920
        %v3613 = vunpack.c.h.b16 %v920
        %v3614 = vunpack.c.l.b16 %v921
        %v3615 = vunpack.c.h.b16 %v921
        %v3616 = vunpack.c.l.b16 %v922
        %v3617 = vunpack.c.h.b16 %v922
        %v3618 = vunpack.c.l.b16 %v923
        %v3619 = vunpack.c.h.b16 %v923
        %v3620 = vunpack.c.l.b16 %v924
        %v3621 = vunpack.c.h.b16 %v924
        %v3622 = vunpack.c.l.b16 %v925
        %v3623 = vunpack.c.h.b16 %v925
        %v3624 = vunpack.c.l.b16 %v926
        %v3625 = vunpack.c.h.b16 %v926
        %v3626 = vunpack.c.l.b16 %v927
        %v3627 = vunpack.c.h.b16 %v927
        %v3628 = vunpack.c.l.b16 %v928
        %v3629 = vunpack.c.h.b16 %v928
        %v3630 = vunpack.c.l.b16 %v929
        %v3631 = vunpack.c.h.b16 %v929
        %v3632 = vunpack.c.l.b16 %v930
        %v3633 = vunpack.c.h.b16 %v930
        %v3634 = vunpack.c.l.b16 %v931
        %v3635 = vunpack.c.h.b16 %v931
        %v3636 = vunpack.c.l.b16 %v932
        %v3637 = vunpack.c.h.b16 %v932
        %v3638 = vunpack.c.l.b16 %v933
        %v3639 = vunpack.c.h.b16 %v933
        %v3640 = vunpack.c.l.b16 %v934
        %v3641 = vunpack.c.h.b16 %v934
        %v3642 = vunpack.c.l.b16 %v935
        %v3643 = vunpack.c.h.b16 %v935
        %v3644 = vunpack.c.l.b16 %v936
        %v3645 = vunpack.c.h.b16 %v936
        %v3646 = vunpack.c.l.b16 %v937
        %v3647 = vunpack.c.h.b16 %v937
        %v3648 = vunpack.c.l.b16 %v938
        %v3649 = vunpack.c.h.b16 %v938
        %v3650 = vunpack.c.l.b16 %v939
        %v3651 = vunpack.c.h.b16 %v939
        %v3652 = vunpack.c.l.b16 %v940
        %v3653 = vunpack.c.h.b16 %v940
        %v3654 = vunpack.c.l.b16 %v941
        %v3655 = vunpack.c.h.b16 %v941
        %v3656 = vunpack.c.l.b16 %v942
        %v3657 = vunpack.c.h.b16 %v942
        %v3658 = vunpack.c.l.b16 %v943
        %v3659 = vunpack.c.h.b16 %v943
        %v3660 = vunpack.c.l.b16 %v944
        %v3661 = vunpack.c.h.b16 %v944
        %v3662 = vunpack.c.l.b16 %v945
        %v3663 = vunpack.c.h.b16 %v945
        %v3664 = vunpack.c.l.b16 %v946
        %v3665 = vunpack.c.h.b16 %v946
        %v3666 = vunpack.c.l.b16 %v947
        %v3667 = vunpack.c.h.b16 %v947
        %v3668 = vunpack.c.l.b16 %v948
        %v3669 = vunpack.c.h.b16 %v948
        %v3670 = vunpack.c.l.b16 %v949
        %v3671 = vunpack.c.h.b16 %v949
        %v3672 = vunpack.c.l.b16 %v950
        %v3673 = vunpack.c.h.b16 %v950
        %v3674 = vunpack.c.l.b16 %v951
        %v3675 = vunpack.c.h.b16 %v951
        %v3676 = vunpack.c.l.b16 %v952
        %v3677 = vunpack.c.h.b16 %v952
        %v3678 = vunpack.c.l.b16 %v953
        %v3679 = vunpack.c.h.b16 %v953
        %v3680 = vunpack.c.l.b16 %v954
        %v3681 = vunpack.c.h.b16 %v954
        %v3682 = vunpack.c.l.b16 %v955
        %v3683 = vunpack.c.h.b16 %v955
        %v3684 = vunpack.c.l.b16 %v956
        %v3685 = vunpack.c.h.b16 %v956
        %v3686 = vunpack.c.l.b16 %v957
        %v3687 = vunpack.c.h.b16 %v957
        %v3688 = vunpack.c.l.b16 %v958
        %v3689 = vunpack.c.h.b16 %v958
        %v3690 = vunpack.c.l.b16 %v959
        %v3691 = vunpack.c.h.b16 %v959
        %v3692 = vunpack.c.l.b16 %v960
        %v3693 = vunpack.c.h.b16 %v960
        %v3694 = vunpack.c.l.b16 %v961
        %v3695 = vunpack.c.h.b16 %v961
        %v3696 = vunpack.c.l.b16 %v962
        %v3697 = vunpack.c.h.b16 %v962
        %v3698 = vunpack.c.l.b16 %v963
        %v3699 = vunpack.c.h.b16 %v963
        %v3700 = vunpack.c.l.b16 %v964
        %v3701 = vunpack.c.h.b16 %v964
        %v3702 = vunpack.c.l.b16 %v965
        %v3703 = vunpack.c.h.b16 %v965
        %v3704 = vunpack.c.l.b16 %v966
        %v3705 = vunpack.c.h.b16 %v966
        %v3706 = vunpack.c.l.b16 %v967
        %v3707 = vunpack.c.h.b16 %v967
        %v3708 = vunpack.c.l.b16 %v968
        %v3709 = vunpack.c.h.b16 %v968
        %v3710 = vunpack.c.l.b16 %v969
        %v3711 = vunpack.c.h.b16 %v969
        %v3712 = vunpack.c.l.b16 %v970
        %v3713 = vunpack.c.h.b16 %v970
        %v3714 = vunpack.c.l.b16 %v971
        %v3715 = vunpack.c.h.b16 %v971
        %v3716 = vunpack.c.l.b16 %v972
        %v3717 = vunpack.c.h.b16 %v972
        %v3718 = vunpack.c.l.b16 %v973
        %v3719 = vunpack.c.h.b16 %v973
        %v3720 = vunpack.c.l.b16 %v974
        %v3721 = vunpack.c.h.b16 %v974
        %v3722 = vunpack.c.l.b16 %v975
        %v3723 = vunpack.c.h.b16 %v975
        %v3724 = vunpack.c.l.b16 %v976
        %v3725 = vunpack.c.h.b16 %v976
        %v3726 = vunpack.c.l.b16 %v977
        %v3727 = vunpack.c.h.b16 %v977
        %v3728 = vunpack.c.l.b16 %v978
        %v3729 = vunpack.c.h.b16 %v978
        %v3730 = vunpack.c.l.b16 %v979
        %v3731 = vunpack.c.h.b16 %v979
        %v3732 = vunpack.c.l.b16 %v980
        %v3733 = vunpack.c.h.b16 %v980
        %v3734 = vunpack.c.l.b16 %v981
        %v3735 = vunpack.c.h.b16 %v981
        %v3736 = vunpack.c.l.b16 %v982
        %v3737 = vunpack.c.h.b16 %v982
        %v3738 = vunpack.c.l.b16 %v983
        %v3739 = vunpack.c.h.b16 %v983
        %v3740 = vunpack.c.l.b16 %v984
        %v3741 = vunpack.c.h.b16 %v984
        %v3742 = vunpack.c.l.b16 %v985
        %v3743 = vunpack.c.h.b16 %v985
        %v3744 = vunpack.c.l.b16 %v986
        %v3745 = vunpack.c.h.b16 %v986
        %v3746 = vunpack.c.l.b16 %v987
        %v3747 = vunpack.c.h.b16 %v987
        %v3748 = vunpack.c.l.b16 %v988
        %v3749 = vunpack.c.h.b16 %v988
        %v3750 = vunpack.c.l.b16 %v989
        %v3751 = vunpack.c.h.b16 %v989
        %v3752 = vunpack.c.l.b16 %v990
        %v3753 = vunpack.c.h.b16 %v990
        %v3754 = vunpack.c.l.b16 %v991
        %v3755 = vunpack.c.h.b16 %v991
        %v3756 = vunpack.c.l.b16 %v992
        %v3757 = vunpack.c.h.b16 %v992
        %v3758 = vunpack.c.l.b16 %v993
        %v3759 = vunpack.c.h.b16 %v993
        %v3760 = vunpack.c.l.b16 %v994
        %v3761 = vunpack.c.h.b16 %v994
        %v3762 = vunpack.c.l.b16 %v995
        %v3763 = vunpack.c.h.b16 %v995
        %v3764 = vunpack.c.l.b16 %v996
        %v3765 = vunpack.c.h.b16 %v996
        %v3766 = vunpack.c.l.b16 %v997
        %v3767 = vunpack.c.h.b16 %v997
        %v3768 = vunpack.c.l.b16 %v998
        %v3769 = vunpack.c.h.b16 %v998
        %v3770 = vunpack.c.l.b16 %v999
        %v3771 = vunpack.c.h.b16 %v999
        %v3772 = vunpack.c.l.b16 %v1000
        %v3773 = vunpack.c.h.b16 %v1000
        %v3774 = vunpack.c.l.b16 %v1001
        %v3775 = vunpack.c.h.b16 %v1001
        %v3776 = vunpack.c.l.b16 %v1002
        %v3777 = vunpack.c.h.b16 %v1002
        %v3778 = vunpack.c.l.b16 %v1003
        %v3779 = vunpack.c.h.b16 %v1003
        %v3780 = vunpack.c.l.b16 %v1004
        %v3781 = vunpack.c.h.b16 %v1004
        %v3782 = vunpack.c.l.b16 %v1005
        %v3783 = vunpack.c.h.b16 %v1005
        %v3784 = vunpack.c.l.b16 %v1006
        %v3785 = vunpack.c.h.b16 %v1006
        %v3786 = vunpack.c.l.b16 %v1007
        %v3787 = vunpack.c.h.b16 %v1007
        %v3788 = vunpack.c.l.b16 %v1008
        %v3789 = vunpack.c.h.b16 %v1008
        %v3790 = vunpack.c.l.b16 %v1009
        %v3791 = vunpack.c.h.b16 %v1009
        %v3792 = vunpack.c.l.b16 %v1010
        %v3793 = vunpack.c.h.b16 %v1010
        %v3794 = vunpack.c.l.b16 %v1011
        %v3795 = vunpack.c.h.b16 %v1011
        %v3796 = vunpack.c.l.b16 %v1012
        %v3797 = vunpack.c.h.b16 %v1012
        %v3798 = vunpack.c.l.b16 %v1013
        %v3799 = vunpack.c.h.b16 %v1013
        %v3800 = vunpack.c.l.b16 %v1014
        %v3801 = vunpack.c.h.b16 %v1014
        %v3802 = vunpack.c.l.b16 %v1015
        %v3803 = vunpack.c.h.b16 %v1015
        %v3804 = vunpack.c.l.b16 %v1016
        %v3805 = vunpack.c.h.b16 %v1016
        %v3806 = vunpack.c.l.b16 %v1017
        %v3807 = vunpack.c.h.b16 %v1017
        %v3808 = vunpack.c.l.b16 %v1018
        %v3809 = vunpack.c.h.b16 %v1018
        %v3810 = vunpack.c.l.b16 %v1019
        %v3811 = vunpack.c.h.b16 %v1019
        %v3812 = vunpack.c.l.b16 %v1020
        %v3813 = vunpack.c.h.b16 %v1020
        %v3814 = vunpack.c.l.b16 %v1021
        %v3815 = vunpack.c.h.b16 %v1021
        %v3816 = vunpack.c.l.b16 %v1022
        %v3817 = vunpack.c.h.b16 %v1022
        %v3818 = vunpack.c.l.b16 %v1023
        %v3819 = vunpack.c.h.b16 %v1023
        %v3820 = vunpack.c.l.b16 %v1024
        %v3821 = vunpack.c.h.b16 %v1024
        %v3822 = vunpack.c.l.b16 %v1025
        %v3823 = vunpack.c.h.b16 %v1025
        %v3824 = vunpack.c.l.b16 %v1026
        %v3825 = vunpack.c.h.b16 %v1026
        %v3826 = vunpack.c.l.b16 %v1027
        %v3827 = vunpack.c.h.b16 %v1027
        %v3828 = vunpack.c.l.b16 %v1028
        %v3829 = vunpack.c.h.b16 %v1028
        %v3830 = vunpack.c.l.b16 %v1029
        %v3831 = vunpack.c.h.b16 %v1029
        %v3832 = vunpack.c.l.b16 %v1030
        %v3833 = vunpack.c.h.b16 %v1030
        %v3834 = vunpack.c.l.b16 %v1031
        %v3835 = vunpack.c.h.b16 %v1031
        %v3836 = vunpack.c.l.b16 %v1032
        %v3837 = vunpack.c.h.b16 %v1032
        %v3838 = vunpack.c.l.b16 %v1033
        %v3839 = vunpack.c.h.b16 %v1033
        %v3840 = vunpack.c.l.b16 %v1034
        %v3841 = vunpack.c.h.b16 %v1034
        %v3842 = vunpack.c.l.b16 %v1035
        %v3843 = vunpack.c.h.b16 %v1035
        %v3844 = vunpack.c.l.b16 %v1036
        %v3845 = vunpack.c.h.b16 %v1036
        %v3846 = vunpack.c.l.b16 %v1037
        %v3847 = vunpack.c.h.b16 %v1037
        %v3848 = vunpack.c.l.b16 %v1038
        %v3849 = vunpack.c.h.b16 %v1038
        %v3850 = vunpack.c.l.b16 %v1039
        %v3851 = vunpack.c.h.b16 %v1039
        %v3852 = vunpack.c.l.b16 %v1040
        %v3853 = vunpack.c.h.b16 %v1040
        %v3854 = vunpack.c.l.b16 %v1041
        %v3855 = vunpack.c.h.b16 %v1041
        %v3856 = vunpack.c.l.b16 %v1042
        %v3857 = vunpack.c.h.b16 %v1042
        %v3858 = vunpack.c.l.b16 %v1043
        %v3859 = vunpack.c.h.b16 %v1043
        %v3860 = vunpack.c.l.b16 %v1044
        %v3861 = vunpack.c.h.b16 %v1044
        %v3862 = vunpack.c.l.b16 %v1045
        %v3863 = vunpack.c.h.b16 %v1045
        %v3864 = vunpack.c.l.b16 %v1046
        %v3865 = vunpack.c.h.b16 %v1046
        %v3866 = vunpack.c.l.b16 %v1047
        %v3867 = vunpack.c.h.b16 %v1047
        %v3868 = vunpack.c.l.b16 %v1048
        %v3869 = vunpack.c.h.b16 %v1048
        %v3870 = vunpack.c.l.b16 %v1049
        %v3871 = vunpack.c.h.b16 %v1049
        %v3872 = vunpack.c.l.b16 %v1050
        %v3873 = vunpack.c.h.b16 %v1050
        %v3874 = vunpack.c.l.b16 %v1051
        %v3875 = vunpack.c.h.b16 %v1051
        %v3876 = vunpack.c.l.b16 %v1052
        %v3877 = vunpack.c.h.b16 %v1052
        %v3878 = vunpack.c.l.b16 %v1053
        %v3879 = vunpack.c.h.b16 %v1053
        %v3880 = vunpack.c.l.b16 %v1054
        %v3881 = vunpack.c.h.b16 %v1054
        %v3882 = vunpack.c.l.b16 %v1055
        %v3883 = vunpack.c.h.b16 %v1055
        %v3884 = vunpack.c.l.b16 %v1056
        %v3885 = vunpack.c.h.b16 %v1056
        %v3886 = vunpack.c.l.b16 %v1057
        %v3887 = vunpack.c.h.b16 %v1057
        %v3888 = vunpack.c.l.b16 %v1058
        %v3889 = vunpack.c.h.b16 %v1058
        %v3890 = vunpack.c.l.b16 %v1059
        %v3891 = vunpack.c.h.b16 %v1059
        %v3892 = vunpack.c.l.b16 %v1060
        %v3893 = vunpack.c.h.b16 %v1060
        %v3894 = vunpack.c.l.b16 %v1061
        %v3895 = vunpack.c.h.b16 %v1061
        %v3896 = vunpack.c.l.b16 %v1062
        %v3897 = vunpack.c.h.b16 %v1062
        %v3898 = vunpack.c.l.b16 %v1063
        %v3899 = vunpack.c.h.b16 %v1063
        %v3900 = vunpack.c.l.b16 %v1064
        %v3901 = vunpack.c.h.b16 %v1064
        %v3902 = vunpack.c.l.b16 %v1065
        %v3903 = vunpack.c.h.b16 %v1065
        %v3904 = vunpack.c.l.b16 %v1066
        %v3905 = vunpack.c.h.b16 %v1066
        %v3906 = vunpack.c.l.b16 %v1067
        %v3907 = vunpack.c.h.b16 %v1067
        %v3908 = vunpack.c.l.b16 %v1068
        %v3909 = vunpack.c.h.b16 %v1068
        %v3910 = vunpack.c.l.b16 %v1069
        %v3911 = vunpack.c.h.b16 %v1069
        %v3912 = vunpack.c.l.b16 %v1070
        %v3913 = vunpack.c.h.b16 %v1070
        %v3914 = vunpack.c.l.b16 %v1071
        %v3915 = vunpack.c.h.b16 %v1071
        %v3916 = vunpack.c.l.b16 %v1072
        %v3917 = vunpack.c.h.b16 %v1072
        %v3918 = vunpack.c.l.b16 %v1073
        %v3919 = vunpack.c.h.b16 %v1073
        %v3920 = vunpack.c.l.b16 %v1074
        %v3921 = vunpack.c.h.b16 %v1074
        %v3922 = vunpack.c.l.b16 %v1075
        %v3923 = vunpack.c.h.b16 %v1075
        %v3924 = vunpack.c.l.b16 %v1076
        %v3925 = vunpack.c.h.b16 %v1076
        %v3926 = vunpack.c.l.b16 %v1077
        %v3927 = vunpack.c.h.b16 %v1077
        %v3928 = vunpack.c.l.b16 %v1078
        %v3929 = vunpack.c.h.b16 %v1078
        %v3930 = vunpack.c.l.b16 %v1079
        %v3931 = vunpack.c.h.b16 %v1079
        %v3932 = vunpack.c.l.b16 %v1080
        %v3933 = vunpack.c.h.b16 %v1080
        %v3934 = vunpack.c.l.b16 %v1081
        %v3935 = vunpack.c.h.b16 %v1081
        %v3936 = vunpack.c.l.b16 %v1082
        %v3937 = vunpack.c.h.b16 %v1082
        %v3938 = vunpack.c.l.b16 %v1083
        %v3939 = vunpack.c.h.b16 %v1083
        %v3940 = vunpack.c.l.b16 %v1084
        %v3941 = vunpack.c.h.b16 %v1084
        %v3942 = vunpack.c.l.b16 %v1085
        %v3943 = vunpack.c.h.b16 %v1085
        %v3944 = vunpack.c.l.b16 %v1086
        %v3945 = vunpack.c.h.b16 %v1086
        %v3946 = vunpack.c.l.b16 %v1087
        %v3947 = vunpack.c.h.b16 %v1087
        %v3948 = vunpack.c.l.b16 %v1088
        %v3949 = vunpack.c.h.b16 %v1088
        %v3950 = vunpack.c.l.b16 %v1089
        %v3951 = vunpack.c.h.b16 %v1089
        %v3952 = vunpack.c.l.b16 %v1090
        %v3953 = vunpack.c.h.b16 %v1090
        %v3954 = vunpack.c.l.b16 %v1091
        %v3955 = vunpack.c.h.b16 %v1091
        %v3956 = vunpack.c.l.b16 %v1092
        %v3957 = vunpack.c.h.b16 %v1092
        %v3958 = vunpack.c.l.b16 %v1093
        %v3959 = vunpack.c.h.b16 %v1093
        %v3960 = vunpack.c.l.b16 %v1094
        %v3961 = vunpack.c.h.b16 %v1094
        %v3962 = vunpack.c.l.b16 %v1095
        %v3963 = vunpack.c.h.b16 %v1095
        %v3964 = vunpack.c.l.b16 %v1096
        %v3965 = vunpack.c.h.b16 %v1096
        %v3966 = vunpack.c.l.b16 %v1097
        %v3967 = vunpack.c.h.b16 %v1097
        %v3968 = vunpack.c.l.b16 %v1098
        %v3969 = vunpack.c.h.b16 %v1098
        %v3970 = vunpack.c.l.b16 %v1099
        %v3971 = vunpack.c.h.b16 %v1099
        %v3972 = vunpack.c.l.b16 %v1100
        %v3973 = vunpack.c.h.b16 %v1100
        %v3974 = vunpack.c.l.b16 %v1101
        %v3975 = vunpack.c.h.b16 %v1101
        %v3976 = vunpack.c.l.b16 %v1102
        %v3977 = vunpack.c.h.b16 %v1102
        %v3978 = vunpack.c.l.b16 %v1103
        %v3979 = vunpack.c.h.b16 %v1103
        %v3980 = vunpack.c.l.b16 %v1104
        %v3981 = vunpack.c.h.b16 %v1104
        %v3982 = vunpack.c.l.b16 %v1105
        %v3983 = vunpack.c.h.b16 %v1105
        %v3984 = vunpack.c.l.b16 %v1106
        %v3985 = vunpack.c.h.b16 %v1106
        %v3986 = vunpack.c.l.b16 %v1107
        %v3987 = vunpack.c.h.b16 %v1107
        %v3988 = vunpack.c.l.b16 %v1108
        %v3989 = vunpack.c.h.b16 %v1108
        %v3990 = vunpack.c.l.b16 %v1109
        %v3991 = vunpack.c.h.b16 %v1109
        %v3992 = vunpack.c.l.b16 %v1110
        %v3993 = vunpack.c.h.b16 %v1110
        %v3994 = vunpack.c.l.b16 %v1111
        %v3995 = vunpack.c.h.b16 %v1111
        %v3996 = vunpack.c.l.b16 %v1112
        %v3997 = vunpack.c.h.b16 %v1112
        %v3998 = vunpack.c.l.b16 %v1113
        %v3999 = vunpack.c.h.b16 %v1113
        %v4000 = vunpack.c.l.b16 %v1114
        %v4001 = vunpack.c.h.b16 %v1114
        %v4002 = vunpack.c.l.b16 %v1115
        %v4003 = vunpack.c.h.b16 %v1115
        %v4004 = vunpack.c.l.b16 %v1116
        %v4005 = vunpack.c.h.b16 %v1116
        %v4006 = vunpack.c.l.b16 %v1117
        %v4007 = vunpack.c.h.b16 %v1117
        %v4008 = vunpack.c.l.b16 %v1118
        %v4009 = vunpack.c.h.b16 %v1118
        %v4010 = vunpack.c.l.b16 %v1119
        %v4011 = vunpack.c.h.b16 %v1119
        %v4012 = vunpack.c.l.b16 %v1120
        %v4013 = vunpack.c.h.b16 %v1120
        %v4014 = vunpack.c.l.b16 %v1121
        %v4015 = vunpack.c.h.b16 %v1121
        %v4016 = vunpack.c.l.b16 %v1122
        %v4017 = vunpack.c.h.b16 %v1122
        %v4018 = vunpack.c.l.b16 %v1123
        %v4019 = vunpack.c.h.b16 %v1123
        %v4020 = vunpack.c.l.b16 %v1124
        %v4021 = vunpack.c.h.b16 %v1124
        %v4022 = vunpack.c.l.b16 %v1125
        %v4023 = vunpack.c.h.b16 %v1125
        %v4024 = vunpack.c.l.b16 %v1126
        %v4025 = vunpack.c.h.b16 %v1126
        %v4026 = vunpack.c.l.b16 %v1127
        %v4027 = vunpack.c.h.b16 %v1127
        %v4028 = vunpack.c.l.b16 %v1128
        %v4029 = vunpack.c.h.b16 %v1128
        %v4030 = vunpack.c.l.b16 %v1129
        %v4031 = vunpack.c.h.b16 %v1129
        %v4032 = vunpack.c.l.b16 %v1130
        %v4033 = vunpack.c.h.b16 %v1130
        %v4034 = vunpack.c.l.b16 %v1131
        %v4035 = vunpack.c.h.b16 %v1131
        %v4036 = vunpack.c.l.b16 %v1132
        %v4037 = vunpack.c.h.b16 %v1132
        %v4038 = vunpack.c.l.b16 %v1133
        %v4039 = vunpack.c.h.b16 %v1133
        %v4040 = vunpack.c.l.b16 %v1134
        %v4041 = vunpack.c.h.b16 %v1134
        %v4042 = vunpack.c.l.b16 %v1135
        %v4043 = vunpack.c.h.b16 %v1135
        %v4044 = vunpack.c.l.b16 %v1136
        %v4045 = vunpack.c.h.b16 %v1136
        %v4046 = vunpack.c.l.b16 %v1137
        %v4047 = vunpack.c.h.b16 %v1137
        %v4048 = vunpack.c.l.b16 %v1138
        %v4049 = vunpack.c.h.b16 %v1138
        %v4050 = vunpack.c.l.b16 %v1139
        %v4051 = vunpack.c.h.b16 %v1139
        %v4052 = vunpack.c.l.b16 %v1140
        %v4053 = vunpack.c.h.b16 %v1140
        %v4054 = vunpack.c.l.b16 %v1141
        %v4055 = vunpack.c.h.b16 %v1141
        %v4056 = vunpack.c.l.b16 %v1142
        %v4057 = vunpack.c.h.b16 %v1142
        %v4058 = vunpack.c.l.b16 %v1143
        %v4059 = vunpack.c.h.b16 %v1143
        %v4060 = vunpack.c.l.b16 %v1144
        %v4061 = vunpack.c.h.b16 %v1144
        %v4062 = vunpack.c.l.b16 %v1145
        %v4063 = vunpack.c.h.b16 %v1145
        %v4064 = vunpack.c.l.b16 %v1146
        %v4065 = vunpack.c.h.b16 %v1146
        %v4066 = vunpack.c.l.b16 %v1147
        %v4067 = vunpack.c.h.b16 %v1147
        %v4068 = vunpack.c.l.b16 %v1148
        %v4069 = vunpack.c.h.b16 %v1148
        %v4070 = vunpack.c.l.b16 %v1149
        %v4071 = vunpack.c.h.b16 %v1149
        %v4072 = vunpack.c.l.b16 %v1150
        %v4073 = vunpack.c.h.b16 %v1150
        %v4074 = vunpack.c.l.b16 %v1151
        %v4075 = vunpack.c.h.b16 %v1151
        %v4076 = vunpack.c.l.b16 %v1152
        %v4077 = vunpack.c.h.b16 %v1152
        %v4078 = vunpack.c.l.b16 %v1153
        %v4079 = vunpack.c.h.b16 %v1153
        %v4080 = vunpack.c.l.b16 %v1154
        %v4081 = vunpack.c.h.b16 %v1154
        %v4082 = vunpack.c.l.b16 %v1155
        %v4083 = vunpack.c.h.b16 %v1155
        %v4084 = vunpack.c.l.b16 %v1156
        %v4085 = vunpack.c.h.b16 %v1156
        %v4086 = vunpack.c.l.b16 %v1157
        %v4087 = vunpack.c.h.b16 %v1157
        %v4088 = vunpack.c.l.b16 %v1158
        %v4089 = vunpack.c.h.b16 %v1158
        %v4090 = vunpack.c.l.b16 %v1159
        %v4091 = vunpack.c.h.b16 %v1159
        %v4092 = vunpack.c.l.b16 %v1160
        %v4093 = vunpack.c.h.b16 %v1160
        %v4094 = vunpack.c.l.b16 %v1161
        %v4095 = vunpack.c.h.b16 %v1161
        %v4096 = vunpack.c.l.b16 %v1162
        %v4097 = vunpack.c.h.b16 %v1162
        %v4098 = vunpack.c.l.b16 %v1163
        %v4099 = vunpack.c.h.b16 %v1163
        %v4100 = vunpack.c.l.b16 %v1164
        %v4101 = vunpack.c.h.b16 %v1164
        %v4102 = vunpack.c.l.b16 %v1165
        %v4103 = vunpack.c.h.b16 %v1165
        %v4104 = vunpack.c.l.b16 %v1166
        %v4105 = vunpack.c.h.b16 %v1166
        %v4106 = vunpack.c.l.b16 %v1167
        %v4107 = vunpack.c.h.b16 %v1167
        %v4108 = vunpack.c.l.b16 %v1168
        %v4109 = vunpack.c.h.b16 %v1168
        %v4110 = vunpack.c.l.b16 %v1169
        %v4111 = vunpack.c.h.b16 %v1169
        %v4112 = vunpack.c.l.b16 %v1170
        %v4113 = vunpack.c.h.b16 %v1170
        %v4114 = vunpack.c.l.b16 %v1171
        %v4115 = vunpack.c.h.b16 %v1171
        %v4116 = vunpack.c.l.b16 %v1172
        %v4117 = vunpack.c.h.b16 %v1172
        %v4118 = vunpack.c.l.b16 %v1173
        %v4119 = vunpack.c.h.b16 %v1173
        %v4120 = vunpack.c.l.b16 %v1174
        %v4121 = vunpack.c.h.b16 %v1174
        %v4122 = vunpack.c.l.b16 %v1175
        %v4123 = vunpack.c.h.b16 %v1175
        %v4124 = vunpack.c.l.b16 %v1176
        %v4125 = vunpack.c.h.b16 %v1176
        %v4126 = vunpack.c.l.b16 %v1177
        %v4127 = vunpack.c.h.b16 %v1177
        %v4128 = vunpack.c.l.b16 %v1178
        %v4129 = vunpack.c.h.b16 %v1178
        %v4130 = vunpack.c.l.b16 %v1179
        %v4131 = vunpack.c.h.b16 %v1179
        %v4132 = vunpack.c.l.b16 %v1180
        %v4133 = vunpack.c.h.b16 %v1180
        %v4134 = vunpack.c.l.b16 %v1181
        %v4135 = vunpack.c.h.b16 %v1181
        %v4136 = vunpack.c.l.b16 %v1182
        %v4137 = vunpack.c.h.b16 %v1182
        %v4138 = vunpack.c.l.b16 %v1183
        %v4139 = vunpack.c.h.b16 %v1183
        %v4140 = vunpack.c.l.b16 %v1184
        %v4141 = vunpack.c.h.b16 %v1184
        %v4142 = vunpack.c.l.b16 %v1185
        %v4143 = vunpack.c.h.b16 %v1185
        %v4144 = vunpack.c.l.b16 %v1186
        %v4145 = vunpack.c.h.b16 %v1186
        %v4146 = vunpack.c.l.b16 %v1187
        %v4147 = vunpack.c.h.b16 %v1187
        %v4148 = vunpack.c.l.b16 %v1188
        %v4149 = vunpack.c.h.b16 %v1188
        %v4150 = vunpack.c.l.b16 %v1189
        %v4151 = vunpack.c.h.b16 %v1189
        %v4152 = vunpack.c.l.b16 %v1190
        %v4153 = vunpack.c.h.b16 %v1190
        %v4154 = vunpack.c.l.b16 %v1191
        %v4155 = vunpack.c.h.b16 %v1191
        %v4156 = vunpack.c.l.b16 %v1192
        %v4157 = vunpack.c.h.b16 %v1192
        %v4158 = vunpack.c.l.b16 %v1193
        %v4159 = vunpack.c.h.b16 %v1193
        %v4160 = vunpack.c.l.b16 %v1194
        %v4161 = vunpack.c.h.b16 %v1194
        %v4162 = vunpack.c.l.b16 %v1195
        %v4163 = vunpack.c.h.b16 %v1195
        %v4164 = vunpack.c.l.b16 %v1196
        %v4165 = vunpack.c.h.b16 %v1196
        %v4166 = vunpack.c.l.b16 %v1197
        %v4167 = vunpack.c.h.b16 %v1197
        %v4168 = vunpack.c.l.b16 %v1198
        %v4169 = vunpack.c.h.b16 %v1198
        %v4170 = vunpack.c.l.b16 %v1199
        %v4171 = vunpack.c.h.b16 %v1199
        %v4172 = vunpack.c.l.b16 %v1200
        %v4173 = vunpack.c.h.b16 %v1200
        %v4174 = vunpack.c.l.b16 %v1201
        %v4175 = vunpack.c.h.b16 %v1201
        %v4176 = vunpack.c.l.b16 %v1202
        %v4177 = vunpack.c.h.b16 %v1202
        %v4178 = vunpack.c.l.b16 %v1203
        %v4179 = vunpack.c.h.b16 %v1203
        %v4180 = vunpack.c.l.b16 %v1204
        %v4181 = vunpack.c.h.b16 %v1204
        %v4182 = vunpack.c.l.b16 %v1205
        %v4183 = vunpack.c.h.b16 %v1205
        %v4184 = vunpack.c.l.b16 %v1206
        %v4185 = vunpack.c.h.b16 %v1206
        %v4186 = vunpack.c.l.b16 %v1207
        %v4187 = vunpack.c.h.b16 %v1207
        %v4188 = vunpack.c.l.b16 %v1208
        %v4189 = vunpack.c.h.b16 %v1208
        %v4190 = vunpack.c.l.b16 %v1209
        %v4191 = vunpack.c.h.b16 %v1209
        %v4192 = vunpack.c.l.b16 %v1210
        %v4193 = vunpack.c.h.b16 %v1210
        %v4194 = vunpack.c.l.b16 %v1211
        %v4195 = vunpack.c.h.b16 %v1211
        %v4196 = vunpack.c.l.b16 %v1212
        %v4197 = vunpack.c.h.b16 %v1212
        %v4198 = vunpack.c.l.b16 %v1213
        %v4199 = vunpack.c.h.b16 %v1213
        %v4200 = vunpack.c.l.b16 %v1214
        %v4201 = vunpack.c.h.b16 %v1214
        %v4202 = vunpack.c.l.b16 %v1215
        %v4203 = vunpack.c.h.b16 %v1215
        %v4204 = vunpack.c.l.b16 %v1216
        %v4205 = vunpack.c.h.b16 %v1216
        %v4206 = vunpack.c.l.b16 %v1217
        %v4207 = vunpack.c.h.b16 %v1217
        %v4208 = vunpack.c.l.b16 %v1218
        %v4209 = vunpack.c.h.b16 %v1218
        %v4210 = vunpack.c.l.b16 %v1219
        %v4211 = vunpack.c.h.b16 %v1219
        %v4212 = vunpack.c.l.b16 %v1220
        %v4213 = vunpack.c.h.b16 %v1220
        %v4214 = vunpack.c.l.b16 %v1221
        %v4215 = vunpack.c.h.b16 %v1221
        %v4216 = vunpack.c.l.b16 %v1222
        %v4217 = vunpack.c.h.b16 %v1222
        %v4218 = vunpack.c.l.b16 %v1223
        %v4219 = vunpack.c.h.b16 %v1223
        %v4220 = vunpack.c.l.b16 %v1224
        %v4221 = vunpack.c.h.b16 %v1224
        %v4222 = vunpack.c.l.b16 %v1225
        %v4223 = vunpack.c.h.b16 %v1225
        %v4224 = vunpack.c.l.b16 %v1226
        %v4225 = vunpack.c.h.b16 %v1226
        %v4226 = vunpack.c.l.b16 %v1227
        %v4227 = vunpack.c.h.b16 %v1227
        %v4228 = vunpack.c.l.b16 %v1228
        %v4229 = vunpack.c.h.b16 %v1228
        %v4230 = vunpack.c.l.b16 %v1229
        %v4231 = vunpack.c.h.b16 %v1229
        %v4232 = vunpack.c.l.b16 %v1230
        %v4233 = vunpack.c.h.b16 %v1230
        %v4234 = vunpack.c.l.b16 %v1231
        %v4235 = vunpack.c.h.b16 %v1231
        %v4236 = vunpack.c.l.b16 %v1232
        %v4237 = vunpack.c.h.b16 %v1232
        %v4238 = vunpack.c.l.b16 %v1233
        %v4239 = vunpack.c.h.b16 %v1233
        %v4240 = vunpack.c.l.b16 %v1234
        %v4241 = vunpack.c.h.b16 %v1234
        %v4242 = vunpack.c.l.b16 %v1235
        %v4243 = vunpack.c.h.b16 %v1235
        %v4244 = vunpack.c.l.b16 %v1236
        %v4245 = vunpack.c.h.b16 %v1236
        %v4246 = vunpack.c.l.b16 %v1237
        %v4247 = vunpack.c.h.b16 %v1237
        %v4248 = vunpack.c.l.b16 %v1238
        %v4249 = vunpack.c.h.b16 %v1238
        %v4250 = vunpack.c.l.b16 %v1239
        %v4251 = vunpack.c.h.b16 %v1239
        %v4252 = vunpack.c.l.b16 %v1240
        %v4253 = vunpack.c.h.b16 %v1240
        %v4254 = vunpack.c.l.b16 %v1241
        %v4255 = vunpack.c.h.b16 %v1241
        %v4256 = vunpack.c.l.b16 %v1242
        %v4257 = vunpack.c.h.b16 %v1242
        %v4258 = vunpack.c.l.b16 %v1243
        %v4259 = vunpack.c.h.b16 %v1243
        %v4260 = vunpack.c.l.b16 %v1244
        %v4261 = vunpack.c.h.b16 %v1244
        %v4262 = vunpack.c.l.b16 %v1245
        %v4263 = vunpack.c.h.b16 %v1245
        %v4264 = vunpack.c.l.b16 %v1246
        %v4265 = vunpack.c.h.b16 %v1246
        %v4266 = vunpack.c.l.b16 %v1247
        %v4267 = vunpack.c.h.b16 %v1247
        %v4268 = vunpack.c.l.b16 %v1248
        %v4269 = vunpack.c.h.b16 %v1248
        %v4270 = vunpack.c.l.b16 %v1249
        %v4271 = vunpack.c.h.b16 %v1249
        %v4272 = vunpack.c.l.b16 %v1250
        %v4273 = vunpack.c.h.b16 %v1250
        %v4274 = vunpack.c.l.b16 %v1251
        %v4275 = vunpack.c.h.b16 %v1251
        %v4276 = vunpack.c.l.b16 %v1252
        %v4277 = vunpack.c.h.b16 %v1252
        %v4278 = vunpack.c.l.b16 %v1253
        %v4279 = vunpack.c.h.b16 %v1253
        %v4280 = vunpack.c.l.b16 %v1254
        %v4281 = vunpack.c.h.b16 %v1254
        %v4282 = vunpack.c.l.b16 %v1255
        %v4283 = vunpack.c.h.b16 %v1255
        %v4284 = vunpack.c.l.b16 %v1256
        %v4285 = vunpack.c.h.b16 %v1256
        %v4286 = vunpack.c.l.b16 %v1257
        %v4287 = vunpack.c.h.b16 %v1257
        %v4288 = vunpack.c.l.b16 %v1258
        %v4289 = vunpack.c.h.b16 %v1258
        %v4290 = vunpack.c.l.b16 %v1259
        %v4291 = vunpack.c.h.b16 %v1259
        %v4292 = vunpack.c.l.b16 %v1260
        %v4293 = vunpack.c.h.b16 %v1260
        %v4294 = vunpack.c.l.b16 %v1261
        %v4295 = vunpack.c.h.b16 %v1261
        %v4296 = vunpack.c.l.b16 %v1262
        %v4297 = vunpack.c.h.b16 %v1262
        %v4298 = vunpack.c.l.b16 %v1263
        %v4299 = vunpack.c.h.b16 %v1263
        %v4300 = vunpack.c.l.b16 %v1264
        %v4301 = vunpack.c.h.b16 %v1264
        %v4302 = vunpack.c.l.b16 %v1265
        %v4303 = vunpack.c.h.b16 %v1265
        %v4304 = vunpack.c.l.b16 %v1266
        %v4305 = vunpack.c.h.b16 %v1266
        %v4306 = vunpack.c.l.b16 %v1267
        %v4307 = vunpack.c.h.b16 %v1267
        %v4308 = vunpack.c.l.b16 %v1268
        %v4309 = vunpack.c.h.b16 %v1268
        %v4310 = vunpack.c.l.b16 %v1269
        %v4311 = vunpack.c.h.b16 %v1269
        %v4312 = vunpack.c.l.b16 %v1270
        %v4313 = vunpack.c.h.b16 %v1270
        %v4314 = vunpack.c.l.b16 %v1271
        %v4315 = vunpack.c.h.b16 %v1271
        %v4316 = vunpack.c.l.b16 %v1272
        %v4317 = vunpack.c.h.b16 %v1272
        %v4318 = vunpack.c.l.b16 %v1273
        %v4319 = vunpack.c.h.b16 %v1273
        %v4320 = vpack.c.b16 %v2340, %v2336
        %v4321 = vpack.c.b16 %v2341, %v2337
        %v4322 = vpack.c.b16 %v2342, %v2338
        %v4323 = vpack.c.b16 %v2343, %v2339
        %v4324 = vpack.c.b16 %v2348, %v2344
        %v4325 = vpack.c.b16 %v2349, %v2345
        %v4326 = vpack.c.b16 %v2350, %v2346
        %v4327 = vpack.c.b16 %v2351, %v2347
        %v4328 = vpack.c.b16 %v2356, %v2352
        %v4329 = vpack.c.b16 %v2357, %v2353
        %v4330 = vpack.c.b16 %v2358, %v2354
        %v4331 = vpack.c.b16 %v2359, %v2355
        %v4332 = vpack.c.b16 %v2364, %v2360
        %v4333 = vpack.c.b16 %v2365, %v2361
        %v4334 = vpack.c.b16 %v2366, %v2362
        %v4335 = vpack.c.b16 %v2367, %v2363
        %v4336 = vpack.c.b16 %v2372, %v2368
        %v4337 = vpack.c.b16 %v2373, %v2369
        %v4338 = vpack.c.b16 %v2374, %v2370
        %v4339 = vpack.c.b16 %v2375, %v2371
        %v4340 = vpack.c.b16 %v2380, %v2376
        %v4341 = vpack.c.b16 %v2381, %v2377
        %v4342 = vpack.c.b16 %v2382, %v2378
        %v4343 = vpack.c.b16 %v2383, %v2379
        %v4344 = vpack.c.b16 %v2388, %v2384
        %v4345 = vpack.c.b16 %v2389, %v2385
        %v4346 = vpack.c.b16 %v2390, %v2386
        %v4347 = vpack.c.b16 %v2391, %v2387
        %v4348 = vpack.c.b16 %v2396, %v2392
        %v4349 = vpack.c.b16 %v2397, %v2393
        %v4350 = vpack.c.b16 %v2398, %v2394
        %v4351 = vpack.c.b16 %v2399, %v2395
        %v4352 = vpack.c.b16 %v2404, %v2400
        %v4353 = vpack.c.b16 %v2405, %v2401
        %v4354 = vpack.c.b16 %v2406, %v2402
        %v4355 = vpack.c.b16 %v2407, %v2403
        %v4356 = vpack.c.b16 %v2412, %v2408
        %v4357 = vpack.c.b16 %v2413, %v2409
        %v4358 = vpack.c.b16 %v2414, %v2410
        %v4359 = vpack.c.b16 %v2415, %v2411
        %v4360 = vpack.c.b16 %v2420, %v2416
        %v4361 = vpack.c.b16 %v2421, %v2417
        %v4362 = vpack.c.b16 %v2422, %v2418
        %v4363 = vpack.c.b16 %v2423, %v2419
        %v4364 = vpack.c.b16 %v2428, %v2424
        %v4365 = vpack.c.b16 %v2429, %v2425
        %v4366 = vpack.c.b16 %v2430, %v2426
        %v4367 = vpack.c.b16 %v2431, %v2427
        %v4368 = vpack.c.b16 %v2436, %v2432
        %v4369 = vpack.c.b16 %v2437, %v2433
        %v4370 = vpack.c.b16 %v2438, %v2434
        %v4371 = vpack.c.b16 %v2439, %v2435
        %v4372 = vpack.c.b16 %v2444, %v2440
        %v4373 = vpack.c.b16 %v2445, %v2441
        %v4374 = vpack.c.b16 %v2446, %v2442
        %v4375 = vpack.c.b16 %v2447, %v2443
        %v4376 = vpack.c.b16 %v2452, %v2448
        %v4377 = vpack.c.b16 %v2453, %v2449
        %v4378 = vpack.c.b16 %v2454, %v2450
        %v4379 = vpack.c.b16 %v2455, %v2451
        %v4380 = vpack.c.b16 %v2460, %v2456
        %v4381 = vpack.c.b16 %v2461, %v2457
        %v4382 = vpack.c.b16 %v2462, %v2458
        %v4383 = vpack.c.b16 %v2463, %v2459
        %v4384 = vpack.c.b16 %v2468, %v2464
        %v4385 = vpack.c.b16 %v2469, %v2465
        %v4386 = vpack.c.b16 %v2470, %v2466
        %v4387 = vpack.c.b16 %v2471, %v2467
        %v4388 = vpack.c.b16 %v2476, %v2472
        %v4389 = vpack.c.b16 %v2477, %v2473
        %v4390 = vpack.c.b16 %v2478, %v2474
        %v4391 = vpack.c.b16 %v2479, %v2475
        %v4392 = vpack.c.b16 %v2484, %v2480
        %v4393 = vpack.c.b16 %v2485, %v2481
        %v4394 = vpack.c.b16 %v2486, %v2482
        %v4395 = vpack.c.b16 %v2487, %v2483
        %v4396 = vpack.c.b16 %v2492, %v2488
        %v4397 = vpack.c.b16 %v2493, %v2489
        %v4398 = vpack.c.b16 %v2494, %v2490
        %v4399 = vpack.c.b16 %v2495, %v2491
        %v4400 = vpack.c.b16 %v2500, %v2496
        %v4401 = vpack.c.b16 %v2501, %v2497
        %v4402 = vpack.c.b16 %v2502, %v2498
        %v4403 = vpack.c.b16 %v2503, %v2499
        %v4404 = vpack.c.b16 %v2508, %v2504
        %v4405 = vpack.c.b16 %v2509, %v2505
        %v4406 = vpack.c.b16 %v2510, %v2506
        %v4407 = vpack.c.b16 %v2511, %v2507
        %v4408 = vpack.c.b16 %v2516, %v2512
        %v4409 = vpack.c.b16 %v2517, %v2513
        %v4410 = vpack.c.b16 %v2518, %v2514
        %v4411 = vpack.c.b16 %v2519, %v2515
        %v4412 = vpack.c.b16 %v2524, %v2520
        %v4413 = vpack.c.b16 %v2525, %v2521
        %v4414 = vpack.c.b16 %v2526, %v2522
        %v4415 = vpack.c.b16 %v2527, %v2523
        %v4416 = vpack.c.b16 %v2532, %v2528
        %v4417 = vpack.c.b16 %v2533, %v2529
        %v4418 = vpack.c.b16 %v2534, %v2530
        %v4419 = vpack.c.b16 %v2535, %v2531
        %v4420 = vpack.c.b16 %v2540, %v2536
        %v4421 = vpack.c.b16 %v2541, %v2537
        %v4422 = vpack.c.b16 %v2542, %v2538
        %v4423 = vpack.c.b16 %v2543, %v2539
        %v4424 = vpack.c.b16 %v2548, %v2544
        %v4425 = vpack.c.b16 %v2549, %v2545
        %v4426 = vpack.c.b16 %v2550, %v2546
        %v4427 = vpack.c.b16 %v2551, %v2547
        %v4428 = vpack.c.b16 %v2556, %v2552
        %v4429 = vpack.c.b16 %v2557, %v2553
        %v4430 = vpack.c.b16 %v2558, %v2554
        %v4431 = vpack.c.b16 %v2559, %v2555
        %v4432 = vpack.c.b16 %v2564, %v2560
        %v4433 = vpack.c.b16 %v2565, %v2561
        %v4434 = vpack.c.b16 %v2566, %v2562
        %v4435 = vpack.c.b16 %v2567, %v2563
        %v4436 = vpack.c.b16 %v2572, %v2568
        %v4437 = vpack.c.b16 %v2573, %v2569
        %v4438 = vpack.c.b16 %v2574, %v2570
        %v4439 = vpack.c.b16 %v2575, %v2571
        %v4440 = vpack.c.b16 %v2580, %v2576
        %v4441 = vpack.c.b16 %v2581, %v2577
        %v4442 = vpack.c.b16 %v2582, %v2578
        %v4443 = vpack.c.b16 %v2583, %v2579
        %v4444 = vpack.c.b16 %v2588, %v2584
        %v4445 = vpack.c.b16 %v2589, %v2585
        %v4446 = vpack.c.b16 %v2590, %v2586
        %v4447 = vpack.c.b16 %v2591, %v2587
        %v4448 = vpack.c.b16 %v2596, %v2592
        %v4449 = vpack.c.b16 %v2597, %v2593
        %v4450 = vpack.c.b16 %v2598, %v2594
        %v4451 = vpack.c.b16 %v2599, %v2595
        %v4452 = vpack.c.b16 %v2604, %v2600
        %v4453 = vpack.c.b16 %v2605, %v2601
        %v4454 = vpack.c.b16 %v2606, %v2602
        %v4455 = vpack.c.b16 %v2607, %v2603
        %v4456 = vpack.c.b16 %v2612, %v2608
        %v4457 = vpack.c.b16 %v2613, %v2609
        %v4458 = vpack.c.b16 %v2614, %v2610
        %v4459 = vpack.c.b16 %v2615, %v2611
        %v4460 = vpack.c.b16 %v2620, %v2616
        %v4461 = vpack.c.b16 %v2621, %v2617
        %v4462 = vpack.c.b16 %v2622, %v2618
        %v4463 = vpack.c.b16 %v2623, %v2619
        %v4464 = vpack.c.b16 %v2628, %v2624
        %v4465 = vpack.c.b16 %v2629, %v2625
        %v4466 = vpack.c.b16 %v2630, %v2626
        %v4467 = vpack.c.b16 %v2631, %v2627
        %v4468 = vpack.c.b16 %v2636, %v2632
        %v4469 = vpack.c.b16 %v2637, %v2633
        %v4470 = vpack.c.b16 %v2638, %v2634
        %v4471 = vpack.c.b16 %v2639, %v2635
        %v4472 = vpack.c.b16 %v2644, %v2640
        %v4473 = vpack.c.b16 %v2645, %v2641
        %v4474 = vpack.c.b16 %v2646, %v2642
        %v4475 = vpack.c.b16 %v2647, %v2643
        %v4476 = vpack.c.b16 %v2652, %v2648
        %v4477 = vpack.c.b16 %v2653, %v2649
        %v4478 = vpack.c.b16 %v2654, %v2650
        %v4479 = vpack.c.b16 %v2655, %v2651
        %v4480 = vpack.c.b16 %v2660, %v2656
        %v4481 = vpack.c.b16 %v2661, %v2657
        %v4482 = vpack.c.b16 %v2662, %v2658
        %v4483 = vpack.c.b16 %v2663, %v2659
        %v4484 = vpack.c.b16 %v2668, %v2664
        %v4485 = vpack.c.b16 %v2669, %v2665
        %v4486 = vpack.c.b16 %v2670, %v2666
        %v4487 = vpack.c.b16 %v2671, %v2667
        %v4488 = vpack.c.b16 %v2676, %v2672
        %v4489 = vpack.c.b16 %v2677, %v2673
        %v4490 = vpack.c.b16 %v2678, %v2674
        %v4491 = vpack.c.b16 %v2679, %v2675
        %v4492 = vpack.c.b16 %v2684, %v2680
        %v4493 = vpack.c.b16 %v2685, %v2681
        %v4494 = vpack.c.b16 %v2686, %v2682
        %v4495 = vpack.c.b16 %v2687, %v2683
        %v4496 = vpack.c.b16 %v2692, %v2688
        %v4497 = vpack.c.b16 %v2693, %v2689
        %v4498 = vpack.c.b16 %v2694, %v2690
        %v4499 = vpack.c.b16 %v2695, %v2691
        %v4500 = vpack.c.b16 %v2700, %v2696
        %v4501 = vpack.c.b16 %v2701, %v2697
        %v4502 = vpack.c.b16 %v2702, %v2698
        %v4503 = vpack.c.b16 %v2703, %v2699
        %v4504 = vpack.c.b16 %v2708, %v2704
        %v4505 = vpack.c.b16 %v2709, %v2705
        %v4506 = vpack.c.b16 %v2710, %v2706
        %v4507 = vpack.c.b16 %v2711, %v2707
        %v4508 = vpack.c.b16 %v2716, %v2712
        %v4509 = vpack.c.b16 %v2717, %v2713
        %v4510 = vpack.c.b16 %v2718, %v2714
        %v4511 = vpack.c.b16 %v2719, %v2715
        %v4512 = vpack.c.b16 %v2724, %v2720
        %v4513 = vpack.c.b16 %v2725, %v2721
        %v4514 = vpack.c.b16 %v2726, %v2722
        %v4515 = vpack.c.b16 %v2727, %v2723
        %v4516 = vpack.c.b16 %v2732, %v2728
        %v4517 = vpack.c.b16 %v2733, %v2729
        %v4518 = vpack.c.b16 %v2734, %v2730
        %v4519 = vpack.c.b16 %v2735, %v2731
        %v4520 = vpack.c.b16 %v2740, %v2736
        %v4521 = vpack.c.b16 %v2741, %v2737
        %v4522 = vpack.c.b16 %v2742, %v2738
        %v4523 = vpack.c.b16 %v2743, %v2739
        %v4524 = vpack.c.b16 %v2748, %v2744
        %v4525 = vpack.c.b16 %v2749, %v2745
        %v4526 = vpack.c.b16 %v2750, %v2746
        %v4527 = vpack.c.b16 %v2751, %v2747
        %v4528 = vpack.c.b16 %v2756, %v2752
        %v4529 = vpack.c.b16 %v2757, %v2753
        %v4530 = vpack.c.b16 %v2758, %v2754
        %v4531 = vpack.c.b16 %v2759, %v2755
        %v4532 = vpack.c.b16 %v2764, %v2760
        %v4533 = vpack.c.b16 %v2765, %v2761
        %v4534 = vpack.c.b16 %v2766, %v2762
        %v4535 = vpack.c.b16 %v2767, %v2763
        %v4536 = vpack.c.b16 %v2772, %v2768
        %v4537 = vpack.c.b16 %v2773, %v2769
        %v4538 = vpack.c.b16 %v2774, %v2770
        %v4539 = vpack.c.b16 %v2775, %v2771
        %v4540 = vpack.c.b16 %v2780, %v2776
        %v4541 = vpack.c.b16 %v2781, %v2777
        %v4542 = vpack.c.b16 %v2782, %v2778
        %v4543 = vpack.c.b16 %v2783, %v2779
        %v4544 = vpack.c.b16 %v2788, %v2784
        %v4545 = vpack.c.b16 %v2789, %v2785
        %v4546 = vpack.c.b16 %v2790, %v2786
        %v4547 = vpack.c.b16 %v2791, %v2787
        %v4548 = vpack.c.b16 %v2796, %v2792
        %v4549 = vpack.c.b16 %v2797, %v2793
        %v4550 = vpack.c.b16 %v2798, %v2794
        %v4551 = vpack.c.b16 %v2799, %v2795
        %v4552 = vpack.c.b16 %v2804, %v2800
        %v4553 = vpack.c.b16 %v2805, %v2801
        %v4554 = vpack.c.b16 %v2806, %v2802
        %v4555 = vpack.c.b16 %v2807, %v2803
        %v4556 = vpack.c.b16 %v2812, %v2808
        %v4557 = vpack.c.b16 %v2813, %v2809
        %v4558 = vpack.c.b16 %v2814, %v2810
        %v4559 = vpack.c.b16 %v2815, %v2811
        %v4560 = vpack.c.b16 %v2820, %v2816
        %v4561 = vpack.c.b16 %v2821, %v2817
        %v4562 = vpack.c.b16 %v2822, %v2818
        %v4563 = vpack.c.b16 %v2823, %v2819
        %v4564 = vpack.c.b16 %v2828, %v2824
        %v4565 = vpack.c.b16 %v2829, %v2825
        %v4566 = vpack.c.b16 %v2830, %v2826
        %v4567 = vpack.c.b16 %v2831, %v2827
        %v4568 = vpack.c.b16 %v2836, %v2832
        %v4569 = vpack.c.b16 %v2837, %v2833
        %v4570 = vpack.c.b16 %v2838, %v2834
        %v4571 = vpack.c.b16 %v2839, %v2835
        %v4572 = vpack.c.b16 %v2844, %v2840
        %v4573 = vpack.c.b16 %v2845, %v2841
        %v4574 = vpack.c.b16 %v2846, %v2842
        %v4575 = vpack.c.b16 %v2847, %v2843
        %v4576 = vpack.c.b16 %v2852, %v2848
        %v4577 = vpack.c.b16 %v2853, %v2849
        %v4578 = vpack.c.b16 %v2854, %v2850
        %v4579 = vpack.c.b16 %v2855, %v2851
        %v4580 = vpack.c.b16 %v2860, %v2856
        %v4581 = vpack.c.b16 %v2861, %v2857
        %v4582 = vpack.c.b16 %v2862, %v2858
        %v4583 = vpack.c.b16 %v2863, %v2859
        %v4584 = vpack.c.b16 %v2868, %v2864
        %v4585 = vpack.c.b16 %v2869, %v2865
        %v4586 = vpack.c.b16 %v2870, %v2866
        %v4587 = vpack.c.b16 %v2871, %v2867
        %v4588 = vpack.c.b16 %v2876, %v2872
        %v4589 = vpack.c.b16 %v2877, %v2873
        %v4590 = vpack.c.b16 %v2878, %v2874
        %v4591 = vpack.c.b16 %v2879, %v2875
        %v4592 = vpack.c.b16 %v2884, %v2880
        %v4593 = vpack.c.b16 %v2885, %v2881
        %v4594 = vpack.c.b16 %v2886, %v2882
        %v4595 = vpack.c.b16 %v2887, %v2883
        %v4596 = vpack.c.b16 %v2892, %v2888
        %v4597 = vpack.c.b16 %v2893, %v2889
        %v4598 = vpack.c.b16 %v2894, %v2890
        %v4599 = vpack.c.b16 %v2895, %v2891
        %v4600 = vpack.c.b16 %v2900, %v2896
        %v4601 = vpack.c.b16 %v2901, %v2897
        %v4602 = vpack.c.b16 %v2902, %v2898
        %v4603 = vpack.c.b16 %v2903, %v2899
        %v4604 = vpack.c.b16 %v2908, %v2904
        %v4605 = vpack.c.b16 %v2909, %v2905
        %v4606 = vpack.c.b16 %v2910, %v2906
        %v4607 = vpack.c.b16 %v2911, %v2907
        %v4608 = vpack.c.b16 %v2916, %v2912
        %v4609 = vpack.c.b16 %v2917, %v2913
        %v4610 = vpack.c.b16 %v2918, %v2914
        %v4611 = vpack.c.b16 %v2919, %v2915
        %v4612 = vpack.c.b16 %v2924, %v2920
        %v4613 = vpack.c.b16 %v2925, %v2921
        %v4614 = vpack.c.b16 %v2926, %v2922
        %v4615 = vpack.c.b16 %v2927, %v2923
        %v4616 = vpack.c.b16 %v2932, %v2928
        %v4617 = vpack.c.b16 %v2933, %v2929
        %v4618 = vpack.c.b16 %v2934, %v2930
        %v4619 = vpack.c.b16 %v2935, %v2931
        %v4620 = vpack.c.b16 %v2940, %v2936
        %v4621 = vpack.c.b16 %v2941, %v2937
        %v4622 = vpack.c.b16 %v2942, %v2938
        %v4623 = vpack.c.b16 %v2943, %v2939
        %v4624 = vpack.c.b16 %v2948, %v2944
        %v4625 = vpack.c.b16 %v2949, %v2945
        %v4626 = vpack.c.b16 %v2950, %v2946
        %v4627 = vpack.c.b16 %v2951, %v2947
        %v4628 = vpack.c.b16 %v2956, %v2952
        %v4629 = vpack.c.b16 %v2957, %v2953
        %v4630 = vpack.c.b16 %v2958, %v2954
        %v4631 = vpack.c.b16 %v2959, %v2955
        %v4632 = vpack.c.b16 %v2964, %v2960
        %v4633 = vpack.c.b16 %v2965, %v2961
        %v4634 = vpack.c.b16 %v2966, %v2962
        %v4635 = vpack.c.b16 %v2967, %v2963
        %v4636 = vpack.c.b16 %v2972, %v2968
        %v4637 = vpack.c.b16 %v2973, %v2969
        %v4638 = vpack.c.b16 %v2974, %v2970
        %v4639 = vpack.c.b16 %v2975, %v2971
        %v4640 = vpack.c.b16 %v2980, %v2976
        %v4641 = vpack.c.b16 %v2981, %v2977
        %v4642 = vpack.c.b16 %v2982, %v2978
        %v4643 = vpack.c.b16 %v2983, %v2979
        %v4644 = vpack.c.b16 %v2988, %v2984
        %v4645 = vpack.c.b16 %v2989, %v2985
        %v4646 = vpack.c.b16 %v2990, %v2986
        %v4647 = vpack.c.b16 %v2991, %v2987
        %v4648 = vpack.c.b16 %v2996, %v2992
        %v4649 = vpack.c.b16 %v2997, %v2993
        %v4650 = vpack.c.b16 %v2998, %v2994
        %v4651 = vpack.c.b16 %v2999, %v2995
        %v4652 = vpack.c.b16 %v3004, %v3000
        %v4653 = vpack.c.b16 %v3005, %v3001
        %v4654 = vpack.c.b16 %v3006, %v3002
        %v4655 = vpack.c.b16 %v3007, %v3003
        %v4656 = vpack.c.b16 %v3012, %v3008
        %v4657 = vpack.c.b16 %v3013, %v3009
        %v4658 = vpack.c.b16 %v3014, %v3010
        %v4659 = vpack.c.b16 %v3015, %v3011
        %v4660 = vpack.c.b16 %v3020, %v3016
        %v4661 = vpack.c.b16 %v3021, %v3017
        %v4662 = vpack.c.b16 %v3022, %v3018
        %v4663 = vpack.c.b16 %v3023, %v3019
        %v4664 = vpack.c.b16 %v3028, %v3024
        %v4665 = vpack.c.b16 %v3029, %v3025
        %v4666 = vpack.c.b16 %v3030, %v3026
        %v4667 = vpack.c.b16 %v3031, %v3027
        %v4668 = vpack.c.b16 %v3036, %v3032
        %v4669 = vpack.c.b16 %v3037, %v3033
        %v4670 = vpack.c.b16 %v3038, %v3034
        %v4671 = vpack.c.b16 %v3039, %v3035
        %v4672 = vpack.c.b16 %v3044, %v3040
        %v4673 = vpack.c.b16 %v3045, %v3041
        %v4674 = vpack.c.b16 %v3046, %v3042
        %v4675 = vpack.c.b16 %v3047, %v3043
        %v4676 = vpack.c.b16 %v3052, %v3048
        %v4677 = vpack.c.b16 %v3053, %v3049
        %v4678 = vpack.c.b16 %v3054, %v3050
        %v4679 = vpack.c.b16 %v3055, %v3051
        %v4680 = vpack.c.b16 %v3060, %v3056
        %v4681 = vpack.c.b16 %v3061, %v3057
        %v4682 = vpack.c.b16 %v3062, %v3058
        %v4683 = vpack.c.b16 %v3063, %v3059
        %v4684 = vpack.c.b16 %v3068, %v3064
        %v4685 = vpack.c.b16 %v3069, %v3065
        %v4686 = vpack.c.b16 %v3070, %v3066
        %v4687 = vpack.c.b16 %v3071, %v3067
        %v4688 = vpack.c.b16 %v3076, %v3072
        %v4689 = vpack.c.b16 %v3077, %v3073
        %v4690 = vpack.c.b16 %v3078, %v3074
        %v4691 = vpack.c.b16 %v3079, %v3075
        %v4692 = vpack.c.b16 %v3084, %v3080
        %v4693 = vpack.c.b16 %v3085, %v3081
        %v4694 = vpack.c.b16 %v3086, %v3082
        %v4695 = vpack.c.b16 %v3087, %v3083
        %v4696 = vpack.c.b16 %v3092, %v3088
        %v4697 = vpack.c.b16 %v3093, %v3089
        %v4698 = vpack.c.b16 %v3094, %v3090
        %v4699 = vpack.c.b16 %v3095, %v3091
        %v4700 = vpack.c.b16 %v3100, %v3096
        %v4701 = vpack.c.b16 %v3101, %v3097
        %v4702 = vpack.c.b16 %v3102, %v3098
        %v4703 = vpack.c.b16 %v3103, %v3099
        %v4704 = vpack.c.b16 %v3108, %v3104
        %v4705 = vpack.c.b16 %v3109, %v3105
        %v4706 = vpack.c.b16 %v3110, %v3106
        %v4707 = vpack.c.b16 %v3111, %v3107
        %v4708 = vpack.c.b16 %v3116, %v3112
        %v4709 = vpack.c.b16 %v3117, %v3113
        %v4710 = vpack.c.b16 %v3118, %v3114
        %v4711 = vpack.c.b16 %v3119, %v3115
        %v4712 = vpack.c.b16 %v3124, %v3120
        %v4713 = vpack.c.b16 %v3125, %v3121
        %v4714 = vpack.c.b16 %v3126, %v3122
        %v4715 = vpack.c.b16 %v3127, %v3123
        %v4716 = vpack.c.b16 %v3132, %v3128
        %v4717 = vpack.c.b16 %v3133, %v3129
        %v4718 = vpack.c.b16 %v3134, %v3130
        %v4719 = vpack.c.b16 %v3135, %v3131
        %v4720 = vpack.c.b16 %v3140, %v3136
        %v4721 = vpack.c.b16 %v3141, %v3137
        %v4722 = vpack.c.b16 %v3142, %v3138
        %v4723 = vpack.c.b16 %v3143, %v3139
        %v4724 = vpack.c.b16 %v3148, %v3144
        %v4725 = vpack.c.b16 %v3149, %v3145
        %v4726 = vpack.c.b16 %v3150, %v3146
        %v4727 = vpack.c.b16 %v3151, %v3147
        %v4728 = vpack.c.b16 %v3156, %v3152
        %v4729 = vpack.c.b16 %v3157, %v3153
        %v4730 = vpack.c.b16 %v3158, %v3154
        %v4731 = vpack.c.b16 %v3159, %v3155
        %v4732 = vpack.c.b16 %v3164, %v3160
        %v4733 = vpack.c.b16 %v3165, %v3161
        %v4734 = vpack.c.b16 %v3166, %v3162
        %v4735 = vpack.c.b16 %v3167, %v3163
        %v4736 = vpack.c.b16 %v3172, %v3168
        %v4737 = vpack.c.b16 %v3173, %v3169
        %v4738 = vpack.c.b16 %v3174, %v3170
        %v4739 = vpack.c.b16 %v3175, %v3171
        %v4740 = vpack.c.b16 %v3180, %v3176
        %v4741 = vpack.c.b16 %v3181, %v3177
        %v4742 = vpack.c.b16 %v3182, %v3178
        %v4743 = vpack.c.b16 %v3183, %v3179
        %v4744 = vpack.c.b16 %v3188, %v3184
        %v4745 = vpack.c.b16 %v3189, %v3185
        %v4746 = vpack.c.b16 %v3190, %v3186
        %v4747 = vpack.c.b16 %v3191, %v3187
        %v4748 = vpack.c.b16 %v3196, %v3192
        %v4749 = vpack.c.b16 %v3197, %v3193
        %v4750 = vpack.c.b16 %v3198, %v3194
        %v4751 = vpack.c.b16 %v3199, %v3195
        %v4752 = vpack.c.b16 %v3204, %v3200
        %v4753 = vpack.c.b16 %v3205, %v3201
        %v4754 = vpack.c.b16 %v3206, %v3202
        %v4755 = vpack.c.b16 %v3207, %v3203
        %v4756 = vpack.c.b16 %v3212, %v3208
        %v4757 = vpack.c.b16 %v3213, %v3209
        %v4758 = vpack.c.b16 %v3214, %v3210
        %v4759 = vpack.c.b16 %v3215, %v3211
        %v4760 = vpack.c.b16 %v3220, %v3216
        %v4761 = vpack.c.b16 %v3221, %v3217
        %v4762 = vpack.c.b16 %v3222, %v3218
        %v4763 = vpack.c.b16 %v3223, %v3219
        %v4764 = vpack.c.b16 %v3228, %v3224
        %v4765 = vpack.c.b16 %v3229, %v3225
        %v4766 = vpack.c.b16 %v3230, %v3226
        %v4767 = vpack.c.b16 %v3231, %v3227
        %v4768 = vpack.c.b16 %v3236, %v3232
        %v4769 = vpack.c.b16 %v3237, %v3233
        %v4770 = vpack.c.b16 %v3238, %v3234
        %v4771 = vpack.c.b16 %v3239, %v3235
        %v4772 = vpack.c.b16 %v3244, %v3240
        %v4773 = vpack.c.b16 %v3245, %v3241
        %v4774 = vpack.c.b16 %v3246, %v3242
        %v4775 = vpack.c.b16 %v3247, %v3243
        %v4776 = vpack.c.b16 %v3252, %v3248
        %v4777 = vpack.c.b16 %v3253, %v3249
        %v4778 = vpack.c.b16 %v3254, %v3250
        %v4779 = vpack.c.b16 %v3255, %v3251
        %v4780 = vpack.c.b16 %v3260, %v3256
        %v4781 = vpack.c.b16 %v3261, %v3257
        %v4782 = vpack.c.b16 %v3262, %v3258
        %v4783 = vpack.c.b16 %v3263, %v3259
        %v4784 = vpack.c.b16 %v3268, %v3264
        %v4785 = vpack.c.b16 %v3269, %v3265
        %v4786 = vpack.c.b16 %v3270, %v3266
        %v4787 = vpack.c.b16 %v3271, %v3267
        %v4788 = vpack.c.b16 %v3276, %v3272
        %v4789 = vpack.c.b16 %v3277, %v3273
        %v4790 = vpack.c.b16 %v3278, %v3274
        %v4791 = vpack.c.b16 %v3279, %v3275
        %v4792 = vpack.c.b16 %v3284, %v3280
        %v4793 = vpack.c.b16 %v3285, %v3281
        %v4794 = vpack.c.b16 %v3286, %v3282
        %v4795 = vpack.c.b16 %v3287, %v3283
        %v4796 = vpack.c.b16 %v3292, %v3288
        %v4797 = vpack.c.b16 %v3293, %v3289
        %v4798 = vpack.c.b16 %v3294, %v3290
        %v4799 = vpack.c.b16 %v3295, %v3291
        %v4800 = vpack.c.b16 %v3300, %v3296
        %v4801 = vpack.c.b16 %v3301, %v3297
        %v4802 = vpack.c.b16 %v3302, %v3298
        %v4803 = vpack.c.b16 %v3303, %v3299
        %v4804 = vpack.c.b16 %v3308, %v3304
        %v4805 = vpack.c.b16 %v3309, %v3305
        %v4806 = vpack.c.b16 %v3310, %v3306
        %v4807 = vpack.c.b16 %v3311, %v3307
        %v4808 = vpack.c.b16 %v3316, %v3312
        %v4809 = vpack.c.b16 %v3317, %v3313
        %v4810 = vpack.c.b16 %v3318, %v3314
        %v4811 = vpack.c.b16 %v3319, %v3315
        %v4812 = vpack.c.b16 %v3324, %v3320
        %v4813 = vpack.c.b16 %v3325, %v3321
        %v4814 = vpack.c.b16 %v3326, %v3322
        %v4815 = vpack.c.b16 %v3327, %v3323
        %v4816 = vpack.c.b16 %v3332, %v3328
        %v4817 = vpack.c.b16 %v3333, %v3329
        %v4818 = vpack.c.b16 %v3334, %v3330
        %v4819 = vpack.c.b16 %v3335, %v3331
        %v4820 = vpack.c.b16 %v3340, %v3336
        %v4821 = vpack.c.b16 %v3341, %v3337
        %v4822 = vpack.c.b16 %v3342, %v3338
        %v4823 = vpack.c.b16 %v3343, %v3339
        %v4824 = vpack.c.b16 %v3348, %v3344
        %v4825 = vpack.c.b16 %v3349, %v3345
        %v4826 = vpack.c.b16 %v3350, %v3346
        %v4827 = vpack.c.b16 %v3351, %v3347
        %v4828 = vpack.c.b16 %v3356, %v3352
        %v4829 = vpack.c.b16 %v3357, %v3353
        %v4830 = vpack.c.b16 %v3358, %v3354
        %v4831 = vpack.c.b16 %v3359, %v3355
        %v4832 = vpack.c.b16 %v3364, %v3360
        %v4833 = vpack.c.b16 %v3365, %v3361
        %v4834 = vpack.c.b16 %v3366, %v3362
        %v4835 = vpack.c.b16 %v3367, %v3363
        %v4836 = vpack.c.b16 %v3372, %v3368
        %v4837 = vpack.c.b16 %v3373, %v3369
        %v4838 = vpack.c.b16 %v3374, %v3370
        %v4839 = vpack.c.b16 %v3375, %v3371
        %v4840 = vpack.c.b16 %v3380, %v3376
        %v4841 = vpack.c.b16 %v3381, %v3377
        %v4842 = vpack.c.b16 %v3382, %v3378
        %v4843 = vpack.c.b16 %v3383, %v3379
        %v4844 = vpack.c.b16 %v3388, %v3384
        %v4845 = vpack.c.b16 %v3389, %v3385
        %v4846 = vpack.c.b16 %v3390, %v3386
        %v4847 = vpack.c.b16 %v3391, %v3387
        %v4848 = vpack.c.b16 %v3396, %v3392
        %v4849 = vpack.c.b16 %v3397, %v3393
        %v4850 = vpack.c.b16 %v3398, %v3394
        %v4851 = vpack.c.b16 %v3399, %v3395
        %v4852 = vpack.c.b16 %v3404, %v3400
        %v4853 = vpack.c.b16 %v3405, %v3401
        %v4854 = vpack.c.b16 %v3406, %v3402
        %v4855 = vpack.c.b16 %v3407, %v3403
        %v4856 = vpack.c.b16 %v3412, %v3408
        %v4857 = vpack.c.b16 %v3413, %v3409
        %v4858 = vpack.c.b16 %v3414, %v3410
        %v4859 = vpack.c.b16 %v3415, %v3411
        %v4860 = vpack.c.b16 %v3420, %v3416
        %v4861 = vpack.c.b16 %v3421, %v3417
        %v4862 = vpack.c.b16 %v3422, %v3418
        %v4863 = vpack.c.b16 %v3423, %v3419
        %v4864 = vpack.c.b16 %v3428, %v3424
        %v4865 = vpack.c.b16 %v3429, %v3425
        %v4866 = vpack.c.b16 %v3430, %v3426
        %v4867 = vpack.c.b16 %v3431, %v3427
        %v4868 = vpack.c.b16 %v3436, %v3432
        %v4869 = vpack.c.b16 %v3437, %v3433
        %v4870 = vpack.c.b16 %v3438, %v3434
        %v4871 = vpack.c.b16 %v3439, %v3435
        %v4872 = vpack.c.b16 %v3444, %v3440
        %v4873 = vpack.c.b16 %v3445, %v3441
        %v4874 = vpack.c.b16 %v3446, %v3442
        %v4875 = vpack.c.b16 %v3447, %v3443
        %v4876 = vpack.c.b16 %v3452, %v3448
        %v4877 = vpack.c.b16 %v3453, %v3449
        %v4878 = vpack.c.b16 %v3454, %v3450
        %v4879 = vpack.c.b16 %v3455, %v3451
        %v4880 = vpack.c.b16 %v3460, %v3456
        %v4881 = vpack.c.b16 %v3461, %v3457
        %v4882 = vpack.c.b16 %v3462, %v3458
        %v4883 = vpack.c.b16 %v3463, %v3459
        %v4884 = vpack.c.b16 %v3468, %v3464
        %v4885 = vpack.c.b16 %v3469, %v3465
        %v4886 = vpack.c.b16 %v3470, %v3466
        %v4887 = vpack.c.b16 %v3471, %v3467
        %v4888 = vpack.c.b16 %v3476, %v3472
        %v4889 = vpack.c.b16 %v3477, %v3473
        %v4890 = vpack.c.b16 %v3478, %v3474
        %v4891 = vpack.c.b16 %v3479, %v3475
        %v4892 = vpack.c.b16 %v3484, %v3480
        %v4893 = vpack.c.b16 %v3485, %v3481
        %v4894 = vpack.c.b16 %v3486, %v3482
        %v4895 = vpack.c.b16 %v3487, %v3483
        %v4896 = vpack.c.b16 %v3492, %v3488
        %v4897 = vpack.c.b16 %v3493, %v3489
        %v4898 = vpack.c.b16 %v3494, %v3490
        %v4899 = vpack.c.b16 %v3495, %v3491
        %v4900 = vpack.c.b16 %v3500, %v3496
        %v4901 = vpack.c.b16 %v3501, %v3497
        %v4902 = vpack.c.b16 %v3502, %v3498
        %v4903 = vpack.c.b16 %v3503, %v3499
        %v4904 = vpack.c.b16 %v3508, %v3504
        %v4905 = vpack.c.b16 %v3509, %v3505
        %v4906 = vpack.c.b16 %v3510, %v3506
        %v4907 = vpack.c.b16 %v3511, %v3507
        %v4908 = vpack.c.b16 %v3516, %v3512
        %v4909 = vpack.c.b16 %v3517, %v3513
        %v4910 = vpack.c.b16 %v3518, %v3514
        %v4911 = vpack.c.b16 %v3519, %v3515
        %v4912 = vpack.c.b16 %v3524, %v3520
        %v4913 = vpack.c.b16 %v3525, %v3521
        %v4914 = vpack.c.b16 %v3526, %v3522
        %v4915 = vpack.c.b16 %v3527, %v3523
        %v4916 = vpack.c.b16 %v3532, %v3528
        %v4917 = vpack.c.b16 %v3533, %v3529
        %v4918 = vpack.c.b16 %v3534, %v3530
        %v4919 = vpack.c.b16 %v3535, %v3531
        %v4920 = vpack.c.b16 %v3540, %v3536
        %v4921 = vpack.c.b16 %v3541, %v3537
        %v4922 = vpack.c.b16 %v3542, %v3538
        %v4923 = vpack.c.b16 %v3543, %v3539
        %v4924 = vpack.c.b16 %v3548, %v3544
        %v4925 = vpack.c.b16 %v3549, %v3545
        %v4926 = vpack.c.b16 %v3550, %v3546
        %v4927 = vpack.c.b16 %v3551, %v3547
        %v4928 = vpack.c.b16 %v3556, %v3552
        %v4929 = vpack.c.b16 %v3557, %v3553
        %v4930 = vpack.c.b16 %v3558, %v3554
        %v4931 = vpack.c.b16 %v3559, %v3555
        %v4932 = vpack.c.b16 %v3564, %v3560
        %v4933 = vpack.c.b16 %v3565, %v3561
        %v4934 = vpack.c.b16 %v3566, %v3562
        %v4935 = vpack.c.b16 %v3567, %v3563
        %v4936 = vpack.c.b16 %v3572, %v3568
        %v4937 = vpack.c.b16 %v3573, %v3569
        %v4938 = vpack.c.b16 %v3574, %v3570
        %v4939 = vpack.c.b16 %v3575, %v3571
        %v4940 = vpack.c.b16 %v3580, %v3576
        %v4941 = vpack.c.b16 %v3581, %v3577
        %v4942 = vpack.c.b16 %v3582, %v3578
        %v4943 = vpack.c.b16 %v3583, %v3579
        %v4944 = vpack.c.b16 %v3588, %v3584
        %v4945 = vpack.c.b16 %v3589, %v3585
        %v4946 = vpack.c.b16 %v3590, %v3586
        %v4947 = vpack.c.b16 %v3591, %v3587
        %v4948 = vpack.c.b16 %v3596, %v3592
        %v4949 = vpack.c.b16 %v3597, %v3593
        %v4950 = vpack.c.b16 %v3598, %v3594
        %v4951 = vpack.c.b16 %v3599, %v3595
        %v4952 = vpack.c.b16 %v3604, %v3600
        %v4953 = vpack.c.b16 %v3605, %v3601
        %v4954 = vpack.c.b16 %v3606, %v3602
        %v4955 = vpack.c.b16 %v3607, %v3603
        %v4956 = vpack.c.b16 %v3612, %v3608
        %v4957 = vpack.c.b16 %v3613, %v3609
        %v4958 = vpack.c.b16 %v3614, %v3610
        %v4959 = vpack.c.b16 %v3615, %v3611
        %v4960 = vpack.c.b16 %v3620, %v3616
        %v4961 = vpack.c.b16 %v3621, %v3617
        %v4962 = vpack.c.b16 %v3622, %v3618
        %v4963 = vpack.c.b16 %v3623, %v3619
        %v4964 = vpack.c.b16 %v3628, %v3624
        %v4965 = vpack.c.b16 %v3629, %v3625
        %v4966 = vpack.c.b16 %v3630, %v3626
        %v4967 = vpack.c.b16 %v3631, %v3627
        %v4968 = vpack.c.b16 %v3636, %v3632
        %v4969 = vpack.c.b16 %v3637, %v3633
        %v4970 = vpack.c.b16 %v3638, %v3634
        %v4971 = vpack.c.b16 %v3639, %v3635
        %v4972 = vpack.c.b16 %v3644, %v3640
        %v4973 = vpack.c.b16 %v3645, %v3641
        %v4974 = vpack.c.b16 %v3646, %v3642
        %v4975 = vpack.c.b16 %v3647, %v3643
        %v4976 = vpack.c.b16 %v3652, %v3648
        %v4977 = vpack.c.b16 %v3653, %v3649
        %v4978 = vpack.c.b16 %v3654, %v3650
        %v4979 = vpack.c.b16 %v3655, %v3651
        %v4980 = vpack.c.b16 %v3660, %v3656
        %v4981 = vpack.c.b16 %v3661, %v3657
        %v4982 = vpack.c.b16 %v3662, %v3658
        %v4983 = vpack.c.b16 %v3663, %v3659
        %v4984 = vpack.c.b16 %v3668, %v3664
        %v4985 = vpack.c.b16 %v3669, %v3665
        %v4986 = vpack.c.b16 %v3670, %v3666
        %v4987 = vpack.c.b16 %v3671, %v3667
        %v4988 = vpack.c.b16 %v3676, %v3672
        %v4989 = vpack.c.b16 %v3677, %v3673
        %v4990 = vpack.c.b16 %v3678, %v3674
        %v4991 = vpack.c.b16 %v3679, %v3675
        %v4992 = vpack.c.b16 %v3684, %v3680
        %v4993 = vpack.c.b16 %v3685, %v3681
        %v4994 = vpack.c.b16 %v3686, %v3682
        %v4995 = vpack.c.b16 %v3687, %v3683
        %v4996 = vpack.c.b16 %v3692, %v3688
        %v4997 = vpack.c.b16 %v3693, %v3689
        %v4998 = vpack.c.b16 %v3694, %v3690
        %v4999 = vpack.c.b16 %v3695, %v3691
        %v5000 = vpack.c.b16 %v3700, %v3696
        %v5001 = vpack.c.b16 %v3701, %v3697
        %v5002 = vpack.c.b16 %v3702, %v3698
        %v5003 = vpack.c.b16 %v3703, %v3699
        %v5004 = vpack.c.b16 %v3708, %v3704
        %v5005 = vpack.c.b16 %v3709, %v3705
        %v5006 = vpack.c.b16 %v3710, %v3706
        %v5007 = vpack.c.b16 %v3711, %v3707
        %v5008 = vpack.c.b16 %v3716, %v3712
        %v5009 = vpack.c.b16 %v3717, %v3713
        %v5010 = vpack.c.b16 %v3718, %v3714
        %v5011 = vpack.c.b16 %v3719, %v3715
        %v5012 = vpack.c.b16 %v3724, %v3720
        %v5013 = vpack.c.b16 %v3725, %v3721
        %v5014 = vpack.c.b16 %v3726, %v3722
        %v5015 = vpack.c.b16 %v3727, %v3723
        %v5016 = vpack.c.b16 %v3732, %v3728
        %v5017 = vpack.c.b16 %v3733, %v3729
        %v5018 = vpack.c.b16 %v3734, %v3730
        %v5019 = vpack.c.b16 %v3735, %v3731
        %v5020 = vpack.c.b16 %v3740, %v3736
        %v5021 = vpack.c.b16 %v3741, %v3737
        %v5022 = vpack.c.b16 %v3742, %v3738
        %v5023 = vpack.c.b16 %v3743, %v3739
        %v5024 = vpack.c.b16 %v3748, %v3744
        %v5025 = vpack.c.b16 %v3749, %v3745
        %v5026 = vpack.c.b16 %v3750, %v3746
        %v5027 = vpack.c.b16 %v3751, %v3747
        %v5028 = vpack.c.b16 %v3756, %v3752
        %v5029 = vpack.c.b16 %v3757, %v3753
        %v5030 = vpack.c.b16 %v3758, %v3754
        %v5031 = vpack.c.b16 %v3759, %v3755
        %v5032 = vpack.c.b16 %v3764, %v3760
        %v5033 = vpack.c.b16 %v3765, %v3761
        %v5034 = vpack.c.b16 %v3766, %v3762
        %v5035 = vpack.c.b16 %v3767, %v3763
        %v5036 = vpack.c.b16 %v3772, %v3768
        %v5037 = vpack.c.b16 %v3773, %v3769
        %v5038 = vpack.c.b16 %v3774, %v3770
        %v5039 = vpack.c.b16 %v3775, %v3771
        %v5040 = vpack.c.b16 %v3780, %v3776
        %v5041 = vpack.c.b16 %v3781, %v3777
        %v5042 = vpack.c.b16 %v3782, %v3778
        %v5043 = vpack.c.b16 %v3783, %v3779
        %v5044 = vpack.c.b16 %v3788, %v3784
        %v5045 = vpack.c.b16 %v3789, %v3785
        %v5046 = vpack.c.b16 %v3790, %v3786
        %v5047 = vpack.c.b16 %v3791, %v3787
        %v5048 = vpack.c.b16 %v3796, %v3792
        %v5049 = vpack.c.b16 %v3797, %v3793
        %v5050 = vpack.c.b16 %v3798, %v3794
        %v5051 = vpack.c.b16 %v3799, %v3795
        %v5052 = vpack.c.b16 %v3804, %v3800
        %v5053 = vpack.c.b16 %v3805, %v3801
        %v5054 = vpack.c.b16 %v3806, %v3802
        %v5055 = vpack.c.b16 %v3807, %v3803
        %v5056 = vpack.c.b16 %v3812, %v3808
        %v5057 = vpack.c.b16 %v3813, %v3809
        %v5058 = vpack.c.b16 %v3814, %v3810
        %v5059 = vpack.c.b16 %v3815, %v3811
        %v5060 = vpack.c.b16 %v3820, %v3816
        %v5061 = vpack.c.b16 %v3821, %v3817
        %v5062 = vpack.c.b16 %v3822, %v3818
        %v5063 = vpack.c.b16 %v3823, %v3819
        %v5064 = vpack.c.b16 %v3828, %v3824
        %v5065 = vpack.c.b16 %v3829, %v3825
        %v5066 = vpack.c.b16 %v3830, %v3826
        %v5067 = vpack.c.b16 %v3831, %v3827
        %v5068 = vpack.c.b16 %v3836, %v3832
        %v5069 = vpack.c.b16 %v3837, %v3833
        %v5070 = vpack.c.b16 %v3838, %v3834
        %v5071 = vpack.c.b16 %v3839, %v3835
        %v5072 = vpack.c.b16 %v3844, %v3840
        %v5073 = vpack.c.b16 %v3845, %v3841
        %v5074 = vpack.c.b16 %v3846, %v3842
        %v5075 = vpack.c.b16 %v3847, %v3843
        %v5076 = vpack.c.b16 %v3852, %v3848
        %v5077 = vpack.c.b16 %v3853, %v3849
        %v5078 = vpack.c.b16 %v3854, %v3850
        %v5079 = vpack.c.b16 %v3855, %v3851
        %v5080 = vpack.c.b16 %v3860, %v3856
        %v5081 = vpack.c.b16 %v3861, %v3857
        %v5082 = vpack.c.b16 %v3862, %v3858
        %v5083 = vpack.c.b16 %v3863, %v3859
        %v5084 = vpack.c.b16 %v3868, %v3864
        %v5085 = vpack.c.b16 %v3869, %v3865
        %v5086 = vpack.c.b16 %v3870, %v3866
        %v5087 = vpack.c.b16 %v3871, %v3867
        %v5088 = vpack.c.b16 %v3876, %v3872
        %v5089 = vpack.c.b16 %v3877, %v3873
        %v5090 = vpack.c.b16 %v3878, %v3874
        %v5091 = vpack.c.b16 %v3879, %v3875
        %v5092 = vpack.c.b16 %v3884, %v3880
        %v5093 = vpack.c.b16 %v3885, %v3881
        %v5094 = vpack.c.b16 %v3886, %v3882
        %v5095 = vpack.c.b16 %v3887, %v3883
        %v5096 = vpack.c.b16 %v3892, %v3888
        %v5097 = vpack.c.b16 %v3893, %v3889
        %v5098 = vpack.c.b16 %v3894, %v3890
        %v5099 = vpack.c.b16 %v3895, %v3891
        %v5100 = vpack.c.b16 %v3900, %v3896
        %v5101 = vpack.c.b16 %v3901, %v3897
        %v5102 = vpack.c.b16 %v3902, %v3898
        %v5103 = vpack.c.b16 %v3903, %v3899
        %v5104 = vpack.c.b16 %v3908, %v3904
        %v5105 = vpack.c.b16 %v3909, %v3905
        %v5106 = vpack.c.b16 %v3910, %v3906
        %v5107 = vpack.c.b16 %v3911, %v3907
        %v5108 = vpack.c.b16 %v3916, %v3912
        %v5109 = vpack.c.b16 %v3917, %v3913
        %v5110 = vpack.c.b16 %v3918, %v3914
        %v5111 = vpack.c.b16 %v3919, %v3915
        %v5112 = vpack.c.b16 %v3924, %v3920
        %v5113 = vpack.c.b16 %v3925, %v3921
        %v5114 = vpack.c.b16 %v3926, %v3922
        %v5115 = vpack.c.b16 %v3927, %v3923
        %v5116 = vpack.c.b16 %v3932, %v3928
        %v5117 = vpack.c.b16 %v3933, %v3929
        %v5118 = vpack.c.b16 %v3934, %v3930
        %v5119 = vpack.c.b16 %v3935, %v3931
        %v5120 = vpack.c.b16 %v3940, %v3936
        %v5121 = vpack.c.b16 %v3941, %v3937
        %v5122 = vpack.c.b16 %v3942, %v3938
        %v5123 = vpack.c.b16 %v3943, %v3939
        %v5124 = vpack.c.b16 %v3948, %v3944
        %v5125 = vpack.c.b16 %v3949, %v3945
        %v5126 = vpack.c.b16 %v3950, %v3946
        %v5127 = vpack.c.b16 %v3951, %v3947
        %v5128 = vpack.c.b16 %v3956, %v3952
        %v5129 = vpack.c.b16 %v3957, %v3953
        %v5130 = vpack.c.b16 %v3958, %v3954
        %v5131 = vpack.c.b16 %v3959, %v3955
        %v5132 = vpack.c.b16 %v3964, %v3960
        %v5133 = vpack.c.b16 %v3965, %v3961
        %v5134 = vpack.c.b16 %v3966, %v3962
        %v5135 = vpack.c.b16 %v3967, %v3963
        %v5136 = vpack.c.b16 %v3972, %v3968
        %v5137 = vpack.c.b16 %v3973, %v3969
        %v5138 = vpack.c.b16 %v3974, %v3970
        %v5139 = vpack.c.b16 %v3975, %v3971
        %v5140 = vpack.c.b16 %v3980, %v3976
        %v5141 = vpack.c.b16 %v3981, %v3977
        %v5142 = vpack.c.b16 %v3982, %v3978
        %v5143 = vpack.c.b16 %v3983, %v3979
        %v5144 = vpack.c.b16 %v3988, %v3984
        %v5145 = vpack.c.b16 %v3989, %v3985
        %v5146 = vpack.c.b16 %v3990, %v3986
        %v5147 = vpack.c.b16 %v3991, %v3987
        %v5148 = vpack.c.b16 %v3996, %v3992
        %v5149 = vpack.c.b16 %v3997, %v3993
        %v5150 = vpack.c.b16 %v3998, %v3994
        %v5151 = vpack.c.b16 %v3999, %v3995
        %v5152 = vpack.c.b16 %v4004, %v4000
        %v5153 = vpack.c.b16 %v4005, %v4001
        %v5154 = vpack.c.b16 %v4006, %v4002
        %v5155 = vpack.c.b16 %v4007, %v4003
        %v5156 = vpack.c.b16 %v4012, %v4008
        %v5157 = vpack.c.b16 %v4013, %v4009
        %v5158 = vpack.c.b16 %v4014, %v4010
        %v5159 = vpack.c.b16 %v4015, %v4011
        %v5160 = vpack.c.b16 %v4020, %v4016
        %v5161 = vpack.c.b16 %v4021, %v4017
        %v5162 = vpack.c.b16 %v4022, %v4018
        %v5163 = vpack.c.b16 %v4023, %v4019
        %v5164 = vpack.c.b16 %v4028, %v4024
        %v5165 = vpack.c.b16 %v4029, %v4025
        %v5166 = vpack.c.b16 %v4030, %v4026
        %v5167 = vpack.c.b16 %v4031, %v4027
        %v5168 = vpack.c.b16 %v4036, %v4032
        %v5169 = vpack.c.b16 %v4037, %v4033
        %v5170 = vpack.c.b16 %v4038, %v4034
        %v5171 = vpack.c.b16 %v4039, %v4035
        %v5172 = vpack.c.b16 %v4044, %v4040
        %v5173 = vpack.c.b16 %v4045, %v4041
        %v5174 = vpack.c.b16 %v4046, %v4042
        %v5175 = vpack.c.b16 %v4047, %v4043
        %v5176 = vpack.c.b16 %v4052, %v4048
        %v5177 = vpack.c.b16 %v4053, %v4049
        %v5178 = vpack.c.b16 %v4054, %v4050
        %v5179 = vpack.c.b16 %v4055, %v4051
        %v5180 = vpack.c.b16 %v4060, %v4056
        %v5181 = vpack.c.b16 %v4061, %v4057
        %v5182 = vpack.c.b16 %v4062, %v4058
        %v5183 = vpack.c.b16 %v4063, %v4059
        %v5184 = vpack.c.b16 %v4068, %v4064
        %v5185 = vpack.c.b16 %v4069, %v4065
        %v5186 = vpack.c.b16 %v4070, %v4066
        %v5187 = vpack.c.b16 %v4071, %v4067
        %v5188 = vpack.c.b16 %v4076, %v4072
        %v5189 = vpack.c.b16 %v4077, %v4073
        %v5190 = vpack.c.b16 %v4078, %v4074
        %v5191 = vpack.c.b16 %v4079, %v4075
        %v5192 = vpack.c.b16 %v4084, %v4080
        %v5193 = vpack.c.b16 %v4085, %v4081
        %v5194 = vpack.c.b16 %v4086, %v4082
        %v5195 = vpack.c.b16 %v4087, %v4083
        %v5196 = vpack.c.b16 %v4092, %v4088
        %v5197 = vpack.c.b16 %v4093, %v4089
        %v5198 = vpack.c.b16 %v4094, %v4090
        %v5199 = vpack.c.b16 %v4095, %v4091
        %v5200 = vpack.c.b16 %v4100, %v4096
        %v5201 = vpack.c.b16 %v4101, %v4097
        %v5202 = vpack.c.b16 %v4102, %v4098
        %v5203 = vpack.c.b16 %v4103, %v4099
        %v5204 = vpack.c.b16 %v4108, %v4104
        %v5205 = vpack.c.b16 %v4109, %v4105
        %v5206 = vpack.c.b16 %v4110, %v4106
        %v5207 = vpack.c.b16 %v4111, %v4107
        %v5208 = vpack.c.b16 %v4116, %v4112
        %v5209 = vpack.c.b16 %v4117, %v4113
        %v5210 = vpack.c.b16 %v4118, %v4114
        %v5211 = vpack.c.b16 %v4119, %v4115
        %v5212 = vpack.c.b16 %v4124, %v4120
        %v5213 = vpack.c.b16 %v4125, %v4121
        %v5214 = vpack.c.b16 %v4126, %v4122
        %v5215 = vpack.c.b16 %v4127, %v4123
        %v5216 = vpack.c.b16 %v4132, %v4128
        %v5217 = vpack.c.b16 %v4133, %v4129
        %v5218 = vpack.c.b16 %v4134, %v4130
        %v5219 = vpack.c.b16 %v4135, %v4131
        %v5220 = vpack.c.b16 %v4140, %v4136
        %v5221 = vpack.c.b16 %v4141, %v4137
        %v5222 = vpack.c.b16 %v4142, %v4138
        %v5223 = vpack.c.b16 %v4143, %v4139
        %v5224 = vpack.c.b16 %v4148, %v4144
        %v5225 = vpack.c.b16 %v4149, %v4145
        %v5226 = vpack.c.b16 %v4150, %v4146
        %v5227 = vpack.c.b16 %v4151, %v4147
        %v5228 = vpack.c.b16 %v4156, %v4152
        %v5229 = vpack.c.b16 %v4157, %v4153
        %v5230 = vpack.c.b16 %v4158, %v4154
        %v5231 = vpack.c.b16 %v4159, %v4155
        %v5232 = vpack.c.b16 %v4164, %v4160
        %v5233 = vpack.c.b16 %v4165, %v4161
        %v5234 = vpack.c.b16 %v4166, %v4162
        %v5235 = vpack.c.b16 %v4167, %v4163
        %v5236 = vpack.c.b16 %v4172, %v4168
        %v5237 = vpack.c.b16 %v4173, %v4169
        %v5238 = vpack.c.b16 %v4174, %v4170
        %v5239 = vpack.c.b16 %v4175, %v4171
        %v5240 = vpack.c.b16 %v4180, %v4176
        %v5241 = vpack.c.b16 %v4181, %v4177
        %v5242 = vpack.c.b16 %v4182, %v4178
        %v5243 = vpack.c.b16 %v4183, %v4179
        %v5244 = vpack.c.b16 %v4188, %v4184
        %v5245 = vpack.c.b16 %v4189, %v4185
        %v5246 = vpack.c.b16 %v4190, %v4186
        %v5247 = vpack.c.b16 %v4191, %v4187
        %v5248 = vpack.c.b16 %v4196, %v4192
        %v5249 = vpack.c.b16 %v4197, %v4193
        %v5250 = vpack.c.b16 %v4198, %v4194
        %v5251 = vpack.c.b16 %v4199, %v4195
        %v5252 = vpack.c.b16 %v4204, %v4200
        %v5253 = vpack.c.b16 %v4205, %v4201
        %v5254 = vpack.c.b16 %v4206, %v4202
        %v5255 = vpack.c.b16 %v4207, %v4203
        %v5256 = vpack.c.b16 %v4212, %v4208
        %v5257 = vpack.c.b16 %v4213, %v4209
        %v5258 = vpack.c.b16 %v4214, %v4210
        %v5259 = vpack.c.b16 %v4215, %v4211
        %v5260 = vpack.c.b16 %v4220, %v4216
        %v5261 = vpack.c.b16 %v4221, %v4217
        %v5262 = vpack.c.b16 %v4222, %v4218
        %v5263 = vpack.c.b16 %v4223, %v4219
        %v5264 = vpack.c.b16 %v4228, %v4224
        %v5265 = vpack.c.b16 %v4229, %v4225
        %v5266 = vpack.c.b16 %v4230, %v4226
        %v5267 = vpack.c.b16 %v4231, %v4227
        %v5268 = vpack.c.b16 %v4236, %v4232
        %v5269 = vpack.c.b16 %v4237, %v4233
        %v5270 = vpack.c.b16 %v4238, %v4234
        %v5271 = vpack.c.b16 %v4239, %v4235
        %v5272 = vpack.c.b16 %v4244, %v4240
        %v5273 = vpack.c.b16 %v4245, %v4241
        %v5274 = vpack.c.b16 %v4246, %v4242
        %v5275 = vpack.c.b16 %v4247, %v4243
        %v5276 = vpack.c.b16 %v4252, %v4248
        %v5277 = vpack.c.b16 %v4253, %v4249
        %v5278 = vpack.c.b16 %v4254, %v4250
        %v5279 = vpack.c.b16 %v4255, %v4251
        %v5280 = vpack.c.b16 %v4260, %v4256
        %v5281 = vpack.c.b16 %v4261, %v4257
        %v5282 = vpack.c.b16 %v4262, %v4258
        %v5283 = vpack.c.b16 %v4263, %v4259
        %v5284 = vpack.c.b16 %v4268, %v4264
        %v5285 = vpack.c.b16 %v4269, %v4265
        %v5286 = vpack.c.b16 %v4270, %v4266
        %v5287 = vpack.c.b16 %v4271, %v4267
        %v5288 = vpack.c.b16 %v4276, %v4272
        %v5289 = vpack.c.b16 %v4277, %v4273
        %v5290 = vpack.c.b16 %v4278, %v4274
        %v5291 = vpack.c.b16 %v4279, %v4275
        %v5292 = vpack.c.b16 %v4284, %v4280
        %v5293 = vpack.c.b16 %v4285, %v4281
        %v5294 = vpack.c.b16 %v4286, %v4282
        %v5295 = vpack.c.b16 %v4287, %v4283
        %v5296 = vpack.c.b16 %v4292, %v4288
        %v5297 = vpack.c.b16 %v4293, %v4289
        %v5298 = vpack.c.b16 %v4294, %v4290
        %v5299 = vpack.c.b16 %v4295, %v4291
        %v5300 = vpack.c.b16 %v4300, %v4296
        %v5301 = vpack.c.b16 %v4301, %v4297
        %v5302 = vpack.c.b16 %v4302, %v4298
        %v5303 = vpack.c.b16 %v4303, %v4299
        %v5304 = vpack.c.b16 %v4308, %v4304
        %v5305 = vpack.c.b16 %v4309, %v4305
        %v5306 = vpack.c.b16 %v4310, %v4306
        %v5307 = vpack.c.b16 %v4311, %v4307
        %v5308 = vpack.c.b16 %v4316, %v4312
        %v5309 = vpack.c.b16 %v4317, %v4313
        %v5310 = vpack.c.b16 %v4318, %v4314
        %v5311 = vpack.c.b16 %v4319, %v4315
        %6304 = vmatpush.bf16.msra.mxu0 %v4348
        %6305 = vmatpush.bf16.msra.mxu0 %v4344
        %6306 = vmatpush.bf16.msra.mxu0 %v4340
        %6307 = vmatpush.bf16.msra.mxu0 %v4336
        %6308 = vmatpush.bf16.msra.mxu0 %v4332
        %6309 = vmatpush.bf16.msra.mxu0 %v4328
        %6310 = vmatpush.bf16.msra.mxu0 %v4324
        %6311 = vmatpush.bf16.msra.mxu0 %v4320
        %6312 = vmatmul.bf16.gmra.mxu0 %v1276
        %v6313 = vpop.f32.mrf.mxu0
        %v6314 = vadd.f32 0.0, %v6313
        %v6315 = vpop.f32.mrf.mxu0
        %6316 = vdwg.mxu0
        %6317 = vmatpush.bf16.msra.mxu0 %v4380
        %6318 = vmatpush.bf16.msra.mxu0 %v4376
        %6319 = vmatpush.bf16.msra.mxu0 %v4372
        %6320 = vmatpush.bf16.msra.mxu0 %v4368
        %6321 = vmatpush.bf16.msra.mxu0 %v4364
        %6322 = vmatpush.bf16.msra.mxu0 %v4360
        %6323 = vmatpush.bf16.msra.mxu0 %v4356
        %6324 = vmatpush.bf16.msra.mxu0 %v4352
        %6325 = vmatmul.bf16.gmra.mxu0 %v1277
        %v6326 = vpop.f32.mrf.mxu0
        %v6327 = vadd.f32 %v6314, %v6326
        %v6328 = vpop.f32.mrf.mxu0
        %6329 = vdwg.mxu0
        %6330 = vmatpush.bf16.msra.mxu0 %v4412
        %6331 = vmatpush.bf16.msra.mxu0 %v4408
        %6332 = vmatpush.bf16.msra.mxu0 %v4404
        %6333 = vmatpush.bf16.msra.mxu0 %v4400
        %6334 = vmatpush.bf16.msra.mxu0 %v4396
        %6335 = vmatpush.bf16.msra.mxu0 %v4392
        %6336 = vmatpush.bf16.msra.mxu0 %v4388
        %6337 = vmatpush.bf16.msra.mxu0 %v4384
        %6338 = vmatmul.bf16.gmra.mxu0 %v1278
        %v6339 = vpop.f32.mrf.mxu0
        %v6340 = vadd.f32 %v6327, %v6339
        %v6341 = vpop.f32.mrf.mxu0
        %6342 = vdwg.mxu0
        %6343 = vmatpush.bf16.msra.mxu0 %v4444
        %6344 = vmatpush.bf16.msra.mxu0 %v4440
        %6345 = vmatpush.bf16.msra.mxu0 %v4436
        %6346 = vmatpush.bf16.msra.mxu0 %v4432
        %6347 = vmatpush.bf16.msra.mxu0 %v4428
        %6348 = vmatpush.bf16.msra.mxu0 %v4424
        %6349 = vmatpush.bf16.msra.mxu0 %v4420
        %6350 = vmatpush.bf16.msra.mxu0 %v4416
        %6351 = vmatmul.bf16.gmra.mxu0 %v1279
        %v6352 = vpop.f32.mrf.mxu0
        %v6353 = vadd.f32 %v6340, %v6352
        %v6354 = vpop.f32.mrf.mxu0
        %6355 = vdwg.mxu0
        %6356 = vmatpush.bf16.msra.mxu0 %v4476
        %6357 = vmatpush.bf16.msra.mxu0 %v4472
        %6358 = vmatpush.bf16.msra.mxu0 %v4468
        %6359 = vmatpush.bf16.msra.mxu0 %v4464
        %6360 = vmatpush.bf16.msra.mxu0 %v4460
        %6361 = vmatpush.bf16.msra.mxu0 %v4456
        %6362 = vmatpush.bf16.msra.mxu0 %v4452
        %6363 = vmatpush.bf16.msra.mxu0 %v4448
        %6364 = vmatmul.bf16.gmra.mxu0 %v1280
        %v6365 = vpop.f32.mrf.mxu0
        %v6366 = vadd.f32 %v6353, %v6365
        %v6367 = vpop.f32.mrf.mxu0
        %6368 = vdwg.mxu0
        %6369 = vmatpush.bf16.msra.mxu0 %v4508
        %6370 = vmatpush.bf16.msra.mxu0 %v4504
        %6371 = vmatpush.bf16.msra.mxu0 %v4500
        %6372 = vmatpush.bf16.msra.mxu0 %v4496
        %6373 = vmatpush.bf16.msra.mxu0 %v4492
        %6374 = vmatpush.bf16.msra.mxu0 %v4488
        %6375 = vmatpush.bf16.msra.mxu0 %v4484
        %6376 = vmatpush.bf16.msra.mxu0 %v4480
        %6377 = vmatmul.bf16.gmra.mxu0 %v1281
        %v6378 = vpop.f32.mrf.mxu0
        %v6379 = vadd.f32 %v6366, %v6378
        %v6380 = vpop.f32.mrf.mxu0
        %6381 = vdwg.mxu0
        %6382 = vmatpush.bf16.msra.mxu0 %v4540
        %6383 = vmatpush.bf16.msra.mxu0 %v4536
        %6384 = vmatpush.bf16.msra.mxu0 %v4532
        %6385 = vmatpush.bf16.msra.mxu0 %v4528
        %6386 = vmatpush.bf16.msra.mxu0 %v4524
        %6387 = vmatpush.bf16.msra.mxu0 %v4520
        %6388 = vmatpush.bf16.msra.mxu0 %v4516
        %6389 = vmatpush.bf16.msra.mxu0 %v4512
        %6390 = vmatmul.bf16.gmra.mxu0 %v1282
        %v6391 = vpop.f32.mrf.mxu0
        %v6392 = vadd.f32 %v6379, %v6391
        %v6393 = vpop.f32.mrf.mxu0
        %6394 = vdwg.mxu0
        %6395 = vmatpush.bf16.msra.mxu0 %v4572
        %6396 = vmatpush.bf16.msra.mxu0 %v4568
        %6397 = vmatpush.bf16.msra.mxu0 %v4564
        %6398 = vmatpush.bf16.msra.mxu0 %v4560
        %6399 = vmatpush.bf16.msra.mxu0 %v4556
        %6400 = vmatpush.bf16.msra.mxu0 %v4552
        %6401 = vmatpush.bf16.msra.mxu0 %v4548
        %6402 = vmatpush.bf16.msra.mxu0 %v4544
        %6403 = vmatmul.bf16.gmra.mxu0 %v1283
        %v6404 = vpop.f32.mrf.mxu0
        %v6405 = vadd.f32 %v6392, %v6404
        %v6406 = vpop.f32.mrf.mxu0
        %6407 = vdwg.mxu0
        %6408 = vmatpush.bf16.msra.mxu0 %v4604
        %6409 = vmatpush.bf16.msra.mxu0 %v4600
        %6410 = vmatpush.bf16.msra.mxu0 %v4596
        %6411 = vmatpush.bf16.msra.mxu0 %v4592
        %6412 = vmatpush.bf16.msra.mxu0 %v4588
        %6413 = vmatpush.bf16.msra.mxu0 %v4584
        %6414 = vmatpush.bf16.msra.mxu0 %v4580
        %6415 = vmatpush.bf16.msra.mxu0 %v4576
        %6416 = vmatmul.bf16.gmra.mxu0 %v1286
        %v6417 = vpop.f32.mrf.mxu0
        %v6418 = vadd.f32 %v6405, %v6417
        %v6419 = vpop.f32.mrf.mxu0
        %6420 = vdwg.mxu0
        %6421 = vmatpush.bf16.msra.mxu0 %v4636
        %6422 = vmatpush.bf16.msra.mxu0 %v4632
        %6423 = vmatpush.bf16.msra.mxu0 %v4628
        %6424 = vmatpush.bf16.msra.mxu0 %v4624
        %6425 = vmatpush.bf16.msra.mxu0 %v4620
        %6426 = vmatpush.bf16.msra.mxu0 %v4616
        %6427 = vmatpush.bf16.msra.mxu0 %v4612
        %6428 = vmatpush.bf16.msra.mxu0 %v4608
        %6429 = vmatmul.bf16.gmra.mxu0 %v1287
        %v6430 = vpop.f32.mrf.mxu0
        %v6431 = vadd.f32 %v6418, %v6430
        %v6432 = vpop.f32.mrf.mxu0
        %6433 = vdwg.mxu0
        %6434 = vmatpush.bf16.msra.mxu0 %v4668
        %6435 = vmatpush.bf16.msra.mxu0 %v4664
        %6436 = vmatpush.bf16.msra.mxu0 %v4660
        %6437 = vmatpush.bf16.msra.mxu0 %v4656
        %6438 = vmatpush.bf16.msra.mxu0 %v4652
        %6439 = vmatpush.bf16.msra.mxu0 %v4648
        %6440 = vmatpush.bf16.msra.mxu0 %v4644
        %6441 = vmatpush.bf16.msra.mxu0 %v4640
        %6442 = vmatmul.bf16.gmra.mxu0 %v1288
        %v6443 = vpop.f32.mrf.mxu0
        %v6444 = vadd.f32 %v6431, %v6443
        %v6445 = vpop.f32.mrf.mxu0
        %6446 = vdwg.mxu0
        %6447 = vmatpush.bf16.msra.mxu0 %v4700
        %6448 = vmatpush.bf16.msra.mxu0 %v4696
        %6449 = vmatpush.bf16.msra.mxu0 %v4692
        %6450 = vmatpush.bf16.msra.mxu0 %v4688
        %6451 = vmatpush.bf16.msra.mxu0 %v4684
        %6452 = vmatpush.bf16.msra.mxu0 %v4680
        %6453 = vmatpush.bf16.msra.mxu0 %v4676
        %6454 = vmatpush.bf16.msra.mxu0 %v4672
        %6455 = vmatmul.bf16.gmra.mxu0 %v1289
        %v6456 = vpop.f32.mrf.mxu0
        %v6457 = vadd.f32 %v6444, %v6456
        %v6458 = vpop.f32.mrf.mxu0
        %6459 = vdwg.mxu0
        %6460 = vmatpush.bf16.msra.mxu0 %v4732
        %6461 = vmatpush.bf16.msra.mxu0 %v4728
        %6462 = vmatpush.bf16.msra.mxu0 %v4724
        %6463 = vmatpush.bf16.msra.mxu0 %v4720
        %6464 = vmatpush.bf16.msra.mxu0 %v4716
        %6465 = vmatpush.bf16.msra.mxu0 %v4712
        %6466 = vmatpush.bf16.msra.mxu0 %v4708
        %6467 = vmatpush.bf16.msra.mxu0 %v4704
        %6468 = vmatmul.bf16.gmra.mxu0 %v1290
        %v6469 = vpop.f32.mrf.mxu0
        %v6470 = vadd.f32 %v6457, %v6469
        %v6471 = vpop.f32.mrf.mxu0
        %6472 = vdwg.mxu0
        %6473 = vmatpush.bf16.msra.mxu0 %v4764
        %6474 = vmatpush.bf16.msra.mxu0 %v4760
        %6475 = vmatpush.bf16.msra.mxu0 %v4756
        %6476 = vmatpush.bf16.msra.mxu0 %v4752
        %6477 = vmatpush.bf16.msra.mxu0 %v4748
        %6478 = vmatpush.bf16.msra.mxu0 %v4744
        %6479 = vmatpush.bf16.msra.mxu0 %v4740
        %6480 = vmatpush.bf16.msra.mxu0 %v4736
        %6481 = vmatmul.bf16.gmra.mxu0 %v1291
        %v6482 = vpop.f32.mrf.mxu0
        %v6483 = vadd.f32 %v6470, %v6482
        %v6484 = vpop.f32.mrf.mxu0
        %6485 = vdwg.mxu0
        %6486 = vmatpush.bf16.msra.mxu0 %v4796
        %6487 = vmatpush.bf16.msra.mxu0 %v4792
        %6488 = vmatpush.bf16.msra.mxu0 %v4788
        %6489 = vmatpush.bf16.msra.mxu0 %v4784
        %6490 = vmatpush.bf16.msra.mxu0 %v4780
        %6491 = vmatpush.bf16.msra.mxu0 %v4776
        %6492 = vmatpush.bf16.msra.mxu0 %v4772
        %6493 = vmatpush.bf16.msra.mxu0 %v4768
        %6494 = vmatmul.bf16.gmra.mxu0 %v1292
        %v6495 = vpop.f32.mrf.mxu0
        %v6496 = vadd.f32 %v6483, %v6495
        %v6497 = vpop.f32.mrf.mxu0
        %6498 = vdwg.mxu0
        %6499 = vmatpush.bf16.msra.mxu0 %v4828
        %6500 = vmatpush.bf16.msra.mxu0 %v4824
        %6501 = vmatpush.bf16.msra.mxu0 %v4820
        %6502 = vmatpush.bf16.msra.mxu0 %v4816
        %6503 = vmatpush.bf16.msra.mxu0 %v4812
        %6504 = vmatpush.bf16.msra.mxu0 %v4808
        %6505 = vmatpush.bf16.msra.mxu0 %v4804
        %6506 = vmatpush.bf16.msra.mxu0 %v4800
        %6507 = vmatmul.bf16.gmra.mxu0 %v1293
        %v6508 = vpop.f32.mrf.mxu0
        %v6509 = vadd.f32 %v6496, %v6508
        %v6510 = vpop.f32.mrf.mxu0
        %6511 = vdwg.mxu0
        %6512 = vmatpush.bf16.msra.mxu0 %v4860
        %6513 = vmatpush.bf16.msra.mxu0 %v4856
        %6514 = vmatpush.bf16.msra.mxu0 %v4852
        %6515 = vmatpush.bf16.msra.mxu0 %v4848
        %6516 = vmatpush.bf16.msra.mxu0 %v4844
        %6517 = vmatpush.bf16.msra.mxu0 %v4840
        %6518 = vmatpush.bf16.msra.mxu0 %v4836
        %6519 = vmatpush.bf16.msra.mxu0 %v4832
        %6520 = vmatmul.bf16.gmra.mxu0 %v1296
        %v6521 = vpop.f32.mrf.mxu0
        %v6522 = vadd.f32 %v6509, %v6521
        %v6523 = vpop.f32.mrf.mxu0
        %6524 = vdwg.mxu0
        %6525 = vmatpush.bf16.msra.mxu0 %v4892
        %6526 = vmatpush.bf16.msra.mxu0 %v4888
        %6527 = vmatpush.bf16.msra.mxu0 %v4884
        %6528 = vmatpush.bf16.msra.mxu0 %v4880
        %6529 = vmatpush.bf16.msra.mxu0 %v4876
        %6530 = vmatpush.bf16.msra.mxu0 %v4872
        %6531 = vmatpush.bf16.msra.mxu0 %v4868
        %6532 = vmatpush.bf16.msra.mxu0 %v4864
        %6533 = vmatmul.bf16.gmra.mxu0 %v1297
        %v6534 = vpop.f32.mrf.mxu0
        %v6535 = vadd.f32 %v6522, %v6534
        %v6536 = vpop.f32.mrf.mxu0
        %6537 = vdwg.mxu0
        %6538 = vmatpush.bf16.msra.mxu0 %v4924
        %6539 = vmatpush.bf16.msra.mxu0 %v4920
        %6540 = vmatpush.bf16.msra.mxu0 %v4916
        %6541 = vmatpush.bf16.msra.mxu0 %v4912
        %6542 = vmatpush.bf16.msra.mxu0 %v4908
        %6543 = vmatpush.bf16.msra.mxu0 %v4904
        %6544 = vmatpush.bf16.msra.mxu0 %v4900
        %6545 = vmatpush.bf16.msra.mxu0 %v4896
        %6546 = vmatmul.bf16.gmra.mxu0 %v1298
        %v6547 = vpop.f32.mrf.mxu0
        %v6548 = vadd.f32 %v6535, %v6547
        %v6549 = vpop.f32.mrf.mxu0
        %6550 = vdwg.mxu0
        %6551 = vmatpush.bf16.msra.mxu0 %v4956
        %6552 = vmatpush.bf16.msra.mxu0 %v4952
        %6553 = vmatpush.bf16.msra.mxu0 %v4948
        %6554 = vmatpush.bf16.msra.mxu0 %v4944
        %6555 = vmatpush.bf16.msra.mxu0 %v4940
        %6556 = vmatpush.bf16.msra.mxu0 %v4936
        %6557 = vmatpush.bf16.msra.mxu0 %v4932
        %6558 = vmatpush.bf16.msra.mxu0 %v4928
        %6559 = vmatmul.bf16.gmra.mxu0 %v1299
        %v6560 = vpop.f32.mrf.mxu0
        %v6561 = vadd.f32 %v6548, %v6560
        %v6562 = vpop.f32.mrf.mxu0
        %6563 = vdwg.mxu0
        %6564 = vmatpush.bf16.msra.mxu0 %v4988
        %6565 = vmatpush.bf16.msra.mxu0 %v4984
        %6566 = vmatpush.bf16.msra.mxu0 %v4980
        %6567 = vmatpush.bf16.msra.mxu0 %v4976
        %6568 = vmatpush.bf16.msra.mxu0 %v4972
        %6569 = vmatpush.bf16.msra.mxu0 %v4968
        %6570 = vmatpush.bf16.msra.mxu0 %v4964
        %6571 = vmatpush.bf16.msra.mxu0 %v4960
        %6572 = vmatmul.bf16.gmra.mxu0 %v1300
        %v6573 = vpop.f32.mrf.mxu0
        %v6574 = vadd.f32 %v6561, %v6573
        %v6575 = vpop.f32.mrf.mxu0
        %6576 = vdwg.mxu0
        %6577 = vmatpush.bf16.msra.mxu0 %v5020
        %6578 = vmatpush.bf16.msra.mxu0 %v5016
        %6579 = vmatpush.bf16.msra.mxu0 %v5012
        %6580 = vmatpush.bf16.msra.mxu0 %v5008
        %6581 = vmatpush.bf16.msra.mxu0 %v5004
        %6582 = vmatpush.bf16.msra.mxu0 %v5000
        %6583 = vmatpush.bf16.msra.mxu0 %v4996
        %6584 = vmatpush.bf16.msra.mxu0 %v4992
        %6585 = vmatmul.bf16.gmra.mxu0 %v1301
        %v6586 = vpop.f32.mrf.mxu0
        %v6587 = vadd.f32 %v6574, %v6586
        %v6588 = vpop.f32.mrf.mxu0
        %6589 = vdwg.mxu0
        %6590 = vmatpush.bf16.msra.mxu0 %v5052
        %6591 = vmatpush.bf16.msra.mxu0 %v5048
        %6592 = vmatpush.bf16.msra.mxu0 %v5044
        %6593 = vmatpush.bf16.msra.mxu0 %v5040
        %6594 = vmatpush.bf16.msra.mxu0 %v5036
        %6595 = vmatpush.bf16.msra.mxu0 %v5032
        %6596 = vmatpush.bf16.msra.mxu0 %v5028
        %6597 = vmatpush.bf16.msra.mxu0 %v5024
        %6598 = vmatmul.bf16.gmra.mxu0 %v1302
        %v6599 = vpop.f32.mrf.mxu0
        %v6600 = vadd.f32 %v6587, %v6599
        %v6601 = vpop.f32.mrf.mxu0
        %6602 = vdwg.mxu0
        %6603 = vmatpush.bf16.msra.mxu0 %v5084
        %6604 = vmatpush.bf16.msra.mxu0 %v5080
        %6605 = vmatpush.bf16.msra.mxu0 %v5076
        %6606 = vmatpush.bf16.msra.mxu0 %v5072
        %6607 = vmatpush.bf16.msra.mxu0 %v5068
        %6608 = vmatpush.bf16.msra.mxu0 %v5064
        %6609 = vmatpush.bf16.msra.mxu0 %v5060
        %6610 = vmatpush.bf16.msra.mxu0 %v5056
        %6611 = vmatmul.bf16.gmra.mxu0 %v1303
        %v6612 = vpop.f32.mrf.mxu0
        %v6613 = vadd.f32 %v6600, %v6612
        %v6614 = vpop.f32.mrf.mxu0
        %6615 = vdwg.mxu0
        %6616 = vmatpush.bf16.msra.mxu0 %v5116
        %6617 = vmatpush.bf16.msra.mxu0 %v5112
        %6618 = vmatpush.bf16.msra.mxu0 %v5108
        %6619 = vmatpush.bf16.msra.mxu0 %v5104
        %6620 = vmatpush.bf16.msra.mxu0 %v5100
        %6621 = vmatpush.bf16.msra.mxu0 %v5096
        %6622 = vmatpush.bf16.msra.mxu0 %v5092
        %6623 = vmatpush.bf16.msra.mxu0 %v5088
        %6624 = vmatmul.bf16.gmra.mxu0 %v1306
        %v6625 = vpop.f32.mrf.mxu0
        %v6626 = vadd.f32 %v6613, %v6625
        %v6627 = vpop.f32.mrf.mxu0
        %6628 = vdwg.mxu0
        %6629 = vmatpush.bf16.msra.mxu0 %v5148
        %6630 = vmatpush.bf16.msra.mxu0 %v5144
        %6631 = vmatpush.bf16.msra.mxu0 %v5140
        %6632 = vmatpush.bf16.msra.mxu0 %v5136
        %6633 = vmatpush.bf16.msra.mxu0 %v5132
        %6634 = vmatpush.bf16.msra.mxu0 %v5128
        %6635 = vmatpush.bf16.msra.mxu0 %v5124
        %6636 = vmatpush.bf16.msra.mxu0 %v5120
        %6637 = vmatmul.bf16.gmra.mxu0 %v1307
        %v6638 = vpop.f32.mrf.mxu0
        %v6639 = vadd.f32 %v6626, %v6638
        %v6640 = vpop.f32.mrf.mxu0
        %6641 = vdwg.mxu0
        %6642 = vmatpush.bf16.msra.mxu0 %v5180
        %6643 = vmatpush.bf16.msra.mxu0 %v5176
        %6644 = vmatpush.bf16.msra.mxu0 %v5172
        %6645 = vmatpush.bf16.msra.mxu0 %v5168
        %6646 = vmatpush.bf16.msra.mxu0 %v5164
        %6647 = vmatpush.bf16.msra.mxu0 %v5160
        %6648 = vmatpush.bf16.msra.mxu0 %v5156
        %6649 = vmatpush.bf16.msra.mxu0 %v5152
        %6650 = vmatmul.bf16.gmra.mxu0 %v1308
        %v6651 = vpop.f32.mrf.mxu0
        %v6652 = vadd.f32 %v6639, %v6651
        %v6653 = vpop.f32.mrf.mxu0
        %6654 = vdwg.mxu0
        %6655 = vmatpush.bf16.msra.mxu0 %v5212
        %6656 = vmatpush.bf16.msra.mxu0 %v5208
        %6657 = vmatpush.bf16.msra.mxu0 %v5204
        %6658 = vmatpush.bf16.msra.mxu0 %v5200
        %6659 = vmatpush.bf16.msra.mxu0 %v5196
        %6660 = vmatpush.bf16.msra.mxu0 %v5192
        %6661 = vmatpush.bf16.msra.mxu0 %v5188
        %6662 = vmatpush.bf16.msra.mxu0 %v5184
        %6663 = vmatmul.bf16.gmra.mxu0 %v1309
        %v6664 = vpop.f32.mrf.mxu0
        %v6665 = vadd.f32 %v6652, %v6664
        %v6666 = vpop.f32.mrf.mxu0
        %6667 = vdwg.mxu0
        %6668 = vmatpush.bf16.msra.mxu0 %v5244
        %6669 = vmatpush.bf16.msra.mxu0 %v5240
        %6670 = vmatpush.bf16.msra.mxu0 %v5236
        %6671 = vmatpush.bf16.msra.mxu0 %v5232
        %6672 = vmatpush.bf16.msra.mxu0 %v5228
        %6673 = vmatpush.bf16.msra.mxu0 %v5224
        %6674 = vmatpush.bf16.msra.mxu0 %v5220
        %6675 = vmatpush.bf16.msra.mxu0 %v5216
        %6676 = vmatmul.bf16.gmra.mxu0 %v1310
        %v6677 = vpop.f32.mrf.mxu0
        %v6678 = vadd.f32 %v6665, %v6677
        %v6679 = vpop.f32.mrf.mxu0
        %6680 = vdwg.mxu0
        %6681 = vmatpush.bf16.msra.mxu0 %v5276
        %6682 = vmatpush.bf16.msra.mxu0 %v5272
        %6683 = vmatpush.bf16.msra.mxu0 %v5268
        %6684 = vmatpush.bf16.msra.mxu0 %v5264
        %6685 = vmatpush.bf16.msra.mxu0 %v5260
        %6686 = vmatpush.bf16.msra.mxu0 %v5256
        %6687 = vmatpush.bf16.msra.mxu0 %v5252
        %6688 = vmatpush.bf16.msra.mxu0 %v5248
        %6689 = vmatmul.bf16.gmra.mxu0 %v1311
        %v6690 = vpop.f32.mrf.mxu0
        %v6691 = vadd.f32 %v6678, %v6690
        %v6692 = vpop.f32.mrf.mxu0
        %6693 = vdwg.mxu0
        %6694 = vmatpush.bf16.msra.mxu0 %v5308
        %6695 = vmatpush.bf16.msra.mxu0 %v5304
        %6696 = vmatpush.bf16.msra.mxu0 %v5300
        %6697 = vmatpush.bf16.msra.mxu0 %v5296
        %6698 = vmatpush.bf16.msra.mxu0 %v5292
        %6699 = vmatpush.bf16.msra.mxu0 %v5288
        %6700 = vmatpush.bf16.msra.mxu0 %v5284
        %6701 = vmatpush.bf16.msra.mxu0 %v5280
        %6702 = vmatmul.bf16.gmra.mxu0 %v1312
        %v6703 = vpop.f32.mrf.mxu0
        %v6704 = vadd.f32 %v6691, %v6703
        %v6705 = vpop.f32.mrf.mxu0
        %6706 = vdwg.mxu0
        %6707 = vmatpush.bf16.msra.mxu0 %v4349
        %6708 = vmatpush.bf16.msra.mxu0 %v4345
        %6709 = vmatpush.bf16.msra.mxu0 %v4341
        %6710 = vmatpush.bf16.msra.mxu0 %v4337
        %6711 = vmatpush.bf16.msra.mxu0 %v4333
        %6712 = vmatpush.bf16.msra.mxu0 %v4329
        %6713 = vmatpush.bf16.msra.mxu0 %v4325
        %6714 = vmatpush.bf16.msra.mxu0 %v4321
        %6715 = vmatmul.bf16.gmra.mxu0 %v1276
        %v6716 = vpop.f32.mrf.mxu0
        %v6717 = vadd.f32 0.0, %v6716
        %v6718 = vpop.f32.mrf.mxu0
        %6719 = vdwg.mxu0
        %6720 = vmatpush.bf16.msra.mxu0 %v4381
        %6721 = vmatpush.bf16.msra.mxu0 %v4377
        %6722 = vmatpush.bf16.msra.mxu0 %v4373
        %6723 = vmatpush.bf16.msra.mxu0 %v4369
        %6724 = vmatpush.bf16.msra.mxu0 %v4365
        %6725 = vmatpush.bf16.msra.mxu0 %v4361
        %6726 = vmatpush.bf16.msra.mxu0 %v4357
        %6727 = vmatpush.bf16.msra.mxu0 %v4353
        %6728 = vmatmul.bf16.gmra.mxu0 %v1277
        %v6729 = vpop.f32.mrf.mxu0
        %v6730 = vadd.f32 %v6717, %v6729
        %v6731 = vpop.f32.mrf.mxu0
        %6732 = vdwg.mxu0
        %6733 = vmatpush.bf16.msra.mxu0 %v4413
        %6734 = vmatpush.bf16.msra.mxu0 %v4409
        %6735 = vmatpush.bf16.msra.mxu0 %v4405
        %6736 = vmatpush.bf16.msra.mxu0 %v4401
        %6737 = vmatpush.bf16.msra.mxu0 %v4397
        %6738 = vmatpush.bf16.msra.mxu0 %v4393
        %6739 = vmatpush.bf16.msra.mxu0 %v4389
        %6740 = vmatpush.bf16.msra.mxu0 %v4385
        %6741 = vmatmul.bf16.gmra.mxu0 %v1278
        %v6742 = vpop.f32.mrf.mxu0
        %v6743 = vadd.f32 %v6730, %v6742
        %v6744 = vpop.f32.mrf.mxu0
        %6745 = vdwg.mxu0
        %6746 = vmatpush.bf16.msra.mxu0 %v4445
        %6747 = vmatpush.bf16.msra.mxu0 %v4441
        %6748 = vmatpush.bf16.msra.mxu0 %v4437
        %6749 = vmatpush.bf16.msra.mxu0 %v4433
        %6750 = vmatpush.bf16.msra.mxu0 %v4429
        %6751 = vmatpush.bf16.msra.mxu0 %v4425
        %6752 = vmatpush.bf16.msra.mxu0 %v4421
        %6753 = vmatpush.bf16.msra.mxu0 %v4417
        %6754 = vmatmul.bf16.gmra.mxu0 %v1279
        %v6755 = vpop.f32.mrf.mxu0
        %v6756 = vadd.f32 %v6743, %v6755
        %v6757 = vpop.f32.mrf.mxu0
        %6758 = vdwg.mxu0
        %6759 = vmatpush.bf16.msra.mxu0 %v4477
        %6760 = vmatpush.bf16.msra.mxu0 %v4473
        %6761 = vmatpush.bf16.msra.mxu0 %v4469
        %6762 = vmatpush.bf16.msra.mxu0 %v4465
        %6763 = vmatpush.bf16.msra.mxu0 %v4461
        %6764 = vmatpush.bf16.msra.mxu0 %v4457
        %6765 = vmatpush.bf16.msra.mxu0 %v4453
        %6766 = vmatpush.bf16.msra.mxu0 %v4449
        %6767 = vmatmul.bf16.gmra.mxu0 %v1280
        %v6768 = vpop.f32.mrf.mxu0
        %v6769 = vadd.f32 %v6756, %v6768
        %v6770 = vpop.f32.mrf.mxu0
        %6771 = vdwg.mxu0
        %6772 = vmatpush.bf16.msra.mxu0 %v4509
        %6773 = vmatpush.bf16.msra.mxu0 %v4505
        %6774 = vmatpush.bf16.msra.mxu0 %v4501
        %6775 = vmatpush.bf16.msra.mxu0 %v4497
        %6776 = vmatpush.bf16.msra.mxu0 %v4493
        %6777 = vmatpush.bf16.msra.mxu0 %v4489
        %6778 = vmatpush.bf16.msra.mxu0 %v4485
        %6779 = vmatpush.bf16.msra.mxu0 %v4481
        %6780 = vmatmul.bf16.gmra.mxu0 %v1281
        %v6781 = vpop.f32.mrf.mxu0
        %v6782 = vadd.f32 %v6769, %v6781
        %v6783 = vpop.f32.mrf.mxu0
        %6784 = vdwg.mxu0
        %6785 = vmatpush.bf16.msra.mxu0 %v4541
        %6786 = vmatpush.bf16.msra.mxu0 %v4537
        %6787 = vmatpush.bf16.msra.mxu0 %v4533
        %6788 = vmatpush.bf16.msra.mxu0 %v4529
        %6789 = vmatpush.bf16.msra.mxu0 %v4525
        %6790 = vmatpush.bf16.msra.mxu0 %v4521
        %6791 = vmatpush.bf16.msra.mxu0 %v4517
        %6792 = vmatpush.bf16.msra.mxu0 %v4513
        %6793 = vmatmul.bf16.gmra.mxu0 %v1282
        %v6794 = vpop.f32.mrf.mxu0
        %v6795 = vadd.f32 %v6782, %v6794
        %v6796 = vpop.f32.mrf.mxu0
        %6797 = vdwg.mxu0
        %6798 = vmatpush.bf16.msra.mxu0 %v4573
        %6799 = vmatpush.bf16.msra.mxu0 %v4569
        %6800 = vmatpush.bf16.msra.mxu0 %v4565
        %6801 = vmatpush.bf16.msra.mxu0 %v4561
        %6802 = vmatpush.bf16.msra.mxu0 %v4557
        %6803 = vmatpush.bf16.msra.mxu0 %v4553
        %6804 = vmatpush.bf16.msra.mxu0 %v4549
        %6805 = vmatpush.bf16.msra.mxu0 %v4545
        %6806 = vmatmul.bf16.gmra.mxu0 %v1283
        %v6807 = vpop.f32.mrf.mxu0
        %v6808 = vadd.f32 %v6795, %v6807
        %v6809 = vpop.f32.mrf.mxu0
        %6810 = vdwg.mxu0
        %6811 = vmatpush.bf16.msra.mxu0 %v4605
        %6812 = vmatpush.bf16.msra.mxu0 %v4601
        %6813 = vmatpush.bf16.msra.mxu0 %v4597
        %6814 = vmatpush.bf16.msra.mxu0 %v4593
        %6815 = vmatpush.bf16.msra.mxu0 %v4589
        %6816 = vmatpush.bf16.msra.mxu0 %v4585
        %6817 = vmatpush.bf16.msra.mxu0 %v4581
        %6818 = vmatpush.bf16.msra.mxu0 %v4577
        %6819 = vmatmul.bf16.gmra.mxu0 %v1286
        %v6820 = vpop.f32.mrf.mxu0
        %v6821 = vadd.f32 %v6808, %v6820
        %v6822 = vpop.f32.mrf.mxu0
        %6823 = vdwg.mxu0
        %6824 = vmatpush.bf16.msra.mxu0 %v4637
        %6825 = vmatpush.bf16.msra.mxu0 %v4633
        %6826 = vmatpush.bf16.msra.mxu0 %v4629
        %6827 = vmatpush.bf16.msra.mxu0 %v4625
        %6828 = vmatpush.bf16.msra.mxu0 %v4621
        %6829 = vmatpush.bf16.msra.mxu0 %v4617
        %6830 = vmatpush.bf16.msra.mxu0 %v4613
        %6831 = vmatpush.bf16.msra.mxu0 %v4609
        %6832 = vmatmul.bf16.gmra.mxu0 %v1287
        %v6833 = vpop.f32.mrf.mxu0
        %v6834 = vadd.f32 %v6821, %v6833
        %v6835 = vpop.f32.mrf.mxu0
        %6836 = vdwg.mxu0
        %6837 = vmatpush.bf16.msra.mxu0 %v4669
        %6838 = vmatpush.bf16.msra.mxu0 %v4665
        %6839 = vmatpush.bf16.msra.mxu0 %v4661
        %6840 = vmatpush.bf16.msra.mxu0 %v4657
        %6841 = vmatpush.bf16.msra.mxu0 %v4653
        %6842 = vmatpush.bf16.msra.mxu0 %v4649
        %6843 = vmatpush.bf16.msra.mxu0 %v4645
        %6844 = vmatpush.bf16.msra.mxu0 %v4641
        %6845 = vmatmul.bf16.gmra.mxu0 %v1288
        %v6846 = vpop.f32.mrf.mxu0
        %v6847 = vadd.f32 %v6834, %v6846
        %v6848 = vpop.f32.mrf.mxu0
        %6849 = vdwg.mxu0
        %6850 = vmatpush.bf16.msra.mxu0 %v4701
        %6851 = vmatpush.bf16.msra.mxu0 %v4697
        %6852 = vmatpush.bf16.msra.mxu0 %v4693
        %6853 = vmatpush.bf16.msra.mxu0 %v4689
        %6854 = vmatpush.bf16.msra.mxu0 %v4685
        %6855 = vmatpush.bf16.msra.mxu0 %v4681
        %6856 = vmatpush.bf16.msra.mxu0 %v4677
        %6857 = vmatpush.bf16.msra.mxu0 %v4673
        %6858 = vmatmul.bf16.gmra.mxu0 %v1289
        %v6859 = vpop.f32.mrf.mxu0
        %v6860 = vadd.f32 %v6847, %v6859
        %v6861 = vpop.f32.mrf.mxu0
        %6862 = vdwg.mxu0
        %6863 = vmatpush.bf16.msra.mxu0 %v4733
        %6864 = vmatpush.bf16.msra.mxu0 %v4729
        %6865 = vmatpush.bf16.msra.mxu0 %v4725
        %6866 = vmatpush.bf16.msra.mxu0 %v4721
        %6867 = vmatpush.bf16.msra.mxu0 %v4717
        %6868 = vmatpush.bf16.msra.mxu0 %v4713
        %6869 = vmatpush.bf16.msra.mxu0 %v4709
        %6870 = vmatpush.bf16.msra.mxu0 %v4705
        %6871 = vmatmul.bf16.gmra.mxu0 %v1290
        %v6872 = vpop.f32.mrf.mxu0
        %v6873 = vadd.f32 %v6860, %v6872
        %v6874 = vpop.f32.mrf.mxu0
        %6875 = vdwg.mxu0
        %6876 = vmatpush.bf16.msra.mxu0 %v4765
        %6877 = vmatpush.bf16.msra.mxu0 %v4761
        %6878 = vmatpush.bf16.msra.mxu0 %v4757
        %6879 = vmatpush.bf16.msra.mxu0 %v4753
        %6880 = vmatpush.bf16.msra.mxu0 %v4749
        %6881 = vmatpush.bf16.msra.mxu0 %v4745
        %6882 = vmatpush.bf16.msra.mxu0 %v4741
        %6883 = vmatpush.bf16.msra.mxu0 %v4737
        %6884 = vmatmul.bf16.gmra.mxu0 %v1291
        %v6885 = vpop.f32.mrf.mxu0
        %v6886 = vadd.f32 %v6873, %v6885
        %v6887 = vpop.f32.mrf.mxu0
        %6888 = vdwg.mxu0
        %6889 = vmatpush.bf16.msra.mxu0 %v4797
        %6890 = vmatpush.bf16.msra.mxu0 %v4793
        %6891 = vmatpush.bf16.msra.mxu0 %v4789
        %6892 = vmatpush.bf16.msra.mxu0 %v4785
        %6893 = vmatpush.bf16.msra.mxu0 %v4781
        %6894 = vmatpush.bf16.msra.mxu0 %v4777
        %6895 = vmatpush.bf16.msra.mxu0 %v4773
        %6896 = vmatpush.bf16.msra.mxu0 %v4769
        %6897 = vmatmul.bf16.gmra.mxu0 %v1292
        %v6898 = vpop.f32.mrf.mxu0
        %v6899 = vadd.f32 %v6886, %v6898
        %v6900 = vpop.f32.mrf.mxu0
        %6901 = vdwg.mxu0
        %6902 = vmatpush.bf16.msra.mxu0 %v4829
        %6903 = vmatpush.bf16.msra.mxu0 %v4825
        %6904 = vmatpush.bf16.msra.mxu0 %v4821
        %6905 = vmatpush.bf16.msra.mxu0 %v4817
        %6906 = vmatpush.bf16.msra.mxu0 %v4813
        %6907 = vmatpush.bf16.msra.mxu0 %v4809
        %6908 = vmatpush.bf16.msra.mxu0 %v4805
        %6909 = vmatpush.bf16.msra.mxu0 %v4801
        %6910 = vmatmul.bf16.gmra.mxu0 %v1293
        %v6911 = vpop.f32.mrf.mxu0
        %v6912 = vadd.f32 %v6899, %v6911
        %v6913 = vpop.f32.mrf.mxu0
        %6914 = vdwg.mxu0
        %6915 = vmatpush.bf16.msra.mxu0 %v4861
        %6916 = vmatpush.bf16.msra.mxu0 %v4857
        %6917 = vmatpush.bf16.msra.mxu0 %v4853
        %6918 = vmatpush.bf16.msra.mxu0 %v4849
        %6919 = vmatpush.bf16.msra.mxu0 %v4845
        %6920 = vmatpush.bf16.msra.mxu0 %v4841
        %6921 = vmatpush.bf16.msra.mxu0 %v4837
        %6922 = vmatpush.bf16.msra.mxu0 %v4833
        %6923 = vmatmul.bf16.gmra.mxu0 %v1296
        %v6924 = vpop.f32.mrf.mxu0
        %v6925 = vadd.f32 %v6912, %v6924
        %v6926 = vpop.f32.mrf.mxu0
        %6927 = vdwg.mxu0
        %6928 = vmatpush.bf16.msra.mxu0 %v4893
        %6929 = vmatpush.bf16.msra.mxu0 %v4889
        %6930 = vmatpush.bf16.msra.mxu0 %v4885
        %6931 = vmatpush.bf16.msra.mxu0 %v4881
        %6932 = vmatpush.bf16.msra.mxu0 %v4877
        %6933 = vmatpush.bf16.msra.mxu0 %v4873
        %6934 = vmatpush.bf16.msra.mxu0 %v4869
        %6935 = vmatpush.bf16.msra.mxu0 %v4865
        %6936 = vmatmul.bf16.gmra.mxu0 %v1297
        %v6937 = vpop.f32.mrf.mxu0
        %v6938 = vadd.f32 %v6925, %v6937
        %v6939 = vpop.f32.mrf.mxu0
        %6940 = vdwg.mxu0
        %6941 = vmatpush.bf16.msra.mxu0 %v4925
        %6942 = vmatpush.bf16.msra.mxu0 %v4921
        %6943 = vmatpush.bf16.msra.mxu0 %v4917
        %6944 = vmatpush.bf16.msra.mxu0 %v4913
        %6945 = vmatpush.bf16.msra.mxu0 %v4909
        %6946 = vmatpush.bf16.msra.mxu0 %v4905
        %6947 = vmatpush.bf16.msra.mxu0 %v4901
        %6948 = vmatpush.bf16.msra.mxu0 %v4897
        %6949 = vmatmul.bf16.gmra.mxu0 %v1298
        %v6950 = vpop.f32.mrf.mxu0
        %v6951 = vadd.f32 %v6938, %v6950
        %v6952 = vpop.f32.mrf.mxu0
        %6953 = vdwg.mxu0
        %6954 = vmatpush.bf16.msra.mxu0 %v4957
        %6955 = vmatpush.bf16.msra.mxu0 %v4953
        %6956 = vmatpush.bf16.msra.mxu0 %v4949
        %6957 = vmatpush.bf16.msra.mxu0 %v4945
        %6958 = vmatpush.bf16.msra.mxu0 %v4941
        %6959 = vmatpush.bf16.msra.mxu0 %v4937
        %6960 = vmatpush.bf16.msra.mxu0 %v4933
        %6961 = vmatpush.bf16.msra.mxu0 %v4929
        %6962 = vmatmul.bf16.gmra.mxu0 %v1299
        %v6963 = vpop.f32.mrf.mxu0
        %v6964 = vadd.f32 %v6951, %v6963
        %v6965 = vpop.f32.mrf.mxu0
        %6966 = vdwg.mxu0
        %6967 = vmatpush.bf16.msra.mxu0 %v4989
        %6968 = vmatpush.bf16.msra.mxu0 %v4985
        %6969 = vmatpush.bf16.msra.mxu0 %v4981
        %6970 = vmatpush.bf16.msra.mxu0 %v4977
        %6971 = vmatpush.bf16.msra.mxu0 %v4973
        %6972 = vmatpush.bf16.msra.mxu0 %v4969
        %6973 = vmatpush.bf16.msra.mxu0 %v4965
        %6974 = vmatpush.bf16.msra.mxu0 %v4961
        %6975 = vmatmul.bf16.gmra.mxu0 %v1300
        %v6976 = vpop.f32.mrf.mxu0
        %v6977 = vadd.f32 %v6964, %v6976
        %v6978 = vpop.f32.mrf.mxu0
        %6979 = vdwg.mxu0
        %6980 = vmatpush.bf16.msra.mxu0 %v5021
        %6981 = vmatpush.bf16.msra.mxu0 %v5017
        %6982 = vmatpush.bf16.msra.mxu0 %v5013
        %6983 = vmatpush.bf16.msra.mxu0 %v5009
        %6984 = vmatpush.bf16.msra.mxu0 %v5005
        %6985 = vmatpush.bf16.msra.mxu0 %v5001
        %6986 = vmatpush.bf16.msra.mxu0 %v4997
        %6987 = vmatpush.bf16.msra.mxu0 %v4993
        %6988 = vmatmul.bf16.gmra.mxu0 %v1301
        %v6989 = vpop.f32.mrf.mxu0
        %v6990 = vadd.f32 %v6977, %v6989
        %v6991 = vpop.f32.mrf.mxu0
        %6992 = vdwg.mxu0
        %6993 = vmatpush.bf16.msra.mxu0 %v5053
        %6994 = vmatpush.bf16.msra.mxu0 %v5049
        %6995 = vmatpush.bf16.msra.mxu0 %v5045
        %6996 = vmatpush.bf16.msra.mxu0 %v5041
        %6997 = vmatpush.bf16.msra.mxu0 %v5037
        %6998 = vmatpush.bf16.msra.mxu0 %v5033
        %6999 = vmatpush.bf16.msra.mxu0 %v5029
        %7000 = vmatpush.bf16.msra.mxu0 %v5025
        %7001 = vmatmul.bf16.gmra.mxu0 %v1302
        %v7002 = vpop.f32.mrf.mxu0
        %v7003 = vadd.f32 %v6990, %v7002
        %v7004 = vpop.f32.mrf.mxu0
        %7005 = vdwg.mxu0
        %7006 = vmatpush.bf16.msra.mxu0 %v5085
        %7007 = vmatpush.bf16.msra.mxu0 %v5081
        %7008 = vmatpush.bf16.msra.mxu0 %v5077
        %7009 = vmatpush.bf16.msra.mxu0 %v5073
        %7010 = vmatpush.bf16.msra.mxu0 %v5069
        %7011 = vmatpush.bf16.msra.mxu0 %v5065
        %7012 = vmatpush.bf16.msra.mxu0 %v5061
        %7013 = vmatpush.bf16.msra.mxu0 %v5057
        %7014 = vmatmul.bf16.gmra.mxu0 %v1303
        %v7015 = vpop.f32.mrf.mxu0
        %v7016 = vadd.f32 %v7003, %v7015
        %v7017 = vpop.f32.mrf.mxu0
        %7018 = vdwg.mxu0
        %7019 = vmatpush.bf16.msra.mxu0 %v5117
        %7020 = vmatpush.bf16.msra.mxu0 %v5113
        %7021 = vmatpush.bf16.msra.mxu0 %v5109
        %7022 = vmatpush.bf16.msra.mxu0 %v5105
        %7023 = vmatpush.bf16.msra.mxu0 %v5101
        %7024 = vmatpush.bf16.msra.mxu0 %v5097
        %7025 = vmatpush.bf16.msra.mxu0 %v5093
        %7026 = vmatpush.bf16.msra.mxu0 %v5089
        %7027 = vmatmul.bf16.gmra.mxu0 %v1306
        %v7028 = vpop.f32.mrf.mxu0
        %v7029 = vadd.f32 %v7016, %v7028
        %v7030 = vpop.f32.mrf.mxu0
        %7031 = vdwg.mxu0
        %7032 = vmatpush.bf16.msra.mxu0 %v5149
        %7033 = vmatpush.bf16.msra.mxu0 %v5145
        %7034 = vmatpush.bf16.msra.mxu0 %v5141
        %7035 = vmatpush.bf16.msra.mxu0 %v5137
        %7036 = vmatpush.bf16.msra.mxu0 %v5133
        %7037 = vmatpush.bf16.msra.mxu0 %v5129
        %7038 = vmatpush.bf16.msra.mxu0 %v5125
        %7039 = vmatpush.bf16.msra.mxu0 %v5121
        %7040 = vmatmul.bf16.gmra.mxu0 %v1307
        %v7041 = vpop.f32.mrf.mxu0
        %v7042 = vadd.f32 %v7029, %v7041
        %v7043 = vpop.f32.mrf.mxu0
        %7044 = vdwg.mxu0
        %7045 = vmatpush.bf16.msra.mxu0 %v5181
        %7046 = vmatpush.bf16.msra.mxu0 %v5177
        %7047 = vmatpush.bf16.msra.mxu0 %v5173
        %7048 = vmatpush.bf16.msra.mxu0 %v5169
        %7049 = vmatpush.bf16.msra.mxu0 %v5165
        %7050 = vmatpush.bf16.msra.mxu0 %v5161
        %7051 = vmatpush.bf16.msra.mxu0 %v5157
        %7052 = vmatpush.bf16.msra.mxu0 %v5153
        %7053 = vmatmul.bf16.gmra.mxu0 %v1308
        %v7054 = vpop.f32.mrf.mxu0
        %v7055 = vadd.f32 %v7042, %v7054
        %v7056 = vpop.f32.mrf.mxu0
        %7057 = vdwg.mxu0
        %7058 = vmatpush.bf16.msra.mxu0 %v5213
        %7059 = vmatpush.bf16.msra.mxu0 %v5209
        %7060 = vmatpush.bf16.msra.mxu0 %v5205
        %7061 = vmatpush.bf16.msra.mxu0 %v5201
        %7062 = vmatpush.bf16.msra.mxu0 %v5197
        %7063 = vmatpush.bf16.msra.mxu0 %v5193
        %7064 = vmatpush.bf16.msra.mxu0 %v5189
        %7065 = vmatpush.bf16.msra.mxu0 %v5185
        %7066 = vmatmul.bf16.gmra.mxu0 %v1309
        %v7067 = vpop.f32.mrf.mxu0
        %v7068 = vadd.f32 %v7055, %v7067
        %v7069 = vpop.f32.mrf.mxu0
        %7070 = vdwg.mxu0
        %7071 = vmatpush.bf16.msra.mxu0 %v5245
        %7072 = vmatpush.bf16.msra.mxu0 %v5241
        %7073 = vmatpush.bf16.msra.mxu0 %v5237
        %7074 = vmatpush.bf16.msra.mxu0 %v5233
        %7075 = vmatpush.bf16.msra.mxu0 %v5229
        %7076 = vmatpush.bf16.msra.mxu0 %v5225
        %7077 = vmatpush.bf16.msra.mxu0 %v5221
        %7078 = vmatpush.bf16.msra.mxu0 %v5217
        %7079 = vmatmul.bf16.gmra.mxu0 %v1310
        %v7080 = vpop.f32.mrf.mxu0
        %v7081 = vadd.f32 %v7068, %v7080
        %v7082 = vpop.f32.mrf.mxu0
        %7083 = vdwg.mxu0
        %7084 = vmatpush.bf16.msra.mxu0 %v5277
        %7085 = vmatpush.bf16.msra.mxu0 %v5273
        %7086 = vmatpush.bf16.msra.mxu0 %v5269
        %7087 = vmatpush.bf16.msra.mxu0 %v5265
        %7088 = vmatpush.bf16.msra.mxu0 %v5261
        %7089 = vmatpush.bf16.msra.mxu0 %v5257
        %7090 = vmatpush.bf16.msra.mxu0 %v5253
        %7091 = vmatpush.bf16.msra.mxu0 %v5249
        %7092 = vmatmul.bf16.gmra.mxu0 %v1311
        %v7093 = vpop.f32.mrf.mxu0
        %v7094 = vadd.f32 %v7081, %v7093
        %v7095 = vpop.f32.mrf.mxu0
        %7096 = vdwg.mxu0
        %7097 = vmatpush.bf16.msra.mxu0 %v5309
        %7098 = vmatpush.bf16.msra.mxu0 %v5305
        %7099 = vmatpush.bf16.msra.mxu0 %v5301
        %7100 = vmatpush.bf16.msra.mxu0 %v5297
        %7101 = vmatpush.bf16.msra.mxu0 %v5293
        %7102 = vmatpush.bf16.msra.mxu0 %v5289
        %7103 = vmatpush.bf16.msra.mxu0 %v5285
        %7104 = vmatpush.bf16.msra.mxu0 %v5281
        %7105 = vmatmul.bf16.gmra.mxu0 %v1312
        %v7106 = vpop.f32.mrf.mxu0
        %v7107 = vadd.f32 %v7094, %v7106
        %v7108 = vpop.f32.mrf.mxu0
        %7109 = vdwg.mxu0
        %7110 = vmatpush.bf16.msra.mxu0 %v4350
        %7111 = vmatpush.bf16.msra.mxu0 %v4346
        %7112 = vmatpush.bf16.msra.mxu0 %v4342
        %7113 = vmatpush.bf16.msra.mxu0 %v4338
        %7114 = vmatpush.bf16.msra.mxu0 %v4334
        %7115 = vmatpush.bf16.msra.mxu0 %v4330
        %7116 = vmatpush.bf16.msra.mxu0 %v4326
        %7117 = vmatpush.bf16.msra.mxu0 %v4322
        %7118 = vmatmul.bf16.gmra.mxu0 %v1276
        %v7119 = vpop.f32.mrf.mxu0
        %v7120 = vadd.f32 0.0, %v7119
        %v7121 = vpop.f32.mrf.mxu0
        %7122 = vdwg.mxu0
        %7123 = vmatpush.bf16.msra.mxu0 %v4382
        %7124 = vmatpush.bf16.msra.mxu0 %v4378
        %7125 = vmatpush.bf16.msra.mxu0 %v4374
        %7126 = vmatpush.bf16.msra.mxu0 %v4370
        %7127 = vmatpush.bf16.msra.mxu0 %v4366
        %7128 = vmatpush.bf16.msra.mxu0 %v4362
        %7129 = vmatpush.bf16.msra.mxu0 %v4358
        %7130 = vmatpush.bf16.msra.mxu0 %v4354
        %7131 = vmatmul.bf16.gmra.mxu0 %v1277
        %v7132 = vpop.f32.mrf.mxu0
        %v7133 = vadd.f32 %v7120, %v7132
        %v7134 = vpop.f32.mrf.mxu0
        %7135 = vdwg.mxu0
        %7136 = vmatpush.bf16.msra.mxu0 %v4414
        %7137 = vmatpush.bf16.msra.mxu0 %v4410
        %7138 = vmatpush.bf16.msra.mxu0 %v4406
        %7139 = vmatpush.bf16.msra.mxu0 %v4402
        %7140 = vmatpush.bf16.msra.mxu0 %v4398
        %7141 = vmatpush.bf16.msra.mxu0 %v4394
        %7142 = vmatpush.bf16.msra.mxu0 %v4390
        %7143 = vmatpush.bf16.msra.mxu0 %v4386
        %7144 = vmatmul.bf16.gmra.mxu0 %v1278
        %v7145 = vpop.f32.mrf.mxu0
        %v7146 = vadd.f32 %v7133, %v7145
        %v7147 = vpop.f32.mrf.mxu0
        %7148 = vdwg.mxu0
        %7149 = vmatpush.bf16.msra.mxu0 %v4446
        %7150 = vmatpush.bf16.msra.mxu0 %v4442
        %7151 = vmatpush.bf16.msra.mxu0 %v4438
        %7152 = vmatpush.bf16.msra.mxu0 %v4434
        %7153 = vmatpush.bf16.msra.mxu0 %v4430
        %7154 = vmatpush.bf16.msra.mxu0 %v4426
        %7155 = vmatpush.bf16.msra.mxu0 %v4422
        %7156 = vmatpush.bf16.msra.mxu0 %v4418
        %7157 = vmatmul.bf16.gmra.mxu0 %v1279
        %v7158 = vpop.f32.mrf.mxu0
        %v7159 = vadd.f32 %v7146, %v7158
        %v7160 = vpop.f32.mrf.mxu0
        %7161 = vdwg.mxu0
        %7162 = vmatpush.bf16.msra.mxu0 %v4478
        %7163 = vmatpush.bf16.msra.mxu0 %v4474
        %7164 = vmatpush.bf16.msra.mxu0 %v4470
        %7165 = vmatpush.bf16.msra.mxu0 %v4466
        %7166 = vmatpush.bf16.msra.mxu0 %v4462
        %7167 = vmatpush.bf16.msra.mxu0 %v4458
        %7168 = vmatpush.bf16.msra.mxu0 %v4454
        %7169 = vmatpush.bf16.msra.mxu0 %v4450
        %7170 = vmatmul.bf16.gmra.mxu0 %v1280
        %v7171 = vpop.f32.mrf.mxu0
        %v7172 = vadd.f32 %v7159, %v7171
        %v7173 = vpop.f32.mrf.mxu0
        %7174 = vdwg.mxu0
        %7175 = vmatpush.bf16.msra.mxu0 %v4510
        %7176 = vmatpush.bf16.msra.mxu0 %v4506
        %7177 = vmatpush.bf16.msra.mxu0 %v4502
        %7178 = vmatpush.bf16.msra.mxu0 %v4498
        %7179 = vmatpush.bf16.msra.mxu0 %v4494
        %7180 = vmatpush.bf16.msra.mxu0 %v4490
        %7181 = vmatpush.bf16.msra.mxu0 %v4486
        %7182 = vmatpush.bf16.msra.mxu0 %v4482
        %7183 = vmatmul.bf16.gmra.mxu0 %v1281
        %v7184 = vpop.f32.mrf.mxu0
        %v7185 = vadd.f32 %v7172, %v7184
        %v7186 = vpop.f32.mrf.mxu0
        %7187 = vdwg.mxu0
        %7188 = vmatpush.bf16.msra.mxu0 %v4542
        %7189 = vmatpush.bf16.msra.mxu0 %v4538
        %7190 = vmatpush.bf16.msra.mxu0 %v4534
        %7191 = vmatpush.bf16.msra.mxu0 %v4530
        %7192 = vmatpush.bf16.msra.mxu0 %v4526
        %7193 = vmatpush.bf16.msra.mxu0 %v4522
        %7194 = vmatpush.bf16.msra.mxu0 %v4518
        %7195 = vmatpush.bf16.msra.mxu0 %v4514
        %7196 = vmatmul.bf16.gmra.mxu0 %v1282
        %v7197 = vpop.f32.mrf.mxu0
        %v7198 = vadd.f32 %v7185, %v7197
        %v7199 = vpop.f32.mrf.mxu0
        %7200 = vdwg.mxu0
        %7201 = vmatpush.bf16.msra.mxu0 %v4574
        %7202 = vmatpush.bf16.msra.mxu0 %v4570
        %7203 = vmatpush.bf16.msra.mxu0 %v4566
        %7204 = vmatpush.bf16.msra.mxu0 %v4562
        %7205 = vmatpush.bf16.msra.mxu0 %v4558
        %7206 = vmatpush.bf16.msra.mxu0 %v4554
        %7207 = vmatpush.bf16.msra.mxu0 %v4550
        %7208 = vmatpush.bf16.msra.mxu0 %v4546
        %7209 = vmatmul.bf16.gmra.mxu0 %v1283
        %v7210 = vpop.f32.mrf.mxu0
        %v7211 = vadd.f32 %v7198, %v7210
        %v7212 = vpop.f32.mrf.mxu0
        %7213 = vdwg.mxu0
        %7214 = vmatpush.bf16.msra.mxu0 %v4606
        %7215 = vmatpush.bf16.msra.mxu0 %v4602
        %7216 = vmatpush.bf16.msra.mxu0 %v4598
        %7217 = vmatpush.bf16.msra.mxu0 %v4594
        %7218 = vmatpush.bf16.msra.mxu0 %v4590
        %7219 = vmatpush.bf16.msra.mxu0 %v4586
        %7220 = vmatpush.bf16.msra.mxu0 %v4582
        %7221 = vmatpush.bf16.msra.mxu0 %v4578
        %7222 = vmatmul.bf16.gmra.mxu0 %v1286
        %v7223 = vpop.f32.mrf.mxu0
        %v7224 = vadd.f32 %v7211, %v7223
        %v7225 = vpop.f32.mrf.mxu0
        %7226 = vdwg.mxu0
        %7227 = vmatpush.bf16.msra.mxu0 %v4638
        %7228 = vmatpush.bf16.msra.mxu0 %v4634
        %7229 = vmatpush.bf16.msra.mxu0 %v4630
        %7230 = vmatpush.bf16.msra.mxu0 %v4626
        %7231 = vmatpush.bf16.msra.mxu0 %v4622
        %7232 = vmatpush.bf16.msra.mxu0 %v4618
        %7233 = vmatpush.bf16.msra.mxu0 %v4614
        %7234 = vmatpush.bf16.msra.mxu0 %v4610
        %7235 = vmatmul.bf16.gmra.mxu0 %v1287
        %v7236 = vpop.f32.mrf.mxu0
        %v7237 = vadd.f32 %v7224, %v7236
        %v7238 = vpop.f32.mrf.mxu0
        %7239 = vdwg.mxu0
        %7240 = vmatpush.bf16.msra.mxu0 %v4670
        %7241 = vmatpush.bf16.msra.mxu0 %v4666
        %7242 = vmatpush.bf16.msra.mxu0 %v4662
        %7243 = vmatpush.bf16.msra.mxu0 %v4658
        %7244 = vmatpush.bf16.msra.mxu0 %v4654
        %7245 = vmatpush.bf16.msra.mxu0 %v4650
        %7246 = vmatpush.bf16.msra.mxu0 %v4646
        %7247 = vmatpush.bf16.msra.mxu0 %v4642
        %7248 = vmatmul.bf16.gmra.mxu0 %v1288
        %v7249 = vpop.f32.mrf.mxu0
        %v7250 = vadd.f32 %v7237, %v7249
        %v7251 = vpop.f32.mrf.mxu0
        %7252 = vdwg.mxu0
        %7253 = vmatpush.bf16.msra.mxu0 %v4702
        %7254 = vmatpush.bf16.msra.mxu0 %v4698
        %7255 = vmatpush.bf16.msra.mxu0 %v4694
        %7256 = vmatpush.bf16.msra.mxu0 %v4690
        %7257 = vmatpush.bf16.msra.mxu0 %v4686
        %7258 = vmatpush.bf16.msra.mxu0 %v4682
        %7259 = vmatpush.bf16.msra.mxu0 %v4678
        %7260 = vmatpush.bf16.msra.mxu0 %v4674
        %7261 = vmatmul.bf16.gmra.mxu0 %v1289
        %v7262 = vpop.f32.mrf.mxu0
        %v7263 = vadd.f32 %v7250, %v7262
        %v7264 = vpop.f32.mrf.mxu0
        %7265 = vdwg.mxu0
        %7266 = vmatpush.bf16.msra.mxu0 %v4734
        %7267 = vmatpush.bf16.msra.mxu0 %v4730
        %7268 = vmatpush.bf16.msra.mxu0 %v4726
        %7269 = vmatpush.bf16.msra.mxu0 %v4722
        %7270 = vmatpush.bf16.msra.mxu0 %v4718
        %7271 = vmatpush.bf16.msra.mxu0 %v4714
        %7272 = vmatpush.bf16.msra.mxu0 %v4710
        %7273 = vmatpush.bf16.msra.mxu0 %v4706
        %7274 = vmatmul.bf16.gmra.mxu0 %v1290
        %v7275 = vpop.f32.mrf.mxu0
        %v7276 = vadd.f32 %v7263, %v7275
        %v7277 = vpop.f32.mrf.mxu0
        %7278 = vdwg.mxu0
        %7279 = vmatpush.bf16.msra.mxu0 %v4766
        %7280 = vmatpush.bf16.msra.mxu0 %v4762
        %7281 = vmatpush.bf16.msra.mxu0 %v4758
        %7282 = vmatpush.bf16.msra.mxu0 %v4754
        %7283 = vmatpush.bf16.msra.mxu0 %v4750
        %7284 = vmatpush.bf16.msra.mxu0 %v4746
        %7285 = vmatpush.bf16.msra.mxu0 %v4742
        %7286 = vmatpush.bf16.msra.mxu0 %v4738
        %7287 = vmatmul.bf16.gmra.mxu0 %v1291
        %v7288 = vpop.f32.mrf.mxu0
        %v7289 = vadd.f32 %v7276, %v7288
        %v7290 = vpop.f32.mrf.mxu0
        %7291 = vdwg.mxu0
        %7292 = vmatpush.bf16.msra.mxu0 %v4798
        %7293 = vmatpush.bf16.msra.mxu0 %v4794
        %7294 = vmatpush.bf16.msra.mxu0 %v4790
        %7295 = vmatpush.bf16.msra.mxu0 %v4786
        %7296 = vmatpush.bf16.msra.mxu0 %v4782
        %7297 = vmatpush.bf16.msra.mxu0 %v4778
        %7298 = vmatpush.bf16.msra.mxu0 %v4774
        %7299 = vmatpush.bf16.msra.mxu0 %v4770
        %7300 = vmatmul.bf16.gmra.mxu0 %v1292
        %v7301 = vpop.f32.mrf.mxu0
        %v7302 = vadd.f32 %v7289, %v7301
        %v7303 = vpop.f32.mrf.mxu0
        %7304 = vdwg.mxu0
        %7305 = vmatpush.bf16.msra.mxu0 %v4830
        %7306 = vmatpush.bf16.msra.mxu0 %v4826
        %7307 = vmatpush.bf16.msra.mxu0 %v4822
        %7308 = vmatpush.bf16.msra.mxu0 %v4818
        %7309 = vmatpush.bf16.msra.mxu0 %v4814
        %7310 = vmatpush.bf16.msra.mxu0 %v4810
        %7311 = vmatpush.bf16.msra.mxu0 %v4806
        %7312 = vmatpush.bf16.msra.mxu0 %v4802
        %7313 = vmatmul.bf16.gmra.mxu0 %v1293
        %v7314 = vpop.f32.mrf.mxu0
        %v7315 = vadd.f32 %v7302, %v7314
        %v7316 = vpop.f32.mrf.mxu0
        %7317 = vdwg.mxu0
        %7318 = vmatpush.bf16.msra.mxu0 %v4862
        %7319 = vmatpush.bf16.msra.mxu0 %v4858
        %7320 = vmatpush.bf16.msra.mxu0 %v4854
        %7321 = vmatpush.bf16.msra.mxu0 %v4850
        %7322 = vmatpush.bf16.msra.mxu0 %v4846
        %7323 = vmatpush.bf16.msra.mxu0 %v4842
        %7324 = vmatpush.bf16.msra.mxu0 %v4838
        %7325 = vmatpush.bf16.msra.mxu0 %v4834
        %7326 = vmatmul.bf16.gmra.mxu0 %v1296
        %v7327 = vpop.f32.mrf.mxu0
        %v7328 = vadd.f32 %v7315, %v7327
        %v7329 = vpop.f32.mrf.mxu0
        %7330 = vdwg.mxu0
        %7331 = vmatpush.bf16.msra.mxu0 %v4894
        %7332 = vmatpush.bf16.msra.mxu0 %v4890
        %7333 = vmatpush.bf16.msra.mxu0 %v4886
        %7334 = vmatpush.bf16.msra.mxu0 %v4882
        %7335 = vmatpush.bf16.msra.mxu0 %v4878
        %7336 = vmatpush.bf16.msra.mxu0 %v4874
        %7337 = vmatpush.bf16.msra.mxu0 %v4870
        %7338 = vmatpush.bf16.msra.mxu0 %v4866
        %7339 = vmatmul.bf16.gmra.mxu0 %v1297
        %v7340 = vpop.f32.mrf.mxu0
        %v7341 = vadd.f32 %v7328, %v7340
        %v7342 = vpop.f32.mrf.mxu0
        %7343 = vdwg.mxu0
        %7344 = vmatpush.bf16.msra.mxu0 %v4926
        %7345 = vmatpush.bf16.msra.mxu0 %v4922
        %7346 = vmatpush.bf16.msra.mxu0 %v4918
        %7347 = vmatpush.bf16.msra.mxu0 %v4914
        %7348 = vmatpush.bf16.msra.mxu0 %v4910
        %7349 = vmatpush.bf16.msra.mxu0 %v4906
        %7350 = vmatpush.bf16.msra.mxu0 %v4902
        %7351 = vmatpush.bf16.msra.mxu0 %v4898
        %7352 = vmatmul.bf16.gmra.mxu0 %v1298
        %v7353 = vpop.f32.mrf.mxu0
        %v7354 = vadd.f32 %v7341, %v7353
        %v7355 = vpop.f32.mrf.mxu0
        %7356 = vdwg.mxu0
        %7357 = vmatpush.bf16.msra.mxu0 %v4958
        %7358 = vmatpush.bf16.msra.mxu0 %v4954
        %7359 = vmatpush.bf16.msra.mxu0 %v4950
        %7360 = vmatpush.bf16.msra.mxu0 %v4946
        %7361 = vmatpush.bf16.msra.mxu0 %v4942
        %7362 = vmatpush.bf16.msra.mxu0 %v4938
        %7363 = vmatpush.bf16.msra.mxu0 %v4934
        %7364 = vmatpush.bf16.msra.mxu0 %v4930
        %7365 = vmatmul.bf16.gmra.mxu0 %v1299
        %v7366 = vpop.f32.mrf.mxu0
        %v7367 = vadd.f32 %v7354, %v7366
        %v7368 = vpop.f32.mrf.mxu0
        %7369 = vdwg.mxu0
        %7370 = vmatpush.bf16.msra.mxu0 %v4990
        %7371 = vmatpush.bf16.msra.mxu0 %v4986
        %7372 = vmatpush.bf16.msra.mxu0 %v4982
        %7373 = vmatpush.bf16.msra.mxu0 %v4978
        %7374 = vmatpush.bf16.msra.mxu0 %v4974
        %7375 = vmatpush.bf16.msra.mxu0 %v4970
        %7376 = vmatpush.bf16.msra.mxu0 %v4966
        %7377 = vmatpush.bf16.msra.mxu0 %v4962
        %7378 = vmatmul.bf16.gmra.mxu0 %v1300
        %v7379 = vpop.f32.mrf.mxu0
        %v7380 = vadd.f32 %v7367, %v7379
        %v7381 = vpop.f32.mrf.mxu0
        %7382 = vdwg.mxu0
        %7383 = vmatpush.bf16.msra.mxu0 %v5022
        %7384 = vmatpush.bf16.msra.mxu0 %v5018
        %7385 = vmatpush.bf16.msra.mxu0 %v5014
        %7386 = vmatpush.bf16.msra.mxu0 %v5010
        %7387 = vmatpush.bf16.msra.mxu0 %v5006
        %7388 = vmatpush.bf16.msra.mxu0 %v5002
        %7389 = vmatpush.bf16.msra.mxu0 %v4998
        %7390 = vmatpush.bf16.msra.mxu0 %v4994
        %7391 = vmatmul.bf16.gmra.mxu0 %v1301
        %v7392 = vpop.f32.mrf.mxu0
        %v7393 = vadd.f32 %v7380, %v7392
        %v7394 = vpop.f32.mrf.mxu0
        %7395 = vdwg.mxu0
        %7396 = vmatpush.bf16.msra.mxu0 %v5054
        %7397 = vmatpush.bf16.msra.mxu0 %v5050
        %7398 = vmatpush.bf16.msra.mxu0 %v5046
        %7399 = vmatpush.bf16.msra.mxu0 %v5042
        %7400 = vmatpush.bf16.msra.mxu0 %v5038
        %7401 = vmatpush.bf16.msra.mxu0 %v5034
        %7402 = vmatpush.bf16.msra.mxu0 %v5030
        %7403 = vmatpush.bf16.msra.mxu0 %v5026
        %7404 = vmatmul.bf16.gmra.mxu0 %v1302
        %v7405 = vpop.f32.mrf.mxu0
        %v7406 = vadd.f32 %v7393, %v7405
        %v7407 = vpop.f32.mrf.mxu0
        %7408 = vdwg.mxu0
        %7409 = vmatpush.bf16.msra.mxu0 %v5086
        %7410 = vmatpush.bf16.msra.mxu0 %v5082
        %7411 = vmatpush.bf16.msra.mxu0 %v5078
        %7412 = vmatpush.bf16.msra.mxu0 %v5074
        %7413 = vmatpush.bf16.msra.mxu0 %v5070
        %7414 = vmatpush.bf16.msra.mxu0 %v5066
        %7415 = vmatpush.bf16.msra.mxu0 %v5062
        %7416 = vmatpush.bf16.msra.mxu0 %v5058
        %7417 = vmatmul.bf16.gmra.mxu0 %v1303
        %v7418 = vpop.f32.mrf.mxu0
        %v7419 = vadd.f32 %v7406, %v7418
        %v7420 = vpop.f32.mrf.mxu0
        %7421 = vdwg.mxu0
        %7422 = vmatpush.bf16.msra.mxu0 %v5118
        %7423 = vmatpush.bf16.msra.mxu0 %v5114
        %7424 = vmatpush.bf16.msra.mxu0 %v5110
        %7425 = vmatpush.bf16.msra.mxu0 %v5106
        %7426 = vmatpush.bf16.msra.mxu0 %v5102
        %7427 = vmatpush.bf16.msra.mxu0 %v5098
        %7428 = vmatpush.bf16.msra.mxu0 %v5094
        %7429 = vmatpush.bf16.msra.mxu0 %v5090
        %7430 = vmatmul.bf16.gmra.mxu0 %v1306
        %v7431 = vpop.f32.mrf.mxu0
        %v7432 = vadd.f32 %v7419, %v7431
        %v7433 = vpop.f32.mrf.mxu0
        %7434 = vdwg.mxu0
        %7435 = vmatpush.bf16.msra.mxu0 %v5150
        %7436 = vmatpush.bf16.msra.mxu0 %v5146
        %7437 = vmatpush.bf16.msra.mxu0 %v5142
        %7438 = vmatpush.bf16.msra.mxu0 %v5138
        %7439 = vmatpush.bf16.msra.mxu0 %v5134
        %7440 = vmatpush.bf16.msra.mxu0 %v5130
        %7441 = vmatpush.bf16.msra.mxu0 %v5126
        %7442 = vmatpush.bf16.msra.mxu0 %v5122
        %7443 = vmatmul.bf16.gmra.mxu0 %v1307
        %v7444 = vpop.f32.mrf.mxu0
        %v7445 = vadd.f32 %v7432, %v7444
        %v7446 = vpop.f32.mrf.mxu0
        %7447 = vdwg.mxu0
        %7448 = vmatpush.bf16.msra.mxu0 %v5182
        %7449 = vmatpush.bf16.msra.mxu0 %v5178
        %7450 = vmatpush.bf16.msra.mxu0 %v5174
        %7451 = vmatpush.bf16.msra.mxu0 %v5170
        %7452 = vmatpush.bf16.msra.mxu0 %v5166
        %7453 = vmatpush.bf16.msra.mxu0 %v5162
        %7454 = vmatpush.bf16.msra.mxu0 %v5158
        %7455 = vmatpush.bf16.msra.mxu0 %v5154
        %7456 = vmatmul.bf16.gmra.mxu0 %v1308
        %v7457 = vpop.f32.mrf.mxu0
        %v7458 = vadd.f32 %v7445, %v7457
        %v7459 = vpop.f32.mrf.mxu0
        %7460 = vdwg.mxu0
        %7461 = vmatpush.bf16.msra.mxu0 %v5214
        %7462 = vmatpush.bf16.msra.mxu0 %v5210
        %7463 = vmatpush.bf16.msra.mxu0 %v5206
        %7464 = vmatpush.bf16.msra.mxu0 %v5202
        %7465 = vmatpush.bf16.msra.mxu0 %v5198
        %7466 = vmatpush.bf16.msra.mxu0 %v5194
        %7467 = vmatpush.bf16.msra.mxu0 %v5190
        %7468 = vmatpush.bf16.msra.mxu0 %v5186
        %7469 = vmatmul.bf16.gmra.mxu0 %v1309
        %v7470 = vpop.f32.mrf.mxu0
        %v7471 = vadd.f32 %v7458, %v7470
        %v7472 = vpop.f32.mrf.mxu0
        %7473 = vdwg.mxu0
        %7474 = vmatpush.bf16.msra.mxu0 %v5246
        %7475 = vmatpush.bf16.msra.mxu0 %v5242
        %7476 = vmatpush.bf16.msra.mxu0 %v5238
        %7477 = vmatpush.bf16.msra.mxu0 %v5234
        %7478 = vmatpush.bf16.msra.mxu0 %v5230
        %7479 = vmatpush.bf16.msra.mxu0 %v5226
        %7480 = vmatpush.bf16.msra.mxu0 %v5222
        %7481 = vmatpush.bf16.msra.mxu0 %v5218
        %7482 = vmatmul.bf16.gmra.mxu0 %v1310
        %v7483 = vpop.f32.mrf.mxu0
        %v7484 = vadd.f32 %v7471, %v7483
        %v7485 = vpop.f32.mrf.mxu0
        %7486 = vdwg.mxu0
        %7487 = vmatpush.bf16.msra.mxu0 %v5278
        %7488 = vmatpush.bf16.msra.mxu0 %v5274
        %7489 = vmatpush.bf16.msra.mxu0 %v5270
        %7490 = vmatpush.bf16.msra.mxu0 %v5266
        %7491 = vmatpush.bf16.msra.mxu0 %v5262
        %7492 = vmatpush.bf16.msra.mxu0 %v5258
        %7493 = vmatpush.bf16.msra.mxu0 %v5254
        %7494 = vmatpush.bf16.msra.mxu0 %v5250
        %7495 = vmatmul.bf16.gmra.mxu0 %v1311
        %v7496 = vpop.f32.mrf.mxu0
        %v7497 = vadd.f32 %v7484, %v7496
        %v7498 = vpop.f32.mrf.mxu0
        %7499 = vdwg.mxu0
        %7500 = vmatpush.bf16.msra.mxu0 %v5310
        %7501 = vmatpush.bf16.msra.mxu0 %v5306
        %7502 = vmatpush.bf16.msra.mxu0 %v5302
        %7503 = vmatpush.bf16.msra.mxu0 %v5298
        %7504 = vmatpush.bf16.msra.mxu0 %v5294
        %7505 = vmatpush.bf16.msra.mxu0 %v5290
        %7506 = vmatpush.bf16.msra.mxu0 %v5286
        %7507 = vmatpush.bf16.msra.mxu0 %v5282
        %7508 = vmatmul.bf16.gmra.mxu0 %v1312
        %v7509 = vpop.f32.mrf.mxu0
        %v7510 = vadd.f32 %v7497, %v7509
        %v7511 = vpop.f32.mrf.mxu0
        %7512 = vdwg.mxu0
        %7513 = vmatpush.bf16.msra.mxu0 %v4351
        %7514 = vmatpush.bf16.msra.mxu0 %v4347
        %7515 = vmatpush.bf16.msra.mxu0 %v4343
        %7516 = vmatpush.bf16.msra.mxu0 %v4339
        %7517 = vmatpush.bf16.msra.mxu0 %v4335
        %7518 = vmatpush.bf16.msra.mxu0 %v4331
        %7519 = vmatpush.bf16.msra.mxu0 %v4327
        %7520 = vmatpush.bf16.msra.mxu0 %v4323
        %7521 = vmatmul.bf16.gmra.mxu0 %v1276
        %v7522 = vpop.f32.mrf.mxu0
        %v7523 = vadd.f32 0.0, %v7522
        %v7524 = vpop.f32.mrf.mxu0
        %7525 = vdwg.mxu0
        %7526 = vmatpush.bf16.msra.mxu0 %v4383
        %7527 = vmatpush.bf16.msra.mxu0 %v4379
        %7528 = vmatpush.bf16.msra.mxu0 %v4375
        %7529 = vmatpush.bf16.msra.mxu0 %v4371
        %7530 = vmatpush.bf16.msra.mxu0 %v4367
        %7531 = vmatpush.bf16.msra.mxu0 %v4363
        %7532 = vmatpush.bf16.msra.mxu0 %v4359
        %7533 = vmatpush.bf16.msra.mxu0 %v4355
        %7534 = vmatmul.bf16.gmra.mxu0 %v1277
        %v7535 = vpop.f32.mrf.mxu0
        %v7536 = vadd.f32 %v7523, %v7535
        %v7537 = vpop.f32.mrf.mxu0
        %7538 = vdwg.mxu0
        %7539 = vmatpush.bf16.msra.mxu0 %v4415
        %7540 = vmatpush.bf16.msra.mxu0 %v4411
        %7541 = vmatpush.bf16.msra.mxu0 %v4407
        %7542 = vmatpush.bf16.msra.mxu0 %v4403
        %7543 = vmatpush.bf16.msra.mxu0 %v4399
        %7544 = vmatpush.bf16.msra.mxu0 %v4395
        %7545 = vmatpush.bf16.msra.mxu0 %v4391
        %7546 = vmatpush.bf16.msra.mxu0 %v4387
        %7547 = vmatmul.bf16.gmra.mxu0 %v1278
        %v7548 = vpop.f32.mrf.mxu0
        %v7549 = vadd.f32 %v7536, %v7548
        %v7550 = vpop.f32.mrf.mxu0
        %7551 = vdwg.mxu0
        %7552 = vmatpush.bf16.msra.mxu0 %v4447
        %7553 = vmatpush.bf16.msra.mxu0 %v4443
        %7554 = vmatpush.bf16.msra.mxu0 %v4439
        %7555 = vmatpush.bf16.msra.mxu0 %v4435
        %7556 = vmatpush.bf16.msra.mxu0 %v4431
        %7557 = vmatpush.bf16.msra.mxu0 %v4427
        %7558 = vmatpush.bf16.msra.mxu0 %v4423
        %7559 = vmatpush.bf16.msra.mxu0 %v4419
        %7560 = vmatmul.bf16.gmra.mxu0 %v1279
        %v7561 = vpop.f32.mrf.mxu0
        %v7562 = vadd.f32 %v7549, %v7561
        %v7563 = vpop.f32.mrf.mxu0
        %7564 = vdwg.mxu0
        %7565 = vmatpush.bf16.msra.mxu0 %v4479
        %7566 = vmatpush.bf16.msra.mxu0 %v4475
        %7567 = vmatpush.bf16.msra.mxu0 %v4471
        %7568 = vmatpush.bf16.msra.mxu0 %v4467
        %7569 = vmatpush.bf16.msra.mxu0 %v4463
        %7570 = vmatpush.bf16.msra.mxu0 %v4459
        %7571 = vmatpush.bf16.msra.mxu0 %v4455
        %7572 = vmatpush.bf16.msra.mxu0 %v4451
        %7573 = vmatmul.bf16.gmra.mxu0 %v1280
        %v7574 = vpop.f32.mrf.mxu0
        %v7575 = vadd.f32 %v7562, %v7574
        %v7576 = vpop.f32.mrf.mxu0
        %7577 = vdwg.mxu0
        %7578 = vmatpush.bf16.msra.mxu0 %v4511
        %7579 = vmatpush.bf16.msra.mxu0 %v4507
        %7580 = vmatpush.bf16.msra.mxu0 %v4503
        %7581 = vmatpush.bf16.msra.mxu0 %v4499
        %7582 = vmatpush.bf16.msra.mxu0 %v4495
        %7583 = vmatpush.bf16.msra.mxu0 %v4491
        %7584 = vmatpush.bf16.msra.mxu0 %v4487
        %7585 = vmatpush.bf16.msra.mxu0 %v4483
        %7586 = vmatmul.bf16.gmra.mxu0 %v1281
        %v7587 = vpop.f32.mrf.mxu0
        %v7588 = vadd.f32 %v7575, %v7587
        %v7589 = vpop.f32.mrf.mxu0
        %7590 = vdwg.mxu0
        %7591 = vmatpush.bf16.msra.mxu0 %v4543
        %7592 = vmatpush.bf16.msra.mxu0 %v4539
        %7593 = vmatpush.bf16.msra.mxu0 %v4535
        %7594 = vmatpush.bf16.msra.mxu0 %v4531
        %7595 = vmatpush.bf16.msra.mxu0 %v4527
        %7596 = vmatpush.bf16.msra.mxu0 %v4523
        %7597 = vmatpush.bf16.msra.mxu0 %v4519
        %7598 = vmatpush.bf16.msra.mxu0 %v4515
        %7599 = vmatmul.bf16.gmra.mxu0 %v1282
        %v7600 = vpop.f32.mrf.mxu0
        %v7601 = vadd.f32 %v7588, %v7600
        %v7602 = vpop.f32.mrf.mxu0
        %7603 = vdwg.mxu0
        %7604 = vmatpush.bf16.msra.mxu0 %v4575
        %7605 = vmatpush.bf16.msra.mxu0 %v4571
        %7606 = vmatpush.bf16.msra.mxu0 %v4567
        %7607 = vmatpush.bf16.msra.mxu0 %v4563
        %7608 = vmatpush.bf16.msra.mxu0 %v4559
        %7609 = vmatpush.bf16.msra.mxu0 %v4555
        %7610 = vmatpush.bf16.msra.mxu0 %v4551
        %7611 = vmatpush.bf16.msra.mxu0 %v4547
        %7612 = vmatmul.bf16.gmra.mxu0 %v1283
        %v7613 = vpop.f32.mrf.mxu0
        %v7614 = vadd.f32 %v7601, %v7613
        %v7615 = vpop.f32.mrf.mxu0
        %7616 = vdwg.mxu0
        %7617 = vmatpush.bf16.msra.mxu0 %v4607
        %7618 = vmatpush.bf16.msra.mxu0 %v4603
        %7619 = vmatpush.bf16.msra.mxu0 %v4599
        %7620 = vmatpush.bf16.msra.mxu0 %v4595
        %7621 = vmatpush.bf16.msra.mxu0 %v4591
        %7622 = vmatpush.bf16.msra.mxu0 %v4587
        %7623 = vmatpush.bf16.msra.mxu0 %v4583
        %7624 = vmatpush.bf16.msra.mxu0 %v4579
        %7625 = vmatmul.bf16.gmra.mxu0 %v1286
        %v7626 = vpop.f32.mrf.mxu0
        %v7627 = vadd.f32 %v7614, %v7626
        %v7628 = vpop.f32.mrf.mxu0
        %7629 = vdwg.mxu0
        %7630 = vmatpush.bf16.msra.mxu0 %v4639
        %7631 = vmatpush.bf16.msra.mxu0 %v4635
        %7632 = vmatpush.bf16.msra.mxu0 %v4631
        %7633 = vmatpush.bf16.msra.mxu0 %v4627
        %7634 = vmatpush.bf16.msra.mxu0 %v4623
        %7635 = vmatpush.bf16.msra.mxu0 %v4619
        %7636 = vmatpush.bf16.msra.mxu0 %v4615
        %7637 = vmatpush.bf16.msra.mxu0 %v4611
        %7638 = vmatmul.bf16.gmra.mxu0 %v1287
        %v7639 = vpop.f32.mrf.mxu0
        %v7640 = vadd.f32 %v7627, %v7639
        %v7641 = vpop.f32.mrf.mxu0
        %7642 = vdwg.mxu0
        %7643 = vmatpush.bf16.msra.mxu0 %v4671
        %7644 = vmatpush.bf16.msra.mxu0 %v4667
        %7645 = vmatpush.bf16.msra.mxu0 %v4663
        %7646 = vmatpush.bf16.msra.mxu0 %v4659
        %7647 = vmatpush.bf16.msra.mxu0 %v4655
        %7648 = vmatpush.bf16.msra.mxu0 %v4651
        %7649 = vmatpush.bf16.msra.mxu0 %v4647
        %7650 = vmatpush.bf16.msra.mxu0 %v4643
        %7651 = vmatmul.bf16.gmra.mxu0 %v1288
        %v7652 = vpop.f32.mrf.mxu0
        %v7653 = vadd.f32 %v7640, %v7652
        %v7654 = vpop.f32.mrf.mxu0
        %7655 = vdwg.mxu0
        %7656 = vmatpush.bf16.msra.mxu0 %v4703
        %7657 = vmatpush.bf16.msra.mxu0 %v4699
        %7658 = vmatpush.bf16.msra.mxu0 %v4695
        %7659 = vmatpush.bf16.msra.mxu0 %v4691
        %7660 = vmatpush.bf16.msra.mxu0 %v4687
        %7661 = vmatpush.bf16.msra.mxu0 %v4683
        %7662 = vmatpush.bf16.msra.mxu0 %v4679
        %7663 = vmatpush.bf16.msra.mxu0 %v4675
        %7664 = vmatmul.bf16.gmra.mxu0 %v1289
        %v7665 = vpop.f32.mrf.mxu0
        %v7666 = vadd.f32 %v7653, %v7665
        %v7667 = vpop.f32.mrf.mxu0
        %7668 = vdwg.mxu0
        %7669 = vmatpush.bf16.msra.mxu0 %v4735
        %7670 = vmatpush.bf16.msra.mxu0 %v4731
        %7671 = vmatpush.bf16.msra.mxu0 %v4727
        %7672 = vmatpush.bf16.msra.mxu0 %v4723
        %7673 = vmatpush.bf16.msra.mxu0 %v4719
        %7674 = vmatpush.bf16.msra.mxu0 %v4715
        %7675 = vmatpush.bf16.msra.mxu0 %v4711
        %7676 = vmatpush.bf16.msra.mxu0 %v4707
        %7677 = vmatmul.bf16.gmra.mxu0 %v1290
        %v7678 = vpop.f32.mrf.mxu0
        %v7679 = vadd.f32 %v7666, %v7678
        %v7680 = vpop.f32.mrf.mxu0
        %7681 = vdwg.mxu0
        %7682 = vmatpush.bf16.msra.mxu0 %v4767
        %7683 = vmatpush.bf16.msra.mxu0 %v4763
        %7684 = vmatpush.bf16.msra.mxu0 %v4759
        %7685 = vmatpush.bf16.msra.mxu0 %v4755
        %7686 = vmatpush.bf16.msra.mxu0 %v4751
        %7687 = vmatpush.bf16.msra.mxu0 %v4747
        %7688 = vmatpush.bf16.msra.mxu0 %v4743
        %7689 = vmatpush.bf16.msra.mxu0 %v4739
        %7690 = vmatmul.bf16.gmra.mxu0 %v1291
        %v7691 = vpop.f32.mrf.mxu0
        %v7692 = vadd.f32 %v7679, %v7691
        %v7693 = vpop.f32.mrf.mxu0
        %7694 = vdwg.mxu0
        %7695 = vmatpush.bf16.msra.mxu0 %v4799
        %7696 = vmatpush.bf16.msra.mxu0 %v4795
        %7697 = vmatpush.bf16.msra.mxu0 %v4791
        %7698 = vmatpush.bf16.msra.mxu0 %v4787
        %7699 = vmatpush.bf16.msra.mxu0 %v4783
        %7700 = vmatpush.bf16.msra.mxu0 %v4779
        %7701 = vmatpush.bf16.msra.mxu0 %v4775
        %7702 = vmatpush.bf16.msra.mxu0 %v4771
        %7703 = vmatmul.bf16.gmra.mxu0 %v1292
        %v7704 = vpop.f32.mrf.mxu0
        %v7705 = vadd.f32 %v7692, %v7704
        %v7706 = vpop.f32.mrf.mxu0
        %7707 = vdwg.mxu0
        %7708 = vmatpush.bf16.msra.mxu0 %v4831
        %7709 = vmatpush.bf16.msra.mxu0 %v4827
        %7710 = vmatpush.bf16.msra.mxu0 %v4823
        %7711 = vmatpush.bf16.msra.mxu0 %v4819
        %7712 = vmatpush.bf16.msra.mxu0 %v4815
        %7713 = vmatpush.bf16.msra.mxu0 %v4811
        %7714 = vmatpush.bf16.msra.mxu0 %v4807
        %7715 = vmatpush.bf16.msra.mxu0 %v4803
        %7716 = vmatmul.bf16.gmra.mxu0 %v1293
        %v7717 = vpop.f32.mrf.mxu0
        %v7718 = vadd.f32 %v7705, %v7717
        %v7719 = vpop.f32.mrf.mxu0
        %7720 = vdwg.mxu0
        %7721 = vmatpush.bf16.msra.mxu0 %v4863
        %7722 = vmatpush.bf16.msra.mxu0 %v4859
        %7723 = vmatpush.bf16.msra.mxu0 %v4855
        %7724 = vmatpush.bf16.msra.mxu0 %v4851
        %7725 = vmatpush.bf16.msra.mxu0 %v4847
        %7726 = vmatpush.bf16.msra.mxu0 %v4843
        %7727 = vmatpush.bf16.msra.mxu0 %v4839
        %7728 = vmatpush.bf16.msra.mxu0 %v4835
        %7729 = vmatmul.bf16.gmra.mxu0 %v1296
        %v7730 = vpop.f32.mrf.mxu0
        %v7731 = vadd.f32 %v7718, %v7730
        %v7732 = vpop.f32.mrf.mxu0
        %7733 = vdwg.mxu0
        %7734 = vmatpush.bf16.msra.mxu0 %v4895
        %7735 = vmatpush.bf16.msra.mxu0 %v4891
        %7736 = vmatpush.bf16.msra.mxu0 %v4887
        %7737 = vmatpush.bf16.msra.mxu0 %v4883
        %7738 = vmatpush.bf16.msra.mxu0 %v4879
        %7739 = vmatpush.bf16.msra.mxu0 %v4875
        %7740 = vmatpush.bf16.msra.mxu0 %v4871
        %7741 = vmatpush.bf16.msra.mxu0 %v4867
        %7742 = vmatmul.bf16.gmra.mxu0 %v1297
        %v7743 = vpop.f32.mrf.mxu0
        %v7744 = vadd.f32 %v7731, %v7743
        %v7745 = vpop.f32.mrf.mxu0
        %7746 = vdwg.mxu0
        %7747 = vmatpush.bf16.msra.mxu0 %v4927
        %7748 = vmatpush.bf16.msra.mxu0 %v4923
        %7749 = vmatpush.bf16.msra.mxu0 %v4919
        %7750 = vmatpush.bf16.msra.mxu0 %v4915
        %7751 = vmatpush.bf16.msra.mxu0 %v4911
        %7752 = vmatpush.bf16.msra.mxu0 %v4907
        %7753 = vmatpush.bf16.msra.mxu0 %v4903
        %7754 = vmatpush.bf16.msra.mxu0 %v4899
        %7755 = vmatmul.bf16.gmra.mxu0 %v1298
        %v7756 = vpop.f32.mrf.mxu0
        %v7757 = vadd.f32 %v7744, %v7756
        %v7758 = vpop.f32.mrf.mxu0
        %7759 = vdwg.mxu0
        %7760 = vmatpush.bf16.msra.mxu0 %v4959
        %7761 = vmatpush.bf16.msra.mxu0 %v4955
        %7762 = vmatpush.bf16.msra.mxu0 %v4951
        %7763 = vmatpush.bf16.msra.mxu0 %v4947
        %7764 = vmatpush.bf16.msra.mxu0 %v4943
        %7765 = vmatpush.bf16.msra.mxu0 %v4939
        %7766 = vmatpush.bf16.msra.mxu0 %v4935
        %7767 = vmatpush.bf16.msra.mxu0 %v4931
        %7768 = vmatmul.bf16.gmra.mxu0 %v1299
        %v7769 = vpop.f32.mrf.mxu0
        %v7770 = vadd.f32 %v7757, %v7769
        %v7771 = vpop.f32.mrf.mxu0
        %7772 = vdwg.mxu0
        %7773 = vmatpush.bf16.msra.mxu0 %v4991
        %7774 = vmatpush.bf16.msra.mxu0 %v4987
        %7775 = vmatpush.bf16.msra.mxu0 %v4983
        %7776 = vmatpush.bf16.msra.mxu0 %v4979
        %7777 = vmatpush.bf16.msra.mxu0 %v4975
        %7778 = vmatpush.bf16.msra.mxu0 %v4971
        %7779 = vmatpush.bf16.msra.mxu0 %v4967
        %7780 = vmatpush.bf16.msra.mxu0 %v4963
        %7781 = vmatmul.bf16.gmra.mxu0 %v1300
        %v7782 = vpop.f32.mrf.mxu0
        %v7783 = vadd.f32 %v7770, %v7782
        %v7784 = vpop.f32.mrf.mxu0
        %7785 = vdwg.mxu0
        %7786 = vmatpush.bf16.msra.mxu0 %v5023
        %7787 = vmatpush.bf16.msra.mxu0 %v5019
        %7788 = vmatpush.bf16.msra.mxu0 %v5015
        %7789 = vmatpush.bf16.msra.mxu0 %v5011
        %7790 = vmatpush.bf16.msra.mxu0 %v5007
        %7791 = vmatpush.bf16.msra.mxu0 %v5003
        %7792 = vmatpush.bf16.msra.mxu0 %v4999
        %7793 = vmatpush.bf16.msra.mxu0 %v4995
        %7794 = vmatmul.bf16.gmra.mxu0 %v1301
        %v7795 = vpop.f32.mrf.mxu0
        %v7796 = vadd.f32 %v7783, %v7795
        %v7797 = vpop.f32.mrf.mxu0
        %7798 = vdwg.mxu0
        %7799 = vmatpush.bf16.msra.mxu0 %v5055
        %7800 = vmatpush.bf16.msra.mxu0 %v5051
        %7801 = vmatpush.bf16.msra.mxu0 %v5047
        %7802 = vmatpush.bf16.msra.mxu0 %v5043
        %7803 = vmatpush.bf16.msra.mxu0 %v5039
        %7804 = vmatpush.bf16.msra.mxu0 %v5035
        %7805 = vmatpush.bf16.msra.mxu0 %v5031
        %7806 = vmatpush.bf16.msra.mxu0 %v5027
        %7807 = vmatmul.bf16.gmra.mxu0 %v1302
        %v7808 = vpop.f32.mrf.mxu0
        %v7809 = vadd.f32 %v7796, %v7808
        %v7810 = vpop.f32.mrf.mxu0
        %7811 = vdwg.mxu0
        %7812 = vmatpush.bf16.msra.mxu0 %v5087
        %7813 = vmatpush.bf16.msra.mxu0 %v5083
        %7814 = vmatpush.bf16.msra.mxu0 %v5079
        %7815 = vmatpush.bf16.msra.mxu0 %v5075
        %7816 = vmatpush.bf16.msra.mxu0 %v5071
        %7817 = vmatpush.bf16.msra.mxu0 %v5067
        %7818 = vmatpush.bf16.msra.mxu0 %v5063
        %7819 = vmatpush.bf16.msra.mxu0 %v5059
        %7820 = vmatmul.bf16.gmra.mxu0 %v1303
        %v7821 = vpop.f32.mrf.mxu0
        %v7822 = vadd.f32 %v7809, %v7821
        %v7823 = vpop.f32.mrf.mxu0
        %7824 = vdwg.mxu0
        %7825 = vmatpush.bf16.msra.mxu0 %v5119
        %7826 = vmatpush.bf16.msra.mxu0 %v5115
        %7827 = vmatpush.bf16.msra.mxu0 %v5111
        %7828 = vmatpush.bf16.msra.mxu0 %v5107
        %7829 = vmatpush.bf16.msra.mxu0 %v5103
        %7830 = vmatpush.bf16.msra.mxu0 %v5099
        %7831 = vmatpush.bf16.msra.mxu0 %v5095
        %7832 = vmatpush.bf16.msra.mxu0 %v5091
        %7833 = vmatmul.bf16.gmra.mxu0 %v1306
        %v7834 = vpop.f32.mrf.mxu0
        %v7835 = vadd.f32 %v7822, %v7834
        %v7836 = vpop.f32.mrf.mxu0
        %7837 = vdwg.mxu0
        %7838 = vmatpush.bf16.msra.mxu0 %v5151
        %7839 = vmatpush.bf16.msra.mxu0 %v5147
        %7840 = vmatpush.bf16.msra.mxu0 %v5143
        %7841 = vmatpush.bf16.msra.mxu0 %v5139
        %7842 = vmatpush.bf16.msra.mxu0 %v5135
        %7843 = vmatpush.bf16.msra.mxu0 %v5131
        %7844 = vmatpush.bf16.msra.mxu0 %v5127
        %7845 = vmatpush.bf16.msra.mxu0 %v5123
        %7846 = vmatmul.bf16.gmra.mxu0 %v1307
        %v7847 = vpop.f32.mrf.mxu0
        %v7848 = vadd.f32 %v7835, %v7847
        %v7849 = vpop.f32.mrf.mxu0
        %7850 = vdwg.mxu0
        %7851 = vmatpush.bf16.msra.mxu0 %v5183
        %7852 = vmatpush.bf16.msra.mxu0 %v5179
        %7853 = vmatpush.bf16.msra.mxu0 %v5175
        %7854 = vmatpush.bf16.msra.mxu0 %v5171
        %7855 = vmatpush.bf16.msra.mxu0 %v5167
        %7856 = vmatpush.bf16.msra.mxu0 %v5163
        %7857 = vmatpush.bf16.msra.mxu0 %v5159
        %7858 = vmatpush.bf16.msra.mxu0 %v5155
        %7859 = vmatmul.bf16.gmra.mxu0 %v1308
        %v7860 = vpop.f32.mrf.mxu0
        %v7861 = vadd.f32 %v7848, %v7860
        %v7862 = vpop.f32.mrf.mxu0
        %7863 = vdwg.mxu0
        %7864 = vmatpush.bf16.msra.mxu0 %v5215
        %7865 = vmatpush.bf16.msra.mxu0 %v5211
        %7866 = vmatpush.bf16.msra.mxu0 %v5207
        %7867 = vmatpush.bf16.msra.mxu0 %v5203
        %7868 = vmatpush.bf16.msra.mxu0 %v5199
        %7869 = vmatpush.bf16.msra.mxu0 %v5195
        %7870 = vmatpush.bf16.msra.mxu0 %v5191
        %7871 = vmatpush.bf16.msra.mxu0 %v5187
        %7872 = vmatmul.bf16.gmra.mxu0 %v1309
        %v7873 = vpop.f32.mrf.mxu0
        %v7874 = vadd.f32 %v7861, %v7873
        %v7875 = vpop.f32.mrf.mxu0
        %7876 = vdwg.mxu0
        %7877 = vmatpush.bf16.msra.mxu0 %v5247
        %7878 = vmatpush.bf16.msra.mxu0 %v5243
        %7879 = vmatpush.bf16.msra.mxu0 %v5239
        %7880 = vmatpush.bf16.msra.mxu0 %v5235
        %7881 = vmatpush.bf16.msra.mxu0 %v5231
        %7882 = vmatpush.bf16.msra.mxu0 %v5227
        %7883 = vmatpush.bf16.msra.mxu0 %v5223
        %7884 = vmatpush.bf16.msra.mxu0 %v5219
        %7885 = vmatmul.bf16.gmra.mxu0 %v1310
        %v7886 = vpop.f32.mrf.mxu0
        %v7887 = vadd.f32 %v7874, %v7886
        %v7888 = vpop.f32.mrf.mxu0
        %7889 = vdwg.mxu0
        %7890 = vmatpush.bf16.msra.mxu0 %v5279
        %7891 = vmatpush.bf16.msra.mxu0 %v5275
        %7892 = vmatpush.bf16.msra.mxu0 %v5271
        %7893 = vmatpush.bf16.msra.mxu0 %v5267
        %7894 = vmatpush.bf16.msra.mxu0 %v5263
        %7895 = vmatpush.bf16.msra.mxu0 %v5259
        %7896 = vmatpush.bf16.msra.mxu0 %v5255
        %7897 = vmatpush.bf16.msra.mxu0 %v5251
        %7898 = vmatmul.bf16.gmra.mxu0 %v1311
        %v7899 = vpop.f32.mrf.mxu0
        %v7900 = vadd.f32 %v7887, %v7899
        %v7901 = vpop.f32.mrf.mxu0
        %7902 = vdwg.mxu0
        %7903 = vmatpush.bf16.msra.mxu0 %v5311
        %7904 = vmatpush.bf16.msra.mxu0 %v5307
        %7905 = vmatpush.bf16.msra.mxu0 %v5303
        %7906 = vmatpush.bf16.msra.mxu0 %v5299
        %7907 = vmatpush.bf16.msra.mxu0 %v5295
        %7908 = vmatpush.bf16.msra.mxu0 %v5291
        %7909 = vmatpush.bf16.msra.mxu0 %v5287
        %7910 = vmatpush.bf16.msra.mxu0 %v5283
        %7911 = vmatmul.bf16.gmra.mxu0 %v1312
        %v7912 = vpop.f32.mrf.mxu0
        %v7913 = vadd.f32 %v7900, %v7912
        %v7914 = vpop.f32.mrf.mxu0
        %7915 = vdwg.mxu0
        %v7920 = vrot.slane %v7107, 6
        %v7921 = vrot.slane %v7510, 4
        %v7922 = vrot.slane %v7913, 2
        %vm7923 = vcmask 1041408
        %v7924 = vsel %vm7923, %v6704, %v7920
        %vm7925 = vcmask 1045508
        %v7926 = vsel %vm7925, %v7921, %v7922
        %vm7927 = vcmask 1043456
        %v7928 = vsel %vm7927, %v7924, %v7926
        %v7930 = vadd.f32 %v277, %v7928
        %7931 = vst [vmem:[#allocation2] sm:$0xff] %v7930
        %p7932 = scmp.eq.s32.totalorder %s25, 30
        // Predicated region
        $region45: #{net1_forward.4} parent=31 // pred_check
          %p7933 = pneg %p7932
        $region46: #{net1_forward.4} parent=31 // pred_check_branch
          %7935 = sbr.rel (%p7933) target = $region48
        $region47: #{net1_forward.4} parent=31 // pred_region
          %v7936 = vld [vmem:[#allocation2] sm:$0xff]
          %v7937 = vld [vmem:[%s225] sm:$0xf]
          %v7939 = vperm.slane %v7937, 0
          %v7940 = vperm.slane %v7937, 1
          %v7941 = vperm.slane %v7937, 2
          %v7942 = vperm.slane %v7937, 3
          %v7943 = vrot.slane %v7940, 6
          %v7944 = vrot.slane %v7941, 4
          %v7945 = vrot.slane %v7942, 2
          %v7946 = vsel %vm7923, %v7939, %v7943
          %v7947 = vsel %vm7925, %v7944, %v7945
          %v7948 = vsel %vm7927, %v7946, %v7947
          %v7950 = vadd.f32 %v7936, %v7948
          %v7951 = vmax.f32 %v7950, 0.0
          %7952 = vst [vmem:[%s270] sm:$0xff] %v7951
        $region48: #{net1_forward.4} parent=31 // pred_fallthru
          _
        %s7953 = smul.u32 4, %s24
        %p7954 = scmp.lt.s32.totalorder %s7953, 7
        %s7955 = scalar_select %p7954, %s7953, 7
        %s7956 = smul.addr %s7955, 2
        %s7957 = scalar_lea.vmem %s3, %s7956
        // Predicated region
        $region49: #{net1_forward.4} parent=31 // pred_check
          %p7958 = pneg %p130
        $region50: #{net1_forward.4} parent=31 // pred_check_branch
          %7960 = sbr.rel (%p7958) target = $region52
        $region51: #{net1_forward.4} parent=31 // pred_region
          %s7961 = smul.u32 4, %s24
        $region52: #{net1_forward.4} parent=31 // pred_fallthru
          _
      $region32: #{net1_forward.4} parent=5 // pred_fallthru
        _
      %p7962 = scmp.le.s32.totalorder 2, %s15
      // Predicated region
      $region53: #{net1_forward.4} parent=5 // pred_check
        %p7963 = pneg %p7962
      $region54: #{net1_forward.4} parent=5 // pred_check_branch
        %7965 = sbr.rel (%p7963) target = $region56
      $region55: #{net1_forward.4} parent=5 // pred_region
        %s7966 = ssub.s32 %s15, 2
        // Predicated region
        $region57: #{net1_forward.4} parent=55 // pred_check
          %p7967 = pneg %p136
        $region58: #{net1_forward.4} parent=55 // pred_check_branch
          %7969 = sbr.rel (%p7967) target = $region60
        $region59: #{net1_forward.4} parent=55 // pred_region
          %s7970 = smul.u32 4, %s26
          %p7971 = scmp.lt.s32.totalorder %s7970, 7
          %s7972 = scalar_select %p7971, %s7970, 7
          %s7973 = smul.addr %s7972, 2
          %s7974 = scalar_lea.vmem %s3, %s7973
        $region60: #{net1_forward.4} parent=55 // pred_fallthru
          _
      $region56: #{net1_forward.4} parent=5 // pred_fallthru
        _
    $region6: #{net1_forward.4} parent=1 // loop_footer
      %s19 = sadd.s32 1, %s15
    $region7: #{net1_forward.4} parent=1 // loop_footer_branch
      %14 = sbr.rel target = $region3
    $region8: #{net1_forward.4} parent=1 // loop_exit
      _
    %7975 = vsyncpa [#allocation4], 1
    %s7976 = scalar_lea.sflag [#allocation4], 1
    %7977 = vsyncpa %s7976, 1
    %7978 = vsyncpa [#allocation6], 1
    %s7979 = scalar_lea.sflag [#allocation6], 1
    %7980 = vsyncpa %s7979, 1

</llo_original>
